<compile_context>
chip_gen: v6e
topology: v6e:2x2x1
jax: 0.10.0
libtpu: 0.0.40
codegen_flags: <defaults>
</compile_context>

<pallas_src>
import functools
import math

import numpy as np
import jax
import jax.numpy as jnp
from jax.experimental import pallas as pl
from jax.experimental.pallas import tpu as pltpu

NEG_INF = -1e30  # finite additive mask fill (avoids NaN on fully-masked rows)

_PARALLEL = pltpu.CompilerParams(dimension_semantics=("parallel",))


# ----------------------------- in-kernel helpers -----------------------------

def _split(vec, sizes):
    """Static slicing of a packed 1-D parameter vector."""
    out, off = [], 0
    for s in sizes:
        out.append(vec[off:off + s])
        off += s
    return out


def _layernorm(x, g, b, eps=1e-5):
    mu = jnp.mean(x, axis=-1, keepdims=True)
    var = jnp.mean((x - mu) ** 2, axis=-1, keepdims=True)
    return (x - mu) * jax.lax.rsqrt(var + eps) * g + b


def _softmax_rows(s):
    m = jnp.max(s, axis=-1, keepdims=True)
    p = jnp.exp(s - m)
    return p * pl.reciprocal(jnp.sum(p, axis=-1, keepdims=True), approx=True)


# ----------------------------- single fused kernel -----------------------------

def _transformer_kernel(H, N,
                        src_ref, trg_ref, amask_ref,
                        ewqkv_ref, ewo_ref, ew1_ref, ew2_ref, evec_ref,
                        dwqkv_ref, dwos_ref, dwq_ref, dwkv_ref, dwoc_ref,
                        dw1_ref, dw2_ref, dvec_ref,
                        gw1_ref, gw2_ref, gvec_ref,
                        out_ref):
    D = src_ref.shape[-1]
    F = ew1_ref.shape[-1]
    V = gw1_ref.shape[-1]
    dk = D // H
    scale = 1.0 / math.sqrt(dk)

    def matmul(a, w):
        return jnp.dot(a, w, preferred_element_type=jnp.float32)

    def mha(q_all, k_all, v_all, add_mask):
        # q_all already scaled; q_all [Sq,D], k_all/v_all [Sk,D], add_mask [Sq,Sk] or None.
        heads = []
        for h in range(H):                      # static unroll (H=4 here)
            q = q_all[:, h * dk:(h + 1) * dk]
            k = k_all[:, h * dk:(h + 1) * dk]
            v = v_all[:, h * dk:(h + 1) * dk]
            s = jnp.einsum('qd,kd->qk', q, k, preferred_element_type=jnp.float32)
            if add_mask is not None:
                s = s + add_mask
            heads.append(jnp.dot(_softmax_rows(s), v, preferred_element_type=jnp.float32))
        # contiguous lane slab [Sq, D] -> a single full-K Wo matmul in the caller
        return jnp.concatenate(heads, axis=-1)

    # -------------------- encoder stack --------------------
    x = src_ref[...].astype(jnp.float32)
    for l in range(N):
        vec = evec_ref[l]
        g0, b0, bqkv, bo, g1, b1ln, bf1, bf2 = _split(
            vec, [D, D, 3 * D, D, D, D, F, D])
        # self-attention sublayer (no mask inside Encoder)
        y = _layernorm(x, g0, b0)
        qkv = matmul(y, ewqkv_ref[l]) + bqkv
        att = mha(qkv[:, :D] * scale, qkv[:, D:2 * D], qkv[:, 2 * D:], None)
        x = x + matmul(att, ewo_ref[l]) + bo
        # FFN sublayer
        y = _layernorm(x, g1, b1ln)
        h1 = jnp.maximum(matmul(y, ew1_ref[l]) + bf1, 0.0)
        x = x + matmul(h1, ew2_ref[l]) + bf2
    mem = x

    # -------------------- decoder stack --------------------
    add_mask = amask_ref[...].astype(jnp.float32)
    x = trg_ref[...].astype(jnp.float32)
    for l in range(N):
        vec = dvec_ref[l]
        (g0, b0, bqkv, bos, g1, b1ln, bq, bkv, boc,
         g2, b2ln, bf1, bf2) = _split(
            vec, [D, D, 3 * D, D, D, D, D, 2 * D, D, D, D, F, D])
        # masked self-attention
        y = _layernorm(x, g0, b0)
        qkv = matmul(y, dwqkv_ref[l]) + bqkv
        att = mha(qkv[:, :D] * scale, qkv[:, D:2 * D], qkv[:, 2 * D:], add_mask)
        x = x + matmul(att, dwos_ref[l]) + bos
        # cross-attention over encoder memory (src_mask is forced to None in the module)
        y = _layernorm(x, g1, b1ln)
        q_all = (matmul(y, dwq_ref[l]) + bq) * scale
        kv = matmul(mem, dwkv_ref[l]) + bkv
        att = mha(q_all, kv[:, :D], kv[:, D:], None)
        x = x + matmul(att, dwoc_ref[l]) + boc
        # FFN
        y = _layernorm(x, g2, b2ln)
        h1 = jnp.maximum(matmul(y, dw1_ref[l]) + bf1, 0.0)
        x = x + matmul(h1, dw2_ref[l]) + bf2

    # -------------------- generator --------------------
    gb1, gb2 = _split(gvec_ref[0], [V, V])
    h1 = jnp.maximum(matmul(x, gw1_ref[...]) + gb1, 0.0)   # dropout(p=0) is identity
    logits = matmul(h1, gw2_ref[...]) + gb2
    m = jnp.max(logits, axis=-1, keepdims=True)
    lse = jnp.log(jnp.sum(jnp.exp(logits - m), axis=-1, keepdims=True)) + m
    out_ref[...] = (logits - lse).astype(out_ref.dtype)


# ----------------------------- pallas_call wrapper -----------------------------

def _full(shape):
    zeros = (0,) * len(shape)
    return pl.BlockSpec(shape, lambda b, _z=zeros: _z)


def transformer_forward(packed, src, trg, trg_mask, H, N):
    B, Ss, D = src.shape
    St = trg.shape[1]
    e, d, g = packed['enc'], packed['dec'], packed['gen']
    V = g['w1'].shape[-1]

    # src embedder = Identity; positional encodings added (dropout p=0 -> identity)
    src_v = src.astype(jnp.float32) + packed['pos_feat'][:Ss][None]
    trg_v = packed['emb'][trg] * math.sqrt(D) + packed['pos'][:St][None]
    # additive f32 mask precomputed once (no per-head int compare inside the kernel)
    amask = jnp.where(trg_mask == 0, jnp.float32(NEG_INF), jnp.float32(0.0))

    kern = functools.partial(_transformer_kernel, H, N)
    in_specs = [
        pl.BlockSpec((None, Ss, D), lambda b: (b, 0, 0)),    # src_v
        pl.BlockSpec((None, St, D), lambda b: (b, 0, 0)),    # trg_v
        pl.BlockSpec((None, St, St), lambda b: (b, 0, 0)),   # additive trg mask
        _full(e['wqkv'].shape), _full(e['wo'].shape),
        _full(e['w1'].shape), _full(e['w2'].shape), _full(e['vec'].shape),
        _full(d['wqkv'].shape), _full(d['wo_s'].shape), _full(d['wq'].shape),
        _full(d['wkv'].shape), _full(d['wo_c'].shape),
        _full(d['w1'].shape), _full(d['w2'].shape), _full(d['vec'].shape),
        _full(g['w1'].shape), _full(g['w2'].shape), _full(g['vec'].shape),
    ]
    return pl.pallas_call(
        kern,
        out_shape=jax.ShapeDtypeStruct((B, St, V), jnp.float32),
        grid=(B,),
        in_specs=in_specs,
        out_specs=pl.BlockSpec((None, St, V), lambda b: (b, 0, 0)),
        compiler_params=_PARALLEL,
    )(src_v, trg_v, amask,
      e['wqkv'], e['wo'], e['w1'], e['w2'], e['vec'],
      d['wqkv'], d['wo_s'], d['wq'], d['wkv'], d['wo_c'], d['w1'], d['w2'], d['vec'],
      g['w1'], g['w2'], g['vec'])


# ----------------------------- parameter packing -----------------------------

def pack_params(params):
    enc, dec, gen = params['enc_layers'], params['dec_layers'], params['gen']

    def enc_vec(lp):
        sa, f = lp['self_att'], lp['ffn']
        return jnp.concatenate([lp['ln0_g'], lp['ln0_b'], sa['bqkv'], sa['bo'],
                                lp['ln1_g'], lp['ln1_b'], f['b1'], f['b2']])

    def dec_vec(lp):
        sa, ea, f = lp['self_att'], lp['enc_att'], lp['ffn']
        return jnp.concatenate([lp['ln0_g'], lp['ln0_b'], sa['bqkv'], sa['bo'],
                                lp['ln1_g'], lp['ln1_b'], ea['bq'], ea['bkv'], ea['bo'],
                                lp['ln2_g'], lp['ln2_b'], f['b1'], f['b2']])

    e = {'wqkv': jnp.stack([lp['self_att']['wqkv'] for lp in enc]),
         'wo':   jnp.stack([lp['self_att']['wo'] for lp in enc]),
         'w1':   jnp.stack([lp['ffn']['w1'] for lp in enc]),
         'w2':   jnp.stack([lp['ffn']['w2'] for lp in enc]),
         'vec':  jnp.stack([enc_vec(lp) for lp in enc])}
    d = {'wqkv': jnp.stack([lp['self_att']['wqkv'] for lp in dec]),
         'wo_s': jnp.stack([lp['self_att']['wo'] for lp in dec]),
         'wq':   jnp.stack([lp['enc_att']['wq'] for lp in dec]),
         'wkv':  jnp.stack([lp['enc_att']['wkv'] for lp in dec]),
         'wo_c': jnp.stack([lp['enc_att']['wo'] for lp in dec]),
         'w1':   jnp.stack([lp['ffn']['w1'] for lp in dec]),
         'w2':   jnp.stack([lp['ffn']['w2'] for lp in dec]),
         'vec':  jnp.stack([dec_vec(lp) for lp in dec])}
    gp = {'w1': gen['w1'], 'w2': gen['w2'],
          'vec': jnp.concatenate([gen['b1'], gen['b2']])[None, :]}
    return {'enc': e, 'dec': d, 'gen': gp, 'emb': params['emb'],
            'pos': params['pos'], 'pos_feat': params['pos_feat']}


# ----------------------------- pure-jnp reference -----------------------------

def ref_forward(params, src, trg, trg_mask, H):
    def lin(x, w, b):
        return jnp.dot(x, w, precision='highest') + b

    def ln(x, g, b):
        mu = x.mean(-1, keepdims=True)
        var = ((x - mu) ** 2).mean(-1, keepdims=True)
        return (x - mu) / jnp.sqrt(var + 1e-5) * g + b

    def attn(q, k, v, m):
        B, Sq, D = q.shape
        Sk = k.shape[1]
        dk = D // H
        q = q.reshape(B, Sq, H, dk).transpose(0, 2, 1, 3)
        k = k.reshape(B, Sk, H, dk).transpose(0, 2, 1, 3)
        v = v.reshape(B, Sk, H, dk).transpose(0, 2, 1, 3)
        s = jnp.einsum('bhqd,bhkd->bhqk', q, k, precision='highest') / math.sqrt(dk)
        if m is not None:
            s = jnp.where(m[:, None] == 0, -jnp.inf, s)
        p = jax.nn.softmax(s, axis=-1)
        o = jnp.einsum('bhqk,bhkd->bhqd', p, v, precision='highest')
        return o.transpose(0, 2, 1, 3).reshape(B, Sq, D)

    def self_mha(p, x, m):
        D = x.shape[-1]
        qkv = lin(x, p['wqkv'], p['bqkv'])
        q, k, v = qkv[..., :D], qkv[..., D:2 * D], qkv[..., 2 * D:]
        return lin(attn(q, k, v, m), p['wo'], p['bo'])

    def cross_mha(p, x, mem, m):
        D = x.shape[-1]
        q = lin(x, p['wq'], p['bq'])
        kv = lin(mem, p['wkv'], p['bkv'])
        k, v = kv[..., :D], kv[..., D:]
        return lin(attn(q, k, v, m), p['wo'], p['bo'])

    def ffn(p, x):
        return lin(jnp.maximum(lin(x, p['w1'], p['b1']), 0.0), p['w2'], p['b2'])

    B, Ss, D = src.shape
    St = trg.shape[1]
    src_v = src + params['pos_feat'][:Ss][None]
    trg_v = params['emb'][trg] * math.sqrt(D) + params['pos'][:St][None]

    mem = src_v
    for lp in params['enc_layers']:
        y = ln(mem, lp['ln0_g'], lp['ln0_b'])
        mem = mem + self_mha(lp['self_att'], y, None)
        y = ln(mem, lp['ln1_g'], lp['ln1_b'])
        mem = mem + ffn(lp['ffn'], y)

    x = trg_v
    for lp in params['dec_layers']:
        y = ln(x, lp['ln0_g'], lp['ln0_b'])
        x = x + self_mha(lp['self_att'], y, trg_mask)
        y = ln(x, lp['ln1_g'], lp['ln1_b'])
        x = x + cross_mha(lp['enc_att'], y, mem, None)
        y = ln(x, lp['ln2_g'], lp['ln2_b'])
        x = x + ffn(lp['ffn'], y)

    g = params['gen']
    h = jnp.maximum(lin(x, g['w1'], g['b1']), 0.0)
    logits = lin(h, g['w2'], g['b2'])
    return jax.nn.log_softmax(logits, axis=-1)


# ----------------------------- parameter init -----------------------------

def xavier(key, shape):
    limit = math.sqrt(6.0 / (shape[0] + shape[1]))
    return jax.random.uniform(key, shape, jnp.float32, -limit, limit)


def init_self_mha(key, D):
    ks = jax.random.split(key, 4)
    wq, wk, wv, wo = (xavier(k, (D, D)) for k in ks)
    return {'wqkv': jnp.concatenate([wq, wk, wv], axis=1),
            'bqkv': jnp.zeros((3 * D,), jnp.float32),
            'wo': wo, 'bo': jnp.zeros((D,), jnp.float32)}


def init_cross_mha(key, D):
    ks = jax.random.split(key, 4)
    wq, wk, wv, wo = (xavier(k, (D, D)) for k in ks)
    return {'wq': wq, 'bq': jnp.zeros((D,), jnp.float32),
            'wkv': jnp.concatenate([wk, wv], axis=1),
            'bkv': jnp.zeros((2 * D,), jnp.float32),
            'wo': wo, 'bo': jnp.zeros((D,), jnp.float32)}


def init_ffn(key, D, F):
    k1, k2 = jax.random.split(key)
    return {'w1': xavier(k1, (D, F)), 'b1': jnp.zeros((F,), jnp.float32),
            'w2': xavier(k2, (F, D)), 'b2': jnp.zeros((D,), jnp.float32)}


def build_pos_enc(seq_len, d_model):
    pe = np.zeros((seq_len, d_model))
    odds = np.arange(0, d_model, 2)
    evens = np.arange(1, d_model, 2)
    for pos in range(seq_len):
        pe[pos, odds] = np.sin(pos / 10000 ** (odds / d_model))
        pe[pos, evens] = np.cos(pos / 10000 ** (evens / d_model))
    return jnp.asarray(pe, jnp.float32)


def init_params(key, voc, D, F, N):
    ones = jnp.ones((D,), jnp.float32)
    zeros = jnp.zeros((D,), jnp.float32)
    keys = jax.random.split(key, 2 * N + 2)
    enc_layers, dec_layers = [], []
    for i in range(N):
        k1, k2 = jax.random.split(keys[i])
        enc_layers.append({'ln0_g': ones, 'ln0_b': zeros, 'ln1_g': ones, 'ln1_b': zeros,
                           'self_att': init_self_mha(k1, D), 'ffn': init_ffn(k2, D, F)})
    for i in range(N):
        k1, k2, k3 = jax.random.split(keys[N + i], 3)
        dec_layers.append({'ln0_g': ones, 'ln0_b': zeros, 'ln1_g': ones, 'ln1_b': zeros,
                           'ln2_g': ones, 'ln2_b': zeros,
                           'self_att': init_self_mha(k1, D),
                           'enc_att': init_cross_mha(k2, D),
                           'ffn': init_ffn(k3, D, F)})
    kg1, kg2, ke = jax.random.split(keys[-1], 3)
    gen = {'w1': xavier(kg1, (D, voc)), 'b1': jnp.zeros((voc,), jnp.float32),
           'w2': xavier(kg2, (voc, voc)), 'b2': jnp.zeros((voc,), jnp.float32)}
    emb = xavier(ke, (voc, D))
    return {'enc_layers': enc_layers, 'dec_layers': dec_layers, 'gen': gen, 'emb': emb,
            'pos': build_pos_enc(20, D), 'pos_feat': build_pos_enc(64, D)}


# ----------------------------- main -----------------------------

if __name__ == "__main__":
    # small synthetic config (D / vocab chosen = 128 so the only HBM store is lane-dense)
    B, S_src, S_trg = 2, 16, 8
    D, H, F, N, VOC = 128, 4, 256, 2, 128
    PAD = 0

    key = jax.random.PRNGKey(0)
    k_src, k_trg, k_par = jax.random.split(key, 3)

    src = jax.random.normal(k_src, (B, S_src, D), jnp.float32)   # video feats (Identity embedder)
    trg = jax.random.randint(k_trg, (B, S_trg), 1, VOC)          # token ids, no PAD

    # trg_mask semantics of mask(src, trg, pad_idx): (trg != pad)[:, None, :] & tril(ones)
    tril = jnp.tril(jnp.ones((S_trg, S_trg), jnp.int32))
    trg_mask = ((trg != PAD)[:, None, :].astype(jnp.int32) & tril[None]).astype(jnp.int32)

    params = init_params(k_par, VOC, D, F, N)
    packed = pack_params(params)   # stacked per-layer weights + packed bias/LN vectors

    forward = jax.jit(functools.partial(transformer_forward, H=H, N=N))
    out = jax.block_until_ready(forward(packed, src, trg, trg_mask))

    ref = jax.block_until_ready(ref_forward(params, src, trg, trg_mask, H))
    assert out.shape == (B, S_trg, VOC), out.shape
    np.testing.assert_allclose(np.asarray(out), np.asarray(ref), rtol=2e-2, atol=2e-2)

    print("KERNEL_OK")
</pallas_src>

<mosaic_0001>
module attributes {stable_mosaic.version = 11 : i64} {
  func.func @_transformer_kernel(%arg0: i32, %arg1: memref<1x16x128xf32, #tpu.memory_space<vmem>>, %arg2: memref<1x8x128xf32, #tpu.memory_space<vmem>>, %arg3: memref<1x8x8xf32, #tpu.memory_space<vmem>>, %arg4: memref<2x128x384xf32, #tpu.memory_space<vmem>>, %arg5: memref<2x128x128xf32, #tpu.memory_space<vmem>>, %arg6: memref<2x128x256xf32, #tpu.memory_space<vmem>>, %arg7: memref<2x256x128xf32, #tpu.memory_space<vmem>>, %arg8: memref<2x1408xf32, #tpu.memory_space<vmem>>, %arg9: memref<2x128x384xf32, #tpu.memory_space<vmem>>, %arg10: memref<2x128x128xf32, #tpu.memory_space<vmem>>, %arg11: memref<2x128x128xf32, #tpu.memory_space<vmem>>, %arg12: memref<2x128x256xf32, #tpu.memory_space<vmem>>, %arg13: memref<2x128x128xf32, #tpu.memory_space<vmem>>, %arg14: memref<2x128x256xf32, #tpu.memory_space<vmem>>, %arg15: memref<2x256x128xf32, #tpu.memory_space<vmem>>, %arg16: memref<2x2176xf32, #tpu.memory_space<vmem>>, %arg17: memref<128x128xf32, #tpu.memory_space<vmem>>, %arg18: memref<128x128xf32, #tpu.memory_space<vmem>>, %arg19: memref<1x256xf32, #tpu.memory_space<vmem>>, %arg20: memref<1x8x128xf32, #tpu.memory_space<vmem>>) attributes {dimension_semantics = [#tpu.dimension_semantics<parallel>], iteration_bounds = array<i64: 2>, scalar_prefetch = 0 : i64, scratch_operands = 0 : i64, tpu.core_type = #tpu.core_type<tc>, window_params = [{transform_indices = @transform_0, window_bounds = array<i64: 1, 16, 128>}, {transform_indices = @transform_1, window_bounds = array<i64: 1, 8, 128>}, {transform_indices = @transform_2, window_bounds = array<i64: 1, 8, 8>}, {pipeline_mode = #tpu.pipeline_mode<synchronous>, transform_indices = @transform_3, window_bounds = array<i64: 2, 128, 384>}, {pipeline_mode = #tpu.pipeline_mode<synchronous>, transform_indices = @transform_4, window_bounds = array<i64: 2, 128, 128>}, {pipeline_mode = #tpu.pipeline_mode<synchronous>, transform_indices = @transform_5, window_bounds = array<i64: 2, 128, 256>}, {pipeline_mode = #tpu.pipeline_mode<synchronous>, transform_indices = @transform_6, window_bounds = array<i64: 2, 256, 128>}, {pipeline_mode = #tpu.pipeline_mode<synchronous>, transform_indices = @transform_7, window_bounds = array<i64: 2, 1408>}, {pipeline_mode = #tpu.pipeline_mode<synchronous>, transform_indices = @transform_8, window_bounds = array<i64: 2, 128, 384>}, {pipeline_mode = #tpu.pipeline_mode<synchronous>, transform_indices = @transform_9, window_bounds = array<i64: 2, 128, 128>}, {pipeline_mode = #tpu.pipeline_mode<synchronous>, transform_indices = @transform_10, window_bounds = array<i64: 2, 128, 128>}, {pipeline_mode = #tpu.pipeline_mode<synchronous>, transform_indices = @transform_11, window_bounds = array<i64: 2, 128, 256>}, {pipeline_mode = #tpu.pipeline_mode<synchronous>, transform_indices = @transform_12, window_bounds = array<i64: 2, 128, 128>}, {pipeline_mode = #tpu.pipeline_mode<synchronous>, transform_indices = @transform_13, window_bounds = array<i64: 2, 128, 256>}, {pipeline_mode = #tpu.pipeline_mode<synchronous>, transform_indices = @transform_14, window_bounds = array<i64: 2, 256, 128>}, {pipeline_mode = #tpu.pipeline_mode<synchronous>, transform_indices = @transform_15, window_bounds = array<i64: 2, 2176>}, {pipeline_mode = #tpu.pipeline_mode<synchronous>, transform_indices = @transform_16, window_bounds = array<i64: 128, 128>}, {pipeline_mode = #tpu.pipeline_mode<synchronous>, transform_indices = @transform_17, window_bounds = array<i64: 128, 128>}, {pipeline_mode = #tpu.pipeline_mode<synchronous>, transform_indices = @transform_18, window_bounds = array<i64: 1, 256>}, {transform_indices = @transform_19, window_bounds = array<i64: 1, 8, 128>}]} {
    %c0 = arith.constant 0 : index
    %c0_0 = arith.constant 0 : index
    %c0_1 = arith.constant 0 : index
    %0 = vector.load %arg1[%c0, %c0_0, %c0_1] : memref<1x16x128xf32, #tpu.memory_space<vmem>>, vector<1x16x128xf32>
    %1 = vector.shape_cast %0 : vector<1x16x128xf32> to vector<16x128xf32>
    %c0_2 = arith.constant 0 : index
    %c0_3 = arith.constant 0 : index
    %2 = vector.load %arg8[%c0_2, %c0_3] : memref<2x1408xf32, #tpu.memory_space<vmem>>, vector<1x1408xf32>
    %3 = vector.shape_cast %2 : vector<1x1408xf32> to vector<1408xf32>
    %4 = vector.extract_strided_slice %3 {offsets = [0], sizes = [128], strides = [1]} : vector<1408xf32> to vector<128xf32>
    %5 = vector.extract_strided_slice %3 {offsets = [128], sizes = [128], strides = [1]} : vector<1408xf32> to vector<128xf32>
    %6 = vector.extract_strided_slice %3 {offsets = [256], sizes = [384], strides = [1]} : vector<1408xf32> to vector<384xf32>
    %7 = vector.extract_strided_slice %3 {offsets = [640], sizes = [128], strides = [1]} : vector<1408xf32> to vector<128xf32>
    %8 = vector.extract_strided_slice %3 {offsets = [768], sizes = [128], strides = [1]} : vector<1408xf32> to vector<128xf32>
    %9 = vector.extract_strided_slice %3 {offsets = [896], sizes = [128], strides = [1]} : vector<1408xf32> to vector<128xf32>
    %10 = vector.extract_strided_slice %3 {offsets = [1024], sizes = [256], strides = [1]} : vector<1408xf32> to vector<256xf32>
    %11 = vector.extract_strided_slice %3 {offsets = [1280], sizes = [128], strides = [1]} : vector<1408xf32> to vector<128xf32>
    %cst = arith.constant dense<0.000000e+00> : vector<16xf32>
    %12 = vector.multi_reduction <add>, %1, %cst [1] : vector<16x128xf32> to vector<16xf32>
    %13 = vector.shape_cast %12 : vector<16xf32> to vector<16x1xf32>
    %cst_4 = arith.constant 1.280000e+02 : f32
    %14 = vector.broadcast %cst_4 : f32 to vector<16x1xf32>
    %15 = arith.divf %13, %14 : vector<16x1xf32>
    %16 = vector.broadcast %15 : vector<16x1xf32> to vector<16x128xf32>
    %17 = arith.subf %1, %16 : vector<16x128xf32>
    %18 = arith.mulf %17, %17 : vector<16x128xf32>
    %cst_5 = arith.constant dense<0.000000e+00> : vector<16xf32>
    %19 = vector.multi_reduction <add>, %18, %cst_5 [1] : vector<16x128xf32> to vector<16xf32>
    %20 = vector.shape_cast %19 : vector<16xf32> to vector<16x1xf32>
    %cst_6 = arith.constant 1.280000e+02 : f32
    %21 = vector.broadcast %cst_6 : f32 to vector<16x1xf32>
    %22 = arith.divf %20, %21 : vector<16x1xf32>
    %23 = vector.broadcast %15 : vector<16x1xf32> to vector<16x128xf32>
    %24 = arith.subf %1, %23 : vector<16x128xf32>
    %cst_7 = arith.constant 9.99999974E-6 : f32
    %25 = vector.broadcast %cst_7 : f32 to vector<16x1xf32>
    %26 = arith.addf %22, %25 : vector<16x1xf32>
    %27 = math.rsqrt %26 : vector<16x1xf32>
    %28 = vector.broadcast %27 : vector<16x1xf32> to vector<16x128xf32>
    %29 = arith.mulf %24, %28 : vector<16x128xf32>
    %30 = vector.shape_cast %4 : vector<128xf32> to vector<1x128xf32>
    %31 = vector.broadcast %30 : vector<1x128xf32> to vector<16x128xf32>
    %32 = arith.mulf %29, %31 : vector<16x128xf32>
    %33 = vector.shape_cast %5 : vector<128xf32> to vector<1x128xf32>
    %34 = vector.broadcast %33 : vector<1x128xf32> to vector<16x128xf32>
    %35 = arith.addf %32, %34 : vector<16x128xf32>
    %c0_8 = arith.constant 0 : index
    %c0_9 = arith.constant 0 : index
    %c0_10 = arith.constant 0 : index
    %36 = vector.load %arg4[%c0_8, %c0_9, %c0_10] : memref<2x128x384xf32, #tpu.memory_space<vmem>>, vector<1x128x384xf32>
    %37 = vector.shape_cast %36 : vector<1x128x384xf32> to vector<128x384xf32>
    %cst_11 = arith.constant dense<0.000000e+00> : vector<16x384xf32>
    %38 = tpu.matmul %35, %37, %cst_11 {dimension_numbers = #tpu.dot_dimension_numbers<[1], [0], [0], [1], [0, 0, 1, 1], [], []>} : vector<16x128xf32>, vector<128x384xf32>, vector<16x384xf32> -> vector<16x384xf32>
    %39 = vector.shape_cast %6 : vector<384xf32> to vector<1x384xf32>
    %40 = vector.broadcast %39 : vector<1x384xf32> to vector<16x384xf32>
    %41 = arith.addf %38, %40 : vector<16x384xf32>
    %42 = vector.extract_strided_slice %41 {offsets = [0, 0], sizes = [16, 128], strides = [1, 1]} : vector<16x384xf32> to vector<16x128xf32>
    %cst_12 = arith.constant 0.176776692 : f32
    %43 = vector.broadcast %cst_12 : f32 to vector<16x128xf32>
    %44 = arith.mulf %42, %43 : vector<16x128xf32>
    %45 = vector.extract_strided_slice %41 {offsets = [0, 128], sizes = [16, 128], strides = [1, 1]} : vector<16x384xf32> to vector<16x128xf32>
    %46 = vector.extract_strided_slice %41 {offsets = [0, 256], sizes = [16, 128], strides = [1, 1]} : vector<16x384xf32> to vector<16x128xf32>
    %47 = vector.extract_strided_slice %44 {offsets = [0, 0], sizes = [16, 32], strides = [1, 1]} : vector<16x128xf32> to vector<16x32xf32>
    %48 = vector.extract_strided_slice %45 {offsets = [0, 0], sizes = [16, 32], strides = [1, 1]} : vector<16x128xf32> to vector<16x32xf32>
    %49 = vector.extract_strided_slice %46 {offsets = [0, 0], sizes = [16, 32], strides = [1, 1]} : vector<16x128xf32> to vector<16x32xf32>
    "tpu.trace_start"() <{level = 10 : i32, message = "qd,kd->qk"}> : () -> ()
    %cst_13 = arith.constant dense<0.000000e+00> : vector<16x16xf32>
    %50 = tpu.matmul %47, %48, %cst_13 {dimension_numbers = #tpu.dot_dimension_numbers<[1], [1], [0], [0], [0, 0, 1, 0], [], []>} : vector<16x32xf32>, vector<16x32xf32>, vector<16x16xf32> -> vector<16x16xf32>
    "tpu.trace_stop"() : () -> ()
    %cst_14 = arith.constant dense<0xFF800000> : vector<16xf32>
    %51 = vector.multi_reduction <maximumf>, %50, %cst_14 [1] : vector<16x16xf32> to vector<16xf32>
    %52 = vector.shape_cast %51 : vector<16xf32> to vector<16x1xf32>
    %53 = vector.broadcast %52 : vector<16x1xf32> to vector<16x16xf32>
    %54 = arith.subf %50, %53 : vector<16x16xf32>
    %55 = math.exp %54 : vector<16x16xf32>
    %cst_15 = arith.constant dense<0.000000e+00> : vector<16xf32>
    %56 = vector.multi_reduction <add>, %55, %cst_15 [1] : vector<16x16xf32> to vector<16xf32>
    %57 = vector.shape_cast %56 : vector<16xf32> to vector<16x1xf32>
    %58 = tpu.reciprocal %57 {approx = true} : vector<16x1xf32> -> vector<16x1xf32>
    %59 = vector.broadcast %58 : vector<16x1xf32> to vector<16x16xf32>
    %60 = arith.mulf %55, %59 : vector<16x16xf32>
    %cst_16 = arith.constant dense<0.000000e+00> : vector<16x32xf32>
    %61 = tpu.matmul %60, %49, %cst_16 {dimension_numbers = #tpu.dot_dimension_numbers<[1], [0], [0], [1], [0, 0, 1, 1], [], []>} : vector<16x16xf32>, vector<16x32xf32>, vector<16x32xf32> -> vector<16x32xf32>
    %62 = vector.extract_strided_slice %44 {offsets = [0, 32], sizes = [16, 32], strides = [1, 1]} : vector<16x128xf32> to vector<16x32xf32>
    %63 = vector.extract_strided_slice %45 {offsets = [0, 32], sizes = [16, 32], strides = [1, 1]} : vector<16x128xf32> to vector<16x32xf32>
    %64 = vector.extract_strided_slice %46 {offsets = [0, 32], sizes = [16, 32], strides = [1, 1]} : vector<16x128xf32> to vector<16x32xf32>
    "tpu.trace_start"() <{level = 10 : i32, message = "qd,kd->qk"}> : () -> ()
    %cst_17 = arith.constant dense<0.000000e+00> : vector<16x16xf32>
    %65 = tpu.matmul %62, %63, %cst_17 {dimension_numbers = #tpu.dot_dimension_numbers<[1], [1], [0], [0], [0, 0, 1, 0], [], []>} : vector<16x32xf32>, vector<16x32xf32>, vector<16x16xf32> -> vector<16x16xf32>
    "tpu.trace_stop"() : () -> ()
    %cst_18 = arith.constant dense<0xFF800000> : vector<16xf32>
    %66 = vector.multi_reduction <maximumf>, %65, %cst_18 [1] : vector<16x16xf32> to vector<16xf32>
    %67 = vector.shape_cast %66 : vector<16xf32> to vector<16x1xf32>
    %68 = vector.broadcast %67 : vector<16x1xf32> to vector<16x16xf32>
    %69 = arith.subf %65, %68 : vector<16x16xf32>
    %70 = math.exp %69 : vector<16x16xf32>
    %cst_19 = arith.constant dense<0.000000e+00> : vector<16xf32>
    %71 = vector.multi_reduction <add>, %70, %cst_19 [1] : vector<16x16xf32> to vector<16xf32>
    %72 = vector.shape_cast %71 : vector<16xf32> to vector<16x1xf32>
    %73 = tpu.reciprocal %72 {approx = true} : vector<16x1xf32> -> vector<16x1xf32>
    %74 = vector.broadcast %73 : vector<16x1xf32> to vector<16x16xf32>
    %75 = arith.mulf %70, %74 : vector<16x16xf32>
    %cst_20 = arith.constant dense<0.000000e+00> : vector<16x32xf32>
    %76 = tpu.matmul %75, %64, %cst_20 {dimension_numbers = #tpu.dot_dimension_numbers<[1], [0], [0], [1], [0, 0, 1, 1], [], []>} : vector<16x16xf32>, vector<16x32xf32>, vector<16x32xf32> -> vector<16x32xf32>
    %77 = vector.extract_strided_slice %44 {offsets = [0, 64], sizes = [16, 32], strides = [1, 1]} : vector<16x128xf32> to vector<16x32xf32>
    %78 = vector.extract_strided_slice %45 {offsets = [0, 64], sizes = [16, 32], strides = [1, 1]} : vector<16x128xf32> to vector<16x32xf32>
    %79 = vector.extract_strided_slice %46 {offsets = [0, 64], sizes = [16, 32], strides = [1, 1]} : vector<16x128xf32> to vector<16x32xf32>
    "tpu.trace_start"() <{level = 10 : i32, message = "qd,kd->qk"}> : () -> ()
    %cst_21 = arith.constant dense<0.000000e+00> : vector<16x16xf32>
    %80 = tpu.matmul %77, %78, %cst_21 {dimension_numbers = #tpu.dot_dimension_numbers<[1], [1], [0], [0], [0, 0, 1, 0], [], []>} : vector<16x32xf32>, vector<16x32xf32>, vector<16x16xf32> -> vector<16x16xf32>
    "tpu.trace_stop"() : () -> ()
    %cst_22 = arith.constant dense<0xFF800000> : vector<16xf32>
    %81 = vector.multi_reduction <maximumf>, %80, %cst_22 [1] : vector<16x16xf32> to vector<16xf32>
    %82 = vector.shape_cast %81 : vector<16xf32> to vector<16x1xf32>
    %83 = vector.broadcast %82 : vector<16x1xf32> to vector<16x16xf32>
    %84 = arith.subf %80, %83 : vector<16x16xf32>
    %85 = math.exp %84 : vector<16x16xf32>
    %cst_23 = arith.constant dense<0.000000e+00> : vector<16xf32>
    %86 = vector.multi_reduction <add>, %85, %cst_23 [1] : vector<16x16xf32> to vector<16xf32>
    %87 = vector.shape_cast %86 : vector<16xf32> to vector<16x1xf32>
    %88 = tpu.reciprocal %87 {approx = true} : vector<16x1xf32> -> vector<16x1xf32>
    %89 = vector.broadcast %88 : vector<16x1xf32> to vector<16x16xf32>
    %90 = arith.mulf %85, %89 : vector<16x16xf32>
    %cst_24 = arith.constant dense<0.000000e+00> : vector<16x32xf32>
    %91 = tpu.matmul %90, %79, %cst_24 {dimension_numbers = #tpu.dot_dimension_numbers<[1], [0], [0], [1], [0, 0, 1, 1], [], []>} : vector<16x16xf32>, vector<16x32xf32>, vector<16x32xf32> -> vector<16x32xf32>
    %92 = vector.extract_strided_slice %44 {offsets = [0, 96], sizes = [16, 32], strides = [1, 1]} : vector<16x128xf32> to vector<16x32xf32>
    %93 = vector.extract_strided_slice %45 {offsets = [0, 96], sizes = [16, 32], strides = [1, 1]} : vector<16x128xf32> to vector<16x32xf32>
    %94 = vector.extract_strided_slice %46 {offsets = [0, 96], sizes = [16, 32], strides = [1, 1]} : vector<16x128xf32> to vector<16x32xf32>
    "tpu.trace_start"() <{level = 10 : i32, message = "qd,kd->qk"}> : () -> ()
    %cst_25 = arith.constant dense<0.000000e+00> : vector<16x16xf32>
    %95 = tpu.matmul %92, %93, %cst_25 {dimension_numbers = #tpu.dot_dimension_numbers<[1], [1], [0], [0], [0, 0, 1, 0], [], []>} : vector<16x32xf32>, vector<16x32xf32>, vector<16x16xf32> -> vector<16x16xf32>
    "tpu.trace_stop"() : () -> ()
    %cst_26 = arith.constant dense<0xFF800000> : vector<16xf32>
    %96 = vector.multi_reduction <maximumf>, %95, %cst_26 [1] : vector<16x16xf32> to vector<16xf32>
    %97 = vector.shape_cast %96 : vector<16xf32> to vector<16x1xf32>
    %98 = vector.broadcast %97 : vector<16x1xf32> to vector<16x16xf32>
    %99 = arith.subf %95, %98 : vector<16x16xf32>
    %100 = math.exp %99 : vector<16x16xf32>
    %cst_27 = arith.constant dense<0.000000e+00> : vector<16xf32>
    %101 = vector.multi_reduction <add>, %100, %cst_27 [1] : vector<16x16xf32> to vector<16xf32>
    %102 = vector.shape_cast %101 : vector<16xf32> to vector<16x1xf32>
    %103 = tpu.reciprocal %102 {approx = true} : vector<16x1xf32> -> vector<16x1xf32>
    %104 = vector.broadcast %103 : vector<16x1xf32> to vector<16x16xf32>
    %105 = arith.mulf %100, %104 : vector<16x16xf32>
    %cst_28 = arith.constant dense<0.000000e+00> : vector<16x32xf32>
    %106 = tpu.matmul %105, %94, %cst_28 {dimension_numbers = #tpu.dot_dimension_numbers<[1], [0], [0], [1], [0, 0, 1, 1], [], []>} : vector<16x16xf32>, vector<16x32xf32>, vector<16x32xf32> -> vector<16x32xf32>
    %107 = tpu.concatenate %61, %76, %91, %106 in 1 : vector<16x32xf32>, vector<16x32xf32>, vector<16x32xf32>, vector<16x32xf32> -> vector<16x128xf32>
    %c0_29 = arith.constant 0 : index
    %c0_30 = arith.constant 0 : index
    %c0_31 = arith.constant 0 : index
    %108 = vector.load %arg5[%c0_29, %c0_30, %c0_31] : memref<2x128x128xf32, #tpu.memory_space<vmem>>, vector<1x128x128xf32>
    %109 = vector.shape_cast %108 : vector<1x128x128xf32> to vector<128x128xf32>
    %cst_32 = arith.constant dense<0.000000e+00> : vector<16x128xf32>
    %110 = tpu.matmul %107, %109, %cst_32 {dimension_numbers = #tpu.dot_dimension_numbers<[1], [0], [0], [1], [0, 0, 1, 1], [], []>} : vector<16x128xf32>, vector<128x128xf32>, vector<16x128xf32> -> vector<16x128xf32>
    %111 = arith.addf %1, %110 : vector<16x128xf32>
    %112 = vector.shape_cast %7 : vector<128xf32> to vector<1x128xf32>
    %113 = vector.broadcast %112 : vector<1x128xf32> to vector<16x128xf32>
    %114 = arith.addf %111, %113 : vector<16x128xf32>
    %cst_33 = arith.constant dense<0.000000e+00> : vector<16xf32>
    %115 = vector.multi_reduction <add>, %114, %cst_33 [1] : vector<16x128xf32> to vector<16xf32>
    %116 = vector.shape_cast %115 : vector<16xf32> to vector<16x1xf32>
    %cst_34 = arith.constant 1.280000e+02 : f32
    %117 = vector.broadcast %cst_34 : f32 to vector<16x1xf32>
    %118 = arith.divf %116, %117 : vector<16x1xf32>
    %119 = vector.broadcast %118 : vector<16x1xf32> to vector<16x128xf32>
    %120 = arith.subf %114, %119 : vector<16x128xf32>
    %121 = arith.mulf %120, %120 : vector<16x128xf32>
    %cst_35 = arith.constant dense<0.000000e+00> : vector<16xf32>
    %122 = vector.multi_reduction <add>, %121, %cst_35 [1] : vector<16x128xf32> to vector<16xf32>
    %123 = vector.shape_cast %122 : vector<16xf32> to vector<16x1xf32>
    %cst_36 = arith.constant 1.280000e+02 : f32
    %124 = vector.broadcast %cst_36 : f32 to vector<16x1xf32>
    %125 = arith.divf %123, %124 : vector<16x1xf32>
    %126 = vector.broadcast %118 : vector<16x1xf32> to vector<16x128xf32>
    %127 = arith.subf %114, %126 : vector<16x128xf32>
    %cst_37 = arith.constant 9.99999974E-6 : f32
    %128 = vector.broadcast %cst_37 : f32 to vector<16x1xf32>
    %129 = arith.addf %125, %128 : vector<16x1xf32>
    %130 = math.rsqrt %129 : vector<16x1xf32>
    %131 = vector.broadcast %130 : vector<16x1xf32> to vector<16x128xf32>
    %132 = arith.mulf %127, %131 : vector<16x128xf32>
    %133 = vector.shape_cast %8 : vector<128xf32> to vector<1x128xf32>
    %134 = vector.broadcast %133 : vector<1x128xf32> to vector<16x128xf32>
    %135 = arith.mulf %132, %134 : vector<16x128xf32>
    %136 = vector.shape_cast %9 : vector<128xf32> to vector<1x128xf32>
    %137 = vector.broadcast %136 : vector<1x128xf32> to vector<16x128xf32>
    %138 = arith.addf %135, %137 : vector<16x128xf32>
    %c0_38 = arith.constant 0 : index
    %c0_39 = arith.constant 0 : index
    %c0_40 = arith.constant 0 : index
    %139 = vector.load %arg6[%c0_38, %c0_39, %c0_40] : memref<2x128x256xf32, #tpu.memory_space<vmem>>, vector<1x128x256xf32>
    %140 = vector.shape_cast %139 : vector<1x128x256xf32> to vector<128x256xf32>
    %cst_41 = arith.constant dense<0.000000e+00> : vector<16x256xf32>
    %141 = tpu.matmul %138, %140, %cst_41 {dimension_numbers = #tpu.dot_dimension_numbers<[1], [0], [0], [1], [0, 0, 1, 1], [], []>} : vector<16x128xf32>, vector<128x256xf32>, vector<16x256xf32> -> vector<16x256xf32>
    %142 = vector.shape_cast %10 : vector<256xf32> to vector<1x256xf32>
    %143 = vector.broadcast %142 : vector<1x256xf32> to vector<16x256xf32>
    %144 = arith.addf %141, %143 : vector<16x256xf32>
    %cst_42 = arith.constant 0.000000e+00 : f32
    %145 = vector.broadcast %cst_42 : f32 to vector<16x256xf32>
    %146 = arith.maximumf %144, %145 : vector<16x256xf32>
    %c0_43 = arith.constant 0 : index
    %c0_44 = arith.constant 0 : index
    %c0_45 = arith.constant 0 : index
    %147 = vector.load %arg7[%c0_43, %c0_44, %c0_45] : memref<2x256x128xf32, #tpu.memory_space<vmem>>, vector<1x256x128xf32>
    %148 = vector.shape_cast %147 : vector<1x256x128xf32> to vector<256x128xf32>
    %cst_46 = arith.constant dense<0.000000e+00> : vector<16x128xf32>
    %149 = tpu.matmul %146, %148, %cst_46 {dimension_numbers = #tpu.dot_dimension_numbers<[1], [0], [0], [1], [0, 0, 1, 1], [], []>} : vector<16x256xf32>, vector<256x128xf32>, vector<16x128xf32> -> vector<16x128xf32>
    %150 = arith.addf %114, %149 : vector<16x128xf32>
    %151 = vector.shape_cast %11 : vector<128xf32> to vector<1x128xf32>
    %152 = vector.broadcast %151 : vector<1x128xf32> to vector<16x128xf32>
    %153 = arith.addf %150, %152 : vector<16x128xf32>
    %c1 = arith.constant 1 : index
    %c0_47 = arith.constant 0 : index
    %154 = vector.load %arg8[%c1, %c0_47] : memref<2x1408xf32, #tpu.memory_space<vmem>>, vector<1x1408xf32>
    %155 = vector.shape_cast %154 : vector<1x1408xf32> to vector<1408xf32>
    %156 = vector.extract_strided_slice %155 {offsets = [0], sizes = [128], strides = [1]} : vector<1408xf32> to vector<128xf32>
    %157 = vector.extract_strided_slice %155 {offsets = [128], sizes = [128], strides = [1]} : vector<1408xf32> to vector<128xf32>
    %158 = vector.extract_strided_slice %155 {offsets = [256], sizes = [384], strides = [1]} : vector<1408xf32> to vector<384xf32>
    %159 = vector.extract_strided_slice %155 {offsets = [640], sizes = [128], strides = [1]} : vector<1408xf32> to vector<128xf32>
    %160 = vector.extract_strided_slice %155 {offsets = [768], sizes = [128], strides = [1]} : vector<1408xf32> to vector<128xf32>
    %161 = vector.extract_strided_slice %155 {offsets = [896], sizes = [128], strides = [1]} : vector<1408xf32> to vector<128xf32>
    %162 = vector.extract_strided_slice %155 {offsets = [1024], sizes = [256], strides = [1]} : vector<1408xf32> to vector<256xf32>
    %163 = vector.extract_strided_slice %155 {offsets = [1280], sizes = [128], strides = [1]} : vector<1408xf32> to vector<128xf32>
    %cst_48 = arith.constant dense<0.000000e+00> : vector<16xf32>
    %164 = vector.multi_reduction <add>, %153, %cst_48 [1] : vector<16x128xf32> to vector<16xf32>
    %165 = vector.shape_cast %164 : vector<16xf32> to vector<16x1xf32>
    %cst_49 = arith.constant 1.280000e+02 : f32
    %166 = vector.broadcast %cst_49 : f32 to vector<16x1xf32>
    %167 = arith.divf %165, %166 : vector<16x1xf32>
    %168 = vector.broadcast %167 : vector<16x1xf32> to vector<16x128xf32>
    %169 = arith.subf %153, %168 : vector<16x128xf32>
    %170 = arith.mulf %169, %169 : vector<16x128xf32>
    %cst_50 = arith.constant dense<0.000000e+00> : vector<16xf32>
    %171 = vector.multi_reduction <add>, %170, %cst_50 [1] : vector<16x128xf32> to vector<16xf32>
    %172 = vector.shape_cast %171 : vector<16xf32> to vector<16x1xf32>
    %cst_51 = arith.constant 1.280000e+02 : f32
    %173 = vector.broadcast %cst_51 : f32 to vector<16x1xf32>
    %174 = arith.divf %172, %173 : vector<16x1xf32>
    %175 = vector.broadcast %167 : vector<16x1xf32> to vector<16x128xf32>
    %176 = arith.subf %153, %175 : vector<16x128xf32>
    %cst_52 = arith.constant 9.99999974E-6 : f32
    %177 = vector.broadcast %cst_52 : f32 to vector<16x1xf32>
    %178 = arith.addf %174, %177 : vector<16x1xf32>
    %179 = math.rsqrt %178 : vector<16x1xf32>
    %180 = vector.broadcast %179 : vector<16x1xf32> to vector<16x128xf32>
    %181 = arith.mulf %176, %180 : vector<16x128xf32>
    %182 = vector.shape_cast %156 : vector<128xf32> to vector<1x128xf32>
    %183 = vector.broadcast %182 : vector<1x128xf32> to vector<16x128xf32>
    %184 = arith.mulf %181, %183 : vector<16x128xf32>
    %185 = vector.shape_cast %157 : vector<128xf32> to vector<1x128xf32>
    %186 = vector.broadcast %185 : vector<1x128xf32> to vector<16x128xf32>
    %187 = arith.addf %184, %186 : vector<16x128xf32>
    %c1_53 = arith.constant 1 : index
    %c0_54 = arith.constant 0 : index
    %c0_55 = arith.constant 0 : index
    %188 = vector.load %arg4[%c1_53, %c0_54, %c0_55] : memref<2x128x384xf32, #tpu.memory_space<vmem>>, vector<1x128x384xf32>
    %189 = vector.shape_cast %188 : vector<1x128x384xf32> to vector<128x384xf32>
    %cst_56 = arith.constant dense<0.000000e+00> : vector<16x384xf32>
    %190 = tpu.matmul %187, %189, %cst_56 {dimension_numbers = #tpu.dot_dimension_numbers<[1], [0], [0], [1], [0, 0, 1, 1], [], []>} : vector<16x128xf32>, vector<128x384xf32>, vector<16x384xf32> -> vector<16x384xf32>
    %191 = vector.shape_cast %158 : vector<384xf32> to vector<1x384xf32>
    %192 = vector.broadcast %191 : vector<1x384xf32> to vector<16x384xf32>
    %193 = arith.addf %190, %192 : vector<16x384xf32>
    %194 = vector.extract_strided_slice %193 {offsets = [0, 0], sizes = [16, 128], strides = [1, 1]} : vector<16x384xf32> to vector<16x128xf32>
    %cst_57 = arith.constant 0.176776692 : f32
    %195 = vector.broadcast %cst_57 : f32 to vector<16x128xf32>
    %196 = arith.mulf %194, %195 : vector<16x128xf32>
    %197 = vector.extract_strided_slice %193 {offsets = [0, 128], sizes = [16, 128], strides = [1, 1]} : vector<16x384xf32> to vector<16x128xf32>
    %198 = vector.extract_strided_slice %193 {offsets = [0, 256], sizes = [16, 128], strides = [1, 1]} : vector<16x384xf32> to vector<16x128xf32>
    %199 = vector.extract_strided_slice %196 {offsets = [0, 0], sizes = [16, 32], strides = [1, 1]} : vector<16x128xf32> to vector<16x32xf32>
    %200 = vector.extract_strided_slice %197 {offsets = [0, 0], sizes = [16, 32], strides = [1, 1]} : vector<16x128xf32> to vector<16x32xf32>
    %201 = vector.extract_strided_slice %198 {offsets = [0, 0], sizes = [16, 32], strides = [1, 1]} : vector<16x128xf32> to vector<16x32xf32>
    "tpu.trace_start"() <{level = 10 : i32, message = "qd,kd->qk"}> : () -> ()
    %cst_58 = arith.constant dense<0.000000e+00> : vector<16x16xf32>
    %202 = tpu.matmul %199, %200, %cst_58 {dimension_numbers = #tpu.dot_dimension_numbers<[1], [1], [0], [0], [0, 0, 1, 0], [], []>} : vector<16x32xf32>, vector<16x32xf32>, vector<16x16xf32> -> vector<16x16xf32>
    "tpu.trace_stop"() : () -> ()
    %cst_59 = arith.constant dense<0xFF800000> : vector<16xf32>
    %203 = vector.multi_reduction <maximumf>, %202, %cst_59 [1] : vector<16x16xf32> to vector<16xf32>
    %204 = vector.shape_cast %203 : vector<16xf32> to vector<16x1xf32>
    %205 = vector.broadcast %204 : vector<16x1xf32> to vector<16x16xf32>
    %206 = arith.subf %202, %205 : vector<16x16xf32>
    %207 = math.exp %206 : vector<16x16xf32>
    %cst_60 = arith.constant dense<0.000000e+00> : vector<16xf32>
    %208 = vector.multi_reduction <add>, %207, %cst_60 [1] : vector<16x16xf32> to vector<16xf32>
    %209 = vector.shape_cast %208 : vector<16xf32> to vector<16x1xf32>
    %210 = tpu.reciprocal %209 {approx = true} : vector<16x1xf32> -> vector<16x1xf32>
    %211 = vector.broadcast %210 : vector<16x1xf32> to vector<16x16xf32>
    %212 = arith.mulf %207, %211 : vector<16x16xf32>
    %cst_61 = arith.constant dense<0.000000e+00> : vector<16x32xf32>
    %213 = tpu.matmul %212, %201, %cst_61 {dimension_numbers = #tpu.dot_dimension_numbers<[1], [0], [0], [1], [0, 0, 1, 1], [], []>} : vector<16x16xf32>, vector<16x32xf32>, vector<16x32xf32> -> vector<16x32xf32>
    %214 = vector.extract_strided_slice %196 {offsets = [0, 32], sizes = [16, 32], strides = [1, 1]} : vector<16x128xf32> to vector<16x32xf32>
    %215 = vector.extract_strided_slice %197 {offsets = [0, 32], sizes = [16, 32], strides = [1, 1]} : vector<16x128xf32> to vector<16x32xf32>
    %216 = vector.extract_strided_slice %198 {offsets = [0, 32], sizes = [16, 32], strides = [1, 1]} : vector<16x128xf32> to vector<16x32xf32>
    "tpu.trace_start"() <{level = 10 : i32, message = "qd,kd->qk"}> : () -> ()
    %cst_62 = arith.constant dense<0.000000e+00> : vector<16x16xf32>
    %217 = tpu.matmul %214, %215, %cst_62 {dimension_numbers = #tpu.dot_dimension_numbers<[1], [1], [0], [0], [0, 0, 1, 0], [], []>} : vector<16x32xf32>, vector<16x32xf32>, vector<16x16xf32> -> vector<16x16xf32>
    "tpu.trace_stop"() : () -> ()
    %cst_63 = arith.constant dense<0xFF800000> : vector<16xf32>
    %218 = vector.multi_reduction <maximumf>, %217, %cst_63 [1] : vector<16x16xf32> to vector<16xf32>
    %219 = vector.shape_cast %218 : vector<16xf32> to vector<16x1xf32>
    %220 = vector.broadcast %219 : vector<16x1xf32> to vector<16x16xf32>
    %221 = arith.subf %217, %220 : vector<16x16xf32>
    %222 = math.exp %221 : vector<16x16xf32>
    %cst_64 = arith.constant dense<0.000000e+00> : vector<16xf32>
    %223 = vector.multi_reduction <add>, %222, %cst_64 [1] : vector<16x16xf32> to vector<16xf32>
    %224 = vector.shape_cast %223 : vector<16xf32> to vector<16x1xf32>
    %225 = tpu.reciprocal %224 {approx = true} : vector<16x1xf32> -> vector<16x1xf32>
    %226 = vector.broadcast %225 : vector<16x1xf32> to vector<16x16xf32>
    %227 = arith.mulf %222, %226 : vector<16x16xf32>
    %cst_65 = arith.constant dense<0.000000e+00> : vector<16x32xf32>
    %228 = tpu.matmul %227, %216, %cst_65 {dimension_numbers = #tpu.dot_dimension_numbers<[1], [0], [0], [1], [0, 0, 1, 1], [], []>} : vector<16x16xf32>, vector<16x32xf32>, vector<16x32xf32> -> vector<16x32xf32>
    %229 = vector.extract_strided_slice %196 {offsets = [0, 64], sizes = [16, 32], strides = [1, 1]} : vector<16x128xf32> to vector<16x32xf32>
    %230 = vector.extract_strided_slice %197 {offsets = [0, 64], sizes = [16, 32], strides = [1, 1]} : vector<16x128xf32> to vector<16x32xf32>
    %231 = vector.extract_strided_slice %198 {offsets = [0, 64], sizes = [16, 32], strides = [1, 1]} : vector<16x128xf32> to vector<16x32xf32>
    "tpu.trace_start"() <{level = 10 : i32, message = "qd,kd->qk"}> : () -> ()
    %cst_66 = arith.constant dense<0.000000e+00> : vector<16x16xf32>
    %232 = tpu.matmul %229, %230, %cst_66 {dimension_numbers = #tpu.dot_dimension_numbers<[1], [1], [0], [0], [0, 0, 1, 0], [], []>} : vector<16x32xf32>, vector<16x32xf32>, vector<16x16xf32> -> vector<16x16xf32>
    "tpu.trace_stop"() : () -> ()
    %cst_67 = arith.constant dense<0xFF800000> : vector<16xf32>
    %233 = vector.multi_reduction <maximumf>, %232, %cst_67 [1] : vector<16x16xf32> to vector<16xf32>
    %234 = vector.shape_cast %233 : vector<16xf32> to vector<16x1xf32>
    %235 = vector.broadcast %234 : vector<16x1xf32> to vector<16x16xf32>
    %236 = arith.subf %232, %235 : vector<16x16xf32>
    %237 = math.exp %236 : vector<16x16xf32>
    %cst_68 = arith.constant dense<0.000000e+00> : vector<16xf32>
    %238 = vector.multi_reduction <add>, %237, %cst_68 [1] : vector<16x16xf32> to vector<16xf32>
    %239 = vector.shape_cast %238 : vector<16xf32> to vector<16x1xf32>
    %240 = tpu.reciprocal %239 {approx = true} : vector<16x1xf32> -> vector<16x1xf32>
    %241 = vector.broadcast %240 : vector<16x1xf32> to vector<16x16xf32>
    %242 = arith.mulf %237, %241 : vector<16x16xf32>
    %cst_69 = arith.constant dense<0.000000e+00> : vector<16x32xf32>
    %243 = tpu.matmul %242, %231, %cst_69 {dimension_numbers = #tpu.dot_dimension_numbers<[1], [0], [0], [1], [0, 0, 1, 1], [], []>} : vector<16x16xf32>, vector<16x32xf32>, vector<16x32xf32> -> vector<16x32xf32>
    %244 = vector.extract_strided_slice %196 {offsets = [0, 96], sizes = [16, 32], strides = [1, 1]} : vector<16x128xf32> to vector<16x32xf32>
    %245 = vector.extract_strided_slice %197 {offsets = [0, 96], sizes = [16, 32], strides = [1, 1]} : vector<16x128xf32> to vector<16x32xf32>
    %246 = vector.extract_strided_slice %198 {offsets = [0, 96], sizes = [16, 32], strides = [1, 1]} : vector<16x128xf32> to vector<16x32xf32>
    "tpu.trace_start"() <{level = 10 : i32, message = "qd,kd->qk"}> : () -> ()
    %cst_70 = arith.constant dense<0.000000e+00> : vector<16x16xf32>
    %247 = tpu.matmul %244, %245, %cst_70 {dimension_numbers = #tpu.dot_dimension_numbers<[1], [1], [0], [0], [0, 0, 1, 0], [], []>} : vector<16x32xf32>, vector<16x32xf32>, vector<16x16xf32> -> vector<16x16xf32>
    "tpu.trace_stop"() : () -> ()
    %cst_71 = arith.constant dense<0xFF800000> : vector<16xf32>
    %248 = vector.multi_reduction <maximumf>, %247, %cst_71 [1] : vector<16x16xf32> to vector<16xf32>
    %249 = vector.shape_cast %248 : vector<16xf32> to vector<16x1xf32>
    %250 = vector.broadcast %249 : vector<16x1xf32> to vector<16x16xf32>
    %251 = arith.subf %247, %250 : vector<16x16xf32>
    %252 = math.exp %251 : vector<16x16xf32>
    %cst_72 = arith.constant dense<0.000000e+00> : vector<16xf32>
    %253 = vector.multi_reduction <add>, %252, %cst_72 [1] : vector<16x16xf32> to vector<16xf32>
    %254 = vector.shape_cast %253 : vector<16xf32> to vector<16x1xf32>
    %255 = tpu.reciprocal %254 {approx = true} : vector<16x1xf32> -> vector<16x1xf32>
    %256 = vector.broadcast %255 : vector<16x1xf32> to vector<16x16xf32>
    %257 = arith.mulf %252, %256 : vector<16x16xf32>
    %cst_73 = arith.constant dense<0.000000e+00> : vector<16x32xf32>
    %258 = tpu.matmul %257, %246, %cst_73 {dimension_numbers = #tpu.dot_dimension_numbers<[1], [0], [0], [1], [0, 0, 1, 1], [], []>} : vector<16x16xf32>, vector<16x32xf32>, vector<16x32xf32> -> vector<16x32xf32>
    %259 = tpu.concatenate %213, %228, %243, %258 in 1 : vector<16x32xf32>, vector<16x32xf32>, vector<16x32xf32>, vector<16x32xf32> -> vector<16x128xf32>
    %c1_74 = arith.constant 1 : index
    %c0_75 = arith.constant 0 : index
    %c0_76 = arith.constant 0 : index
    %260 = vector.load %arg5[%c1_74, %c0_75, %c0_76] : memref<2x128x128xf32, #tpu.memory_space<vmem>>, vector<1x128x128xf32>
    %261 = vector.shape_cast %260 : vector<1x128x128xf32> to vector<128x128xf32>
    %cst_77 = arith.constant dense<0.000000e+00> : vector<16x128xf32>
    %262 = tpu.matmul %259, %261, %cst_77 {dimension_numbers = #tpu.dot_dimension_numbers<[1], [0], [0], [1], [0, 0, 1, 1], [], []>} : vector<16x128xf32>, vector<128x128xf32>, vector<16x128xf32> -> vector<16x128xf32>
    %263 = arith.addf %153, %262 : vector<16x128xf32>
    %264 = vector.shape_cast %159 : vector<128xf32> to vector<1x128xf32>
    %265 = vector.broadcast %264 : vector<1x128xf32> to vector<16x128xf32>
    %266 = arith.addf %263, %265 : vector<16x128xf32>
    %cst_78 = arith.constant dense<0.000000e+00> : vector<16xf32>
    %267 = vector.multi_reduction <add>, %266, %cst_78 [1] : vector<16x128xf32> to vector<16xf32>
    %268 = vector.shape_cast %267 : vector<16xf32> to vector<16x1xf32>
    %cst_79 = arith.constant 1.280000e+02 : f32
    %269 = vector.broadcast %cst_79 : f32 to vector<16x1xf32>
    %270 = arith.divf %268, %269 : vector<16x1xf32>
    %271 = vector.broadcast %270 : vector<16x1xf32> to vector<16x128xf32>
    %272 = arith.subf %266, %271 : vector<16x128xf32>
    %273 = arith.mulf %272, %272 : vector<16x128xf32>
    %cst_80 = arith.constant dense<0.000000e+00> : vector<16xf32>
    %274 = vector.multi_reduction <add>, %273, %cst_80 [1] : vector<16x128xf32> to vector<16xf32>
    %275 = vector.shape_cast %274 : vector<16xf32> to vector<16x1xf32>
    %cst_81 = arith.constant 1.280000e+02 : f32
    %276 = vector.broadcast %cst_81 : f32 to vector<16x1xf32>
    %277 = arith.divf %275, %276 : vector<16x1xf32>
    %278 = vector.broadcast %270 : vector<16x1xf32> to vector<16x128xf32>
    %279 = arith.subf %266, %278 : vector<16x128xf32>
    %cst_82 = arith.constant 9.99999974E-6 : f32
    %280 = vector.broadcast %cst_82 : f32 to vector<16x1xf32>
    %281 = arith.addf %277, %280 : vector<16x1xf32>
    %282 = math.rsqrt %281 : vector<16x1xf32>
    %283 = vector.broadcast %282 : vector<16x1xf32> to vector<16x128xf32>
    %284 = arith.mulf %279, %283 : vector<16x128xf32>
    %285 = vector.shape_cast %160 : vector<128xf32> to vector<1x128xf32>
    %286 = vector.broadcast %285 : vector<1x128xf32> to vector<16x128xf32>
    %287 = arith.mulf %284, %286 : vector<16x128xf32>
    %288 = vector.shape_cast %161 : vector<128xf32> to vector<1x128xf32>
    %289 = vector.broadcast %288 : vector<1x128xf32> to vector<16x128xf32>
    %290 = arith.addf %287, %289 : vector<16x128xf32>
    %c1_83 = arith.constant 1 : index
    %c0_84 = arith.constant 0 : index
    %c0_85 = arith.constant 0 : index
    %291 = vector.load %arg6[%c1_83, %c0_84, %c0_85] : memref<2x128x256xf32, #tpu.memory_space<vmem>>, vector<1x128x256xf32>
    %292 = vector.shape_cast %291 : vector<1x128x256xf32> to vector<128x256xf32>
    %cst_86 = arith.constant dense<0.000000e+00> : vector<16x256xf32>
    %293 = tpu.matmul %290, %292, %cst_86 {dimension_numbers = #tpu.dot_dimension_numbers<[1], [0], [0], [1], [0, 0, 1, 1], [], []>} : vector<16x128xf32>, vector<128x256xf32>, vector<16x256xf32> -> vector<16x256xf32>
    %294 = vector.shape_cast %162 : vector<256xf32> to vector<1x256xf32>
    %295 = vector.broadcast %294 : vector<1x256xf32> to vector<16x256xf32>
    %296 = arith.addf %293, %295 : vector<16x256xf32>
    %cst_87 = arith.constant 0.000000e+00 : f32
    %297 = vector.broadcast %cst_87 : f32 to vector<16x256xf32>
    %298 = arith.maximumf %296, %297 : vector<16x256xf32>
    %c1_88 = arith.constant 1 : index
    %c0_89 = arith.constant 0 : index
    %c0_90 = arith.constant 0 : index
    %299 = vector.load %arg7[%c1_88, %c0_89, %c0_90] : memref<2x256x128xf32, #tpu.memory_space<vmem>>, vector<1x256x128xf32>
    %300 = vector.shape_cast %299 : vector<1x256x128xf32> to vector<256x128xf32>
    %cst_91 = arith.constant dense<0.000000e+00> : vector<16x128xf32>
    %301 = tpu.matmul %298, %300, %cst_91 {dimension_numbers = #tpu.dot_dimension_numbers<[1], [0], [0], [1], [0, 0, 1, 1], [], []>} : vector<16x256xf32>, vector<256x128xf32>, vector<16x128xf32> -> vector<16x128xf32>
    %302 = arith.addf %266, %301 : vector<16x128xf32>
    %303 = vector.shape_cast %163 : vector<128xf32> to vector<1x128xf32>
    %304 = vector.broadcast %303 : vector<1x128xf32> to vector<16x128xf32>
    %305 = arith.addf %302, %304 : vector<16x128xf32>
    %c0_92 = arith.constant 0 : index
    %c0_93 = arith.constant 0 : index
    %c0_94 = arith.constant 0 : index
    %306 = vector.load %arg3[%c0_92, %c0_93, %c0_94] : memref<1x8x8xf32, #tpu.memory_space<vmem>>, vector<1x8x8xf32>
    %307 = vector.shape_cast %306 : vector<1x8x8xf32> to vector<8x8xf32>
    %c0_95 = arith.constant 0 : index
    %c0_96 = arith.constant 0 : index
    %c0_97 = arith.constant 0 : index
    %308 = vector.load %arg2[%c0_95, %c0_96, %c0_97] : memref<1x8x128xf32, #tpu.memory_space<vmem>>, vector<1x8x128xf32>
    %309 = vector.shape_cast %308 : vector<1x8x128xf32> to vector<8x128xf32>
    %c0_98 = arith.constant 0 : index
    %c0_99 = arith.constant 0 : index
    %310 = vector.load %arg16[%c0_98, %c0_99] : memref<2x2176xf32, #tpu.memory_space<vmem>>, vector<1x2176xf32>
    %311 = vector.shape_cast %310 : vector<1x2176xf32> to vector<2176xf32>
    %312 = vector.extract_strided_slice %311 {offsets = [0], sizes = [128], strides = [1]} : vector<2176xf32> to vector<128xf32>
    %313 = vector.extract_strided_slice %311 {offsets = [128], sizes = [128], strides = [1]} : vector<2176xf32> to vector<128xf32>
    %314 = vector.extract_strided_slice %311 {offsets = [256], sizes = [384], strides = [1]} : vector<2176xf32> to vector<384xf32>
    %315 = vector.extract_strided_slice %311 {offsets = [640], sizes = [128], strides = [1]} : vector<2176xf32> to vector<128xf32>
    %316 = vector.extract_strided_slice %311 {offsets = [768], sizes = [128], strides = [1]} : vector<2176xf32> to vector<128xf32>
    %317 = vector.extract_strided_slice %311 {offsets = [896], sizes = [128], strides = [1]} : vector<2176xf32> to vector<128xf32>
    %318 = vector.extract_strided_slice %311 {offsets = [1024], sizes = [128], strides = [1]} : vector<2176xf32> to vector<128xf32>
    %319 = vector.extract_strided_slice %311 {offsets = [1152], sizes = [256], strides = [1]} : vector<2176xf32> to vector<256xf32>
    %320 = vector.extract_strided_slice %311 {offsets = [1408], sizes = [128], strides = [1]} : vector<2176xf32> to vector<128xf32>
    %321 = vector.extract_strided_slice %311 {offsets = [1536], sizes = [128], strides = [1]} : vector<2176xf32> to vector<128xf32>
    %322 = vector.extract_strided_slice %311 {offsets = [1664], sizes = [128], strides = [1]} : vector<2176xf32> to vector<128xf32>
    %323 = vector.extract_strided_slice %311 {offsets = [1792], sizes = [256], strides = [1]} : vector<2176xf32> to vector<256xf32>
    %324 = vector.extract_strided_slice %311 {offsets = [2048], sizes = [128], strides = [1]} : vector<2176xf32> to vector<128xf32>
    %cst_100 = arith.constant dense<0.000000e+00> : vector<8xf32>
    %325 = vector.multi_reduction <add>, %309, %cst_100 [1] : vector<8x128xf32> to vector<8xf32>
    %326 = vector.shape_cast %325 : vector<8xf32> to vector<8x1xf32>
    %cst_101 = arith.constant 1.280000e+02 : f32
    %327 = vector.broadcast %cst_101 : f32 to vector<8x1xf32>
    %328 = arith.divf %326, %327 : vector<8x1xf32>
    %329 = vector.broadcast %328 : vector<8x1xf32> to vector<8x128xf32>
    %330 = arith.subf %309, %329 : vector<8x128xf32>
    %331 = arith.mulf %330, %330 : vector<8x128xf32>
    %cst_102 = arith.constant dense<0.000000e+00> : vector<8xf32>
    %332 = vector.multi_reduction <add>, %331, %cst_102 [1] : vector<8x128xf32> to vector<8xf32>
    %333 = vector.shape_cast %332 : vector<8xf32> to vector<8x1xf32>
    %cst_103 = arith.constant 1.280000e+02 : f32
    %334 = vector.broadcast %cst_103 : f32 to vector<8x1xf32>
    %335 = arith.divf %333, %334 : vector<8x1xf32>
    %336 = vector.broadcast %328 : vector<8x1xf32> to vector<8x128xf32>
    %337 = arith.subf %309, %336 : vector<8x128xf32>
    %cst_104 = arith.constant 9.99999974E-6 : f32
    %338 = vector.broadcast %cst_104 : f32 to vector<8x1xf32>
    %339 = arith.addf %335, %338 : vector<8x1xf32>
    %340 = math.rsqrt %339 : vector<8x1xf32>
    %341 = vector.broadcast %340 : vector<8x1xf32> to vector<8x128xf32>
    %342 = arith.mulf %337, %341 : vector<8x128xf32>
    %343 = vector.shape_cast %312 : vector<128xf32> to vector<1x128xf32>
    %344 = vector.broadcast %343 : vector<1x128xf32> to vector<8x128xf32>
    %345 = arith.mulf %342, %344 : vector<8x128xf32>
    %346 = vector.shape_cast %313 : vector<128xf32> to vector<1x128xf32>
    %347 = vector.broadcast %346 : vector<1x128xf32> to vector<8x128xf32>
    %348 = arith.addf %345, %347 : vector<8x128xf32>
    %c0_105 = arith.constant 0 : index
    %c0_106 = arith.constant 0 : index
    %c0_107 = arith.constant 0 : index
    %349 = vector.load %arg9[%c0_105, %c0_106, %c0_107] : memref<2x128x384xf32, #tpu.memory_space<vmem>>, vector<1x128x384xf32>
    %350 = vector.shape_cast %349 : vector<1x128x384xf32> to vector<128x384xf32>
    %cst_108 = arith.constant dense<0.000000e+00> : vector<8x384xf32>
    %351 = tpu.matmul %348, %350, %cst_108 {dimension_numbers = #tpu.dot_dimension_numbers<[1], [0], [0], [1], [0, 0, 1, 1], [], []>} : vector<8x128xf32>, vector<128x384xf32>, vector<8x384xf32> -> vector<8x384xf32>
    %352 = vector.shape_cast %314 : vector<384xf32> to vector<1x384xf32>
    %353 = vector.broadcast %352 : vector<1x384xf32> to vector<8x384xf32>
    %354 = arith.addf %351, %353 : vector<8x384xf32>
    %355 = vector.extract_strided_slice %354 {offsets = [0, 0], sizes = [8, 128], strides = [1, 1]} : vector<8x384xf32> to vector<8x128xf32>
    %cst_109 = arith.constant 0.176776692 : f32
    %356 = vector.broadcast %cst_109 : f32 to vector<8x128xf32>
    %357 = arith.mulf %355, %356 : vector<8x128xf32>
    %358 = vector.extract_strided_slice %354 {offsets = [0, 128], sizes = [8, 128], strides = [1, 1]} : vector<8x384xf32> to vector<8x128xf32>
    %359 = vector.extract_strided_slice %354 {offsets = [0, 256], sizes = [8, 128], strides = [1, 1]} : vector<8x384xf32> to vector<8x128xf32>
    %360 = vector.extract_strided_slice %357 {offsets = [0, 0], sizes = [8, 32], strides = [1, 1]} : vector<8x128xf32> to vector<8x32xf32>
    %361 = vector.extract_strided_slice %358 {offsets = [0, 0], sizes = [8, 32], strides = [1, 1]} : vector<8x128xf32> to vector<8x32xf32>
    %362 = vector.extract_strided_slice %359 {offsets = [0, 0], sizes = [8, 32], strides = [1, 1]} : vector<8x128xf32> to vector<8x32xf32>
    "tpu.trace_start"() <{level = 10 : i32, message = "qd,kd->qk"}> : () -> ()
    %cst_110 = arith.constant dense<0.000000e+00> : vector<8x8xf32>
    %363 = tpu.matmul %360, %361, %cst_110 {dimension_numbers = #tpu.dot_dimension_numbers<[1], [1], [0], [0], [0, 0, 1, 0], [], []>} : vector<8x32xf32>, vector<8x32xf32>, vector<8x8xf32> -> vector<8x8xf32>
    "tpu.trace_stop"() : () -> ()
    %364 = arith.addf %363, %307 : vector<8x8xf32>
    %cst_111 = arith.constant dense<0xFF800000> : vector<8xf32>
    %365 = vector.multi_reduction <maximumf>, %364, %cst_111 [1] : vector<8x8xf32> to vector<8xf32>
    %366 = vector.shape_cast %365 : vector<8xf32> to vector<8x1xf32>
    %367 = vector.broadcast %366 : vector<8x1xf32> to vector<8x8xf32>
    %368 = arith.subf %364, %367 : vector<8x8xf32>
    %369 = math.exp %368 : vector<8x8xf32>
    %cst_112 = arith.constant dense<0.000000e+00> : vector<8xf32>
    %370 = vector.multi_reduction <add>, %369, %cst_112 [1] : vector<8x8xf32> to vector<8xf32>
    %371 = vector.shape_cast %370 : vector<8xf32> to vector<8x1xf32>
    %372 = tpu.reciprocal %371 {approx = true} : vector<8x1xf32> -> vector<8x1xf32>
    %373 = vector.broadcast %372 : vector<8x1xf32> to vector<8x8xf32>
    %374 = arith.mulf %369, %373 : vector<8x8xf32>
    %cst_113 = arith.constant dense<0.000000e+00> : vector<8x32xf32>
    %375 = tpu.matmul %374, %362, %cst_113 {dimension_numbers = #tpu.dot_dimension_numbers<[1], [0], [0], [1], [0, 0, 1, 1], [], []>} : vector<8x8xf32>, vector<8x32xf32>, vector<8x32xf32> -> vector<8x32xf32>
    %376 = vector.extract_strided_slice %357 {offsets = [0, 32], sizes = [8, 32], strides = [1, 1]} : vector<8x128xf32> to vector<8x32xf32>
    %377 = vector.extract_strided_slice %358 {offsets = [0, 32], sizes = [8, 32], strides = [1, 1]} : vector<8x128xf32> to vector<8x32xf32>
    %378 = vector.extract_strided_slice %359 {offsets = [0, 32], sizes = [8, 32], strides = [1, 1]} : vector<8x128xf32> to vector<8x32xf32>
    "tpu.trace_start"() <{level = 10 : i32, message = "qd,kd->qk"}> : () -> ()
    %cst_114 = arith.constant dense<0.000000e+00> : vector<8x8xf32>
    %379 = tpu.matmul %376, %377, %cst_114 {dimension_numbers = #tpu.dot_dimension_numbers<[1], [1], [0], [0], [0, 0, 1, 0], [], []>} : vector<8x32xf32>, vector<8x32xf32>, vector<8x8xf32> -> vector<8x8xf32>
    "tpu.trace_stop"() : () -> ()
    %380 = arith.addf %379, %307 : vector<8x8xf32>
    %cst_115 = arith.constant dense<0xFF800000> : vector<8xf32>
    %381 = vector.multi_reduction <maximumf>, %380, %cst_115 [1] : vector<8x8xf32> to vector<8xf32>
    %382 = vector.shape_cast %381 : vector<8xf32> to vector<8x1xf32>
    %383 = vector.broadcast %382 : vector<8x1xf32> to vector<8x8xf32>
    %384 = arith.subf %380, %383 : vector<8x8xf32>
    %385 = math.exp %384 : vector<8x8xf32>
    %cst_116 = arith.constant dense<0.000000e+00> : vector<8xf32>
    %386 = vector.multi_reduction <add>, %385, %cst_116 [1] : vector<8x8xf32> to vector<8xf32>
    %387 = vector.shape_cast %386 : vector<8xf32> to vector<8x1xf32>
    %388 = tpu.reciprocal %387 {approx = true} : vector<8x1xf32> -> vector<8x1xf32>
    %389 = vector.broadcast %388 : vector<8x1xf32> to vector<8x8xf32>
    %390 = arith.mulf %385, %389 : vector<8x8xf32>
    %cst_117 = arith.constant dense<0.000000e+00> : vector<8x32xf32>
    %391 = tpu.matmul %390, %378, %cst_117 {dimension_numbers = #tpu.dot_dimension_numbers<[1], [0], [0], [1], [0, 0, 1, 1], [], []>} : vector<8x8xf32>, vector<8x32xf32>, vector<8x32xf32> -> vector<8x32xf32>
    %392 = vector.extract_strided_slice %357 {offsets = [0, 64], sizes = [8, 32], strides = [1, 1]} : vector<8x128xf32> to vector<8x32xf32>
    %393 = vector.extract_strided_slice %358 {offsets = [0, 64], sizes = [8, 32], strides = [1, 1]} : vector<8x128xf32> to vector<8x32xf32>
    %394 = vector.extract_strided_slice %359 {offsets = [0, 64], sizes = [8, 32], strides = [1, 1]} : vector<8x128xf32> to vector<8x32xf32>
    "tpu.trace_start"() <{level = 10 : i32, message = "qd,kd->qk"}> : () -> ()
    %cst_118 = arith.constant dense<0.000000e+00> : vector<8x8xf32>
    %395 = tpu.matmul %392, %393, %cst_118 {dimension_numbers = #tpu.dot_dimension_numbers<[1], [1], [0], [0], [0, 0, 1, 0], [], []>} : vector<8x32xf32>, vector<8x32xf32>, vector<8x8xf32> -> vector<8x8xf32>
    "tpu.trace_stop"() : () -> ()
    %396 = arith.addf %395, %307 : vector<8x8xf32>
    %cst_119 = arith.constant dense<0xFF800000> : vector<8xf32>
    %397 = vector.multi_reduction <maximumf>, %396, %cst_119 [1] : vector<8x8xf32> to vector<8xf32>
    %398 = vector.shape_cast %397 : vector<8xf32> to vector<8x1xf32>
    %399 = vector.broadcast %398 : vector<8x1xf32> to vector<8x8xf32>
    %400 = arith.subf %396, %399 : vector<8x8xf32>
    %401 = math.exp %400 : vector<8x8xf32>
    %cst_120 = arith.constant dense<0.000000e+00> : vector<8xf32>
    %402 = vector.multi_reduction <add>, %401, %cst_120 [1] : vector<8x8xf32> to vector<8xf32>
    %403 = vector.shape_cast %402 : vector<8xf32> to vector<8x1xf32>
    %404 = tpu.reciprocal %403 {approx = true} : vector<8x1xf32> -> vector<8x1xf32>
    %405 = vector.broadcast %404 : vector<8x1xf32> to vector<8x8xf32>
    %406 = arith.mulf %401, %405 : vector<8x8xf32>
    %cst_121 = arith.constant dense<0.000000e+00> : vector<8x32xf32>
    %407 = tpu.matmul %406, %394, %cst_121 {dimension_numbers = #tpu.dot_dimension_numbers<[1], [0], [0], [1], [0, 0, 1, 1], [], []>} : vector<8x8xf32>, vector<8x32xf32>, vector<8x32xf32> -> vector<8x32xf32>
    %408 = vector.extract_strided_slice %357 {offsets = [0, 96], sizes = [8, 32], strides = [1, 1]} : vector<8x128xf32> to vector<8x32xf32>
    %409 = vector.extract_strided_slice %358 {offsets = [0, 96], sizes = [8, 32], strides = [1, 1]} : vector<8x128xf32> to vector<8x32xf32>
    %410 = vector.extract_strided_slice %359 {offsets = [0, 96], sizes = [8, 32], strides = [1, 1]} : vector<8x128xf32> to vector<8x32xf32>
    "tpu.trace_start"() <{level = 10 : i32, message = "qd,kd->qk"}> : () -> ()
    %cst_122 = arith.constant dense<0.000000e+00> : vector<8x8xf32>
    %411 = tpu.matmul %408, %409, %cst_122 {dimension_numbers = #tpu.dot_dimension_numbers<[1], [1], [0], [0], [0, 0, 1, 0], [], []>} : vector<8x32xf32>, vector<8x32xf32>, vector<8x8xf32> -> vector<8x8xf32>
    "tpu.trace_stop"() : () -> ()
    %412 = arith.addf %411, %307 : vector<8x8xf32>
    %cst_123 = arith.constant dense<0xFF800000> : vector<8xf32>
    %413 = vector.multi_reduction <maximumf>, %412, %cst_123 [1] : vector<8x8xf32> to vector<8xf32>
    %414 = vector.shape_cast %413 : vector<8xf32> to vector<8x1xf32>
    %415 = vector.broadcast %414 : vector<8x1xf32> to vector<8x8xf32>
    %416 = arith.subf %412, %415 : vector<8x8xf32>
    %417 = math.exp %416 : vector<8x8xf32>
    %cst_124 = arith.constant dense<0.000000e+00> : vector<8xf32>
    %418 = vector.multi_reduction <add>, %417, %cst_124 [1] : vector<8x8xf32> to vector<8xf32>
    %419 = vector.shape_cast %418 : vector<8xf32> to vector<8x1xf32>
    %420 = tpu.reciprocal %419 {approx = true} : vector<8x1xf32> -> vector<8x1xf32>
    %421 = vector.broadcast %420 : vector<8x1xf32> to vector<8x8xf32>
    %422 = arith.mulf %417, %421 : vector<8x8xf32>
    %cst_125 = arith.constant dense<0.000000e+00> : vector<8x32xf32>
    %423 = tpu.matmul %422, %410, %cst_125 {dimension_numbers = #tpu.dot_dimension_numbers<[1], [0], [0], [1], [0, 0, 1, 1], [], []>} : vector<8x8xf32>, vector<8x32xf32>, vector<8x32xf32> -> vector<8x32xf32>
    %424 = tpu.concatenate %375, %391, %407, %423 in 1 : vector<8x32xf32>, vector<8x32xf32>, vector<8x32xf32>, vector<8x32xf32> -> vector<8x128xf32>
    %c0_126 = arith.constant 0 : index
    %c0_127 = arith.constant 0 : index
    %c0_128 = arith.constant 0 : index
    %425 = vector.load %arg10[%c0_126, %c0_127, %c0_128] : memref<2x128x128xf32, #tpu.memory_space<vmem>>, vector<1x128x128xf32>
    %426 = vector.shape_cast %425 : vector<1x128x128xf32> to vector<128x128xf32>
    %cst_129 = arith.constant dense<0.000000e+00> : vector<8x128xf32>
    %427 = tpu.matmul %424, %426, %cst_129 {dimension_numbers = #tpu.dot_dimension_numbers<[1], [0], [0], [1], [0, 0, 1, 1], [], []>} : vector<8x128xf32>, vector<128x128xf32>, vector<8x128xf32> -> vector<8x128xf32>
    %428 = arith.addf %309, %427 : vector<8x128xf32>
    %429 = vector.shape_cast %315 : vector<128xf32> to vector<1x128xf32>
    %430 = vector.broadcast %429 : vector<1x128xf32> to vector<8x128xf32>
    %431 = arith.addf %428, %430 : vector<8x128xf32>
    %cst_130 = arith.constant dense<0.000000e+00> : vector<8xf32>
    %432 = vector.multi_reduction <add>, %431, %cst_130 [1] : vector<8x128xf32> to vector<8xf32>
    %433 = vector.shape_cast %432 : vector<8xf32> to vector<8x1xf32>
    %cst_131 = arith.constant 1.280000e+02 : f32
    %434 = vector.broadcast %cst_131 : f32 to vector<8x1xf32>
    %435 = arith.divf %433, %434 : vector<8x1xf32>
    %436 = vector.broadcast %435 : vector<8x1xf32> to vector<8x128xf32>
    %437 = arith.subf %431, %436 : vector<8x128xf32>
    %438 = arith.mulf %437, %437 : vector<8x128xf32>
    %cst_132 = arith.constant dense<0.000000e+00> : vector<8xf32>
    %439 = vector.multi_reduction <add>, %438, %cst_132 [1] : vector<8x128xf32> to vector<8xf32>
    %440 = vector.shape_cast %439 : vector<8xf32> to vector<8x1xf32>
    %cst_133 = arith.constant 1.280000e+02 : f32
    %441 = vector.broadcast %cst_133 : f32 to vector<8x1xf32>
    %442 = arith.divf %440, %441 : vector<8x1xf32>
    %443 = vector.broadcast %435 : vector<8x1xf32> to vector<8x128xf32>
    %444 = arith.subf %431, %443 : vector<8x128xf32>
    %cst_134 = arith.constant 9.99999974E-6 : f32
    %445 = vector.broadcast %cst_134 : f32 to vector<8x1xf32>
    %446 = arith.addf %442, %445 : vector<8x1xf32>
    %447 = math.rsqrt %446 : vector<8x1xf32>
    %448 = vector.broadcast %447 : vector<8x1xf32> to vector<8x128xf32>
    %449 = arith.mulf %444, %448 : vector<8x128xf32>
    %450 = vector.shape_cast %316 : vector<128xf32> to vector<1x128xf32>
    %451 = vector.broadcast %450 : vector<1x128xf32> to vector<8x128xf32>
    %452 = arith.mulf %449, %451 : vector<8x128xf32>
    %453 = vector.shape_cast %317 : vector<128xf32> to vector<1x128xf32>
    %454 = vector.broadcast %453 : vector<1x128xf32> to vector<8x128xf32>
    %455 = arith.addf %452, %454 : vector<8x128xf32>
    %c0_135 = arith.constant 0 : index
    %c0_136 = arith.constant 0 : index
    %c0_137 = arith.constant 0 : index
    %456 = vector.load %arg11[%c0_135, %c0_136, %c0_137] : memref<2x128x128xf32, #tpu.memory_space<vmem>>, vector<1x128x128xf32>
    %457 = vector.shape_cast %456 : vector<1x128x128xf32> to vector<128x128xf32>
    %cst_138 = arith.constant dense<0.000000e+00> : vector<8x128xf32>
    %458 = tpu.matmul %455, %457, %cst_138 {dimension_numbers = #tpu.dot_dimension_numbers<[1], [0], [0], [1], [0, 0, 1, 1], [], []>} : vector<8x128xf32>, vector<128x128xf32>, vector<8x128xf32> -> vector<8x128xf32>
    %459 = vector.shape_cast %318 : vector<128xf32> to vector<1x128xf32>
    %460 = vector.broadcast %459 : vector<1x128xf32> to vector<8x128xf32>
    %461 = arith.addf %458, %460 : vector<8x128xf32>
    %cst_139 = arith.constant 0.176776692 : f32
    %462 = vector.broadcast %cst_139 : f32 to vector<8x128xf32>
    %463 = arith.mulf %461, %462 : vector<8x128xf32>
    %c0_140 = arith.constant 0 : index
    %c0_141 = arith.constant 0 : index
    %c0_142 = arith.constant 0 : index
    %464 = vector.load %arg12[%c0_140, %c0_141, %c0_142] : memref<2x128x256xf32, #tpu.memory_space<vmem>>, vector<1x128x256xf32>
    %465 = vector.shape_cast %464 : vector<1x128x256xf32> to vector<128x256xf32>
    %cst_143 = arith.constant dense<0.000000e+00> : vector<16x256xf32>
    %466 = tpu.matmul %305, %465, %cst_143 {dimension_numbers = #tpu.dot_dimension_numbers<[1], [0], [0], [1], [0, 0, 1, 1], [], []>} : vector<16x128xf32>, vector<128x256xf32>, vector<16x256xf32> -> vector<16x256xf32>
    %467 = vector.shape_cast %319 : vector<256xf32> to vector<1x256xf32>
    %468 = vector.broadcast %467 : vector<1x256xf32> to vector<16x256xf32>
    %469 = arith.addf %466, %468 : vector<16x256xf32>
    %470 = vector.extract_strided_slice %469 {offsets = [0, 0], sizes = [16, 128], strides = [1, 1]} : vector<16x256xf32> to vector<16x128xf32>
    %471 = vector.extract_strided_slice %469 {offsets = [0, 128], sizes = [16, 128], strides = [1, 1]} : vector<16x256xf32> to vector<16x128xf32>
    %472 = vector.extract_strided_slice %463 {offsets = [0, 0], sizes = [8, 32], strides = [1, 1]} : vector<8x128xf32> to vector<8x32xf32>
    %473 = vector.extract_strided_slice %470 {offsets = [0, 0], sizes = [16, 32], strides = [1, 1]} : vector<16x128xf32> to vector<16x32xf32>
    %474 = vector.extract_strided_slice %471 {offsets = [0, 0], sizes = [16, 32], strides = [1, 1]} : vector<16x128xf32> to vector<16x32xf32>
    "tpu.trace_start"() <{level = 10 : i32, message = "qd,kd->qk"}> : () -> ()
    %cst_144 = arith.constant dense<0.000000e+00> : vector<8x16xf32>
    %475 = tpu.matmul %472, %473, %cst_144 {dimension_numbers = #tpu.dot_dimension_numbers<[1], [1], [0], [0], [0, 0, 1, 0], [], []>} : vector<8x32xf32>, vector<16x32xf32>, vector<8x16xf32> -> vector<8x16xf32>
    "tpu.trace_stop"() : () -> ()
    %cst_145 = arith.constant dense<0xFF800000> : vector<8xf32>
    %476 = vector.multi_reduction <maximumf>, %475, %cst_145 [1] : vector<8x16xf32> to vector<8xf32>
    %477 = vector.shape_cast %476 : vector<8xf32> to vector<8x1xf32>
    %478 = vector.broadcast %477 : vector<8x1xf32> to vector<8x16xf32>
    %479 = arith.subf %475, %478 : vector<8x16xf32>
    %480 = math.exp %479 : vector<8x16xf32>
    %cst_146 = arith.constant dense<0.000000e+00> : vector<8xf32>
    %481 = vector.multi_reduction <add>, %480, %cst_146 [1] : vector<8x16xf32> to vector<8xf32>
    %482 = vector.shape_cast %481 : vector<8xf32> to vector<8x1xf32>
    %483 = tpu.reciprocal %482 {approx = true} : vector<8x1xf32> -> vector<8x1xf32>
    %484 = vector.broadcast %483 : vector<8x1xf32> to vector<8x16xf32>
    %485 = arith.mulf %480, %484 : vector<8x16xf32>
    %cst_147 = arith.constant dense<0.000000e+00> : vector<8x32xf32>
    %486 = tpu.matmul %485, %474, %cst_147 {dimension_numbers = #tpu.dot_dimension_numbers<[1], [0], [0], [1], [0, 0, 1, 1], [], []>} : vector<8x16xf32>, vector<16x32xf32>, vector<8x32xf32> -> vector<8x32xf32>
    %487 = vector.extract_strided_slice %463 {offsets = [0, 32], sizes = [8, 32], strides = [1, 1]} : vector<8x128xf32> to vector<8x32xf32>
    %488 = vector.extract_strided_slice %470 {offsets = [0, 32], sizes = [16, 32], strides = [1, 1]} : vector<16x128xf32> to vector<16x32xf32>
    %489 = vector.extract_strided_slice %471 {offsets = [0, 32], sizes = [16, 32], strides = [1, 1]} : vector<16x128xf32> to vector<16x32xf32>
    "tpu.trace_start"() <{level = 10 : i32, message = "qd,kd->qk"}> : () -> ()
    %cst_148 = arith.constant dense<0.000000e+00> : vector<8x16xf32>
    %490 = tpu.matmul %487, %488, %cst_148 {dimension_numbers = #tpu.dot_dimension_numbers<[1], [1], [0], [0], [0, 0, 1, 0], [], []>} : vector<8x32xf32>, vector<16x32xf32>, vector<8x16xf32> -> vector<8x16xf32>
    "tpu.trace_stop"() : () -> ()
    %cst_149 = arith.constant dense<0xFF800000> : vector<8xf32>
    %491 = vector.multi_reduction <maximumf>, %490, %cst_149 [1] : vector<8x16xf32> to vector<8xf32>
    %492 = vector.shape_cast %491 : vector<8xf32> to vector<8x1xf32>
    %493 = vector.broadcast %492 : vector<8x1xf32> to vector<8x16xf32>
    %494 = arith.subf %490, %493 : vector<8x16xf32>
    %495 = math.exp %494 : vector<8x16xf32>
    %cst_150 = arith.constant dense<0.000000e+00> : vector<8xf32>
    %496 = vector.multi_reduction <add>, %495, %cst_150 [1] : vector<8x16xf32> to vector<8xf32>
    %497 = vector.shape_cast %496 : vector<8xf32> to vector<8x1xf32>
    %498 = tpu.reciprocal %497 {approx = true} : vector<8x1xf32> -> vector<8x1xf32>
    %499 = vector.broadcast %498 : vector<8x1xf32> to vector<8x16xf32>
    %500 = arith.mulf %495, %499 : vector<8x16xf32>
    %cst_151 = arith.constant dense<0.000000e+00> : vector<8x32xf32>
    %501 = tpu.matmul %500, %489, %cst_151 {dimension_numbers = #tpu.dot_dimension_numbers<[1], [0], [0], [1], [0, 0, 1, 1], [], []>} : vector<8x16xf32>, vector<16x32xf32>, vector<8x32xf32> -> vector<8x32xf32>
    %502 = vector.extract_strided_slice %463 {offsets = [0, 64], sizes = [8, 32], strides = [1, 1]} : vector<8x128xf32> to vector<8x32xf32>
    %503 = vector.extract_strided_slice %470 {offsets = [0, 64], sizes = [16, 32], strides = [1, 1]} : vector<16x128xf32> to vector<16x32xf32>
    %504 = vector.extract_strided_slice %471 {offsets = [0, 64], sizes = [16, 32], strides = [1, 1]} : vector<16x128xf32> to vector<16x32xf32>
    "tpu.trace_start"() <{level = 10 : i32, message = "qd,kd->qk"}> : () -> ()
    %cst_152 = arith.constant dense<0.000000e+00> : vector<8x16xf32>
    %505 = tpu.matmul %502, %503, %cst_152 {dimension_numbers = #tpu.dot_dimension_numbers<[1], [1], [0], [0], [0, 0, 1, 0], [], []>} : vector<8x32xf32>, vector<16x32xf32>, vector<8x16xf32> -> vector<8x16xf32>
    "tpu.trace_stop"() : () -> ()
    %cst_153 = arith.constant dense<0xFF800000> : vector<8xf32>
    %506 = vector.multi_reduction <maximumf>, %505, %cst_153 [1] : vector<8x16xf32> to vector<8xf32>
    %507 = vector.shape_cast %506 : vector<8xf32> to vector<8x1xf32>
    %508 = vector.broadcast %507 : vector<8x1xf32> to vector<8x16xf32>
    %509 = arith.subf %505, %508 : vector<8x16xf32>
    %510 = math.exp %509 : vector<8x16xf32>
    %cst_154 = arith.constant dense<0.000000e+00> : vector<8xf32>
    %511 = vector.multi_reduction <add>, %510, %cst_154 [1] : vector<8x16xf32> to vector<8xf32>
    %512 = vector.shape_cast %511 : vector<8xf32> to vector<8x1xf32>
    %513 = tpu.reciprocal %512 {approx = true} : vector<8x1xf32> -> vector<8x1xf32>
    %514 = vector.broadcast %513 : vector<8x1xf32> to vector<8x16xf32>
    %515 = arith.mulf %510, %514 : vector<8x16xf32>
    %cst_155 = arith.constant dense<0.000000e+00> : vector<8x32xf32>
    %516 = tpu.matmul %515, %504, %cst_155 {dimension_numbers = #tpu.dot_dimension_numbers<[1], [0], [0], [1], [0, 0, 1, 1], [], []>} : vector<8x16xf32>, vector<16x32xf32>, vector<8x32xf32> -> vector<8x32xf32>
    %517 = vector.extract_strided_slice %463 {offsets = [0, 96], sizes = [8, 32], strides = [1, 1]} : vector<8x128xf32> to vector<8x32xf32>
    %518 = vector.extract_strided_slice %470 {offsets = [0, 96], sizes = [16, 32], strides = [1, 1]} : vector<16x128xf32> to vector<16x32xf32>
    %519 = vector.extract_strided_slice %471 {offsets = [0, 96], sizes = [16, 32], strides = [1, 1]} : vector<16x128xf32> to vector<16x32xf32>
    "tpu.trace_start"() <{level = 10 : i32, message = "qd,kd->qk"}> : () -> ()
    %cst_156 = arith.constant dense<0.000000e+00> : vector<8x16xf32>
    %520 = tpu.matmul %517, %518, %cst_156 {dimension_numbers = #tpu.dot_dimension_numbers<[1], [1], [0], [0], [0, 0, 1, 0], [], []>} : vector<8x32xf32>, vector<16x32xf32>, vector<8x16xf32> -> vector<8x16xf32>
    "tpu.trace_stop"() : () -> ()
    %cst_157 = arith.constant dense<0xFF800000> : vector<8xf32>
    %521 = vector.multi_reduction <maximumf>, %520, %cst_157 [1] : vector<8x16xf32> to vector<8xf32>
    %522 = vector.shape_cast %521 : vector<8xf32> to vector<8x1xf32>
    %523 = vector.broadcast %522 : vector<8x1xf32> to vector<8x16xf32>
    %524 = arith.subf %520, %523 : vector<8x16xf32>
    %525 = math.exp %524 : vector<8x16xf32>
    %cst_158 = arith.constant dense<0.000000e+00> : vector<8xf32>
    %526 = vector.multi_reduction <add>, %525, %cst_158 [1] : vector<8x16xf32> to vector<8xf32>
    %527 = vector.shape_cast %526 : vector<8xf32> to vector<8x1xf32>
    %528 = tpu.reciprocal %527 {approx = true} : vector<8x1xf32> -> vector<8x1xf32>
    %529 = vector.broadcast %528 : vector<8x1xf32> to vector<8x16xf32>
    %530 = arith.mulf %525, %529 : vector<8x16xf32>
    %cst_159 = arith.constant dense<0.000000e+00> : vector<8x32xf32>
    %531 = tpu.matmul %530, %519, %cst_159 {dimension_numbers = #tpu.dot_dimension_numbers<[1], [0], [0], [1], [0, 0, 1, 1], [], []>} : vector<8x16xf32>, vector<16x32xf32>, vector<8x32xf32> -> vector<8x32xf32>
    %532 = tpu.concatenate %486, %501, %516, %531 in 1 : vector<8x32xf32>, vector<8x32xf32>, vector<8x32xf32>, vector<8x32xf32> -> vector<8x128xf32>
    %c0_160 = arith.constant 0 : index
    %c0_161 = arith.constant 0 : index
    %c0_162 = arith.constant 0 : index
    %533 = vector.load %arg13[%c0_160, %c0_161, %c0_162] : memref<2x128x128xf32, #tpu.memory_space<vmem>>, vector<1x128x128xf32>
    %534 = vector.shape_cast %533 : vector<1x128x128xf32> to vector<128x128xf32>
    %cst_163 = arith.constant dense<0.000000e+00> : vector<8x128xf32>
    %535 = tpu.matmul %532, %534, %cst_163 {dimension_numbers = #tpu.dot_dimension_numbers<[1], [0], [0], [1], [0, 0, 1, 1], [], []>} : vector<8x128xf32>, vector<128x128xf32>, vector<8x128xf32> -> vector<8x128xf32>
    %536 = arith.addf %431, %535 : vector<8x128xf32>
    %537 = vector.shape_cast %320 : vector<128xf32> to vector<1x128xf32>
    %538 = vector.broadcast %537 : vector<1x128xf32> to vector<8x128xf32>
    %539 = arith.addf %536, %538 : vector<8x128xf32>
    %cst_164 = arith.constant dense<0.000000e+00> : vector<8xf32>
    %540 = vector.multi_reduction <add>, %539, %cst_164 [1] : vector<8x128xf32> to vector<8xf32>
    %541 = vector.shape_cast %540 : vector<8xf32> to vector<8x1xf32>
    %cst_165 = arith.constant 1.280000e+02 : f32
    %542 = vector.broadcast %cst_165 : f32 to vector<8x1xf32>
    %543 = arith.divf %541, %542 : vector<8x1xf32>
    %544 = vector.broadcast %543 : vector<8x1xf32> to vector<8x128xf32>
    %545 = arith.subf %539, %544 : vector<8x128xf32>
    %546 = arith.mulf %545, %545 : vector<8x128xf32>
    %cst_166 = arith.constant dense<0.000000e+00> : vector<8xf32>
    %547 = vector.multi_reduction <add>, %546, %cst_166 [1] : vector<8x128xf32> to vector<8xf32>
    %548 = vector.shape_cast %547 : vector<8xf32> to vector<8x1xf32>
    %cst_167 = arith.constant 1.280000e+02 : f32
    %549 = vector.broadcast %cst_167 : f32 to vector<8x1xf32>
    %550 = arith.divf %548, %549 : vector<8x1xf32>
    %551 = vector.broadcast %543 : vector<8x1xf32> to vector<8x128xf32>
    %552 = arith.subf %539, %551 : vector<8x128xf32>
    %cst_168 = arith.constant 9.99999974E-6 : f32
    %553 = vector.broadcast %cst_168 : f32 to vector<8x1xf32>
    %554 = arith.addf %550, %553 : vector<8x1xf32>
    %555 = math.rsqrt %554 : vector<8x1xf32>
    %556 = vector.broadcast %555 : vector<8x1xf32> to vector<8x128xf32>
    %557 = arith.mulf %552, %556 : vector<8x128xf32>
    %558 = vector.shape_cast %321 : vector<128xf32> to vector<1x128xf32>
    %559 = vector.broadcast %558 : vector<1x128xf32> to vector<8x128xf32>
    %560 = arith.mulf %557, %559 : vector<8x128xf32>
    %561 = vector.shape_cast %322 : vector<128xf32> to vector<1x128xf32>
    %562 = vector.broadcast %561 : vector<1x128xf32> to vector<8x128xf32>
    %563 = arith.addf %560, %562 : vector<8x128xf32>
    %c0_169 = arith.constant 0 : index
    %c0_170 = arith.constant 0 : index
    %c0_171 = arith.constant 0 : index
    %564 = vector.load %arg14[%c0_169, %c0_170, %c0_171] : memref<2x128x256xf32, #tpu.memory_space<vmem>>, vector<1x128x256xf32>
    %565 = vector.shape_cast %564 : vector<1x128x256xf32> to vector<128x256xf32>
    %cst_172 = arith.constant dense<0.000000e+00> : vector<8x256xf32>
    %566 = tpu.matmul %563, %565, %cst_172 {dimension_numbers = #tpu.dot_dimension_numbers<[1], [0], [0], [1], [0, 0, 1, 1], [], []>} : vector<8x128xf32>, vector<128x256xf32>, vector<8x256xf32> -> vector<8x256xf32>
    %567 = vector.shape_cast %323 : vector<256xf32> to vector<1x256xf32>
    %568 = vector.broadcast %567 : vector<1x256xf32> to vector<8x256xf32>
    %569 = arith.addf %566, %568 : vector<8x256xf32>
    %cst_173 = arith.constant 0.000000e+00 : f32
    %570 = vector.broadcast %cst_173 : f32 to vector<8x256xf32>
    %571 = arith.maximumf %569, %570 : vector<8x256xf32>
    %c0_174 = arith.constant 0 : index
    %c0_175 = arith.constant 0 : index
    %c0_176 = arith.constant 0 : index
    %572 = vector.load %arg15[%c0_174, %c0_175, %c0_176] : memref<2x256x128xf32, #tpu.memory_space<vmem>>, vector<1x256x128xf32>
    %573 = vector.shape_cast %572 : vector<1x256x128xf32> to vector<256x128xf32>
    %cst_177 = arith.constant dense<0.000000e+00> : vector<8x128xf32>
    %574 = tpu.matmul %571, %573, %cst_177 {dimension_numbers = #tpu.dot_dimension_numbers<[1], [0], [0], [1], [0, 0, 1, 1], [], []>} : vector<8x256xf32>, vector<256x128xf32>, vector<8x128xf32> -> vector<8x128xf32>
    %575 = arith.addf %539, %574 : vector<8x128xf32>
    %576 = vector.shape_cast %324 : vector<128xf32> to vector<1x128xf32>
    %577 = vector.broadcast %576 : vector<1x128xf32> to vector<8x128xf32>
    %578 = arith.addf %575, %577 : vector<8x128xf32>
    %c1_178 = arith.constant 1 : index
    %c0_179 = arith.constant 0 : index
    %579 = vector.load %arg16[%c1_178, %c0_179] : memref<2x2176xf32, #tpu.memory_space<vmem>>, vector<1x2176xf32>
    %580 = vector.shape_cast %579 : vector<1x2176xf32> to vector<2176xf32>
    %581 = vector.extract_strided_slice %580 {offsets = [0], sizes = [128], strides = [1]} : vector<2176xf32> to vector<128xf32>
    %582 = vector.extract_strided_slice %580 {offsets = [128], sizes = [128], strides = [1]} : vector<2176xf32> to vector<128xf32>
    %583 = vector.extract_strided_slice %580 {offsets = [256], sizes = [384], strides = [1]} : vector<2176xf32> to vector<384xf32>
    %584 = vector.extract_strided_slice %580 {offsets = [640], sizes = [128], strides = [1]} : vector<2176xf32> to vector<128xf32>
    %585 = vector.extract_strided_slice %580 {offsets = [768], sizes = [128], strides = [1]} : vector<2176xf32> to vector<128xf32>
    %586 = vector.extract_strided_slice %580 {offsets = [896], sizes = [128], strides = [1]} : vector<2176xf32> to vector<128xf32>
    %587 = vector.extract_strided_slice %580 {offsets = [1024], sizes = [128], strides = [1]} : vector<2176xf32> to vector<128xf32>
    %588 = vector.extract_strided_slice %580 {offsets = [1152], sizes = [256], strides = [1]} : vector<2176xf32> to vector<256xf32>
    %589 = vector.extract_strided_slice %580 {offsets = [1408], sizes = [128], strides = [1]} : vector<2176xf32> to vector<128xf32>
    %590 = vector.extract_strided_slice %580 {offsets = [1536], sizes = [128], strides = [1]} : vector<2176xf32> to vector<128xf32>
    %591 = vector.extract_strided_slice %580 {offsets = [1664], sizes = [128], strides = [1]} : vector<2176xf32> to vector<128xf32>
    %592 = vector.extract_strided_slice %580 {offsets = [1792], sizes = [256], strides = [1]} : vector<2176xf32> to vector<256xf32>
    %593 = vector.extract_strided_slice %580 {offsets = [2048], sizes = [128], strides = [1]} : vector<2176xf32> to vector<128xf32>
    %cst_180 = arith.constant dense<0.000000e+00> : vector<8xf32>
    %594 = vector.multi_reduction <add>, %578, %cst_180 [1] : vector<8x128xf32> to vector<8xf32>
    %595 = vector.shape_cast %594 : vector<8xf32> to vector<8x1xf32>
    %cst_181 = arith.constant 1.280000e+02 : f32
    %596 = vector.broadcast %cst_181 : f32 to vector<8x1xf32>
    %597 = arith.divf %595, %596 : vector<8x1xf32>
    %598 = vector.broadcast %597 : vector<8x1xf32> to vector<8x128xf32>
    %599 = arith.subf %578, %598 : vector<8x128xf32>
    %600 = arith.mulf %599, %599 : vector<8x128xf32>
    %cst_182 = arith.constant dense<0.000000e+00> : vector<8xf32>
    %601 = vector.multi_reduction <add>, %600, %cst_182 [1] : vector<8x128xf32> to vector<8xf32>
    %602 = vector.shape_cast %601 : vector<8xf32> to vector<8x1xf32>
    %cst_183 = arith.constant 1.280000e+02 : f32
    %603 = vector.broadcast %cst_183 : f32 to vector<8x1xf32>
    %604 = arith.divf %602, %603 : vector<8x1xf32>
    %605 = vector.broadcast %597 : vector<8x1xf32> to vector<8x128xf32>
    %606 = arith.subf %578, %605 : vector<8x128xf32>
    %cst_184 = arith.constant 9.99999974E-6 : f32
    %607 = vector.broadcast %cst_184 : f32 to vector<8x1xf32>
    %608 = arith.addf %604, %607 : vector<8x1xf32>
    %609 = math.rsqrt %608 : vector<8x1xf32>
    %610 = vector.broadcast %609 : vector<8x1xf32> to vector<8x128xf32>
    %611 = arith.mulf %606, %610 : vector<8x128xf32>
    %612 = vector.shape_cast %581 : vector<128xf32> to vector<1x128xf32>
    %613 = vector.broadcast %612 : vector<1x128xf32> to vector<8x128xf32>
    %614 = arith.mulf %611, %613 : vector<8x128xf32>
    %615 = vector.shape_cast %582 : vector<128xf32> to vector<1x128xf32>
    %616 = vector.broadcast %615 : vector<1x128xf32> to vector<8x128xf32>
    %617 = arith.addf %614, %616 : vector<8x128xf32>
    %c1_185 = arith.constant 1 : index
    %c0_186 = arith.constant 0 : index
    %c0_187 = arith.constant 0 : index
    %618 = vector.load %arg9[%c1_185, %c0_186, %c0_187] : memref<2x128x384xf32, #tpu.memory_space<vmem>>, vector<1x128x384xf32>
    %619 = vector.shape_cast %618 : vector<1x128x384xf32> to vector<128x384xf32>
    %cst_188 = arith.constant dense<0.000000e+00> : vector<8x384xf32>
    %620 = tpu.matmul %617, %619, %cst_188 {dimension_numbers = #tpu.dot_dimension_numbers<[1], [0], [0], [1], [0, 0, 1, 1], [], []>} : vector<8x128xf32>, vector<128x384xf32>, vector<8x384xf32> -> vector<8x384xf32>
    %621 = vector.shape_cast %583 : vector<384xf32> to vector<1x384xf32>
    %622 = vector.broadcast %621 : vector<1x384xf32> to vector<8x384xf32>
    %623 = arith.addf %620, %622 : vector<8x384xf32>
    %624 = vector.extract_strided_slice %623 {offsets = [0, 0], sizes = [8, 128], strides = [1, 1]} : vector<8x384xf32> to vector<8x128xf32>
    %cst_189 = arith.constant 0.176776692 : f32
    %625 = vector.broadcast %cst_189 : f32 to vector<8x128xf32>
    %626 = arith.mulf %624, %625 : vector<8x128xf32>
    %627 = vector.extract_strided_slice %623 {offsets = [0, 128], sizes = [8, 128], strides = [1, 1]} : vector<8x384xf32> to vector<8x128xf32>
    %628 = vector.extract_strided_slice %623 {offsets = [0, 256], sizes = [8, 128], strides = [1, 1]} : vector<8x384xf32> to vector<8x128xf32>
    %629 = vector.extract_strided_slice %626 {offsets = [0, 0], sizes = [8, 32], strides = [1, 1]} : vector<8x128xf32> to vector<8x32xf32>
    %630 = vector.extract_strided_slice %627 {offsets = [0, 0], sizes = [8, 32], strides = [1, 1]} : vector<8x128xf32> to vector<8x32xf32>
    %631 = vector.extract_strided_slice %628 {offsets = [0, 0], sizes = [8, 32], strides = [1, 1]} : vector<8x128xf32> to vector<8x32xf32>
    "tpu.trace_start"() <{level = 10 : i32, message = "qd,kd->qk"}> : () -> ()
    %cst_190 = arith.constant dense<0.000000e+00> : vector<8x8xf32>
    %632 = tpu.matmul %629, %630, %cst_190 {dimension_numbers = #tpu.dot_dimension_numbers<[1], [1], [0], [0], [0, 0, 1, 0], [], []>} : vector<8x32xf32>, vector<8x32xf32>, vector<8x8xf32> -> vector<8x8xf32>
    "tpu.trace_stop"() : () -> ()
    %633 = arith.addf %632, %307 : vector<8x8xf32>
    %cst_191 = arith.constant dense<0xFF800000> : vector<8xf32>
    %634 = vector.multi_reduction <maximumf>, %633, %cst_191 [1] : vector<8x8xf32> to vector<8xf32>
    %635 = vector.shape_cast %634 : vector<8xf32> to vector<8x1xf32>
    %636 = vector.broadcast %635 : vector<8x1xf32> to vector<8x8xf32>
    %637 = arith.subf %633, %636 : vector<8x8xf32>
    %638 = math.exp %637 : vector<8x8xf32>
    %cst_192 = arith.constant dense<0.000000e+00> : vector<8xf32>
    %639 = vector.multi_reduction <add>, %638, %cst_192 [1] : vector<8x8xf32> to vector<8xf32>
    %640 = vector.shape_cast %639 : vector<8xf32> to vector<8x1xf32>
    %641 = tpu.reciprocal %640 {approx = true} : vector<8x1xf32> -> vector<8x1xf32>
    %642 = vector.broadcast %641 : vector<8x1xf32> to vector<8x8xf32>
    %643 = arith.mulf %638, %642 : vector<8x8xf32>
    %cst_193 = arith.constant dense<0.000000e+00> : vector<8x32xf32>
    %644 = tpu.matmul %643, %631, %cst_193 {dimension_numbers = #tpu.dot_dimension_numbers<[1], [0], [0], [1], [0, 0, 1, 1], [], []>} : vector<8x8xf32>, vector<8x32xf32>, vector<8x32xf32> -> vector<8x32xf32>
    %645 = vector.extract_strided_slice %626 {offsets = [0, 32], sizes = [8, 32], strides = [1, 1]} : vector<8x128xf32> to vector<8x32xf32>
    %646 = vector.extract_strided_slice %627 {offsets = [0, 32], sizes = [8, 32], strides = [1, 1]} : vector<8x128xf32> to vector<8x32xf32>
    %647 = vector.extract_strided_slice %628 {offsets = [0, 32], sizes = [8, 32], strides = [1, 1]} : vector<8x128xf32> to vector<8x32xf32>
    "tpu.trace_start"() <{level = 10 : i32, message = "qd,kd->qk"}> : () -> ()
    %cst_194 = arith.constant dense<0.000000e+00> : vector<8x8xf32>
    %648 = tpu.matmul %645, %646, %cst_194 {dimension_numbers = #tpu.dot_dimension_numbers<[1], [1], [0], [0], [0, 0, 1, 0], [], []>} : vector<8x32xf32>, vector<8x32xf32>, vector<8x8xf32> -> vector<8x8xf32>
    "tpu.trace_stop"() : () -> ()
    %649 = arith.addf %648, %307 : vector<8x8xf32>
    %cst_195 = arith.constant dense<0xFF800000> : vector<8xf32>
    %650 = vector.multi_reduction <maximumf>, %649, %cst_195 [1] : vector<8x8xf32> to vector<8xf32>
    %651 = vector.shape_cast %650 : vector<8xf32> to vector<8x1xf32>
    %652 = vector.broadcast %651 : vector<8x1xf32> to vector<8x8xf32>
    %653 = arith.subf %649, %652 : vector<8x8xf32>
    %654 = math.exp %653 : vector<8x8xf32>
    %cst_196 = arith.constant dense<0.000000e+00> : vector<8xf32>
    %655 = vector.multi_reduction <add>, %654, %cst_196 [1] : vector<8x8xf32> to vector<8xf32>
    %656 = vector.shape_cast %655 : vector<8xf32> to vector<8x1xf32>
    %657 = tpu.reciprocal %656 {approx = true} : vector<8x1xf32> -> vector<8x1xf32>
    %658 = vector.broadcast %657 : vector<8x1xf32> to vector<8x8xf32>
    %659 = arith.mulf %654, %658 : vector<8x8xf32>
    %cst_197 = arith.constant dense<0.000000e+00> : vector<8x32xf32>
    %660 = tpu.matmul %659, %647, %cst_197 {dimension_numbers = #tpu.dot_dimension_numbers<[1], [0], [0], [1], [0, 0, 1, 1], [], []>} : vector<8x8xf32>, vector<8x32xf32>, vector<8x32xf32> -> vector<8x32xf32>
    %661 = vector.extract_strided_slice %626 {offsets = [0, 64], sizes = [8, 32], strides = [1, 1]} : vector<8x128xf32> to vector<8x32xf32>
    %662 = vector.extract_strided_slice %627 {offsets = [0, 64], sizes = [8, 32], strides = [1, 1]} : vector<8x128xf32> to vector<8x32xf32>
    %663 = vector.extract_strided_slice %628 {offsets = [0, 64], sizes = [8, 32], strides = [1, 1]} : vector<8x128xf32> to vector<8x32xf32>
    "tpu.trace_start"() <{level = 10 : i32, message = "qd,kd->qk"}> : () -> ()
    %cst_198 = arith.constant dense<0.000000e+00> : vector<8x8xf32>
    %664 = tpu.matmul %661, %662, %cst_198 {dimension_numbers = #tpu.dot_dimension_numbers<[1], [1], [0], [0], [0, 0, 1, 0], [], []>} : vector<8x32xf32>, vector<8x32xf32>, vector<8x8xf32> -> vector<8x8xf32>
    "tpu.trace_stop"() : () -> ()
    %665 = arith.addf %664, %307 : vector<8x8xf32>
    %cst_199 = arith.constant dense<0xFF800000> : vector<8xf32>
    %666 = vector.multi_reduction <maximumf>, %665, %cst_199 [1] : vector<8x8xf32> to vector<8xf32>
    %667 = vector.shape_cast %666 : vector<8xf32> to vector<8x1xf32>
    %668 = vector.broadcast %667 : vector<8x1xf32> to vector<8x8xf32>
    %669 = arith.subf %665, %668 : vector<8x8xf32>
    %670 = math.exp %669 : vector<8x8xf32>
    %cst_200 = arith.constant dense<0.000000e+00> : vector<8xf32>
    %671 = vector.multi_reduction <add>, %670, %cst_200 [1] : vector<8x8xf32> to vector<8xf32>
    %672 = vector.shape_cast %671 : vector<8xf32> to vector<8x1xf32>
    %673 = tpu.reciprocal %672 {approx = true} : vector<8x1xf32> -> vector<8x1xf32>
    %674 = vector.broadcast %673 : vector<8x1xf32> to vector<8x8xf32>
    %675 = arith.mulf %670, %674 : vector<8x8xf32>
    %cst_201 = arith.constant dense<0.000000e+00> : vector<8x32xf32>
    %676 = tpu.matmul %675, %663, %cst_201 {dimension_numbers = #tpu.dot_dimension_numbers<[1], [0], [0], [1], [0, 0, 1, 1], [], []>} : vector<8x8xf32>, vector<8x32xf32>, vector<8x32xf32> -> vector<8x32xf32>
    %677 = vector.extract_strided_slice %626 {offsets = [0, 96], sizes = [8, 32], strides = [1, 1]} : vector<8x128xf32> to vector<8x32xf32>
    %678 = vector.extract_strided_slice %627 {offsets = [0, 96], sizes = [8, 32], strides = [1, 1]} : vector<8x128xf32> to vector<8x32xf32>
    %679 = vector.extract_strided_slice %628 {offsets = [0, 96], sizes = [8, 32], strides = [1, 1]} : vector<8x128xf32> to vector<8x32xf32>
    "tpu.trace_start"() <{level = 10 : i32, message = "qd,kd->qk"}> : () -> ()
    %cst_202 = arith.constant dense<0.000000e+00> : vector<8x8xf32>
    %680 = tpu.matmul %677, %678, %cst_202 {dimension_numbers = #tpu.dot_dimension_numbers<[1], [1], [0], [0], [0, 0, 1, 0], [], []>} : vector<8x32xf32>, vector<8x32xf32>, vector<8x8xf32> -> vector<8x8xf32>
    "tpu.trace_stop"() : () -> ()
    %681 = arith.addf %680, %307 : vector<8x8xf32>
    %cst_203 = arith.constant dense<0xFF800000> : vector<8xf32>
    %682 = vector.multi_reduction <maximumf>, %681, %cst_203 [1] : vector<8x8xf32> to vector<8xf32>
    %683 = vector.shape_cast %682 : vector<8xf32> to vector<8x1xf32>
    %684 = vector.broadcast %683 : vector<8x1xf32> to vector<8x8xf32>
    %685 = arith.subf %681, %684 : vector<8x8xf32>
    %686 = math.exp %685 : vector<8x8xf32>
    %cst_204 = arith.constant dense<0.000000e+00> : vector<8xf32>
    %687 = vector.multi_reduction <add>, %686, %cst_204 [1] : vector<8x8xf32> to vector<8xf32>
    %688 = vector.shape_cast %687 : vector<8xf32> to vector<8x1xf32>
    %689 = tpu.reciprocal %688 {approx = true} : vector<8x1xf32> -> vector<8x1xf32>
    %690 = vector.broadcast %689 : vector<8x1xf32> to vector<8x8xf32>
    %691 = arith.mulf %686, %690 : vector<8x8xf32>
    %cst_205 = arith.constant dense<0.000000e+00> : vector<8x32xf32>
    %692 = tpu.matmul %691, %679, %cst_205 {dimension_numbers = #tpu.dot_dimension_numbers<[1], [0], [0], [1], [0, 0, 1, 1], [], []>} : vector<8x8xf32>, vector<8x32xf32>, vector<8x32xf32> -> vector<8x32xf32>
    %693 = tpu.concatenate %644, %660, %676, %692 in 1 : vector<8x32xf32>, vector<8x32xf32>, vector<8x32xf32>, vector<8x32xf32> -> vector<8x128xf32>
    %c1_206 = arith.constant 1 : index
    %c0_207 = arith.constant 0 : index
    %c0_208 = arith.constant 0 : index
    %694 = vector.load %arg10[%c1_206, %c0_207, %c0_208] : memref<2x128x128xf32, #tpu.memory_space<vmem>>, vector<1x128x128xf32>
    %695 = vector.shape_cast %694 : vector<1x128x128xf32> to vector<128x128xf32>
    %cst_209 = arith.constant dense<0.000000e+00> : vector<8x128xf32>
    %696 = tpu.matmul %693, %695, %cst_209 {dimension_numbers = #tpu.dot_dimension_numbers<[1], [0], [0], [1], [0, 0, 1, 1], [], []>} : vector<8x128xf32>, vector<128x128xf32>, vector<8x128xf32> -> vector<8x128xf32>
    %697 = arith.addf %578, %696 : vector<8x128xf32>
    %698 = vector.shape_cast %584 : vector<128xf32> to vector<1x128xf32>
    %699 = vector.broadcast %698 : vector<1x128xf32> to vector<8x128xf32>
    %700 = arith.addf %697, %699 : vector<8x128xf32>
    %cst_210 = arith.constant dense<0.000000e+00> : vector<8xf32>
    %701 = vector.multi_reduction <add>, %700, %cst_210 [1] : vector<8x128xf32> to vector<8xf32>
    %702 = vector.shape_cast %701 : vector<8xf32> to vector<8x1xf32>
    %cst_211 = arith.constant 1.280000e+02 : f32
    %703 = vector.broadcast %cst_211 : f32 to vector<8x1xf32>
    %704 = arith.divf %702, %703 : vector<8x1xf32>
    %705 = vector.broadcast %704 : vector<8x1xf32> to vector<8x128xf32>
    %706 = arith.subf %700, %705 : vector<8x128xf32>
    %707 = arith.mulf %706, %706 : vector<8x128xf32>
    %cst_212 = arith.constant dense<0.000000e+00> : vector<8xf32>
    %708 = vector.multi_reduction <add>, %707, %cst_212 [1] : vector<8x128xf32> to vector<8xf32>
    %709 = vector.shape_cast %708 : vector<8xf32> to vector<8x1xf32>
    %cst_213 = arith.constant 1.280000e+02 : f32
    %710 = vector.broadcast %cst_213 : f32 to vector<8x1xf32>
    %711 = arith.divf %709, %710 : vector<8x1xf32>
    %712 = vector.broadcast %704 : vector<8x1xf32> to vector<8x128xf32>
    %713 = arith.subf %700, %712 : vector<8x128xf32>
    %cst_214 = arith.constant 9.99999974E-6 : f32
    %714 = vector.broadcast %cst_214 : f32 to vector<8x1xf32>
    %715 = arith.addf %711, %714 : vector<8x1xf32>
    %716 = math.rsqrt %715 : vector<8x1xf32>
    %717 = vector.broadcast %716 : vector<8x1xf32> to vector<8x128xf32>
    %718 = arith.mulf %713, %717 : vector<8x128xf32>
    %719 = vector.shape_cast %585 : vector<128xf32> to vector<1x128xf32>
    %720 = vector.broadcast %719 : vector<1x128xf32> to vector<8x128xf32>
    %721 = arith.mulf %718, %720 : vector<8x128xf32>
    %722 = vector.shape_cast %586 : vector<128xf32> to vector<1x128xf32>
    %723 = vector.broadcast %722 : vector<1x128xf32> to vector<8x128xf32>
    %724 = arith.addf %721, %723 : vector<8x128xf32>
    %c1_215 = arith.constant 1 : index
    %c0_216 = arith.constant 0 : index
    %c0_217 = arith.constant 0 : index
    %725 = vector.load %arg11[%c1_215, %c0_216, %c0_217] : memref<2x128x128xf32, #tpu.memory_space<vmem>>, vector<1x128x128xf32>
    %726 = vector.shape_cast %725 : vector<1x128x128xf32> to vector<128x128xf32>
    %cst_218 = arith.constant dense<0.000000e+00> : vector<8x128xf32>
    %727 = tpu.matmul %724, %726, %cst_218 {dimension_numbers = #tpu.dot_dimension_numbers<[1], [0], [0], [1], [0, 0, 1, 1], [], []>} : vector<8x128xf32>, vector<128x128xf32>, vector<8x128xf32> -> vector<8x128xf32>
    %728 = vector.shape_cast %587 : vector<128xf32> to vector<1x128xf32>
    %729 = vector.broadcast %728 : vector<1x128xf32> to vector<8x128xf32>
    %730 = arith.addf %727, %729 : vector<8x128xf32>
    %cst_219 = arith.constant 0.176776692 : f32
    %731 = vector.broadcast %cst_219 : f32 to vector<8x128xf32>
    %732 = arith.mulf %730, %731 : vector<8x128xf32>
    %c1_220 = arith.constant 1 : index
    %c0_221 = arith.constant 0 : index
    %c0_222 = arith.constant 0 : index
    %733 = vector.load %arg12[%c1_220, %c0_221, %c0_222] : memref<2x128x256xf32, #tpu.memory_space<vmem>>, vector<1x128x256xf32>
    %734 = vector.shape_cast %733 : vector<1x128x256xf32> to vector<128x256xf32>
    %cst_223 = arith.constant dense<0.000000e+00> : vector<16x256xf32>
    %735 = tpu.matmul %305, %734, %cst_223 {dimension_numbers = #tpu.dot_dimension_numbers<[1], [0], [0], [1], [0, 0, 1, 1], [], []>} : vector<16x128xf32>, vector<128x256xf32>, vector<16x256xf32> -> vector<16x256xf32>
    %736 = vector.shape_cast %588 : vector<256xf32> to vector<1x256xf32>
    %737 = vector.broadcast %736 : vector<1x256xf32> to vector<16x256xf32>
    %738 = arith.addf %735, %737 : vector<16x256xf32>
    %739 = vector.extract_strided_slice %738 {offsets = [0, 0], sizes = [16, 128], strides = [1, 1]} : vector<16x256xf32> to vector<16x128xf32>
    %740 = vector.extract_strided_slice %738 {offsets = [0, 128], sizes = [16, 128], strides = [1, 1]} : vector<16x256xf32> to vector<16x128xf32>
    %741 = vector.extract_strided_slice %732 {offsets = [0, 0], sizes = [8, 32], strides = [1, 1]} : vector<8x128xf32> to vector<8x32xf32>
    %742 = vector.extract_strided_slice %739 {offsets = [0, 0], sizes = [16, 32], strides = [1, 1]} : vector<16x128xf32> to vector<16x32xf32>
    %743 = vector.extract_strided_slice %740 {offsets = [0, 0], sizes = [16, 32], strides = [1, 1]} : vector<16x128xf32> to vector<16x32xf32>
    "tpu.trace_start"() <{level = 10 : i32, message = "qd,kd->qk"}> : () -> ()
    %cst_224 = arith.constant dense<0.000000e+00> : vector<8x16xf32>
    %744 = tpu.matmul %741, %742, %cst_224 {dimension_numbers = #tpu.dot_dimension_numbers<[1], [1], [0], [0], [0, 0, 1, 0], [], []>} : vector<8x32xf32>, vector<16x32xf32>, vector<8x16xf32> -> vector<8x16xf32>
    "tpu.trace_stop"() : () -> ()
    %cst_225 = arith.constant dense<0xFF800000> : vector<8xf32>
    %745 = vector.multi_reduction <maximumf>, %744, %cst_225 [1] : vector<8x16xf32> to vector<8xf32>
    %746 = vector.shape_cast %745 : vector<8xf32> to vector<8x1xf32>
    %747 = vector.broadcast %746 : vector<8x1xf32> to vector<8x16xf32>
    %748 = arith.subf %744, %747 : vector<8x16xf32>
    %749 = math.exp %748 : vector<8x16xf32>
    %cst_226 = arith.constant dense<0.000000e+00> : vector<8xf32>
    %750 = vector.multi_reduction <add>, %749, %cst_226 [1] : vector<8x16xf32> to vector<8xf32>
    %751 = vector.shape_cast %750 : vector<8xf32> to vector<8x1xf32>
    %752 = tpu.reciprocal %751 {approx = true} : vector<8x1xf32> -> vector<8x1xf32>
    %753 = vector.broadcast %752 : vector<8x1xf32> to vector<8x16xf32>
    %754 = arith.mulf %749, %753 : vector<8x16xf32>
    %cst_227 = arith.constant dense<0.000000e+00> : vector<8x32xf32>
    %755 = tpu.matmul %754, %743, %cst_227 {dimension_numbers = #tpu.dot_dimension_numbers<[1], [0], [0], [1], [0, 0, 1, 1], [], []>} : vector<8x16xf32>, vector<16x32xf32>, vector<8x32xf32> -> vector<8x32xf32>
    %756 = vector.extract_strided_slice %732 {offsets = [0, 32], sizes = [8, 32], strides = [1, 1]} : vector<8x128xf32> to vector<8x32xf32>
    %757 = vector.extract_strided_slice %739 {offsets = [0, 32], sizes = [16, 32], strides = [1, 1]} : vector<16x128xf32> to vector<16x32xf32>
    %758 = vector.extract_strided_slice %740 {offsets = [0, 32], sizes = [16, 32], strides = [1, 1]} : vector<16x128xf32> to vector<16x32xf32>
    "tpu.trace_start"() <{level = 10 : i32, message = "qd,kd->qk"}> : () -> ()
    %cst_228 = arith.constant dense<0.000000e+00> : vector<8x16xf32>
    %759 = tpu.matmul %756, %757, %cst_228 {dimension_numbers = #tpu.dot_dimension_numbers<[1], [1], [0], [0], [0, 0, 1, 0], [], []>} : vector<8x32xf32>, vector<16x32xf32>, vector<8x16xf32> -> vector<8x16xf32>
    "tpu.trace_stop"() : () -> ()
    %cst_229 = arith.constant dense<0xFF800000> : vector<8xf32>
    %760 = vector.multi_reduction <maximumf>, %759, %cst_229 [1] : vector<8x16xf32> to vector<8xf32>
    %761 = vector.shape_cast %760 : vector<8xf32> to vector<8x1xf32>
    %762 = vector.broadcast %761 : vector<8x1xf32> to vector<8x16xf32>
    %763 = arith.subf %759, %762 : vector<8x16xf32>
    %764 = math.exp %763 : vector<8x16xf32>
    %cst_230 = arith.constant dense<0.000000e+00> : vector<8xf32>
    %765 = vector.multi_reduction <add>, %764, %cst_230 [1] : vector<8x16xf32> to vector<8xf32>
    %766 = vector.shape_cast %765 : vector<8xf32> to vector<8x1xf32>
    %767 = tpu.reciprocal %766 {approx = true} : vector<8x1xf32> -> vector<8x1xf32>
    %768 = vector.broadcast %767 : vector<8x1xf32> to vector<8x16xf32>
    %769 = arith.mulf %764, %768 : vector<8x16xf32>
    %cst_231 = arith.constant dense<0.000000e+00> : vector<8x32xf32>
    %770 = tpu.matmul %769, %758, %cst_231 {dimension_numbers = #tpu.dot_dimension_numbers<[1], [0], [0], [1], [0, 0, 1, 1], [], []>} : vector<8x16xf32>, vector<16x32xf32>, vector<8x32xf32> -> vector<8x32xf32>
    %771 = vector.extract_strided_slice %732 {offsets = [0, 64], sizes = [8, 32], strides = [1, 1]} : vector<8x128xf32> to vector<8x32xf32>
    %772 = vector.extract_strided_slice %739 {offsets = [0, 64], sizes = [16, 32], strides = [1, 1]} : vector<16x128xf32> to vector<16x32xf32>
    %773 = vector.extract_strided_slice %740 {offsets = [0, 64], sizes = [16, 32], strides = [1, 1]} : vector<16x128xf32> to vector<16x32xf32>
    "tpu.trace_start"() <{level = 10 : i32, message = "qd,kd->qk"}> : () -> ()
    %cst_232 = arith.constant dense<0.000000e+00> : vector<8x16xf32>
    %774 = tpu.matmul %771, %772, %cst_232 {dimension_numbers = #tpu.dot_dimension_numbers<[1], [1], [0], [0], [0, 0, 1, 0], [], []>} : vector<8x32xf32>, vector<16x32xf32>, vector<8x16xf32> -> vector<8x16xf32>
    "tpu.trace_stop"() : () -> ()
    %cst_233 = arith.constant dense<0xFF800000> : vector<8xf32>
    %775 = vector.multi_reduction <maximumf>, %774, %cst_233 [1] : vector<8x16xf32> to vector<8xf32>
    %776 = vector.shape_cast %775 : vector<8xf32> to vector<8x1xf32>
    %777 = vector.broadcast %776 : vector<8x1xf32> to vector<8x16xf32>
    %778 = arith.subf %774, %777 : vector<8x16xf32>
    %779 = math.exp %778 : vector<8x16xf32>
    %cst_234 = arith.constant dense<0.000000e+00> : vector<8xf32>
    %780 = vector.multi_reduction <add>, %779, %cst_234 [1] : vector<8x16xf32> to vector<8xf32>
    %781 = vector.shape_cast %780 : vector<8xf32> to vector<8x1xf32>
    %782 = tpu.reciprocal %781 {approx = true} : vector<8x1xf32> -> vector<8x1xf32>
    %783 = vector.broadcast %782 : vector<8x1xf32> to vector<8x16xf32>
    %784 = arith.mulf %779, %783 : vector<8x16xf32>
    %cst_235 = arith.constant dense<0.000000e+00> : vector<8x32xf32>
    %785 = tpu.matmul %784, %773, %cst_235 {dimension_numbers = #tpu.dot_dimension_numbers<[1], [0], [0], [1], [0, 0, 1, 1], [], []>} : vector<8x16xf32>, vector<16x32xf32>, vector<8x32xf32> -> vector<8x32xf32>
    %786 = vector.extract_strided_slice %732 {offsets = [0, 96], sizes = [8, 32], strides = [1, 1]} : vector<8x128xf32> to vector<8x32xf32>
    %787 = vector.extract_strided_slice %739 {offsets = [0, 96], sizes = [16, 32], strides = [1, 1]} : vector<16x128xf32> to vector<16x32xf32>
    %788 = vector.extract_strided_slice %740 {offsets = [0, 96], sizes = [16, 32], strides = [1, 1]} : vector<16x128xf32> to vector<16x32xf32>
    "tpu.trace_start"() <{level = 10 : i32, message = "qd,kd->qk"}> : () -> ()
    %cst_236 = arith.constant dense<0.000000e+00> : vector<8x16xf32>
    %789 = tpu.matmul %786, %787, %cst_236 {dimension_numbers = #tpu.dot_dimension_numbers<[1], [1], [0], [0], [0, 0, 1, 0], [], []>} : vector<8x32xf32>, vector<16x32xf32>, vector<8x16xf32> -> vector<8x16xf32>
    "tpu.trace_stop"() : () -> ()
    %cst_237 = arith.constant dense<0xFF800000> : vector<8xf32>
    %790 = vector.multi_reduction <maximumf>, %789, %cst_237 [1] : vector<8x16xf32> to vector<8xf32>
    %791 = vector.shape_cast %790 : vector<8xf32> to vector<8x1xf32>
    %792 = vector.broadcast %791 : vector<8x1xf32> to vector<8x16xf32>
    %793 = arith.subf %789, %792 : vector<8x16xf32>
    %794 = math.exp %793 : vector<8x16xf32>
    %cst_238 = arith.constant dense<0.000000e+00> : vector<8xf32>
    %795 = vector.multi_reduction <add>, %794, %cst_238 [1] : vector<8x16xf32> to vector<8xf32>
    %796 = vector.shape_cast %795 : vector<8xf32> to vector<8x1xf32>
    %797 = tpu.reciprocal %796 {approx = true} : vector<8x1xf32> -> vector<8x1xf32>
    %798 = vector.broadcast %797 : vector<8x1xf32> to vector<8x16xf32>
    %799 = arith.mulf %794, %798 : vector<8x16xf32>
    %cst_239 = arith.constant dense<0.000000e+00> : vector<8x32xf32>
    %800 = tpu.matmul %799, %788, %cst_239 {dimension_numbers = #tpu.dot_dimension_numbers<[1], [0], [0], [1], [0, 0, 1, 1], [], []>} : vector<8x16xf32>, vector<16x32xf32>, vector<8x32xf32> -> vector<8x32xf32>
    %801 = tpu.concatenate %755, %770, %785, %800 in 1 : vector<8x32xf32>, vector<8x32xf32>, vector<8x32xf32>, vector<8x32xf32> -> vector<8x128xf32>
    %c1_240 = arith.constant 1 : index
    %c0_241 = arith.constant 0 : index
    %c0_242 = arith.constant 0 : index
    %802 = vector.load %arg13[%c1_240, %c0_241, %c0_242] : memref<2x128x128xf32, #tpu.memory_space<vmem>>, vector<1x128x128xf32>
    %803 = vector.shape_cast %802 : vector<1x128x128xf32> to vector<128x128xf32>
    %cst_243 = arith.constant dense<0.000000e+00> : vector<8x128xf32>
    %804 = tpu.matmul %801, %803, %cst_243 {dimension_numbers = #tpu.dot_dimension_numbers<[1], [0], [0], [1], [0, 0, 1, 1], [], []>} : vector<8x128xf32>, vector<128x128xf32>, vector<8x128xf32> -> vector<8x128xf32>
    %805 = arith.addf %700, %804 : vector<8x128xf32>
    %806 = vector.shape_cast %589 : vector<128xf32> to vector<1x128xf32>
    %807 = vector.broadcast %806 : vector<1x128xf32> to vector<8x128xf32>
    %808 = arith.addf %805, %807 : vector<8x128xf32>
    %cst_244 = arith.constant dense<0.000000e+00> : vector<8xf32>
    %809 = vector.multi_reduction <add>, %808, %cst_244 [1] : vector<8x128xf32> to vector<8xf32>
    %810 = vector.shape_cast %809 : vector<8xf32> to vector<8x1xf32>
    %cst_245 = arith.constant 1.280000e+02 : f32
    %811 = vector.broadcast %cst_245 : f32 to vector<8x1xf32>
    %812 = arith.divf %810, %811 : vector<8x1xf32>
    %813 = vector.broadcast %812 : vector<8x1xf32> to vector<8x128xf32>
    %814 = arith.subf %808, %813 : vector<8x128xf32>
    %815 = arith.mulf %814, %814 : vector<8x128xf32>
    %cst_246 = arith.constant dense<0.000000e+00> : vector<8xf32>
    %816 = vector.multi_reduction <add>, %815, %cst_246 [1] : vector<8x128xf32> to vector<8xf32>
    %817 = vector.shape_cast %816 : vector<8xf32> to vector<8x1xf32>
    %cst_247 = arith.constant 1.280000e+02 : f32
    %818 = vector.broadcast %cst_247 : f32 to vector<8x1xf32>
    %819 = arith.divf %817, %818 : vector<8x1xf32>
    %820 = vector.broadcast %812 : vector<8x1xf32> to vector<8x128xf32>
    %821 = arith.subf %808, %820 : vector<8x128xf32>
    %cst_248 = arith.constant 9.99999974E-6 : f32
    %822 = vector.broadcast %cst_248 : f32 to vector<8x1xf32>
    %823 = arith.addf %819, %822 : vector<8x1xf32>
    %824 = math.rsqrt %823 : vector<8x1xf32>
    %825 = vector.broadcast %824 : vector<8x1xf32> to vector<8x128xf32>
    %826 = arith.mulf %821, %825 : vector<8x128xf32>
    %827 = vector.shape_cast %590 : vector<128xf32> to vector<1x128xf32>
    %828 = vector.broadcast %827 : vector<1x128xf32> to vector<8x128xf32>
    %829 = arith.mulf %826, %828 : vector<8x128xf32>
    %830 = vector.shape_cast %591 : vector<128xf32> to vector<1x128xf32>
    %831 = vector.broadcast %830 : vector<1x128xf32> to vector<8x128xf32>
    %832 = arith.addf %829, %831 : vector<8x128xf32>
    %c1_249 = arith.constant 1 : index
    %c0_250 = arith.constant 0 : index
    %c0_251 = arith.constant 0 : index
    %833 = vector.load %arg14[%c1_249, %c0_250, %c0_251] : memref<2x128x256xf32, #tpu.memory_space<vmem>>, vector<1x128x256xf32>
    %834 = vector.shape_cast %833 : vector<1x128x256xf32> to vector<128x256xf32>
    %cst_252 = arith.constant dense<0.000000e+00> : vector<8x256xf32>
    %835 = tpu.matmul %832, %834, %cst_252 {dimension_numbers = #tpu.dot_dimension_numbers<[1], [0], [0], [1], [0, 0, 1, 1], [], []>} : vector<8x128xf32>, vector<128x256xf32>, vector<8x256xf32> -> vector<8x256xf32>
    %836 = vector.shape_cast %592 : vector<256xf32> to vector<1x256xf32>
    %837 = vector.broadcast %836 : vector<1x256xf32> to vector<8x256xf32>
    %838 = arith.addf %835, %837 : vector<8x256xf32>
    %cst_253 = arith.constant 0.000000e+00 : f32
    %839 = vector.broadcast %cst_253 : f32 to vector<8x256xf32>
    %840 = arith.maximumf %838, %839 : vector<8x256xf32>
    %c1_254 = arith.constant 1 : index
    %c0_255 = arith.constant 0 : index
    %c0_256 = arith.constant 0 : index
    %841 = vector.load %arg15[%c1_254, %c0_255, %c0_256] : memref<2x256x128xf32, #tpu.memory_space<vmem>>, vector<1x256x128xf32>
    %842 = vector.shape_cast %841 : vector<1x256x128xf32> to vector<256x128xf32>
    %cst_257 = arith.constant dense<0.000000e+00> : vector<8x128xf32>
    %843 = tpu.matmul %840, %842, %cst_257 {dimension_numbers = #tpu.dot_dimension_numbers<[1], [0], [0], [1], [0, 0, 1, 1], [], []>} : vector<8x256xf32>, vector<256x128xf32>, vector<8x128xf32> -> vector<8x128xf32>
    %844 = arith.addf %808, %843 : vector<8x128xf32>
    %845 = vector.shape_cast %593 : vector<128xf32> to vector<1x128xf32>
    %846 = vector.broadcast %845 : vector<1x128xf32> to vector<8x128xf32>
    %847 = arith.addf %844, %846 : vector<8x128xf32>
    %c0_258 = arith.constant 0 : index
    %c0_259 = arith.constant 0 : index
    %848 = vector.load %arg19[%c0_258, %c0_259] : memref<1x256xf32, #tpu.memory_space<vmem>>, vector<1x256xf32>
    %849 = vector.shape_cast %848 : vector<1x256xf32> to vector<256xf32>
    %850 = vector.extract_strided_slice %849 {offsets = [0], sizes = [128], strides = [1]} : vector<256xf32> to vector<128xf32>
    %851 = vector.extract_strided_slice %849 {offsets = [128], sizes = [128], strides = [1]} : vector<256xf32> to vector<128xf32>
    %c0_260 = arith.constant 0 : index
    %c0_261 = arith.constant 0 : index
    %852 = vector.load %arg17[%c0_260, %c0_261] : memref<128x128xf32, #tpu.memory_space<vmem>>, vector<128x128xf32>
    %cst_262 = arith.constant dense<0.000000e+00> : vector<8x128xf32>
    %853 = tpu.matmul %847, %852, %cst_262 {dimension_numbers = #tpu.dot_dimension_numbers<[1], [0], [0], [1], [0, 0, 1, 1], [], []>} : vector<8x128xf32>, vector<128x128xf32>, vector<8x128xf32> -> vector<8x128xf32>
    %854 = vector.shape_cast %850 : vector<128xf32> to vector<1x128xf32>
    %855 = vector.broadcast %854 : vector<1x128xf32> to vector<8x128xf32>
    %856 = arith.addf %853, %855 : vector<8x128xf32>
    %cst_263 = arith.constant 0.000000e+00 : f32
    %857 = vector.broadcast %cst_263 : f32 to vector<8x128xf32>
    %858 = arith.maximumf %856, %857 : vector<8x128xf32>
    %c0_264 = arith.constant 0 : index
    %c0_265 = arith.constant 0 : index
    %859 = vector.load %arg18[%c0_264, %c0_265] : memref<128x128xf32, #tpu.memory_space<vmem>>, vector<128x128xf32>
    %cst_266 = arith.constant dense<0.000000e+00> : vector<8x128xf32>
    %860 = tpu.matmul %858, %859, %cst_266 {dimension_numbers = #tpu.dot_dimension_numbers<[1], [0], [0], [1], [0, 0, 1, 1], [], []>} : vector<8x128xf32>, vector<128x128xf32>, vector<8x128xf32> -> vector<8x128xf32>
    %861 = vector.shape_cast %851 : vector<128xf32> to vector<1x128xf32>
    %862 = vector.broadcast %861 : vector<1x128xf32> to vector<8x128xf32>
    %863 = arith.addf %860, %862 : vector<8x128xf32>
    %cst_267 = arith.constant dense<0xFF800000> : vector<8xf32>
    %864 = vector.multi_reduction <maximumf>, %863, %cst_267 [1] : vector<8x128xf32> to vector<8xf32>
    %865 = vector.shape_cast %864 : vector<8xf32> to vector<8x1xf32>
    %866 = vector.broadcast %865 : vector<8x1xf32> to vector<8x128xf32>
    %867 = arith.subf %863, %866 : vector<8x128xf32>
    %868 = math.exp %867 : vector<8x128xf32>
    %cst_268 = arith.constant dense<0.000000e+00> : vector<8xf32>
    %869 = vector.multi_reduction <add>, %868, %cst_268 [1] : vector<8x128xf32> to vector<8xf32>
    %870 = vector.shape_cast %869 : vector<8xf32> to vector<8x1xf32>
    %871 = math.log %870 : vector<8x1xf32>
    %872 = arith.addf %871, %865 : vector<8x1xf32>
    %873 = vector.broadcast %872 : vector<8x1xf32> to vector<8x128xf32>
    %874 = arith.subf %863, %873 : vector<8x128xf32>
    %c0_269 = arith.constant 0 : index
    %c0_270 = arith.constant 0 : index
    %c0_271 = arith.constant 0 : index
    %875 = vector.load %arg20[%c0_269, %c0_270, %c0_271] : memref<1x8x128xf32, #tpu.memory_space<vmem>>, vector<1x8x128xf32>
    %876 = vector.shape_cast %875 : vector<1x8x128xf32> to vector<8x128xf32>
    %877 = vector.shape_cast %874 : vector<8x128xf32> to vector<1x8x128xf32>
    tpu.vector_store %arg20[%c0_269, %c0_270, %c0_271], %877 {strides = array<i32>} : memref<1x8x128xf32, #tpu.memory_space<vmem>>, vector<1x8x128xf32>,
    return
  }
  func.func @transform_0(%arg0: i32) -> (i32, i32, i32) {
    %c0_i32 = arith.constant 0 : i32
    %c0_i32_0 = arith.constant 0 : i32
    %c0_i32_1 = arith.constant 0 : i32
    return %arg0, %c0_i32, %c0_i32_0 : i32, i32, i32
  }
  func.func @transform_1(%arg0: i32) -> (i32, i32, i32) {
    %c0_i32 = arith.constant 0 : i32
    %c0_i32_0 = arith.constant 0 : i32
    %c0_i32_1 = arith.constant 0 : i32
    return %arg0, %c0_i32, %c0_i32_0 : i32, i32, i32
  }
  func.func @transform_2(%arg0: i32) -> (i32, i32, i32) {
    %c0_i32 = arith.constant 0 : i32
    %c0_i32_0 = arith.constant 0 : i32
    %c0_i32_1 = arith.constant 0 : i32
    return %arg0, %c0_i32, %c0_i32_0 : i32, i32, i32
  }
  func.func @transform_3(%arg0: i32) -> (i32, i32, i32) {
    %c0_i32 = arith.constant 0 : i32
    %c0_i32_0 = arith.constant 0 : i32
    %c0_i32_1 = arith.constant 0 : i32
    %c0_i32_2 = arith.constant 0 : i32
    return %c0_i32, %c0_i32_0, %c0_i32_1 : i32, i32, i32
  }
  func.func @transform_4(%arg0: i32) -> (i32, i32, i32) {
    %c0_i32 = arith.constant 0 : i32
    %c0_i32_0 = arith.constant 0 : i32
    %c0_i32_1 = arith.constant 0 : i32
    %c0_i32_2 = arith.constant 0 : i32
    return %c0_i32, %c0_i32_0, %c0_i32_1 : i32, i32, i32
  }
  func.func @transform_5(%arg0: i32) -> (i32, i32, i32) {
    %c0_i32 = arith.constant 0 : i32
    %c0_i32_0 = arith.constant 0 : i32
    %c0_i32_1 = arith.constant 0 : i32
    %c0_i32_2 = arith.constant 0 : i32
    return %c0_i32, %c0_i32_0, %c0_i32_1 : i32, i32, i32
  }
  func.func @transform_6(%arg0: i32) -> (i32, i32, i32) {
    %c0_i32 = arith.constant 0 : i32
    %c0_i32_0 = arith.constant 0 : i32
    %c0_i32_1 = arith.constant 0 : i32
    %c0_i32_2 = arith.constant 0 : i32
    return %c0_i32, %c0_i32_0, %c0_i32_1 : i32, i32, i32
  }
  func.func @transform_7(%arg0: i32) -> (i32, i32) {
    %c0_i32 = arith.constant 0 : i32
    %c0_i32_0 = arith.constant 0 : i32
    %c0_i32_1 = arith.constant 0 : i32
    return %c0_i32, %c0_i32_0 : i32, i32
  }
  func.func @transform_8(%arg0: i32) -> (i32, i32, i32) {
    %c0_i32 = arith.constant 0 : i32
    %c0_i32_0 = arith.constant 0 : i32
    %c0_i32_1 = arith.constant 0 : i32
    %c0_i32_2 = arith.constant 0 : i32
    return %c0_i32, %c0_i32_0, %c0_i32_1 : i32, i32, i32
  }
  func.func @transform_9(%arg0: i32) -> (i32, i32, i32) {
    %c0_i32 = arith.constant 0 : i32
    %c0_i32_0 = arith.constant 0 : i32
    %c0_i32_1 = arith.constant 0 : i32
    %c0_i32_2 = arith.constant 0 : i32
    return %c0_i32, %c0_i32_0, %c0_i32_1 : i32, i32, i32
  }
  func.func @transform_10(%arg0: i32) -> (i32, i32, i32) {
    %c0_i32 = arith.constant 0 : i32
    %c0_i32_0 = arith.constant 0 : i32
    %c0_i32_1 = arith.constant 0 : i32
    %c0_i32_2 = arith.constant 0 : i32
    return %c0_i32, %c0_i32_0, %c0_i32_1 : i32, i32, i32
  }
  func.func @transform_11(%arg0: i32) -> (i32, i32, i32) {
    %c0_i32 = arith.constant 0 : i32
    %c0_i32_0 = arith.constant 0 : i32
    %c0_i32_1 = arith.constant 0 : i32
    %c0_i32_2 = arith.constant 0 : i32
    return %c0_i32, %c0_i32_0, %c0_i32_1 : i32, i32, i32
  }
  func.func @transform_12(%arg0: i32) -> (i32, i32, i32) {
    %c0_i32 = arith.constant 0 : i32
    %c0_i32_0 = arith.constant 0 : i32
    %c0_i32_1 = arith.constant 0 : i32
    %c0_i32_2 = arith.constant 0 : i32
    return %c0_i32, %c0_i32_0, %c0_i32_1 : i32, i32, i32
  }
  func.func @transform_13(%arg0: i32) -> (i32, i32, i32) {
    %c0_i32 = arith.constant 0 : i32
    %c0_i32_0 = arith.constant 0 : i32
    %c0_i32_1 = arith.constant 0 : i32
    %c0_i32_2 = arith.constant 0 : i32
    return %c0_i32, %c0_i32_0, %c0_i32_1 : i32, i32, i32
  }
  func.func @transform_14(%arg0: i32) -> (i32, i32, i32) {
    %c0_i32 = arith.constant 0 : i32
    %c0_i32_0 = arith.constant 0 : i32
    %c0_i32_1 = arith.constant 0 : i32
    %c0_i32_2 = arith.constant 0 : i32
    return %c0_i32, %c0_i32_0, %c0_i32_1 : i32, i32, i32
  }
  func.func @transform_15(%arg0: i32) -> (i32, i32) {
    %c0_i32 = arith.constant 0 : i32
    %c0_i32_0 = arith.constant 0 : i32
    %c0_i32_1 = arith.constant 0 : i32
    return %c0_i32, %c0_i32_0 : i32, i32
  }
  func.func @transform_16(%arg0: i32) -> (i32, i32) {
    %c0_i32 = arith.constant 0 : i32
    %c0_i32_0 = arith.constant 0 : i32
    %c0_i32_1 = arith.constant 0 : i32
    return %c0_i32, %c0_i32_0 : i32, i32
  }
  func.func @transform_17(%arg0: i32) -> (i32, i32) {
    %c0_i32 = arith.constant 0 : i32
    %c0_i32_0 = arith.constant 0 : i32
    %c0_i32_1 = arith.constant 0 : i32
    return %c0_i32, %c0_i32_0 : i32, i32
  }
  func.func @transform_18(%arg0: i32) -> (i32, i32) {
    %c0_i32 = arith.constant 0 : i32
    %c0_i32_0 = arith.constant 0 : i32
    %c0_i32_1 = arith.constant 0 : i32
    return %c0_i32, %c0_i32_0 : i32, i32
  }
  func.func @transform_19(%arg0: i32) -> (i32, i32, i32) {
    %c0_i32 = arith.constant 0 : i32
    %c0_i32_0 = arith.constant 0 : i32
    %c0_i32_1 = arith.constant 0 : i32
    return %arg0, %c0_i32, %c0_i32_0 : i32, i32, i32
  }
}

</mosaic_0001>

<llo_original>
// kernel: transformer_forward.1
$region0: #{transformer_forward.1}
  #allocation0 [shape = 'u32[]', space=smem, size = 0x4, offset = 0x4, fixed_abs, tag = 'smem constant byte address 0x4 - core index']
  #allocation1 [shape = 'u32[144,128]{1,0:T(1,128)}', space=vmem, size = 0x12000, scoped, tag = 'internal scratch']
  %s0 = inlined_call_operand.vmem [shape: f32[2,16,128], index: 0, kind: input, shape index: {}]
  %s1 = inlined_call_operand.vmem [shape: f32[2,8,128], index: 1, kind: input, shape index: {}]
  %s2 = inlined_call_operand.vmem [shape: f32[2,8,8], index: 2, kind: input, shape index: {}]
  %s3 = inlined_call_operand.hbm [shape: f32[2,128,384], index: 3, kind: input, shape index: {}]
  %s4 = inlined_call_operand.vmem [shape: f32[2,128,128], index: 4, kind: input, shape index: {}]
  %s5 = inlined_call_operand.hbm [shape: f32[2,128,256], index: 5, kind: input, shape index: {}]
  %s6 = inlined_call_operand.hbm [shape: f32[2,256,128], index: 6, kind: input, shape index: {}]
  %s7 = inlined_call_operand.hbm [shape: f32[2,1408], index: 7, kind: input, shape index: {}]
  %s8 = inlined_call_operand.hbm [shape: f32[2,128,384], index: 8, kind: input, shape index: {}]
  %s9 = inlined_call_operand.hbm [shape: f32[2,128,128], index: 9, kind: input, shape index: {}]
  %s10 = inlined_call_operand.hbm [shape: f32[2,128,128], index: 10, kind: input, shape index: {}]
  %s11 = inlined_call_operand.hbm [shape: f32[2,128,256], index: 11, kind: input, shape index: {}]
  %s12 = inlined_call_operand.hbm [shape: f32[2,128,128], index: 12, kind: input, shape index: {}]
  %s13 = inlined_call_operand.hbm [shape: f32[2,128,256], index: 13, kind: input, shape index: {}]
  %s14 = inlined_call_operand.hbm [shape: f32[2,256,128], index: 14, kind: input, shape index: {}]
  %s15 = inlined_call_operand.hbm [shape: f32[2,2176], index: 15, kind: input, shape index: {}]
  %s16 = inlined_call_operand.vmem [shape: f32[128,128], index: 16, kind: input, shape index: {}]
  %s17 = inlined_call_operand.hbm [shape: f32[128,128], index: 17, kind: input, shape index: {}]
  %s18 = inlined_call_operand.hbm [shape: f32[1,256], index: 18, kind: input, shape index: {}]
  %s19 = inlined_call_operand.hbm [shape: f32[2,8,128], index: 19, kind: output, shape index: {}]
  %s20 = sld [smem:[#allocation0]]
  $region165: #{transformer_forward.1} parent=0
    _
  %s22 = ssub.s32 1, %s20
  %s23 = scalar_select 0, %s22, %s20
  $region1: #{transformer_forward.1} parent=0
    #allocation2 [shape = 'u8[393216]{0}', space=vmem, size = 0x60000, scoped, tag = 'input window, operand 3, single buffered']
    #allocation3 [shape = 's32[2]{0}', space=sflag, size = 0x8, scoped, tag = 'scoped memory for transformer_forward.1']
    #allocation4 [shape = 's32[2]{0}', space=sflag, size = 0x8, scoped, tag = 'scoped memory for transformer_forward.1']
    #allocation5 [shape = 'u8[262144]{0}', space=vmem, size = 0x40000, scoped, tag = 'input window, operand 5, single buffered']
    #allocation6 [shape = 's32[1]{0}', space=sflag, size = 0x4, scoped, tag = 'scoped memory for transformer_forward.1']
    #allocation7 [shape = 'u8[262144]{0}', space=vmem, size = 0x40000, scoped, tag = 'input window, operand 6, single buffered']
    #allocation8 [shape = 'u8[11264]{0}', space=vmem, size = 0x2c00, scoped, tag = 'input window, operand 7, single buffered']
    #allocation9 [shape = 's32[1]{0}', space=sflag, size = 0x4, scoped, tag = 'scoped memory for transformer_forward.1']
    #allocation10 [shape = 'u8[393216]{0}', space=vmem, size = 0x60000, scoped, tag = 'input window, operand 8, single buffered']
    #allocation11 [shape = 'u8[131072]{0}', space=vmem, size = 0x20000, scoped, tag = 'input window, operand 9, single buffered']
    #allocation12 [shape = 's32[1]{0}', space=sflag, size = 0x4, scoped, tag = 'scoped memory for transformer_forward.1']
    #allocation13 [shape = 'u8[131072]{0}', space=vmem, size = 0x20000, scoped, tag = 'input window, operand 10, single buffered']
    #allocation14 [shape = 'u8[262144]{0}', space=vmem, size = 0x40000, scoped, tag = 'input window, operand 11, single buffered']
    #allocation15 [shape = 's32[1]{0}', space=sflag, size = 0x4, scoped, tag = 'scoped memory for transformer_forward.1']
    #allocation16 [shape = 'u8[131072]{0}', space=vmem, size = 0x20000, scoped, tag = 'input window, operand 12, single buffered']
    #allocation17 [shape = 'u8[262144]{0}', space=vmem, size = 0x40000, scoped, tag = 'input window, operand 13, single buffered']
    #allocation18 [shape = 's32[1]{0}', space=sflag, size = 0x4, scoped, tag = 'scoped memory for transformer_forward.1']
    #allocation19 [shape = 'u8[262144]{0}', space=vmem, size = 0x40000, scoped, tag = 'input window, operand 14, single buffered']
    #allocation20 [shape = 'u8[17408]{0}', space=vmem, size = 0x4400, scoped, tag = 'input window, operand 15, single buffered']
    #allocation21 [shape = 's32[1]{0}', space=sflag, size = 0x4, scoped, tag = 'scoped memory for transformer_forward.1']
    #allocation22 [shape = 'u8[65536]{0}', space=vmem, size = 0x10000, scoped, tag = 'input window, operand 17, single buffered']
    #allocation23 [shape = 'u8[1024]{0}', space=vmem, size = 0x400, scoped, tag = 'input window, operand 18, single buffered']
    #allocation24 [shape = 's32[1]{0}', space=sflag, size = 0x4, scoped, tag = 'scoped memory for transformer_forward.1']
    #allocation25 [shape = 'u8[8192]{0}', space=vmem, size = 0x2000, scoped, tag = 'output window, operand 0']
    %24 = vsyncpa [#allocation3], 0
    %25 = vsyncpa [#allocation6], 0
    %26 = vsyncpa [#allocation9], 0
    %27 = vsyncpa [#allocation12], 0
    %28 = vsyncpa [#allocation15], 0
    %29 = vsyncpa [#allocation18], 0
    %30 = vsyncpa [#allocation21], 0
    %31 = vsyncpa [#allocation24], 0
    %32 = vsyncpa [#allocation4], 0
    %s33 = scalar_lea.sflag [#allocation4], 1
    %34 = vsyncpa %s33, 0
    loop: start=0, step=1, limit=4
    $region2: #{transformer_forward.1} parent=1 // loop_pre_header
      _
    $region3: #{transformer_forward.1} parent=1 // loop_header
      %s36 = sphi 0, %s40
      %p37 = scmp.ge.s32.totalorder %s36, 4
      %s46 = sphi 0, %s48
      %s49 = sphi 0, %s46
      %s50 = sphi 0, %s49
      %s66 = sphi 0, %s50
      %s72 = sphi 0, %s74
      %s75 = sphi 0, %s72
      %s76 = sphi 0, %s75
      %s92 = sphi 0, %s76
      %s98 = sphi 0, %s100
      %s101 = sphi 0, %s98
      %s102 = sphi 0, %s101
      %s118 = sphi 0, %s102
      %s122 = sphi 0, %s122
      %s124 = sphi 0, %s122
      %s125 = sphi 0, %s124
      %s139 = sphi 0, %s125
      %s143 = sphi 0, %s143
      %s145 = sphi 0, %s143
      %s146 = sphi 0, %s145
      %s160 = sphi 0, %s146
      %s164 = sphi 0, %s164
      %s166 = sphi 0, %s164
      %s167 = sphi 0, %s166
      %s181 = sphi 0, %s167
      %s185 = sphi 0, %s185
      %s187 = sphi 0, %s185
      %s188 = sphi 0, %s187
      %s202 = sphi 0, %s188
      %s206 = sphi 0, %s206
      %s208 = sphi 0, %s206
      %s209 = sphi 0, %s208
      %s223 = sphi 0, %s209
      %s227 = sphi 0, %s227
      %s229 = sphi 0, %s227
      %s230 = sphi 0, %s229
      %s244 = sphi 0, %s230
      %s248 = sphi 0, %s248
      %s250 = sphi 0, %s248
      %s251 = sphi 0, %s250
      %s265 = sphi 0, %s251
      %s269 = sphi 0, %s269
      %s271 = sphi 0, %s269
      %s272 = sphi 0, %s271
      %s286 = sphi 0, %s272
      %s290 = sphi 0, %s290
      %s292 = sphi 0, %s290
      %s293 = sphi 0, %s292
      %s307 = sphi 0, %s293
      %s311 = sphi 0, %s311
      %s313 = sphi 0, %s311
      %s314 = sphi 0, %s313
      %s328 = sphi 0, %s314
      %s332 = sphi 0, %s332
      %s334 = sphi 0, %s332
      %s335 = sphi 0, %s334
      %s349 = sphi 0, %s335
      %s353 = sphi 0, %s353
      %s355 = sphi 0, %s353
      %s356 = sphi 0, %s355
      %s370 = sphi 0, %s356
      %s374 = sphi 0, %s374
      %s376 = sphi 0, %s374
      %s377 = sphi 0, %s376
      %s391 = sphi 0, %s377
      %s395 = sphi 0, %s395
      %s397 = sphi 0, %s395
      %s398 = sphi 0, %s397
      %s412 = sphi 0, %s398
      %s416 = sphi 0, %s416
      %s418 = sphi 0, %s416
      %s419 = sphi 0, %s418
      %s433 = sphi 0, %s419
      %s437 = sphi 0, %s437
      %s439 = sphi 0, %s437
      %s440 = sphi 0, %s439
      %s454 = sphi 0, %s440
      %s460 = sphi 0, %s462
      %s463 = sphi 0, %s460
      %s464 = sphi 0, %s463
      %s480 = sphi 0, %s464
    $region4: #{transformer_forward.1} parent=1 // loop_header_branch
      %39 = sbr.rel (%p37) target = $region8
    $region5: #{transformer_forward.1} parent=1 // loop_body
      %s41 = ssub.s32 %s36, 1
      %s42 = ssub.s32 %s36, 2
      %s43 = sadd.s32 %s36, 1
      %s44 = ssub.s32 %s36, %s43
      %p45 = scmp.eq.s32.totalorder %s44, 0
      %s47 = sadd.s32 %s46, 1
      %s48 = scalar_select %p45, %s46, %s47
      %p51 = pneg %p45
      %p52 = scmp.eq.s32.totalorder %s36, 1
      %p53 = por %p51, %p52
      %p54 = scmp.ne.s32.totalorder %s46, %s49
      %p55 = scmp.eq.s32.totalorder %s36, 0
      %p56 = por %p54, %p55
      %p57 = scmp.ne.s32.totalorder %s46, %s49
      %p58 = scmp.eq.s32.totalorder %s41, 1
      %p59 = por %p57, %p58
      %p60 = scmp.ne.s32.totalorder %s49, %s50
      %p61 = scmp.eq.s32.totalorder %s41, 0
      %p62 = por %p60, %p61
      %p63 = scmp.ne.s32.totalorder %s49, %s50
      %p64 = scmp.eq.s32.totalorder %s42, 1
      %p65 = por %p63, %p64
      %p67 = scmp.ne.s32.totalorder %s50, %s66
      %p68 = scmp.eq.s32.totalorder %s42, 0
      %p69 = por %p67, %p68
      %s70 = ssub.s32 %s36, %s43
      %p71 = scmp.eq.s32.totalorder %s70, 0
      %s73 = sadd.s32 %s72, 1
      %s74 = scalar_select %p71, %s72, %s73
      %p77 = pneg %p71
      %p78 = scmp.eq.s32.totalorder %s36, 1
      %p79 = por %p77, %p78
      %p80 = scmp.ne.s32.totalorder %s72, %s75
      %p81 = scmp.eq.s32.totalorder %s36, 0
      %p82 = por %p80, %p81
      %p83 = scmp.ne.s32.totalorder %s72, %s75
      %p84 = scmp.eq.s32.totalorder %s41, 1
      %p85 = por %p83, %p84
      %p86 = scmp.ne.s32.totalorder %s75, %s76
      %p87 = scmp.eq.s32.totalorder %s41, 0
      %p88 = por %p86, %p87
      %p89 = scmp.ne.s32.totalorder %s75, %s76
      %p90 = scmp.eq.s32.totalorder %s42, 1
      %p91 = por %p89, %p90
      %p93 = scmp.ne.s32.totalorder %s76, %s92
      %p94 = scmp.eq.s32.totalorder %s42, 0
      %p95 = por %p93, %p94
      %s96 = ssub.s32 %s36, %s43
      %p97 = scmp.eq.s32.totalorder %s96, 0
      %s99 = sadd.s32 %s98, 1
      %s100 = scalar_select %p97, %s98, %s99
      %p103 = pneg %p97
      %p104 = scmp.eq.s32.totalorder %s36, 1
      %p105 = por %p103, %p104
      %p106 = scmp.ne.s32.totalorder %s98, %s101
      %p107 = scmp.eq.s32.totalorder %s36, 0
      %p108 = por %p106, %p107
      %p109 = scmp.ne.s32.totalorder %s98, %s101
      %p110 = scmp.eq.s32.totalorder %s41, 1
      %p111 = por %p109, %p110
      %p112 = scmp.ne.s32.totalorder %s101, %s102
      %p113 = scmp.eq.s32.totalorder %s41, 0
      %p114 = por %p112, %p113
      %p115 = scmp.ne.s32.totalorder %s101, %s102
      %p116 = scmp.eq.s32.totalorder %s42, 1
      %p117 = por %p115, %p116
      %p119 = scmp.ne.s32.totalorder %s102, %s118
      %p120 = scmp.eq.s32.totalorder %s42, 0
      %p121 = por %p119, %p120
      %s123 = sadd.s32 %s122, 1
      %p126 = scmp.eq.s32.totalorder %s36, 1
      %p127 = scmp.ne.s32.totalorder %s122, %s124
      %p128 = scmp.eq.s32.totalorder %s36, 0
      %p129 = por %p127, %p128
      %p130 = scmp.ne.s32.totalorder %s122, %s124
      %p131 = scmp.eq.s32.totalorder %s41, 1
      %p132 = por %p130, %p131
      %p133 = scmp.ne.s32.totalorder %s124, %s125
      %p134 = scmp.eq.s32.totalorder %s41, 0
      %p135 = por %p133, %p134
      %p136 = scmp.ne.s32.totalorder %s124, %s125
      %p137 = scmp.eq.s32.totalorder %s42, 1
      %p138 = por %p136, %p137
      %p140 = scmp.ne.s32.totalorder %s125, %s139
      %p141 = scmp.eq.s32.totalorder %s42, 0
      %p142 = por %p140, %p141
      %s144 = sadd.s32 %s143, 1
      %p147 = scmp.eq.s32.totalorder %s36, 1
      %p148 = scmp.ne.s32.totalorder %s143, %s145
      %p149 = scmp.eq.s32.totalorder %s36, 0
      %p150 = por %p148, %p149
      %p151 = scmp.ne.s32.totalorder %s143, %s145
      %p152 = scmp.eq.s32.totalorder %s41, 1
      %p153 = por %p151, %p152
      %p154 = scmp.ne.s32.totalorder %s145, %s146
      %p155 = scmp.eq.s32.totalorder %s41, 0
      %p156 = por %p154, %p155
      %p157 = scmp.ne.s32.totalorder %s145, %s146
      %p158 = scmp.eq.s32.totalorder %s42, 1
      %p159 = por %p157, %p158
      %p161 = scmp.ne.s32.totalorder %s146, %s160
      %p162 = scmp.eq.s32.totalorder %s42, 0
      %p163 = por %p161, %p162
      %s165 = sadd.s32 %s164, 1
      %p168 = scmp.eq.s32.totalorder %s36, 1
      %p169 = scmp.ne.s32.totalorder %s164, %s166
      %p170 = scmp.eq.s32.totalorder %s36, 0
      %p171 = por %p169, %p170
      %p172 = scmp.ne.s32.totalorder %s164, %s166
      %p173 = scmp.eq.s32.totalorder %s41, 1
      %p174 = por %p172, %p173
      %p175 = scmp.ne.s32.totalorder %s166, %s167
      %p176 = scmp.eq.s32.totalorder %s41, 0
      %p177 = por %p175, %p176
      %p178 = scmp.ne.s32.totalorder %s166, %s167
      %p179 = scmp.eq.s32.totalorder %s42, 1
      %p180 = por %p178, %p179
      %p182 = scmp.ne.s32.totalorder %s167, %s181
      %p183 = scmp.eq.s32.totalorder %s42, 0
      %p184 = por %p182, %p183
      %s186 = sadd.s32 %s185, 1
      %p189 = scmp.eq.s32.totalorder %s36, 1
      %p190 = scmp.ne.s32.totalorder %s185, %s187
      %p191 = scmp.eq.s32.totalorder %s36, 0
      %p192 = por %p190, %p191
      %p193 = scmp.ne.s32.totalorder %s185, %s187
      %p194 = scmp.eq.s32.totalorder %s41, 1
      %p195 = por %p193, %p194
      %p196 = scmp.ne.s32.totalorder %s187, %s188
      %p197 = scmp.eq.s32.totalorder %s41, 0
      %p198 = por %p196, %p197
      %p199 = scmp.ne.s32.totalorder %s187, %s188
      %p200 = scmp.eq.s32.totalorder %s42, 1
      %p201 = por %p199, %p200
      %p203 = scmp.ne.s32.totalorder %s188, %s202
      %p204 = scmp.eq.s32.totalorder %s42, 0
      %p205 = por %p203, %p204
      %s207 = sadd.s32 %s206, 1
      %p210 = scmp.eq.s32.totalorder %s36, 1
      %p211 = scmp.ne.s32.totalorder %s206, %s208
      %p212 = scmp.eq.s32.totalorder %s36, 0
      %p213 = por %p211, %p212
      %p214 = scmp.ne.s32.totalorder %s206, %s208
      %p215 = scmp.eq.s32.totalorder %s41, 1
      %p216 = por %p214, %p215
      %p217 = scmp.ne.s32.totalorder %s208, %s209
      %p218 = scmp.eq.s32.totalorder %s41, 0
      %p219 = por %p217, %p218
      %p220 = scmp.ne.s32.totalorder %s208, %s209
      %p221 = scmp.eq.s32.totalorder %s42, 1
      %p222 = por %p220, %p221
      %p224 = scmp.ne.s32.totalorder %s209, %s223
      %p225 = scmp.eq.s32.totalorder %s42, 0
      %p226 = por %p224, %p225
      %s228 = sadd.s32 %s227, 1
      %p231 = scmp.eq.s32.totalorder %s36, 1
      %p232 = scmp.ne.s32.totalorder %s227, %s229
      %p233 = scmp.eq.s32.totalorder %s36, 0
      %p234 = por %p232, %p233
      %p235 = scmp.ne.s32.totalorder %s227, %s229
      %p236 = scmp.eq.s32.totalorder %s41, 1
      %p237 = por %p235, %p236
      %p238 = scmp.ne.s32.totalorder %s229, %s230
      %p239 = scmp.eq.s32.totalorder %s41, 0
      %p240 = por %p238, %p239
      %p241 = scmp.ne.s32.totalorder %s229, %s230
      %p242 = scmp.eq.s32.totalorder %s42, 1
      %p243 = por %p241, %p242
      %p245 = scmp.ne.s32.totalorder %s230, %s244
      %p246 = scmp.eq.s32.totalorder %s42, 0
      %p247 = por %p245, %p246
      %s249 = sadd.s32 %s248, 1
      %p252 = scmp.eq.s32.totalorder %s36, 1
      %p253 = scmp.ne.s32.totalorder %s248, %s250
      %p254 = scmp.eq.s32.totalorder %s36, 0
      %p255 = por %p253, %p254
      %p256 = scmp.ne.s32.totalorder %s248, %s250
      %p257 = scmp.eq.s32.totalorder %s41, 1
      %p258 = por %p256, %p257
      %p259 = scmp.ne.s32.totalorder %s250, %s251
      %p260 = scmp.eq.s32.totalorder %s41, 0
      %p261 = por %p259, %p260
      %p262 = scmp.ne.s32.totalorder %s250, %s251
      %p263 = scmp.eq.s32.totalorder %s42, 1
      %p264 = por %p262, %p263
      %p266 = scmp.ne.s32.totalorder %s251, %s265
      %p267 = scmp.eq.s32.totalorder %s42, 0
      %p268 = por %p266, %p267
      %s270 = sadd.s32 %s269, 1
      %p273 = scmp.eq.s32.totalorder %s36, 1
      %p274 = scmp.ne.s32.totalorder %s269, %s271
      %p275 = scmp.eq.s32.totalorder %s36, 0
      %p276 = por %p274, %p275
      %p277 = scmp.ne.s32.totalorder %s269, %s271
      %p278 = scmp.eq.s32.totalorder %s41, 1
      %p279 = por %p277, %p278
      %p280 = scmp.ne.s32.totalorder %s271, %s272
      %p281 = scmp.eq.s32.totalorder %s41, 0
      %p282 = por %p280, %p281
      %p283 = scmp.ne.s32.totalorder %s271, %s272
      %p284 = scmp.eq.s32.totalorder %s42, 1
      %p285 = por %p283, %p284
      %p287 = scmp.ne.s32.totalorder %s272, %s286
      %p288 = scmp.eq.s32.totalorder %s42, 0
      %p289 = por %p287, %p288
      %s291 = sadd.s32 %s290, 1
      %p294 = scmp.eq.s32.totalorder %s36, 1
      %p295 = scmp.ne.s32.totalorder %s290, %s292
      %p296 = scmp.eq.s32.totalorder %s36, 0
      %p297 = por %p295, %p296
      %p298 = scmp.ne.s32.totalorder %s290, %s292
      %p299 = scmp.eq.s32.totalorder %s41, 1
      %p300 = por %p298, %p299
      %p301 = scmp.ne.s32.totalorder %s292, %s293
      %p302 = scmp.eq.s32.totalorder %s41, 0
      %p303 = por %p301, %p302
      %p304 = scmp.ne.s32.totalorder %s292, %s293
      %p305 = scmp.eq.s32.totalorder %s42, 1
      %p306 = por %p304, %p305
      %p308 = scmp.ne.s32.totalorder %s293, %s307
      %p309 = scmp.eq.s32.totalorder %s42, 0
      %p310 = por %p308, %p309
      %s312 = sadd.s32 %s311, 1
      %p315 = scmp.eq.s32.totalorder %s36, 1
      %p316 = scmp.ne.s32.totalorder %s311, %s313
      %p317 = scmp.eq.s32.totalorder %s36, 0
      %p318 = por %p316, %p317
      %p319 = scmp.ne.s32.totalorder %s311, %s313
      %p320 = scmp.eq.s32.totalorder %s41, 1
      %p321 = por %p319, %p320
      %p322 = scmp.ne.s32.totalorder %s313, %s314
      %p323 = scmp.eq.s32.totalorder %s41, 0
      %p324 = por %p322, %p323
      %p325 = scmp.ne.s32.totalorder %s313, %s314
      %p326 = scmp.eq.s32.totalorder %s42, 1
      %p327 = por %p325, %p326
      %p329 = scmp.ne.s32.totalorder %s314, %s328
      %p330 = scmp.eq.s32.totalorder %s42, 0
      %p331 = por %p329, %p330
      %s333 = sadd.s32 %s332, 1
      %p336 = scmp.eq.s32.totalorder %s36, 1
      %p337 = scmp.ne.s32.totalorder %s332, %s334
      %p338 = scmp.eq.s32.totalorder %s36, 0
      %p339 = por %p337, %p338
      %p340 = scmp.ne.s32.totalorder %s332, %s334
      %p341 = scmp.eq.s32.totalorder %s41, 1
      %p342 = por %p340, %p341
      %p343 = scmp.ne.s32.totalorder %s334, %s335
      %p344 = scmp.eq.s32.totalorder %s41, 0
      %p345 = por %p343, %p344
      %p346 = scmp.ne.s32.totalorder %s334, %s335
      %p347 = scmp.eq.s32.totalorder %s42, 1
      %p348 = por %p346, %p347
      %p350 = scmp.ne.s32.totalorder %s335, %s349
      %p351 = scmp.eq.s32.totalorder %s42, 0
      %p352 = por %p350, %p351
      %s354 = sadd.s32 %s353, 1
      %p357 = scmp.eq.s32.totalorder %s36, 1
      %p358 = scmp.ne.s32.totalorder %s353, %s355
      %p359 = scmp.eq.s32.totalorder %s36, 0
      %p360 = por %p358, %p359
      %p361 = scmp.ne.s32.totalorder %s353, %s355
      %p362 = scmp.eq.s32.totalorder %s41, 1
      %p363 = por %p361, %p362
      %p364 = scmp.ne.s32.totalorder %s355, %s356
      %p365 = scmp.eq.s32.totalorder %s41, 0
      %p366 = por %p364, %p365
      %p367 = scmp.ne.s32.totalorder %s355, %s356
      %p368 = scmp.eq.s32.totalorder %s42, 1
      %p369 = por %p367, %p368
      %p371 = scmp.ne.s32.totalorder %s356, %s370
      %p372 = scmp.eq.s32.totalorder %s42, 0
      %p373 = por %p371, %p372
      %s375 = sadd.s32 %s374, 1
      %p378 = scmp.eq.s32.totalorder %s36, 1
      %p379 = scmp.ne.s32.totalorder %s374, %s376
      %p380 = scmp.eq.s32.totalorder %s36, 0
      %p381 = por %p379, %p380
      %p382 = scmp.ne.s32.totalorder %s374, %s376
      %p383 = scmp.eq.s32.totalorder %s41, 1
      %p384 = por %p382, %p383
      %p385 = scmp.ne.s32.totalorder %s376, %s377
      %p386 = scmp.eq.s32.totalorder %s41, 0
      %p387 = por %p385, %p386
      %p388 = scmp.ne.s32.totalorder %s376, %s377
      %p389 = scmp.eq.s32.totalorder %s42, 1
      %p390 = por %p388, %p389
      %p392 = scmp.ne.s32.totalorder %s377, %s391
      %p393 = scmp.eq.s32.totalorder %s42, 0
      %p394 = por %p392, %p393
      %s396 = sadd.s32 %s395, 1
      %p399 = scmp.eq.s32.totalorder %s36, 1
      %p400 = scmp.ne.s32.totalorder %s395, %s397
      %p401 = scmp.eq.s32.totalorder %s36, 0
      %p402 = por %p400, %p401
      %p403 = scmp.ne.s32.totalorder %s395, %s397
      %p404 = scmp.eq.s32.totalorder %s41, 1
      %p405 = por %p403, %p404
      %p406 = scmp.ne.s32.totalorder %s397, %s398
      %p407 = scmp.eq.s32.totalorder %s41, 0
      %p408 = por %p406, %p407
      %p409 = scmp.ne.s32.totalorder %s397, %s398
      %p410 = scmp.eq.s32.totalorder %s42, 1
      %p411 = por %p409, %p410
      %p413 = scmp.ne.s32.totalorder %s398, %s412
      %p414 = scmp.eq.s32.totalorder %s42, 0
      %p415 = por %p413, %p414
      %s417 = sadd.s32 %s416, 1
      %p420 = scmp.eq.s32.totalorder %s36, 1
      %p421 = scmp.ne.s32.totalorder %s416, %s418
      %p422 = scmp.eq.s32.totalorder %s36, 0
      %p423 = por %p421, %p422
      %p424 = scmp.ne.s32.totalorder %s416, %s418
      %p425 = scmp.eq.s32.totalorder %s41, 1
      %p426 = por %p424, %p425
      %p427 = scmp.ne.s32.totalorder %s418, %s419
      %p428 = scmp.eq.s32.totalorder %s41, 0
      %p429 = por %p427, %p428
      %p430 = scmp.ne.s32.totalorder %s418, %s419
      %p431 = scmp.eq.s32.totalorder %s42, 1
      %p432 = por %p430, %p431
      %p434 = scmp.ne.s32.totalorder %s419, %s433
      %p435 = scmp.eq.s32.totalorder %s42, 0
      %p436 = por %p434, %p435
      %s438 = sadd.s32 %s437, 1
      %p441 = scmp.eq.s32.totalorder %s36, 1
      %p442 = scmp.ne.s32.totalorder %s437, %s439
      %p443 = scmp.eq.s32.totalorder %s36, 0
      %p444 = por %p442, %p443
      %p445 = scmp.ne.s32.totalorder %s437, %s439
      %p446 = scmp.eq.s32.totalorder %s41, 1
      %p447 = por %p445, %p446
      %p448 = scmp.ne.s32.totalorder %s439, %s440
      %p449 = scmp.eq.s32.totalorder %s41, 0
      %p450 = por %p448, %p449
      %p451 = scmp.ne.s32.totalorder %s439, %s440
      %p452 = scmp.eq.s32.totalorder %s42, 1
      %p453 = por %p451, %p452
      %p455 = scmp.ne.s32.totalorder %s440, %s454
      %p456 = scmp.eq.s32.totalorder %s42, 0
      %p457 = por %p455, %p456
      %s458 = ssub.s32 %s36, %s43
      %p459 = scmp.eq.s32.totalorder %s458, 0
      %s461 = sadd.s32 %s460, 1
      %s462 = scalar_select %p459, %s460, %s461
      %p465 = pneg %p459
      %p466 = scmp.eq.s32.totalorder %s36, 1
      %p467 = por %p465, %p466
      %p468 = scmp.ne.s32.totalorder %s460, %s463
      %p469 = scmp.eq.s32.totalorder %s36, 0
      %p470 = por %p468, %p469
      %p471 = scmp.ne.s32.totalorder %s460, %s463
      %p472 = scmp.eq.s32.totalorder %s41, 1
      %p473 = por %p471, %p472
      %p474 = scmp.ne.s32.totalorder %s463, %s464
      %p475 = scmp.eq.s32.totalorder %s41, 0
      %p476 = por %p474, %p475
      %p477 = scmp.ne.s32.totalorder %s463, %s464
      %p478 = scmp.eq.s32.totalorder %s42, 1
      %p479 = por %p477, %p478
      %p481 = scmp.ne.s32.totalorder %s464, %s480
      %p482 = scmp.eq.s32.totalorder %s42, 0
      %p483 = por %p481, %p482
      %p484 = scmp.le.s32.totalorder 1, %s36
      %p485 = scmp.lt.s32.totalorder %s36, 3
      %p486 = pnand %p484, %p485
      %p487 = pneg %p486
      // Predicated region
      $region9: #{transformer_forward.1} parent=5 // pred_check
        _
      $region10: #{transformer_forward.1} parent=5 // pred_check_branch
        %489 = sbr.rel (%p486) target = $region12
      $region11: #{transformer_forward.1} parent=5 // pred_region
        %s490 = ssub.s32 %s36, 1
        // Predicated region
        $region13: #{transformer_forward.1} parent=11 // pred_check
          %p491 = pneg %p135
        $region14: #{transformer_forward.1} parent=11 // pred_check_branch
          %493 = sbr.rel (%p491) target = $region16
        $region15: #{transformer_forward.1} parent=11 // pred_region
          %s495 = ssub.s32 12288, 12288
          %496 = vsyncadd [#allocation3], %s495
          %s497 = sshll.u32 [#allocation2], 4
          %s498 = int_to_ptr.vmem [resolvable:$true] %s497
          %503 = dma.hbm_to_vmem [thread:$0]  %s3, 12288, %s498, [#allocation3], 384, 384, 24
        $region16: #{transformer_forward.1} parent=11 // pred_fallthru
          _
        // Predicated region
        $region17: #{transformer_forward.1} parent=11 // pred_check
          %p504 = pneg %p156
        $region18: #{transformer_forward.1} parent=11 // pred_check_branch
          %506 = sbr.rel (%p504) target = $region20
        $region19: #{transformer_forward.1} parent=11 // pred_region
          _
        $region20: #{transformer_forward.1} parent=11 // pred_fallthru
          _
        // Predicated region
        $region21: #{transformer_forward.1} parent=11 // pred_check
          %p507 = pneg %p177
        $region22: #{transformer_forward.1} parent=11 // pred_check_branch
          %509 = sbr.rel (%p507) target = $region24
        $region23: #{transformer_forward.1} parent=11 // pred_region
          %s511 = ssub.s32 8192, 8192
          %512 = vsyncadd [#allocation6], %s511
          %s513 = sshll.u32 [#allocation5], 4
          %s514 = int_to_ptr.vmem [resolvable:$true] %s513
          %519 = dma.hbm_to_vmem [thread:$0]  %s5, 8192, %s514, [#allocation6], 256, 256, 16
        $region24: #{transformer_forward.1} parent=11 // pred_fallthru
          _
        // Predicated region
        $region25: #{transformer_forward.1} parent=11 // pred_check
          %p520 = pneg %p198
        $region26: #{transformer_forward.1} parent=11 // pred_check_branch
          %522 = sbr.rel (%p520) target = $region28
        $region27: #{transformer_forward.1} parent=11 // pred_region
          %s524 = ssub.s32 8192, 8192
          %525 = vsyncadd [#allocation6], %s524
          %s526 = sshll.u32 [#allocation7], 4
          %s527 = int_to_ptr.vmem [resolvable:$true] %s526
          %532 = dma.hbm_to_vmem [thread:$0]  %s6, 8192, %s527, [#allocation6], 128, 128, 8
        $region28: #{transformer_forward.1} parent=11 // pred_fallthru
          _
        // Predicated region
        $region29: #{transformer_forward.1} parent=11 // pred_check
          %p533 = pneg %p219
        $region30: #{transformer_forward.1} parent=11 // pred_check_branch
          %535 = sbr.rel (%p533) target = $region32
        $region31: #{transformer_forward.1} parent=11 // pred_region
          %s537 = ssub.s32 352, 352
          %538 = vsyncadd [#allocation9], %s537
          %s540 = sshll.u32 [#allocation8], 4
          %s541 = int_to_ptr.vmem [resolvable:$true] %s540
          %543 = dma.hbm_to_vmem [thread:$0]  %s7, 352, %s541, [#allocation9]
        $region32: #{transformer_forward.1} parent=11 // pred_fallthru
          _
        // Predicated region
        $region33: #{transformer_forward.1} parent=11 // pred_check
          %p544 = pneg %p240
        $region34: #{transformer_forward.1} parent=11 // pred_check_branch
          %546 = sbr.rel (%p544) target = $region36
        $region35: #{transformer_forward.1} parent=11 // pred_region
          %s548 = ssub.s32 12288, 12288
          %549 = vsyncadd [#allocation9], %s548
          %s550 = sshll.u32 [#allocation10], 4
          %s551 = int_to_ptr.vmem [resolvable:$true] %s550
          %556 = dma.hbm_to_vmem [thread:$0]  %s8, 12288, %s551, [#allocation9], 384, 384, 24
        $region36: #{transformer_forward.1} parent=11 // pred_fallthru
          _
        // Predicated region
        $region37: #{transformer_forward.1} parent=11 // pred_check
          %p557 = pneg %p261
        $region38: #{transformer_forward.1} parent=11 // pred_check_branch
          %559 = sbr.rel (%p557) target = $region40
        $region39: #{transformer_forward.1} parent=11 // pred_region
          %s561 = ssub.s32 4096, 4096
          %562 = vsyncadd [#allocation12], %s561
          %s563 = sshll.u32 [#allocation11], 4
          %s564 = int_to_ptr.vmem [resolvable:$true] %s563
          %569 = dma.hbm_to_vmem [thread:$0]  %s9, 4096, %s564, [#allocation12], 128, 128, 8
        $region40: #{transformer_forward.1} parent=11 // pred_fallthru
          _
        // Predicated region
        $region41: #{transformer_forward.1} parent=11 // pred_check
          %p570 = pneg %p282
        $region42: #{transformer_forward.1} parent=11 // pred_check_branch
          %572 = sbr.rel (%p570) target = $region44
        $region43: #{transformer_forward.1} parent=11 // pred_region
          %s574 = ssub.s32 4096, 4096
          %575 = vsyncadd [#allocation12], %s574
          %s576 = sshll.u32 [#allocation13], 4
          %s577 = int_to_ptr.vmem [resolvable:$true] %s576
          %582 = dma.hbm_to_vmem [thread:$0]  %s10, 4096, %s577, [#allocation12], 128, 128, 8
        $region44: #{transformer_forward.1} parent=11 // pred_fallthru
          _
        // Predicated region
        $region45: #{transformer_forward.1} parent=11 // pred_check
          %p583 = pneg %p303
        $region46: #{transformer_forward.1} parent=11 // pred_check_branch
          %585 = sbr.rel (%p583) target = $region48
        $region47: #{transformer_forward.1} parent=11 // pred_region
          %s587 = ssub.s32 8192, 8192
          %588 = vsyncadd [#allocation15], %s587
          %s589 = sshll.u32 [#allocation14], 4
          %s590 = int_to_ptr.vmem [resolvable:$true] %s589
          %595 = dma.hbm_to_vmem [thread:$0]  %s11, 8192, %s590, [#allocation15], 256, 256, 16
        $region48: #{transformer_forward.1} parent=11 // pred_fallthru
          _
        // Predicated region
        $region49: #{transformer_forward.1} parent=11 // pred_check
          %p596 = pneg %p324
        $region50: #{transformer_forward.1} parent=11 // pred_check_branch
          %598 = sbr.rel (%p596) target = $region52
        $region51: #{transformer_forward.1} parent=11 // pred_region
          %s600 = ssub.s32 4096, 4096
          %601 = vsyncadd [#allocation15], %s600
          %s602 = sshll.u32 [#allocation16], 4
          %s603 = int_to_ptr.vmem [resolvable:$true] %s602
          %608 = dma.hbm_to_vmem [thread:$0]  %s12, 4096, %s603, [#allocation15], 128, 128, 8
        $region52: #{transformer_forward.1} parent=11 // pred_fallthru
          _
        // Predicated region
        $region53: #{transformer_forward.1} parent=11 // pred_check
          %p609 = pneg %p345
        $region54: #{transformer_forward.1} parent=11 // pred_check_branch
          %611 = sbr.rel (%p609) target = $region56
        $region55: #{transformer_forward.1} parent=11 // pred_region
          %s613 = ssub.s32 8192, 8192
          %614 = vsyncadd [#allocation18], %s613
          %s615 = sshll.u32 [#allocation17], 4
          %s616 = int_to_ptr.vmem [resolvable:$true] %s615
          %621 = dma.hbm_to_vmem [thread:$0]  %s13, 8192, %s616, [#allocation18], 256, 256, 16
        $region56: #{transformer_forward.1} parent=11 // pred_fallthru
          _
        // Predicated region
        $region57: #{transformer_forward.1} parent=11 // pred_check
          %p622 = pneg %p366
        $region58: #{transformer_forward.1} parent=11 // pred_check_branch
          %624 = sbr.rel (%p622) target = $region60
        $region59: #{transformer_forward.1} parent=11 // pred_region
          %s626 = ssub.s32 8192, 8192
          %627 = vsyncadd [#allocation18], %s626
          %s628 = sshll.u32 [#allocation19], 4
          %s629 = int_to_ptr.vmem [resolvable:$true] %s628
          %634 = dma.hbm_to_vmem [thread:$0]  %s14, 8192, %s629, [#allocation18], 128, 128, 8
        $region60: #{transformer_forward.1} parent=11 // pred_fallthru
          _
        // Predicated region
        $region61: #{transformer_forward.1} parent=11 // pred_check
          %p635 = pneg %p387
        $region62: #{transformer_forward.1} parent=11 // pred_check_branch
          %637 = sbr.rel (%p635) target = $region64
        $region63: #{transformer_forward.1} parent=11 // pred_region
          %s639 = ssub.s32 544, 544
          %640 = vsyncadd [#allocation21], %s639
          %s642 = sshll.u32 [#allocation20], 4
          %s643 = int_to_ptr.vmem [resolvable:$true] %s642
          %645 = dma.hbm_to_vmem [thread:$0]  %s15, 544, %s643, [#allocation21]
        $region64: #{transformer_forward.1} parent=11 // pred_fallthru
          _
        // Predicated region
        $region65: #{transformer_forward.1} parent=11 // pred_check
          %p646 = pneg %p408
        $region66: #{transformer_forward.1} parent=11 // pred_check_branch
          %648 = sbr.rel (%p646) target = $region68
        $region67: #{transformer_forward.1} parent=11 // pred_region
          _
        $region68: #{transformer_forward.1} parent=11 // pred_fallthru
          _
        // Predicated region
        $region69: #{transformer_forward.1} parent=11 // pred_check
          %p649 = pneg %p429
        $region70: #{transformer_forward.1} parent=11 // pred_check_branch
          %651 = sbr.rel (%p649) target = $region72
        $region71: #{transformer_forward.1} parent=11 // pred_region
          %s653 = ssub.s32 2048, 2048
          %654 = vsyncadd [#allocation21], %s653
          %s655 = sshll.u32 [#allocation22], 4
          %s656 = int_to_ptr.vmem [resolvable:$true] %s655
          %661 = dma.hbm_to_vmem [thread:$0]  %s17, 2048, %s656, [#allocation21], 128, 128, 8
        $region72: #{transformer_forward.1} parent=11 // pred_fallthru
          _
        // Predicated region
        $region73: #{transformer_forward.1} parent=11 // pred_check
          %p662 = pneg %p450
        $region74: #{transformer_forward.1} parent=11 // pred_check_branch
          %664 = sbr.rel (%p662) target = $region76
        $region75: #{transformer_forward.1} parent=11 // pred_region
          %s666 = ssub.s32 32, 32
          %667 = vsyncadd [#allocation24], %s666
          %s669 = sshll.u32 [#allocation23], 4
          %s670 = int_to_ptr.vmem [resolvable:$true] %s669
          %672 = dma.hbm_to_vmem [thread:$0]  %s18, 32, %s670, [#allocation24]
        $region76: #{transformer_forward.1} parent=11 // pred_fallthru
          _
      $region12: #{transformer_forward.1} parent=5 // pred_fallthru
        _
      %p673 = scmp.lt.s32.totalorder %s36, 2
      // Predicated region
      $region77: #{transformer_forward.1} parent=5 // pred_check
        %p674 = pneg %p673
      $region78: #{transformer_forward.1} parent=5 // pred_check_branch
        %676 = sbr.rel (%p674) target = $region80
      $region79: #{transformer_forward.1} parent=5 // pred_region
        // Predicated region
        $region81: #{transformer_forward.1} parent=79 // pred_check
          %p677 = pneg %p56
        $region82: #{transformer_forward.1} parent=79 // pred_check_branch
          %679 = sbr.rel (%p677) target = $region84
        $region83: #{transformer_forward.1} parent=79 // pred_region
          %p680 = scmp.lt.s32.totalorder %s36, 1
          %s681 = scalar_select %p680, %s36, 1
          %s682 = smul.addr %s681, 2
          %s683 = smul.addr %s682, 8
          %s684 = scalar_lea.vmem %s0, %s683
        $region84: #{transformer_forward.1} parent=79 // pred_fallthru
          _
        // Predicated region
        $region85: #{transformer_forward.1} parent=79 // pred_check
          %p685 = pneg %p82
        $region86: #{transformer_forward.1} parent=79 // pred_check_branch
          %687 = sbr.rel (%p685) target = $region88
        $region87: #{transformer_forward.1} parent=79 // pred_region
          %p688 = scmp.lt.s32.totalorder %s36, 1
          %s689 = scalar_select %p688, %s36, 1
          %s690 = smul.addr %s689, 8
          %s691 = scalar_lea.vmem %s1, %s690
        $region88: #{transformer_forward.1} parent=79 // pred_fallthru
          _
        // Predicated region
        $region89: #{transformer_forward.1} parent=79 // pred_check
          %p692 = pneg %p108
        $region90: #{transformer_forward.1} parent=79 // pred_check_branch
          %694 = sbr.rel (%p692) target = $region92
        $region91: #{transformer_forward.1} parent=79 // pred_region
          %p695 = scmp.lt.s32.totalorder %s36, 1
          %s696 = scalar_select %p695, %s36, 1
          %s697 = smul.addr %s696, 8
          %s698 = scalar_lea.vmem %s2, %s697
        $region92: #{transformer_forward.1} parent=79 // pred_fallthru
          _
      $region80: #{transformer_forward.1} parent=5 // pred_fallthru
        _
      %p699 = scmp.le.s32.totalorder 1, %s36
      %p700 = scmp.lt.s32.totalorder %s36, 3
      %p701 = pnand %p699, %p700
      %p702 = pneg %p701
      // Predicated region
      $region93: #{transformer_forward.1} parent=5 // pred_check
        _
      $region94: #{transformer_forward.1} parent=5 // pred_check_branch
        %704 = sbr.rel (%p701) target = $region96
      $region95: #{transformer_forward.1} parent=5 // pred_region
        %s705 = ssub.s32 %s36, 1
        // Predicated region
        $region97: #{transformer_forward.1} parent=95 // pred_check
          %p706 = pneg %p135
        $region98: #{transformer_forward.1} parent=95 // pred_check_branch
          %708 = sbr.rel (%p706) target = $region100
        $region99: #{transformer_forward.1} parent=95 // pred_region
          %709 = dma.done [#allocation3], 12288
        $region100: #{transformer_forward.1} parent=95 // pred_fallthru
          _
        // Predicated region
        $region101: #{transformer_forward.1} parent=95 // pred_check
          %p710 = pneg %p177
        $region102: #{transformer_forward.1} parent=95 // pred_check_branch
          %712 = sbr.rel (%p710) target = $region104
        $region103: #{transformer_forward.1} parent=95 // pred_region
          %713 = dma.done [#allocation6], 8192
        $region104: #{transformer_forward.1} parent=95 // pred_fallthru
          _
        // Predicated region
        $region105: #{transformer_forward.1} parent=95 // pred_check
          %p714 = pneg %p198
        $region106: #{transformer_forward.1} parent=95 // pred_check_branch
          %716 = sbr.rel (%p714) target = $region108
        $region107: #{transformer_forward.1} parent=95 // pred_region
          %717 = dma.done [#allocation6], 8192
        $region108: #{transformer_forward.1} parent=95 // pred_fallthru
          _
        // Predicated region
        $region109: #{transformer_forward.1} parent=95 // pred_check
          %p718 = pneg %p219
        $region110: #{transformer_forward.1} parent=95 // pred_check_branch
          %720 = sbr.rel (%p718) target = $region112
        $region111: #{transformer_forward.1} parent=95 // pred_region
          %721 = dma.done [#allocation9], 352
        $region112: #{transformer_forward.1} parent=95 // pred_fallthru
          _
        // Predicated region
        $region113: #{transformer_forward.1} parent=95 // pred_check
          %p722 = pneg %p240
        $region114: #{transformer_forward.1} parent=95 // pred_check_branch
          %724 = sbr.rel (%p722) target = $region116
        $region115: #{transformer_forward.1} parent=95 // pred_region
          %725 = dma.done [#allocation9], 12288
        $region116: #{transformer_forward.1} parent=95 // pred_fallthru
          _
        // Predicated region
        $region117: #{transformer_forward.1} parent=95 // pred_check
          %p726 = pneg %p261
        $region118: #{transformer_forward.1} parent=95 // pred_check_branch
          %728 = sbr.rel (%p726) target = $region120
        $region119: #{transformer_forward.1} parent=95 // pred_region
          %729 = dma.done [#allocation12], 4096
        $region120: #{transformer_forward.1} parent=95 // pred_fallthru
          _
        // Predicated region
        $region121: #{transformer_forward.1} parent=95 // pred_check
          %p730 = pneg %p282
        $region122: #{transformer_forward.1} parent=95 // pred_check_branch
          %732 = sbr.rel (%p730) target = $region124
        $region123: #{transformer_forward.1} parent=95 // pred_region
          %733 = dma.done [#allocation12], 4096
        $region124: #{transformer_forward.1} parent=95 // pred_fallthru
          _
        // Predicated region
        $region125: #{transformer_forward.1} parent=95 // pred_check
          %p734 = pneg %p303
        $region126: #{transformer_forward.1} parent=95 // pred_check_branch
          %736 = sbr.rel (%p734) target = $region128
        $region127: #{transformer_forward.1} parent=95 // pred_region
          %737 = dma.done [#allocation15], 8192
        $region128: #{transformer_forward.1} parent=95 // pred_fallthru
          _
        // Predicated region
        $region129: #{transformer_forward.1} parent=95 // pred_check
          %p738 = pneg %p324
        $region130: #{transformer_forward.1} parent=95 // pred_check_branch
          %740 = sbr.rel (%p738) target = $region132
        $region131: #{transformer_forward.1} parent=95 // pred_region
          %741 = dma.done [#allocation15], 4096
        $region132: #{transformer_forward.1} parent=95 // pred_fallthru
          _
        // Predicated region
        $region133: #{transformer_forward.1} parent=95 // pred_check
          %p742 = pneg %p345
        $region134: #{transformer_forward.1} parent=95 // pred_check_branch
          %744 = sbr.rel (%p742) target = $region136
        $region135: #{transformer_forward.1} parent=95 // pred_region
          %745 = dma.done [#allocation18], 8192
        $region136: #{transformer_forward.1} parent=95 // pred_fallthru
          _
        // Predicated region
        $region137: #{transformer_forward.1} parent=95 // pred_check
          %p746 = pneg %p366
        $region138: #{transformer_forward.1} parent=95 // pred_check_branch
          %748 = sbr.rel (%p746) target = $region140
        $region139: #{transformer_forward.1} parent=95 // pred_region
          %749 = dma.done [#allocation18], 8192
        $region140: #{transformer_forward.1} parent=95 // pred_fallthru
          _
        // Predicated region
        $region141: #{transformer_forward.1} parent=95 // pred_check
          %p750 = pneg %p387
        $region142: #{transformer_forward.1} parent=95 // pred_check_branch
          %752 = sbr.rel (%p750) target = $region144
        $region143: #{transformer_forward.1} parent=95 // pred_region
          %753 = dma.done [#allocation21], 544
        $region144: #{transformer_forward.1} parent=95 // pred_fallthru
          _
        // Predicated region
        $region145: #{transformer_forward.1} parent=95 // pred_check
          %p754 = pneg %p429
        $region146: #{transformer_forward.1} parent=95 // pred_check_branch
          %756 = sbr.rel (%p754) target = $region148
        $region147: #{transformer_forward.1} parent=95 // pred_region
          %757 = dma.done [#allocation21], 2048
        $region148: #{transformer_forward.1} parent=95 // pred_fallthru
          _
        // Predicated region
        $region149: #{transformer_forward.1} parent=95 // pred_check
          %p758 = pneg %p450
        $region150: #{transformer_forward.1} parent=95 // pred_check_branch
          %760 = sbr.rel (%p758) target = $region152
        $region151: #{transformer_forward.1} parent=95 // pred_region
          %761 = dma.done [#allocation24], 32
        $region152: #{transformer_forward.1} parent=95 // pred_fallthru
          _
        %p762 = scmp.lt.s32.totalorder %s41, 1
        %s763 = scalar_select %p762, %s41, 1
        %s764 = smul.addr %s763, 2
        %s765 = smul.addr %s764, 8
        %s766 = scalar_lea.vmem %s0, %s765
        %p767 = pneg %p62
        %p768 = pneg %p59
        %p769 = scmp.lt.s32.totalorder %s41, 1
        %s770 = scalar_select %p769, %s41, 1
        %s771 = smul.addr %s770, 8
        %s772 = scalar_lea.vmem %s1, %s771
        %p773 = pneg %p88
        %p774 = pneg %p85
        %p775 = scmp.lt.s32.totalorder %s41, 1
        %s776 = scalar_select %p775, %s41, 1
        %s777 = smul.addr %s776, 8
        %s778 = scalar_lea.vmem %s2, %s777
        %p779 = pneg %p114
        %p780 = pneg %p111
        %p781 = pneg %p135
        %p782 = pneg %p132
        %p783 = pneg %p156
        %p784 = pneg %p153
        %p785 = pneg %p177
        %p786 = pneg %p174
        %p787 = pneg %p198
        %p788 = pneg %p195
        %p789 = pneg %p219
        %p790 = pneg %p216
        %p791 = pneg %p240
        %p792 = pneg %p237
        %p793 = pneg %p261
        %p794 = pneg %p258
        %p795 = pneg %p282
        %p796 = pneg %p279
        %p797 = pneg %p303
        %p798 = pneg %p300
        %p799 = pneg %p324
        %p800 = pneg %p321
        %p801 = pneg %p345
        %p802 = pneg %p342
        %p803 = pneg %p366
        %p804 = pneg %p363
        %p805 = pneg %p387
        %p806 = pneg %p384
        %p807 = pneg %p408
        %p808 = pneg %p405
        %p809 = pneg %p429
        %p810 = pneg %p426
        %p811 = pneg %p450
        %p812 = pneg %p447
        %p813 = pneg %p476
        %p814 = pneg %p473
        %s815 = sand.u32 %s463, 1
        %s816 = scalar_lea.sflag [#allocation4], %s815
        %s817 = sand.u32 %s463, 1
        %s818 = smul.addr %s817, 8
        %s819 = scalar_lea.vmem [#allocation25], %s818
        %p820 = scmp.lt.s32.totalorder %s41, 1
        %s821 = scalar_select %p820, %s41, 1
        %s822 = smul.addr %s821, 2
        %s823 = smul.addr %s822, 8
        %s824 = scalar_lea.vmem %s0, %s823
        %p825 = scmp.lt.s32.totalorder %s41, 1
        %s826 = scalar_select %p825, %s41, 1
        %s827 = smul.addr %s826, 8
        %s828 = scalar_lea.vmem %s1, %s827
        %p829 = scmp.lt.s32.totalorder %s41, 1
        %s830 = scalar_select %p829, %s41, 1
        %s831 = smul.addr %s830, 8
        %s832 = scalar_lea.vmem %s2, %s831
        %v833 = vld [vmem:[%s824] sm:$0xff]
        %v834 = vld [vmem:[%s824 + $0x8] sm:$0xff]
        %v835 = vld [vmem:[#allocation8] ss:$2 sm:$0xff]
        %s836 = scalar_lea.vmem [#allocation8], 16
        %v837 = vld [vmem:[%s836] ss:$2 sm:$0x7]
        %838 = vadd.xlane.f32.xlu0 %v833
        %v839 = vpop.xlane.xlu0 %838
        %840 = vadd.xlane.f32.xlu0 %v834
        %v841 = vpop.xlane.xlu0 %840
        %v842 = vrcp.pop 128.0
        %v843 = vmul.f32 %v839, %v842
        %v844 = vmul.f32 %v841, %v842
        %v845 = vsub.f32 %v833, %v843
        %v846 = vsub.f32 %v834, %v844
        %v847 = vmul.f32 %v845, %v845
        %v848 = vmul.f32 %v846, %v846
        %849 = vadd.xlane.f32.xlu0 %v847
        %v850 = vpop.xlane.xlu0 %849
        %851 = vadd.xlane.f32.xlu0 %v848
        %v852 = vpop.xlane.xlu0 %851
        %v853 = vmul.f32 %v850, %v842
        %v854 = vmul.f32 %v852, %v842
        %v855 = vadd.f32 %v853, 1e-05
        %v856 = vadd.f32 %v854, 1e-05
        %v857 = vrsqrt.pop %v855
        %v858 = vrsqrt.pop %v856
        %v859 = vmul.f32 %v845, %v857
        %v860 = vmul.f32 %v846, %v858
        %v862 = vlaneseq
        %v863 = vshrl.u32 %v862, 7
        %v864 = vsub.s32 0, %v863
        %v865 = vrot.slane %v835, %v864
        %v867 = vmul.f32 %v859, %v865
        %v868 = vmul.f32 %v860, %v865
        %v869 = vrot.slane %v835, 1
        %v870 = vlaneseq
        %v871 = vshrl.u32 %v870, 7
        %v872 = vsub.s32 0, %v871
        %v873 = vrot.slane %v869, %v872
        %v875 = vadd.f32 %v867, %v873
        %v876 = vadd.f32 %v868, %v873
        %v877 = vld [vmem:[#allocation2] sm:$0xff]
        %v878 = vld [vmem:[#allocation2 + $0x8] sm:$0xff]
        %v879 = vld [vmem:[#allocation2 + $0x10] sm:$0xff]
        %v880 = vld [vmem:[#allocation2 + $0x18] sm:$0xff]
        %v881 = vld [vmem:[#allocation2 + $0x20] sm:$0xff]
        %v882 = vld [vmem:[#allocation2 + $0x28] sm:$0xff]
        %v883 = vld [vmem:[#allocation2 + $0x30] sm:$0xff]
        %v884 = vld [vmem:[#allocation2 + $0x38] sm:$0xff]
        %v885 = vld [vmem:[#allocation2 + $0x40] sm:$0xff]
        %v886 = vld [vmem:[#allocation2 + $0x48] sm:$0xff]
        %v887 = vld [vmem:[#allocation2 + $0x50] sm:$0xff]
        %v888 = vld [vmem:[#allocation2 + $0x58] sm:$0xff]
        %v889 = vld [vmem:[#allocation2 + $0x60] sm:$0xff]
        %v890 = vld [vmem:[#allocation2 + $0x68] sm:$0xff]
        %v891 = vld [vmem:[#allocation2 + $0x70] sm:$0xff]
        %v892 = vld [vmem:[#allocation2 + $0x78] sm:$0xff]
        %v893 = vld [vmem:[#allocation2 + $0x80] sm:$0xff]
        %v894 = vld [vmem:[#allocation2 + $0x88] sm:$0xff]
        %v895 = vld [vmem:[#allocation2 + $0x90] sm:$0xff]
        %v896 = vld [vmem:[#allocation2 + $0x98] sm:$0xff]
        %v897 = vld [vmem:[#allocation2 + $0xa0] sm:$0xff]
        %v898 = vld [vmem:[#allocation2 + $0xa8] sm:$0xff]
        %v899 = vld [vmem:[#allocation2 + $0xb0] sm:$0xff]
        %v900 = vld [vmem:[#allocation2 + $0xb8] sm:$0xff]
        %v901 = vld [vmem:[#allocation2 + $0xc0] sm:$0xff]
        %v902 = vld [vmem:[#allocation2 + $0xc8] sm:$0xff]
        %v903 = vld [vmem:[#allocation2 + $0xd0] sm:$0xff]
        %v904 = vld [vmem:[#allocation2 + $0xd8] sm:$0xff]
        %v905 = vld [vmem:[#allocation2 + $0xe0] sm:$0xff]
        %v906 = vld [vmem:[#allocation2 + $0xe8] sm:$0xff]
        %v907 = vld [vmem:[#allocation2 + $0xf0] sm:$0xff]
        %v908 = vld [vmem:[#allocation2 + $0xf8] sm:$0xff]
        %v909 = vld [vmem:[#allocation2 + $0x100] sm:$0xff]
        %v910 = vld [vmem:[#allocation2 + $0x108] sm:$0xff]
        %v911 = vld [vmem:[#allocation2 + $0x110] sm:$0xff]
        %v912 = vld [vmem:[#allocation2 + $0x118] sm:$0xff]
        %v913 = vld [vmem:[#allocation2 + $0x120] sm:$0xff]
        %v914 = vld [vmem:[#allocation2 + $0x128] sm:$0xff]
        %v915 = vld [vmem:[#allocation2 + $0x130] sm:$0xff]
        %v916 = vld [vmem:[#allocation2 + $0x138] sm:$0xff]
        %v917 = vld [vmem:[#allocation2 + $0x140] sm:$0xff]
        %v918 = vld [vmem:[#allocation2 + $0x148] sm:$0xff]
        %v919 = vld [vmem:[#allocation2 + $0x150] sm:$0xff]
        %v920 = vld [vmem:[#allocation2 + $0x158] sm:$0xff]
        %v921 = vld [vmem:[#allocation2 + $0x160] sm:$0xff]
        %v922 = vld [vmem:[#allocation2 + $0x168] sm:$0xff]
        %v923 = vld [vmem:[#allocation2 + $0x170] sm:$0xff]
        %v924 = vld [vmem:[#allocation2 + $0x178] sm:$0xff]
        %v925 = vrot.slane %v835, 2
        %v926 = vlaneseq
        %v927 = vshrl.u32 %v926, 7
        %v928 = vsub.s32 0, %v927
        %v929 = vrot.slane %v925, %v928
        %v930 = vlaneseq
        %v931 = vshrl.u32 %v930, 7
        %v932 = vsub.s32 1, %v931
        %v933 = vrot.slane %v925, %v932
        %v934 = vlaneseq
        %v935 = vshrl.u32 %v934, 7
        %v936 = vsub.s32 2, %v935
        %v937 = vrot.slane %v925, %v936
        %941 = vmatprep.subr.mxu0 %v923
        %942 = vmatpush1.msra.mxu0 %v922
        %943 = vmatprep.subr.mxu0 %v920
        %944 = vmatpush1.msra.mxu0 %v919
        %945 = vmatprep.subr.mxu0 %v917
        %946 = vmatpush1.msra.mxu0 %v916
        %947 = vmatprep.subr.mxu0 %v914
        %948 = vmatpush1.msra.mxu0 %v913
        %949 = vmatprep.subr.mxu0 %v911
        %950 = vmatpush1.msra.mxu0 %v910
        %951 = vmatprep.subr.mxu0 %v908
        %952 = vmatpush1.msra.mxu0 %v907
        %953 = vmatprep.subr.mxu0 %v905
        %954 = vmatpush1.msra.mxu0 %v904
        %955 = vmatprep.subr.mxu0 %v902
        %956 = vmatpush1.msra.mxu0 %v901
        %957 = vmatprep.subr.mxu0 %v899
        %958 = vmatpush1.msra.mxu0 %v898
        %959 = vmatprep.subr.mxu0 %v896
        %960 = vmatpush1.msra.mxu0 %v895
        %961 = vmatprep.subr.mxu0 %v893
        %962 = vmatpush1.msra.mxu0 %v892
        %963 = vmatprep.subr.mxu0 %v890
        %964 = vmatpush1.msra.mxu0 %v889
        %965 = vmatprep.subr.mxu0 %v887
        %966 = vmatpush1.msra.mxu0 %v886
        %967 = vmatprep.subr.mxu0 %v884
        %968 = vmatpush1.msra.mxu0 %v883
        %969 = vmatprep.subr.mxu0 %v881
        %970 = vmatpush1.msra.mxu0 %v880
        %971 = vmatprep.subr.mxu0 %v878
        %972 = vmatpush1.msra.mxu0 %v877
        %973 = vmatprep.subr.mxu0 0.0
        %974 = vmatpush2.msra.mxu0 0.0
        %975 = vmatprep.subr.mxu0 0.0
        %976 = vmatpush2.msra.mxu0 0.0
        %977 = vmatprep.subr.mxu0 0.0
        %978 = vmatpush2.msra.mxu0 0.0
        %979 = vmatprep.subr.mxu0 0.0
        %980 = vmatpush2.msra.mxu0 0.0
        %981 = vmatprep.subr.mxu0 0.0
        %982 = vmatpush2.msra.mxu0 0.0
        %983 = vmatprep.subr.mxu0 0.0
        %984 = vmatpush2.msra.mxu0 0.0
        %985 = vmatprep.subr.mxu0 0.0
        %986 = vmatpush2.msra.mxu0 0.0
        %987 = vmatprep.subr.mxu0 0.0
        %988 = vmatpush2.msra.mxu0 0.0
        %989 = vmatprep.subr.mxu0 0.0
        %990 = vmatpush2.msra.mxu0 0.0
        %991 = vmatprep.subr.mxu0 0.0
        %992 = vmatpush2.msra.mxu0 0.0
        %993 = vmatprep.subr.mxu0 0.0
        %994 = vmatpush2.msra.mxu0 0.0
        %995 = vmatprep.subr.mxu0 0.0
        %996 = vmatpush2.msra.mxu0 0.0
        %997 = vmatprep.subr.mxu0 0.0
        %998 = vmatpush2.msra.mxu0 0.0
        %999 = vmatprep.subr.mxu0 0.0
        %1000 = vmatpush2.msra.mxu0 0.0
        %1001 = vmatprep.subr.mxu0 0.0
        %1002 = vmatpush2.msra.mxu0 0.0
        %1003 = vmatprep.subr.mxu0 0.0
        %1004 = vmatpush2.msra.mxu0 0.0
        %1005 = vmatprep.mubr.f32.mxu0 0.0
        %1006 = vmatmul.mubr.f32.gmra.mxu0 %v875
        %v1007 = vpop.f32.mrf.mxu0
        %v1008 = vadd.f32 %v929, %v1007
        %v1009 = vpop.f32.mrf.mxu0
        %v1010 = vadd.f32 %v933, %v1009
        %1011 = vmatprep.mubr.f32.mxu0 0.0
        %1012 = vmatmul.mubr.f32.gmra.mxu0 %v876
        %v1013 = vpop.f32.mrf.mxu0
        %v1014 = vadd.f32 %v929, %v1013
        %v1015 = vpop.f32.mrf.mxu0
        %v1016 = vadd.f32 %v933, %v1015
        %1017 = vdwg.mxu0
        %1018 = vmatprep.subr.mxu0 0.0
        %1019 = vmatpush1.msra.mxu0 %v924
        %1020 = vmatprep.subr.mxu0 0.0
        %1021 = vmatpush1.msra.mxu0 %v921
        %1022 = vmatprep.subr.mxu0 0.0
        %1023 = vmatpush1.msra.mxu0 %v918
        %1024 = vmatprep.subr.mxu0 0.0
        %1025 = vmatpush1.msra.mxu0 %v915
        %1026 = vmatprep.subr.mxu0 0.0
        %1027 = vmatpush1.msra.mxu0 %v912
        %1028 = vmatprep.subr.mxu0 0.0
        %1029 = vmatpush1.msra.mxu0 %v909
        %1030 = vmatprep.subr.mxu0 0.0
        %1031 = vmatpush1.msra.mxu0 %v906
        %1032 = vmatprep.subr.mxu0 0.0
        %1033 = vmatpush1.msra.mxu0 %v903
        %1034 = vmatprep.subr.mxu0 0.0
        %1035 = vmatpush1.msra.mxu0 %v900
        %1036 = vmatprep.subr.mxu0 0.0
        %1037 = vmatpush1.msra.mxu0 %v897
        %1038 = vmatprep.subr.mxu0 0.0
        %1039 = vmatpush1.msra.mxu0 %v894
        %1040 = vmatprep.subr.mxu0 0.0
        %1041 = vmatpush1.msra.mxu0 %v891
        %1042 = vmatprep.subr.mxu0 0.0
        %1043 = vmatpush1.msra.mxu0 %v888
        %1044 = vmatprep.subr.mxu0 0.0
        %1045 = vmatpush1.msra.mxu0 %v885
        %1046 = vmatprep.subr.mxu0 0.0
        %1047 = vmatpush1.msra.mxu0 %v882
        %1048 = vmatprep.subr.mxu0 0.0
        %1049 = vmatpush1.msra.mxu0 %v879
        %1050 = vmatprep.subr.mxu0 0.0
        %1051 = vmatpush2.msra.mxu0 0.0
        %1052 = vmatprep.subr.mxu0 0.0
        %1053 = vmatpush2.msra.mxu0 0.0
        %1054 = vmatprep.subr.mxu0 0.0
        %1055 = vmatpush2.msra.mxu0 0.0
        %1056 = vmatprep.subr.mxu0 0.0
        %1057 = vmatpush2.msra.mxu0 0.0
        %1058 = vmatprep.subr.mxu0 0.0
        %1059 = vmatpush2.msra.mxu0 0.0
        %1060 = vmatprep.subr.mxu0 0.0
        %1061 = vmatpush2.msra.mxu0 0.0
        %1062 = vmatprep.subr.mxu0 0.0
        %1063 = vmatpush2.msra.mxu0 0.0
        %1064 = vmatprep.subr.mxu0 0.0
        %1065 = vmatpush2.msra.mxu0 0.0
        %1066 = vmatprep.subr.mxu0 0.0
        %1067 = vmatpush2.msra.mxu0 0.0
        %1068 = vmatprep.subr.mxu0 0.0
        %1069 = vmatpush2.msra.mxu0 0.0
        %1070 = vmatprep.subr.mxu0 0.0
        %1071 = vmatpush2.msra.mxu0 0.0
        %1072 = vmatprep.subr.mxu0 0.0
        %1073 = vmatpush2.msra.mxu0 0.0
        %1074 = vmatprep.subr.mxu0 0.0
        %1075 = vmatpush2.msra.mxu0 0.0
        %1076 = vmatprep.subr.mxu0 0.0
        %1077 = vmatpush2.msra.mxu0 0.0
        %1078 = vmatprep.subr.mxu0 0.0
        %1079 = vmatpush2.msra.mxu0 0.0
        %1080 = vmatprep.subr.mxu0 0.0
        %1081 = vmatpush2.msra.mxu0 0.0
        %1082 = vmatprep.mubr.f32.mxu0 0.0
        %1083 = vmatmul.mubr.f32.gmra.mxu0 %v875
        %v1084 = vpop.f32.mrf.mxu0
        %v1085 = vadd.f32 %v937, %v1084
        %v1086 = vpop.f32.mrf.mxu0
        %1087 = vmatprep.mubr.f32.mxu0 0.0
        %1088 = vmatmul.mubr.f32.gmra.mxu0 %v876
        %v1089 = vpop.f32.mrf.mxu0
        %v1090 = vadd.f32 %v937, %v1089
        %v1091 = vpop.f32.mrf.mxu0
        %1092 = vdwg.mxu0
        %v1093 = vmul.f32 %v1008, 0.17677669
        %v1094 = vmul.f32 %v1014, 0.17677669
        %vm1095 = vcmask 261120
        %v1097 = vsel %vm1095, %v1093, 0
        %v1100 = vsel %vm1095, %v1094, 0
        %v1103 = vsel %vm1095, %v1010, 0
        %v1106 = vsel %vm1095, %v1016, 0
        %1108 = vmatprep.subr.mxu0 0.0
        %1109 = vmatpush1.xpose.msra.mxu0 0.0
        %1110 = vmatprep.subr.mxu0 0.0
        %1111 = vmatpush1.xpose.msra.mxu0 0.0
        %1112 = vmatprep.subr.mxu0 0.0
        %1113 = vmatpush1.xpose.msra.mxu0 0.0
        %1114 = vmatprep.subr.mxu0 0.0
        %1115 = vmatpush1.xpose.msra.mxu0 0.0
        %1116 = vmatprep.subr.mxu0 0.0
        %1117 = vmatpush1.xpose.msra.mxu0 0.0
        %1118 = vmatprep.subr.mxu0 0.0
        %1119 = vmatpush1.xpose.msra.mxu0 0.0
        %1120 = vmatprep.subr.mxu0 0.0
        %1121 = vmatpush1.xpose.msra.mxu0 0.0
        %1122 = vmatprep.subr.mxu0 0.0
        %1123 = vmatpush1.xpose.msra.mxu0 0.0
        %1124 = vmatprep.subr.mxu0 0.0
        %1125 = vmatpush1.xpose.msra.mxu0 0.0
        %1126 = vmatprep.subr.mxu0 0.0
        %1127 = vmatpush1.xpose.msra.mxu0 0.0
        %1128 = vmatprep.subr.mxu0 0.0
        %1129 = vmatpush1.xpose.msra.mxu0 0.0
        %1130 = vmatprep.subr.mxu0 0.0
        %1131 = vmatpush1.xpose.msra.mxu0 0.0
        %1132 = vmatprep.subr.mxu0 0.0
        %1133 = vmatpush1.xpose.msra.mxu0 0.0
        %1134 = vmatprep.subr.mxu0 0.0
        %1135 = vmatpush1.xpose.msra.mxu0 0.0
        %1136 = vmatprep.subr.mxu0 0.0
        %1137 = vmatpush1.xpose.msra.mxu0 %v1106
        %1138 = vmatprep.subr.mxu0 0.0
        %1139 = vmatpush1.xpose.msra.mxu0 %v1103
        %1140 = vmatprep.subr.mxu0 0.0
        %1141 = vmatpush2.xpose.msra.mxu0 0.0
        %1142 = vmatprep.subr.mxu0 0.0
        %1143 = vmatpush2.xpose.msra.mxu0 0.0
        %1144 = vmatprep.subr.mxu0 0.0
        %1145 = vmatpush2.xpose.msra.mxu0 0.0
        %1146 = vmatprep.subr.mxu0 0.0
        %1147 = vmatpush2.xpose.msra.mxu0 0.0
        %1148 = vmatprep.subr.mxu0 0.0
        %1149 = vmatpush2.xpose.msra.mxu0 0.0
        %1150 = vmatprep.subr.mxu0 0.0
        %1151 = vmatpush2.xpose.msra.mxu0 0.0
        %1152 = vmatprep.subr.mxu0 0.0
        %1153 = vmatpush2.xpose.msra.mxu0 0.0
        %1154 = vmatprep.subr.mxu0 0.0
        %1155 = vmatpush2.xpose.msra.mxu0 0.0
        %1156 = vmatprep.subr.mxu0 0.0
        %1157 = vmatpush2.xpose.msra.mxu0 0.0
        %1158 = vmatprep.subr.mxu0 0.0
        %1159 = vmatpush2.xpose.msra.mxu0 0.0
        %1160 = vmatprep.subr.mxu0 0.0
        %1161 = vmatpush2.xpose.msra.mxu0 0.0
        %1162 = vmatprep.subr.mxu0 0.0
        %1163 = vmatpush2.xpose.msra.mxu0 0.0
        %1164 = vmatprep.subr.mxu0 0.0
        %1165 = vmatpush2.xpose.msra.mxu0 0.0
        %1166 = vmatprep.subr.mxu0 0.0
        %1167 = vmatpush2.xpose.msra.mxu0 0.0
        %1168 = vmatprep.subr.mxu0 0.0
        %1169 = vmatpush2.xpose.msra.mxu0 0.0
        %1170 = vmatprep.subr.mxu0 0.0
        %1171 = vmatpush2.xpose.msra.mxu0 0.0
        %1172 = vmatprep.mubr.f32.mxu0 0.0
        %1173 = vmatmul.mubr.f32.gmra.mxu0 %v1097
        %v1174 = vpop.f32.mrf.mxu0
        %v1175 = vadd.f32 0.0, %v1174
        %v1176 = vpop.f32.mrf.mxu0
        %1177 = vmatprep.mubr.f32.mxu0 0.0
        %1178 = vmatmul.mubr.f32.gmra.mxu0 %v1100
        %v1179 = vpop.f32.mrf.mxu0
        %v1180 = vadd.f32 0.0, %v1179
        %v1181 = vpop.f32.mrf.mxu0
        %1182 = vdwg.mxu0
        %vm1183 = vcmask 130048
        %v1184 = vsel %vm1183, %v1175, -inf
        %1185 = vmax.xlane.f32.xlu0 %v1184
        %v1186 = vpop.xlane.xlu0 %1185
        %v1187 = vsel %vm1183, %v1180, -inf
        %1188 = vmax.xlane.f32.xlu0 %v1187
        %v1189 = vpop.xlane.xlu0 %1188
        %v1190 = vsub.f32 %v1175, %v1186
        %v1191 = vsub.f32 %v1180, %v1189
        %v1192 = vmul.f32 %v1190, 1.442695
        %v1193 = vpow.pop %v1192
        %v1194 = vmul.f32 %v1191, 1.442695
        %v1195 = vpow.pop %v1194
        %v1196 = vsel %vm1183, %v1193, 0.0
        %1197 = vadd.xlane.f32.xlu0 %v1196
        %v1198 = vpop.xlane.xlu0 %1197
        %v1199 = vsel %vm1183, %v1195, 0.0
        %1200 = vadd.xlane.f32.xlu0 %v1199
        %v1201 = vpop.xlane.xlu0 %1200
        %v1202 = vrcp.pop %v1198
        %v1203 = vrcp.pop %v1201
        %v1204 = vmul.f32 %v1193, %v1202
        %v1205 = vmul.f32 %v1195, %v1203
        %v1207 = vsel %vm1183, %v1204, 0
        %v1210 = vsel %vm1183, %v1205, 0
        %1212 = vmatprep.subr.mxu0 0.0
        %1213 = vmatpush1.msra.mxu0 0.0
        %1214 = vmatprep.subr.mxu0 0.0
        %1215 = vmatpush1.msra.mxu0 0.0
        %1216 = vmatprep.subr.mxu0 0.0
        %1217 = vmatpush1.msra.mxu0 0.0
        %1218 = vmatprep.subr.mxu0 0.0
        %1219 = vmatpush1.msra.mxu0 0.0
        %1220 = vmatprep.subr.mxu0 0.0
        %1221 = vmatpush1.msra.mxu0 0.0
        %1222 = vmatprep.subr.mxu0 0.0
        %1223 = vmatpush1.msra.mxu0 0.0
        %1224 = vmatprep.subr.mxu0 0.0
        %1225 = vmatpush1.msra.mxu0 0.0
        %1226 = vmatprep.subr.mxu0 0.0
        %1227 = vmatpush1.msra.mxu0 0.0
        %1228 = vmatprep.subr.mxu0 0.0
        %1229 = vmatpush1.msra.mxu0 0.0
        %1230 = vmatprep.subr.mxu0 0.0
        %1231 = vmatpush1.msra.mxu0 0.0
        %1232 = vmatprep.subr.mxu0 0.0
        %1233 = vmatpush1.msra.mxu0 0.0
        %1234 = vmatprep.subr.mxu0 0.0
        %1235 = vmatpush1.msra.mxu0 0.0
        %1236 = vmatprep.subr.mxu0 0.0
        %1237 = vmatpush1.msra.mxu0 0.0
        %1238 = vmatprep.subr.mxu0 0.0
        %1239 = vmatpush1.msra.mxu0 0.0
        %1240 = vmatprep.subr.mxu0 0.0
        %1241 = vmatpush1.msra.mxu0 %v1090
        %1242 = vmatprep.subr.mxu0 0.0
        %1243 = vmatpush1.msra.mxu0 %v1085
        %1244 = vmatprep.subr.mxu0 0.0
        %1245 = vmatpush2.msra.mxu0 0.0
        %1246 = vmatprep.subr.mxu0 0.0
        %1247 = vmatpush2.msra.mxu0 0.0
        %1248 = vmatprep.subr.mxu0 0.0
        %1249 = vmatpush2.msra.mxu0 0.0
        %1250 = vmatprep.subr.mxu0 0.0
        %1251 = vmatpush2.msra.mxu0 0.0
        %1252 = vmatprep.subr.mxu0 0.0
        %1253 = vmatpush2.msra.mxu0 0.0
        %1254 = vmatprep.subr.mxu0 0.0
        %1255 = vmatpush2.msra.mxu0 0.0
        %1256 = vmatprep.subr.mxu0 0.0
        %1257 = vmatpush2.msra.mxu0 0.0
        %1258 = vmatprep.subr.mxu0 0.0
        %1259 = vmatpush2.msra.mxu0 0.0
        %1260 = vmatprep.subr.mxu0 0.0
        %1261 = vmatpush2.msra.mxu0 0.0
        %1262 = vmatprep.subr.mxu0 0.0
        %1263 = vmatpush2.msra.mxu0 0.0
        %1264 = vmatprep.subr.mxu0 0.0
        %1265 = vmatpush2.msra.mxu0 0.0
        %1266 = vmatprep.subr.mxu0 0.0
        %1267 = vmatpush2.msra.mxu0 0.0
        %1268 = vmatprep.subr.mxu0 0.0
        %1269 = vmatpush2.msra.mxu0 0.0
        %1270 = vmatprep.subr.mxu0 0.0
        %1271 = vmatpush2.msra.mxu0 0.0
        %1272 = vmatprep.subr.mxu0 0.0
        %1273 = vmatpush2.msra.mxu0 0.0
        %1274 = vmatprep.subr.mxu0 0.0
        %1275 = vmatpush2.msra.mxu0 0.0
        %1276 = vmatprep.mubr.f32.mxu0 0.0
        %1277 = vmatmul.mubr.f32.gmra.mxu0 %v1207
        %v1278 = vpop.f32.mrf.mxu0
        %v1279 = vadd.f32 0.0, %v1278
        %v1280 = vpop.f32.mrf.mxu0
        %1281 = vmatprep.mubr.f32.mxu0 0.0
        %1282 = vmatmul.mubr.f32.gmra.mxu0 %v1210
        %v1283 = vpop.f32.mrf.mxu0
        %v1284 = vadd.f32 0.0, %v1283
        %v1285 = vpop.f32.mrf.mxu0
        %1286 = vdwg.mxu0
        %1287 = vrot.lane.b32.xlu0 %v1093, 96
        %v1288 = vpop.permute.xlu0 %1287
        %1289 = vrot.lane.b32.xlu0 %v1094, 96
        %v1290 = vpop.permute.xlu0 %1289
        %1291 = vrot.lane.b32.xlu0 %v1010, 96
        %v1292 = vpop.permute.xlu0 %1291
        %1293 = vrot.lane.b32.xlu0 %v1016, 96
        %v1294 = vpop.permute.xlu0 %1293
        %v1295 = vsel %vm1095, %v1288, 0
        %v1297 = vsel %vm1095, %v1290, 0
        %v1299 = vsel %vm1095, %v1292, 0
        %v1301 = vsel %vm1095, %v1294, 0
        %1303 = vmatprep.subr.mxu0 0.0
        %1304 = vmatpush1.xpose.msra.mxu0 0.0
        %1305 = vmatprep.subr.mxu0 0.0
        %1306 = vmatpush1.xpose.msra.mxu0 0.0
        %1307 = vmatprep.subr.mxu0 0.0
        %1308 = vmatpush1.xpose.msra.mxu0 0.0
        %1309 = vmatprep.subr.mxu0 0.0
        %1310 = vmatpush1.xpose.msra.mxu0 0.0
        %1311 = vmatprep.subr.mxu0 0.0
        %1312 = vmatpush1.xpose.msra.mxu0 0.0
        %1313 = vmatprep.subr.mxu0 0.0
        %1314 = vmatpush1.xpose.msra.mxu0 0.0
        %1315 = vmatprep.subr.mxu0 0.0
        %1316 = vmatpush1.xpose.msra.mxu0 0.0
        %1317 = vmatprep.subr.mxu0 0.0
        %1318 = vmatpush1.xpose.msra.mxu0 0.0
        %1319 = vmatprep.subr.mxu0 0.0
        %1320 = vmatpush1.xpose.msra.mxu0 0.0
        %1321 = vmatprep.subr.mxu0 0.0
        %1322 = vmatpush1.xpose.msra.mxu0 0.0
        %1323 = vmatprep.subr.mxu0 0.0
        %1324 = vmatpush1.xpose.msra.mxu0 0.0
        %1325 = vmatprep.subr.mxu0 0.0
        %1326 = vmatpush1.xpose.msra.mxu0 0.0
        %1327 = vmatprep.subr.mxu0 0.0
        %1328 = vmatpush1.xpose.msra.mxu0 0.0
        %1329 = vmatprep.subr.mxu0 0.0
        %1330 = vmatpush1.xpose.msra.mxu0 0.0
        %1331 = vmatprep.subr.mxu0 0.0
        %1332 = vmatpush1.xpose.msra.mxu0 %v1301
        %1333 = vmatprep.subr.mxu0 0.0
        %1334 = vmatpush1.xpose.msra.mxu0 %v1299
        %1335 = vmatprep.subr.mxu0 0.0
        %1336 = vmatpush2.xpose.msra.mxu0 0.0
        %1337 = vmatprep.subr.mxu0 0.0
        %1338 = vmatpush2.xpose.msra.mxu0 0.0
        %1339 = vmatprep.subr.mxu0 0.0
        %1340 = vmatpush2.xpose.msra.mxu0 0.0
        %1341 = vmatprep.subr.mxu0 0.0
        %1342 = vmatpush2.xpose.msra.mxu0 0.0
        %1343 = vmatprep.subr.mxu0 0.0
        %1344 = vmatpush2.xpose.msra.mxu0 0.0
        %1345 = vmatprep.subr.mxu0 0.0
        %1346 = vmatpush2.xpose.msra.mxu0 0.0
        %1347 = vmatprep.subr.mxu0 0.0
        %1348 = vmatpush2.xpose.msra.mxu0 0.0
        %1349 = vmatprep.subr.mxu0 0.0
        %1350 = vmatpush2.xpose.msra.mxu0 0.0
        %1351 = vmatprep.subr.mxu0 0.0
        %1352 = vmatpush2.xpose.msra.mxu0 0.0
        %1353 = vmatprep.subr.mxu0 0.0
        %1354 = vmatpush2.xpose.msra.mxu0 0.0
        %1355 = vmatprep.subr.mxu0 0.0
        %1356 = vmatpush2.xpose.msra.mxu0 0.0
        %1357 = vmatprep.subr.mxu0 0.0
        %1358 = vmatpush2.xpose.msra.mxu0 0.0
        %1359 = vmatprep.subr.mxu0 0.0
        %1360 = vmatpush2.xpose.msra.mxu0 0.0
        %1361 = vmatprep.subr.mxu0 0.0
        %1362 = vmatpush2.xpose.msra.mxu0 0.0
        %1363 = vmatprep.subr.mxu0 0.0
        %1364 = vmatpush2.xpose.msra.mxu0 0.0
        %1365 = vmatprep.subr.mxu0 0.0
        %1366 = vmatpush2.xpose.msra.mxu0 0.0
        %1367 = vmatprep.mubr.f32.mxu0 0.0
        %1368 = vmatmul.mubr.f32.gmra.mxu0 %v1295
        %v1369 = vpop.f32.mrf.mxu0
        %v1370 = vadd.f32 0.0, %v1369
        %v1371 = vpop.f32.mrf.mxu0
        %1372 = vmatprep.mubr.f32.mxu0 0.0
        %1373 = vmatmul.mubr.f32.gmra.mxu0 %v1297
        %v1374 = vpop.f32.mrf.mxu0
        %v1375 = vadd.f32 0.0, %v1374
        %v1376 = vpop.f32.mrf.mxu0
        %1377 = vdwg.mxu0
        %v1378 = vsel %vm1183, %v1370, -inf
        %1379 = vmax.xlane.f32.xlu0 %v1378
        %v1380 = vpop.xlane.xlu0 %1379
        %v1381 = vsel %vm1183, %v1375, -inf
        %1382 = vmax.xlane.f32.xlu0 %v1381
        %v1383 = vpop.xlane.xlu0 %1382
        %v1384 = vsub.f32 %v1370, %v1380
        %v1385 = vsub.f32 %v1375, %v1383
        %v1386 = vmul.f32 %v1384, 1.442695
        %v1387 = vpow.pop %v1386
        %v1388 = vmul.f32 %v1385, 1.442695
        %v1389 = vpow.pop %v1388
        %v1390 = vsel %vm1183, %v1387, 0.0
        %1391 = vadd.xlane.f32.xlu0 %v1390
        %v1392 = vpop.xlane.xlu0 %1391
        %v1393 = vsel %vm1183, %v1389, 0.0
        %1394 = vadd.xlane.f32.xlu0 %v1393
        %v1395 = vpop.xlane.xlu0 %1394
        %v1396 = vrcp.pop %v1392
        %v1397 = vrcp.pop %v1395
        %v1398 = vmul.f32 %v1387, %v1396
        %v1399 = vmul.f32 %v1389, %v1397
        %1402 = vrot.lane.b32.xlu0 %v1085, 96
        %v1403 = vpop.permute.xlu0 %1402
        %1404 = vrot.lane.b32.xlu0 %v1090, 96
        %v1405 = vpop.permute.xlu0 %1404
        %v1409 = vsel %vm1183, %v1398, 0
        %v1412 = vsel %vm1183, %v1399, 0
        %1414 = vmatprep.subr.mxu0 0.0
        %1415 = vmatpush1.msra.mxu0 0.0
        %1416 = vmatprep.subr.mxu0 0.0
        %1417 = vmatpush1.msra.mxu0 0.0
        %1418 = vmatprep.subr.mxu0 0.0
        %1419 = vmatpush1.msra.mxu0 0.0
        %1420 = vmatprep.subr.mxu0 0.0
        %1421 = vmatpush1.msra.mxu0 0.0
        %1422 = vmatprep.subr.mxu0 0.0
        %1423 = vmatpush1.msra.mxu0 0.0
        %1424 = vmatprep.subr.mxu0 0.0
        %1425 = vmatpush1.msra.mxu0 0.0
        %1426 = vmatprep.subr.mxu0 0.0
        %1427 = vmatpush1.msra.mxu0 0.0
        %1428 = vmatprep.subr.mxu0 0.0
        %1429 = vmatpush1.msra.mxu0 0.0
        %1430 = vmatprep.subr.mxu0 0.0
        %1431 = vmatpush1.msra.mxu0 0.0
        %1432 = vmatprep.subr.mxu0 0.0
        %1433 = vmatpush1.msra.mxu0 0.0
        %1434 = vmatprep.subr.mxu0 0.0
        %1435 = vmatpush1.msra.mxu0 0.0
        %1436 = vmatprep.subr.mxu0 0.0
        %1437 = vmatpush1.msra.mxu0 0.0
        %1438 = vmatprep.subr.mxu0 0.0
        %1439 = vmatpush1.msra.mxu0 0.0
        %1440 = vmatprep.subr.mxu0 0.0
        %1441 = vmatpush1.msra.mxu0 0.0
        %1442 = vmatprep.subr.mxu0 0.0
        %1443 = vmatpush1.msra.mxu0 %v1405
        %1444 = vmatprep.subr.mxu0 0.0
        %1445 = vmatpush1.msra.mxu0 %v1403
        %1446 = vmatprep.subr.mxu0 0.0
        %1447 = vmatpush2.msra.mxu0 0.0
        %1448 = vmatprep.subr.mxu0 0.0
        %1449 = vmatpush2.msra.mxu0 0.0
        %1450 = vmatprep.subr.mxu0 0.0
        %1451 = vmatpush2.msra.mxu0 0.0
        %1452 = vmatprep.subr.mxu0 0.0
        %1453 = vmatpush2.msra.mxu0 0.0
        %1454 = vmatprep.subr.mxu0 0.0
        %1455 = vmatpush2.msra.mxu0 0.0
        %1456 = vmatprep.subr.mxu0 0.0
        %1457 = vmatpush2.msra.mxu0 0.0
        %1458 = vmatprep.subr.mxu0 0.0
        %1459 = vmatpush2.msra.mxu0 0.0
        %1460 = vmatprep.subr.mxu0 0.0
        %1461 = vmatpush2.msra.mxu0 0.0
        %1462 = vmatprep.subr.mxu0 0.0
        %1463 = vmatpush2.msra.mxu0 0.0
        %1464 = vmatprep.subr.mxu0 0.0
        %1465 = vmatpush2.msra.mxu0 0.0
        %1466 = vmatprep.subr.mxu0 0.0
        %1467 = vmatpush2.msra.mxu0 0.0
        %1468 = vmatprep.subr.mxu0 0.0
        %1469 = vmatpush2.msra.mxu0 0.0
        %1470 = vmatprep.subr.mxu0 0.0
        %1471 = vmatpush2.msra.mxu0 0.0
        %1472 = vmatprep.subr.mxu0 0.0
        %1473 = vmatpush2.msra.mxu0 0.0
        %1474 = vmatprep.subr.mxu0 0.0
        %1475 = vmatpush2.msra.mxu0 0.0
        %1476 = vmatprep.subr.mxu0 0.0
        %1477 = vmatpush2.msra.mxu0 0.0
        %1478 = vmatprep.mubr.f32.mxu0 0.0
        %1479 = vmatmul.mubr.f32.gmra.mxu0 %v1409
        %v1480 = vpop.f32.mrf.mxu0
        %v1481 = vadd.f32 0.0, %v1480
        %v1482 = vpop.f32.mrf.mxu0
        %1483 = vmatprep.mubr.f32.mxu0 0.0
        %1484 = vmatmul.mubr.f32.gmra.mxu0 %v1412
        %v1485 = vpop.f32.mrf.mxu0
        %v1486 = vadd.f32 0.0, %v1485
        %v1487 = vpop.f32.mrf.mxu0
        %1488 = vdwg.mxu0
        %1489 = vrot.lane.b32.xlu0 %v1093, 64
        %v1490 = vpop.permute.xlu0 %1489
        %1491 = vrot.lane.b32.xlu0 %v1094, 64
        %v1492 = vpop.permute.xlu0 %1491
        %1493 = vrot.lane.b32.xlu0 %v1010, 64
        %v1494 = vpop.permute.xlu0 %1493
        %1495 = vrot.lane.b32.xlu0 %v1016, 64
        %v1496 = vpop.permute.xlu0 %1495
        %v1497 = vsel %vm1095, %v1490, 0
        %v1499 = vsel %vm1095, %v1492, 0
        %v1501 = vsel %vm1095, %v1494, 0
        %v1503 = vsel %vm1095, %v1496, 0
        %1505 = vmatprep.subr.mxu0 0.0
        %1506 = vmatpush1.xpose.msra.mxu0 0.0
        %1507 = vmatprep.subr.mxu0 0.0
        %1508 = vmatpush1.xpose.msra.mxu0 0.0
        %1509 = vmatprep.subr.mxu0 0.0
        %1510 = vmatpush1.xpose.msra.mxu0 0.0
        %1511 = vmatprep.subr.mxu0 0.0
        %1512 = vmatpush1.xpose.msra.mxu0 0.0
        %1513 = vmatprep.subr.mxu0 0.0
        %1514 = vmatpush1.xpose.msra.mxu0 0.0
        %1515 = vmatprep.subr.mxu0 0.0
        %1516 = vmatpush1.xpose.msra.mxu0 0.0
        %1517 = vmatprep.subr.mxu0 0.0
        %1518 = vmatpush1.xpose.msra.mxu0 0.0
        %1519 = vmatprep.subr.mxu0 0.0
        %1520 = vmatpush1.xpose.msra.mxu0 0.0
        %1521 = vmatprep.subr.mxu0 0.0
        %1522 = vmatpush1.xpose.msra.mxu0 0.0
        %1523 = vmatprep.subr.mxu0 0.0
        %1524 = vmatpush1.xpose.msra.mxu0 0.0
        %1525 = vmatprep.subr.mxu0 0.0
        %1526 = vmatpush1.xpose.msra.mxu0 0.0
        %1527 = vmatprep.subr.mxu0 0.0
        %1528 = vmatpush1.xpose.msra.mxu0 0.0
        %1529 = vmatprep.subr.mxu0 0.0
        %1530 = vmatpush1.xpose.msra.mxu0 0.0
        %1531 = vmatprep.subr.mxu0 0.0
        %1532 = vmatpush1.xpose.msra.mxu0 0.0
        %1533 = vmatprep.subr.mxu0 0.0
        %1534 = vmatpush1.xpose.msra.mxu0 %v1503
        %1535 = vmatprep.subr.mxu0 0.0
        %1536 = vmatpush1.xpose.msra.mxu0 %v1501
        %1537 = vmatprep.subr.mxu0 0.0
        %1538 = vmatpush2.xpose.msra.mxu0 0.0
        %1539 = vmatprep.subr.mxu0 0.0
        %1540 = vmatpush2.xpose.msra.mxu0 0.0
        %1541 = vmatprep.subr.mxu0 0.0
        %1542 = vmatpush2.xpose.msra.mxu0 0.0
        %1543 = vmatprep.subr.mxu0 0.0
        %1544 = vmatpush2.xpose.msra.mxu0 0.0
        %1545 = vmatprep.subr.mxu0 0.0
        %1546 = vmatpush2.xpose.msra.mxu0 0.0
        %1547 = vmatprep.subr.mxu0 0.0
        %1548 = vmatpush2.xpose.msra.mxu0 0.0
        %1549 = vmatprep.subr.mxu0 0.0
        %1550 = vmatpush2.xpose.msra.mxu0 0.0
        %1551 = vmatprep.subr.mxu0 0.0
        %1552 = vmatpush2.xpose.msra.mxu0 0.0
        %1553 = vmatprep.subr.mxu0 0.0
        %1554 = vmatpush2.xpose.msra.mxu0 0.0
        %1555 = vmatprep.subr.mxu0 0.0
        %1556 = vmatpush2.xpose.msra.mxu0 0.0
        %1557 = vmatprep.subr.mxu0 0.0
        %1558 = vmatpush2.xpose.msra.mxu0 0.0
        %1559 = vmatprep.subr.mxu0 0.0
        %1560 = vmatpush2.xpose.msra.mxu0 0.0
        %1561 = vmatprep.subr.mxu0 0.0
        %1562 = vmatpush2.xpose.msra.mxu0 0.0
        %1563 = vmatprep.subr.mxu0 0.0
        %1564 = vmatpush2.xpose.msra.mxu0 0.0
        %1565 = vmatprep.subr.mxu0 0.0
        %1566 = vmatpush2.xpose.msra.mxu0 0.0
        %1567 = vmatprep.subr.mxu0 0.0
        %1568 = vmatpush2.xpose.msra.mxu0 0.0
        %1569 = vmatprep.mubr.f32.mxu0 0.0
        %1570 = vmatmul.mubr.f32.gmra.mxu0 %v1497
        %v1571 = vpop.f32.mrf.mxu0
        %v1572 = vadd.f32 0.0, %v1571
        %v1573 = vpop.f32.mrf.mxu0
        %1574 = vmatprep.mubr.f32.mxu0 0.0
        %1575 = vmatmul.mubr.f32.gmra.mxu0 %v1499
        %v1576 = vpop.f32.mrf.mxu0
        %v1577 = vadd.f32 0.0, %v1576
        %v1578 = vpop.f32.mrf.mxu0
        %1579 = vdwg.mxu0
        %v1580 = vsel %vm1183, %v1572, -inf
        %1581 = vmax.xlane.f32.xlu0 %v1580
        %v1582 = vpop.xlane.xlu0 %1581
        %v1583 = vsel %vm1183, %v1577, -inf
        %1584 = vmax.xlane.f32.xlu0 %v1583
        %v1585 = vpop.xlane.xlu0 %1584
        %v1586 = vsub.f32 %v1572, %v1582
        %v1587 = vsub.f32 %v1577, %v1585
        %v1588 = vmul.f32 %v1586, 1.442695
        %v1589 = vpow.pop %v1588
        %v1590 = vmul.f32 %v1587, 1.442695
        %v1591 = vpow.pop %v1590
        %v1592 = vsel %vm1183, %v1589, 0.0
        %1593 = vadd.xlane.f32.xlu0 %v1592
        %v1594 = vpop.xlane.xlu0 %1593
        %v1595 = vsel %vm1183, %v1591, 0.0
        %1596 = vadd.xlane.f32.xlu0 %v1595
        %v1597 = vpop.xlane.xlu0 %1596
        %v1598 = vrcp.pop %v1594
        %v1599 = vrcp.pop %v1597
        %v1600 = vmul.f32 %v1589, %v1598
        %v1601 = vmul.f32 %v1591, %v1599
        %1602 = vrot.lane.b32.xlu0 %v1085, 64
        %v1603 = vpop.permute.xlu0 %1602
        %1604 = vrot.lane.b32.xlu0 %v1090, 64
        %v1605 = vpop.permute.xlu0 %1604
        %v1609 = vsel %vm1183, %v1600, 0
        %v1612 = vsel %vm1183, %v1601, 0
        %1614 = vmatprep.subr.mxu0 0.0
        %1615 = vmatpush1.msra.mxu0 0.0
        %1616 = vmatprep.subr.mxu0 0.0
        %1617 = vmatpush1.msra.mxu0 0.0
        %1618 = vmatprep.subr.mxu0 0.0
        %1619 = vmatpush1.msra.mxu0 0.0
        %1620 = vmatprep.subr.mxu0 0.0
        %1621 = vmatpush1.msra.mxu0 0.0
        %1622 = vmatprep.subr.mxu0 0.0
        %1623 = vmatpush1.msra.mxu0 0.0
        %1624 = vmatprep.subr.mxu0 0.0
        %1625 = vmatpush1.msra.mxu0 0.0
        %1626 = vmatprep.subr.mxu0 0.0
        %1627 = vmatpush1.msra.mxu0 0.0
        %1628 = vmatprep.subr.mxu0 0.0
        %1629 = vmatpush1.msra.mxu0 0.0
        %1630 = vmatprep.subr.mxu0 0.0
        %1631 = vmatpush1.msra.mxu0 0.0
        %1632 = vmatprep.subr.mxu0 0.0
        %1633 = vmatpush1.msra.mxu0 0.0
        %1634 = vmatprep.subr.mxu0 0.0
        %1635 = vmatpush1.msra.mxu0 0.0
        %1636 = vmatprep.subr.mxu0 0.0
        %1637 = vmatpush1.msra.mxu0 0.0
        %1638 = vmatprep.subr.mxu0 0.0
        %1639 = vmatpush1.msra.mxu0 0.0
        %1640 = vmatprep.subr.mxu0 0.0
        %1641 = vmatpush1.msra.mxu0 0.0
        %1642 = vmatprep.subr.mxu0 0.0
        %1643 = vmatpush1.msra.mxu0 %v1605
        %1644 = vmatprep.subr.mxu0 0.0
        %1645 = vmatpush1.msra.mxu0 %v1603
        %1646 = vmatprep.subr.mxu0 0.0
        %1647 = vmatpush2.msra.mxu0 0.0
        %1648 = vmatprep.subr.mxu0 0.0
        %1649 = vmatpush2.msra.mxu0 0.0
        %1650 = vmatprep.subr.mxu0 0.0
        %1651 = vmatpush2.msra.mxu0 0.0
        %1652 = vmatprep.subr.mxu0 0.0
        %1653 = vmatpush2.msra.mxu0 0.0
        %1654 = vmatprep.subr.mxu0 0.0
        %1655 = vmatpush2.msra.mxu0 0.0
        %1656 = vmatprep.subr.mxu0 0.0
        %1657 = vmatpush2.msra.mxu0 0.0
        %1658 = vmatprep.subr.mxu0 0.0
        %1659 = vmatpush2.msra.mxu0 0.0
        %1660 = vmatprep.subr.mxu0 0.0
        %1661 = vmatpush2.msra.mxu0 0.0
        %1662 = vmatprep.subr.mxu0 0.0
        %1663 = vmatpush2.msra.mxu0 0.0
        %1664 = vmatprep.subr.mxu0 0.0
        %1665 = vmatpush2.msra.mxu0 0.0
        %1666 = vmatprep.subr.mxu0 0.0
        %1667 = vmatpush2.msra.mxu0 0.0
        %1668 = vmatprep.subr.mxu0 0.0
        %1669 = vmatpush2.msra.mxu0 0.0
        %1670 = vmatprep.subr.mxu0 0.0
        %1671 = vmatpush2.msra.mxu0 0.0
        %1672 = vmatprep.subr.mxu0 0.0
        %1673 = vmatpush2.msra.mxu0 0.0
        %1674 = vmatprep.subr.mxu0 0.0
        %1675 = vmatpush2.msra.mxu0 0.0
        %1676 = vmatprep.subr.mxu0 0.0
        %1677 = vmatpush2.msra.mxu0 0.0
        %1678 = vmatprep.mubr.f32.mxu0 0.0
        %1679 = vmatmul.mubr.f32.gmra.mxu0 %v1609
        %v1680 = vpop.f32.mrf.mxu0
        %v1681 = vadd.f32 0.0, %v1680
        %v1682 = vpop.f32.mrf.mxu0
        %1683 = vmatprep.mubr.f32.mxu0 0.0
        %1684 = vmatmul.mubr.f32.gmra.mxu0 %v1612
        %v1685 = vpop.f32.mrf.mxu0
        %v1686 = vadd.f32 0.0, %v1685
        %v1687 = vpop.f32.mrf.mxu0
        %1688 = vdwg.mxu0
        %1689 = vrot.lane.b32.xlu0 %v1093, 32
        %v1690 = vpop.permute.xlu0 %1689
        %1691 = vrot.lane.b32.xlu0 %v1094, 32
        %v1692 = vpop.permute.xlu0 %1691
        %1693 = vrot.lane.b32.xlu0 %v1010, 32
        %v1694 = vpop.permute.xlu0 %1693
        %1695 = vrot.lane.b32.xlu0 %v1016, 32
        %v1696 = vpop.permute.xlu0 %1695
        %v1697 = vsel %vm1095, %v1690, 0
        %v1699 = vsel %vm1095, %v1692, 0
        %v1701 = vsel %vm1095, %v1694, 0
        %v1703 = vsel %vm1095, %v1696, 0
        %1705 = vmatprep.subr.mxu0 0.0
        %1706 = vmatpush1.xpose.msra.mxu0 0.0
        %1707 = vmatprep.subr.mxu0 0.0
        %1708 = vmatpush1.xpose.msra.mxu0 0.0
        %1709 = vmatprep.subr.mxu0 0.0
        %1710 = vmatpush1.xpose.msra.mxu0 0.0
        %1711 = vmatprep.subr.mxu0 0.0
        %1712 = vmatpush1.xpose.msra.mxu0 0.0
        %1713 = vmatprep.subr.mxu0 0.0
        %1714 = vmatpush1.xpose.msra.mxu0 0.0
        %1715 = vmatprep.subr.mxu0 0.0
        %1716 = vmatpush1.xpose.msra.mxu0 0.0
        %1717 = vmatprep.subr.mxu0 0.0
        %1718 = vmatpush1.xpose.msra.mxu0 0.0
        %1719 = vmatprep.subr.mxu0 0.0
        %1720 = vmatpush1.xpose.msra.mxu0 0.0
        %1721 = vmatprep.subr.mxu0 0.0
        %1722 = vmatpush1.xpose.msra.mxu0 0.0
        %1723 = vmatprep.subr.mxu0 0.0
        %1724 = vmatpush1.xpose.msra.mxu0 0.0
        %1725 = vmatprep.subr.mxu0 0.0
        %1726 = vmatpush1.xpose.msra.mxu0 0.0
        %1727 = vmatprep.subr.mxu0 0.0
        %1728 = vmatpush1.xpose.msra.mxu0 0.0
        %1729 = vmatprep.subr.mxu0 0.0
        %1730 = vmatpush1.xpose.msra.mxu0 0.0
        %1731 = vmatprep.subr.mxu0 0.0
        %1732 = vmatpush1.xpose.msra.mxu0 0.0
        %1733 = vmatprep.subr.mxu0 0.0
        %1734 = vmatpush1.xpose.msra.mxu0 %v1703
        %1735 = vmatprep.subr.mxu0 0.0
        %1736 = vmatpush1.xpose.msra.mxu0 %v1701
        %1737 = vmatprep.subr.mxu0 0.0
        %1738 = vmatpush2.xpose.msra.mxu0 0.0
        %1739 = vmatprep.subr.mxu0 0.0
        %1740 = vmatpush2.xpose.msra.mxu0 0.0
        %1741 = vmatprep.subr.mxu0 0.0
        %1742 = vmatpush2.xpose.msra.mxu0 0.0
        %1743 = vmatprep.subr.mxu0 0.0
        %1744 = vmatpush2.xpose.msra.mxu0 0.0
        %1745 = vmatprep.subr.mxu0 0.0
        %1746 = vmatpush2.xpose.msra.mxu0 0.0
        %1747 = vmatprep.subr.mxu0 0.0
        %1748 = vmatpush2.xpose.msra.mxu0 0.0
        %1749 = vmatprep.subr.mxu0 0.0
        %1750 = vmatpush2.xpose.msra.mxu0 0.0
        %1751 = vmatprep.subr.mxu0 0.0
        %1752 = vmatpush2.xpose.msra.mxu0 0.0
        %1753 = vmatprep.subr.mxu0 0.0
        %1754 = vmatpush2.xpose.msra.mxu0 0.0
        %1755 = vmatprep.subr.mxu0 0.0
        %1756 = vmatpush2.xpose.msra.mxu0 0.0
        %1757 = vmatprep.subr.mxu0 0.0
        %1758 = vmatpush2.xpose.msra.mxu0 0.0
        %1759 = vmatprep.subr.mxu0 0.0
        %1760 = vmatpush2.xpose.msra.mxu0 0.0
        %1761 = vmatprep.subr.mxu0 0.0
        %1762 = vmatpush2.xpose.msra.mxu0 0.0
        %1763 = vmatprep.subr.mxu0 0.0
        %1764 = vmatpush2.xpose.msra.mxu0 0.0
        %1765 = vmatprep.subr.mxu0 0.0
        %1766 = vmatpush2.xpose.msra.mxu0 0.0
        %1767 = vmatprep.subr.mxu0 0.0
        %1768 = vmatpush2.xpose.msra.mxu0 0.0
        %1769 = vmatprep.mubr.f32.mxu0 0.0
        %1770 = vmatmul.mubr.f32.gmra.mxu0 %v1697
        %v1771 = vpop.f32.mrf.mxu0
        %v1772 = vadd.f32 0.0, %v1771
        %v1773 = vpop.f32.mrf.mxu0
        %1774 = vmatprep.mubr.f32.mxu0 0.0
        %1775 = vmatmul.mubr.f32.gmra.mxu0 %v1699
        %v1776 = vpop.f32.mrf.mxu0
        %v1777 = vadd.f32 0.0, %v1776
        %v1778 = vpop.f32.mrf.mxu0
        %1779 = vdwg.mxu0
        %v1780 = vsel %vm1183, %v1772, -inf
        %1781 = vmax.xlane.f32.xlu0 %v1780
        %v1782 = vpop.xlane.xlu0 %1781
        %v1783 = vsel %vm1183, %v1777, -inf
        %1784 = vmax.xlane.f32.xlu0 %v1783
        %v1785 = vpop.xlane.xlu0 %1784
        %v1786 = vsub.f32 %v1772, %v1782
        %v1787 = vsub.f32 %v1777, %v1785
        %v1788 = vmul.f32 %v1786, 1.442695
        %v1789 = vpow.pop %v1788
        %v1790 = vmul.f32 %v1787, 1.442695
        %v1791 = vpow.pop %v1790
        %v1792 = vsel %vm1183, %v1789, 0.0
        %1793 = vadd.xlane.f32.xlu0 %v1792
        %v1794 = vpop.xlane.xlu0 %1793
        %v1795 = vsel %vm1183, %v1791, 0.0
        %1796 = vadd.xlane.f32.xlu0 %v1795
        %v1797 = vpop.xlane.xlu0 %1796
        %v1798 = vrcp.pop %v1794
        %v1799 = vrcp.pop %v1797
        %v1800 = vmul.f32 %v1789, %v1798
        %v1801 = vmul.f32 %v1791, %v1799
        %1802 = vrot.lane.b32.xlu0 %v1085, 32
        %v1803 = vpop.permute.xlu0 %1802
        %1804 = vrot.lane.b32.xlu0 %v1090, 32
        %v1805 = vpop.permute.xlu0 %1804
        %v1809 = vsel %vm1183, %v1800, 0
        %v1812 = vsel %vm1183, %v1801, 0
        %1814 = vmatprep.subr.mxu0 0.0
        %1815 = vmatpush1.msra.mxu0 0.0
        %1816 = vmatprep.subr.mxu0 0.0
        %1817 = vmatpush1.msra.mxu0 0.0
        %1818 = vmatprep.subr.mxu0 0.0
        %1819 = vmatpush1.msra.mxu0 0.0
        %1820 = vmatprep.subr.mxu0 0.0
        %1821 = vmatpush1.msra.mxu0 0.0
        %1822 = vmatprep.subr.mxu0 0.0
        %1823 = vmatpush1.msra.mxu0 0.0
        %1824 = vmatprep.subr.mxu0 0.0
        %1825 = vmatpush1.msra.mxu0 0.0
        %1826 = vmatprep.subr.mxu0 0.0
        %1827 = vmatpush1.msra.mxu0 0.0
        %1828 = vmatprep.subr.mxu0 0.0
        %1829 = vmatpush1.msra.mxu0 0.0
        %1830 = vmatprep.subr.mxu0 0.0
        %1831 = vmatpush1.msra.mxu0 0.0
        %1832 = vmatprep.subr.mxu0 0.0
        %1833 = vmatpush1.msra.mxu0 0.0
        %1834 = vmatprep.subr.mxu0 0.0
        %1835 = vmatpush1.msra.mxu0 0.0
        %1836 = vmatprep.subr.mxu0 0.0
        %1837 = vmatpush1.msra.mxu0 0.0
        %1838 = vmatprep.subr.mxu0 0.0
        %1839 = vmatpush1.msra.mxu0 0.0
        %1840 = vmatprep.subr.mxu0 0.0
        %1841 = vmatpush1.msra.mxu0 0.0
        %1842 = vmatprep.subr.mxu0 0.0
        %1843 = vmatpush1.msra.mxu0 %v1805
        %1844 = vmatprep.subr.mxu0 0.0
        %1845 = vmatpush1.msra.mxu0 %v1803
        %1846 = vmatprep.subr.mxu0 0.0
        %1847 = vmatpush2.msra.mxu0 0.0
        %1848 = vmatprep.subr.mxu0 0.0
        %1849 = vmatpush2.msra.mxu0 0.0
        %1850 = vmatprep.subr.mxu0 0.0
        %1851 = vmatpush2.msra.mxu0 0.0
        %1852 = vmatprep.subr.mxu0 0.0
        %1853 = vmatpush2.msra.mxu0 0.0
        %1854 = vmatprep.subr.mxu0 0.0
        %1855 = vmatpush2.msra.mxu0 0.0
        %1856 = vmatprep.subr.mxu0 0.0
        %1857 = vmatpush2.msra.mxu0 0.0
        %1858 = vmatprep.subr.mxu0 0.0
        %1859 = vmatpush2.msra.mxu0 0.0
        %1860 = vmatprep.subr.mxu0 0.0
        %1861 = vmatpush2.msra.mxu0 0.0
        %1862 = vmatprep.subr.mxu0 0.0
        %1863 = vmatpush2.msra.mxu0 0.0
        %1864 = vmatprep.subr.mxu0 0.0
        %1865 = vmatpush2.msra.mxu0 0.0
        %1866 = vmatprep.subr.mxu0 0.0
        %1867 = vmatpush2.msra.mxu0 0.0
        %1868 = vmatprep.subr.mxu0 0.0
        %1869 = vmatpush2.msra.mxu0 0.0
        %1870 = vmatprep.subr.mxu0 0.0
        %1871 = vmatpush2.msra.mxu0 0.0
        %1872 = vmatprep.subr.mxu0 0.0
        %1873 = vmatpush2.msra.mxu0 0.0
        %1874 = vmatprep.subr.mxu0 0.0
        %1875 = vmatpush2.msra.mxu0 0.0
        %1876 = vmatprep.subr.mxu0 0.0
        %1877 = vmatpush2.msra.mxu0 0.0
        %1878 = vmatprep.mubr.f32.mxu0 0.0
        %1879 = vmatmul.mubr.f32.gmra.mxu0 %v1809
        %v1880 = vpop.f32.mrf.mxu0
        %v1881 = vadd.f32 0.0, %v1880
        %v1882 = vpop.f32.mrf.mxu0
        %1883 = vmatprep.mubr.f32.mxu0 0.0
        %1884 = vmatmul.mubr.f32.gmra.mxu0 %v1812
        %v1885 = vpop.f32.mrf.mxu0
        %v1886 = vadd.f32 0.0, %v1885
        %v1887 = vpop.f32.mrf.mxu0
        %1888 = vdwg.mxu0
        %1891 = vrot.lane.b32.xlu0 %v1481, 32
        %v1892 = vpop.permute.xlu0 %1891
        %1893 = vrot.lane.b32.xlu0 %v1486, 32
        %v1894 = vpop.permute.xlu0 %1893
        %1899 = vrot.lane.b32.xlu0 %v1681, 64
        %v1900 = vpop.permute.xlu0 %1899
        %1901 = vrot.lane.b32.xlu0 %v1686, 64
        %v1902 = vpop.permute.xlu0 %1901
        %1907 = vrot.lane.b32.xlu0 %v1881, 96
        %v1908 = vpop.permute.xlu0 %1907
        %1909 = vrot.lane.b32.xlu0 %v1886, 96
        %v1910 = vpop.permute.xlu0 %1909
        %v1913 = vsel %vm1095, %v1279, %v1892
        %v1914 = vsel %vm1095, %v1284, %v1894
        %vm1915 = vcmask 523264
        %v1916 = vsel %vm1915, %v1913, %v1900
        %v1917 = vsel %vm1915, %v1914, %v1902
        %vm1918 = vcmask 785408
        %v1919 = vsel %vm1918, %v1916, %v1908
        %v1920 = vsel %vm1918, %v1917, %v1910
        %v1921 = vld [vmem:[%s4] sm:$0xff]
        %v1922 = vld [vmem:[%s4 + $0x8] sm:$0xff]
        %v1923 = vld [vmem:[%s4 + $0x10] sm:$0xff]
        %v1924 = vld [vmem:[%s4 + $0x18] sm:$0xff]
        %v1925 = vld [vmem:[%s4 + $0x20] sm:$0xff]
        %v1926 = vld [vmem:[%s4 + $0x28] sm:$0xff]
        %v1927 = vld [vmem:[%s4 + $0x30] sm:$0xff]
        %v1928 = vld [vmem:[%s4 + $0x38] sm:$0xff]
        %v1929 = vld [vmem:[%s4 + $0x40] sm:$0xff]
        %v1930 = vld [vmem:[%s4 + $0x48] sm:$0xff]
        %v1931 = vld [vmem:[%s4 + $0x50] sm:$0xff]
        %v1932 = vld [vmem:[%s4 + $0x58] sm:$0xff]
        %v1933 = vld [vmem:[%s4 + $0x60] sm:$0xff]
        %v1934 = vld [vmem:[%s4 + $0x68] sm:$0xff]
        %v1935 = vld [vmem:[%s4 + $0x70] sm:$0xff]
        %v1936 = vld [vmem:[%s4 + $0x78] sm:$0xff]
        %1937 = vmatprep.subr.mxu0 0.0
        %1938 = vmatpush1.msra.mxu0 %v1936
        %1939 = vmatprep.subr.mxu0 0.0
        %1940 = vmatpush1.msra.mxu0 %v1935
        %1941 = vmatprep.subr.mxu0 0.0
        %1942 = vmatpush1.msra.mxu0 %v1934
        %1943 = vmatprep.subr.mxu0 0.0
        %1944 = vmatpush1.msra.mxu0 %v1933
        %1945 = vmatprep.subr.mxu0 0.0
        %1946 = vmatpush1.msra.mxu0 %v1932
        %1947 = vmatprep.subr.mxu0 0.0
        %1948 = vmatpush1.msra.mxu0 %v1931
        %1949 = vmatprep.subr.mxu0 0.0
        %1950 = vmatpush1.msra.mxu0 %v1930
        %1951 = vmatprep.subr.mxu0 0.0
        %1952 = vmatpush1.msra.mxu0 %v1929
        %1953 = vmatprep.subr.mxu0 0.0
        %1954 = vmatpush1.msra.mxu0 %v1928
        %1955 = vmatprep.subr.mxu0 0.0
        %1956 = vmatpush1.msra.mxu0 %v1927
        %1957 = vmatprep.subr.mxu0 0.0
        %1958 = vmatpush1.msra.mxu0 %v1926
        %1959 = vmatprep.subr.mxu0 0.0
        %1960 = vmatpush1.msra.mxu0 %v1925
        %1961 = vmatprep.subr.mxu0 0.0
        %1962 = vmatpush1.msra.mxu0 %v1924
        %1963 = vmatprep.subr.mxu0 0.0
        %1964 = vmatpush1.msra.mxu0 %v1923
        %1965 = vmatprep.subr.mxu0 0.0
        %1966 = vmatpush1.msra.mxu0 %v1922
        %1967 = vmatprep.subr.mxu0 0.0
        %1968 = vmatpush1.msra.mxu0 %v1921
        %1969 = vmatprep.subr.mxu0 0.0
        %1970 = vmatpush2.msra.mxu0 0.0
        %1971 = vmatprep.subr.mxu0 0.0
        %1972 = vmatpush2.msra.mxu0 0.0
        %1973 = vmatprep.subr.mxu0 0.0
        %1974 = vmatpush2.msra.mxu0 0.0
        %1975 = vmatprep.subr.mxu0 0.0
        %1976 = vmatpush2.msra.mxu0 0.0
        %1977 = vmatprep.subr.mxu0 0.0
        %1978 = vmatpush2.msra.mxu0 0.0
        %1979 = vmatprep.subr.mxu0 0.0
        %1980 = vmatpush2.msra.mxu0 0.0
        %1981 = vmatprep.subr.mxu0 0.0
        %1982 = vmatpush2.msra.mxu0 0.0
        %1983 = vmatprep.subr.mxu0 0.0
        %1984 = vmatpush2.msra.mxu0 0.0
        %1985 = vmatprep.subr.mxu0 0.0
        %1986 = vmatpush2.msra.mxu0 0.0
        %1987 = vmatprep.subr.mxu0 0.0
        %1988 = vmatpush2.msra.mxu0 0.0
        %1989 = vmatprep.subr.mxu0 0.0
        %1990 = vmatpush2.msra.mxu0 0.0
        %1991 = vmatprep.subr.mxu0 0.0
        %1992 = vmatpush2.msra.mxu0 0.0
        %1993 = vmatprep.subr.mxu0 0.0
        %1994 = vmatpush2.msra.mxu0 0.0
        %1995 = vmatprep.subr.mxu0 0.0
        %1996 = vmatpush2.msra.mxu0 0.0
        %1997 = vmatprep.subr.mxu0 0.0
        %1998 = vmatpush2.msra.mxu0 0.0
        %1999 = vmatprep.subr.mxu0 0.0
        %2000 = vmatpush2.msra.mxu0 0.0
        %2001 = vmatprep.mubr.f32.mxu0 0.0
        %2002 = vmatmul.mubr.f32.gmra.mxu0 %v1919
        %v2003 = vpop.f32.mrf.mxu0
        %v2004 = vadd.f32 0.0, %v2003
        %v2005 = vpop.f32.mrf.mxu0
        %2006 = vmatprep.mubr.f32.mxu0 0.0
        %2007 = vmatmul.mubr.f32.gmra.mxu0 %v1920
        %v2008 = vpop.f32.mrf.mxu0
        %v2009 = vadd.f32 0.0, %v2008
        %v2010 = vpop.f32.mrf.mxu0
        %2011 = vdwg.mxu0
        %v2012 = vadd.f32 %v833, %v2004
        %v2013 = vadd.f32 %v834, %v2009
        %v2014 = vrot.slane %v835, 5
        %v2015 = vlaneseq
        %v2016 = vshrl.u32 %v2015, 7
        %v2017 = vsub.s32 0, %v2016
        %v2018 = vrot.slane %v2014, %v2017
        %v2020 = vadd.f32 %v2012, %v2018
        %v2021 = vadd.f32 %v2013, %v2018
        %2022 = vadd.xlane.f32.xlu0 %v2020
        %v2023 = vpop.xlane.xlu0 %2022
        %2024 = vadd.xlane.f32.xlu0 %v2021
        %v2025 = vpop.xlane.xlu0 %2024
        %v2026 = vmul.f32 %v2023, %v842
        %v2027 = vmul.f32 %v2025, %v842
        %v2028 = vsub.f32 %v2020, %v2026
        %v2029 = vsub.f32 %v2021, %v2027
        %v2030 = vmul.f32 %v2028, %v2028
        %v2031 = vmul.f32 %v2029, %v2029
        %2032 = vadd.xlane.f32.xlu0 %v2030
        %v2033 = vpop.xlane.xlu0 %2032
        %2034 = vadd.xlane.f32.xlu0 %v2031
        %v2035 = vpop.xlane.xlu0 %2034
        %v2036 = vmul.f32 %v2033, %v842
        %v2037 = vmul.f32 %v2035, %v842
        %v2038 = vadd.f32 %v2036, 1e-05
        %v2039 = vadd.f32 %v2037, 1e-05
        %v2040 = vrsqrt.pop %v2038
        %v2041 = vrsqrt.pop %v2039
        %v2042 = vmul.f32 %v2028, %v2040
        %v2043 = vmul.f32 %v2029, %v2041
        %v2044 = vrot.slane %v835, 6
        %v2045 = vlaneseq
        %v2046 = vshrl.u32 %v2045, 7
        %v2047 = vsub.s32 0, %v2046
        %v2048 = vrot.slane %v2044, %v2047
        %v2050 = vmul.f32 %v2042, %v2048
        %v2051 = vmul.f32 %v2043, %v2048
        %v2052 = vrot.slane %v835, 7
        %v2053 = vlaneseq
        %v2054 = vshrl.u32 %v2053, 7
        %v2055 = vsub.s32 0, %v2054
        %v2056 = vrot.slane %v2052, %v2055
        %v2058 = vadd.f32 %v2050, %v2056
        %v2059 = vadd.f32 %v2051, %v2056
        %v2060 = vld [vmem:[#allocation5] sm:$0xff]
        %v2061 = vld [vmem:[#allocation5 + $0x8] sm:$0xff]
        %v2062 = vld [vmem:[#allocation5 + $0x10] sm:$0xff]
        %v2063 = vld [vmem:[#allocation5 + $0x18] sm:$0xff]
        %v2064 = vld [vmem:[#allocation5 + $0x20] sm:$0xff]
        %v2065 = vld [vmem:[#allocation5 + $0x28] sm:$0xff]
        %v2066 = vld [vmem:[#allocation5 + $0x30] sm:$0xff]
        %v2067 = vld [vmem:[#allocation5 + $0x38] sm:$0xff]
        %v2068 = vld [vmem:[#allocation5 + $0x40] sm:$0xff]
        %v2069 = vld [vmem:[#allocation5 + $0x48] sm:$0xff]
        %v2070 = vld [vmem:[#allocation5 + $0x50] sm:$0xff]
        %v2071 = vld [vmem:[#allocation5 + $0x58] sm:$0xff]
        %v2072 = vld [vmem:[#allocation5 + $0x60] sm:$0xff]
        %v2073 = vld [vmem:[#allocation5 + $0x68] sm:$0xff]
        %v2074 = vld [vmem:[#allocation5 + $0x70] sm:$0xff]
        %v2075 = vld [vmem:[#allocation5 + $0x78] sm:$0xff]
        %v2076 = vld [vmem:[#allocation5 + $0x80] sm:$0xff]
        %v2077 = vld [vmem:[#allocation5 + $0x88] sm:$0xff]
        %v2078 = vld [vmem:[#allocation5 + $0x90] sm:$0xff]
        %v2079 = vld [vmem:[#allocation5 + $0x98] sm:$0xff]
        %v2080 = vld [vmem:[#allocation5 + $0xa0] sm:$0xff]
        %v2081 = vld [vmem:[#allocation5 + $0xa8] sm:$0xff]
        %v2082 = vld [vmem:[#allocation5 + $0xb0] sm:$0xff]
        %v2083 = vld [vmem:[#allocation5 + $0xb8] sm:$0xff]
        %v2084 = vld [vmem:[#allocation5 + $0xc0] sm:$0xff]
        %v2085 = vld [vmem:[#allocation5 + $0xc8] sm:$0xff]
        %v2086 = vld [vmem:[#allocation5 + $0xd0] sm:$0xff]
        %v2087 = vld [vmem:[#allocation5 + $0xd8] sm:$0xff]
        %v2088 = vld [vmem:[#allocation5 + $0xe0] sm:$0xff]
        %v2089 = vld [vmem:[#allocation5 + $0xe8] sm:$0xff]
        %v2090 = vld [vmem:[#allocation5 + $0xf0] sm:$0xff]
        %v2091 = vld [vmem:[#allocation5 + $0xf8] sm:$0xff]
        %v2093 = vlaneseq
        %v2094 = vshrl.u32 %v2093, 7
        %v2095 = vsub.s32 0, %v2094
        %v2096 = vrot.slane %v837, %v2095
        %v2097 = vlaneseq
        %v2098 = vshrl.u32 %v2097, 7
        %v2099 = vsub.s32 1, %v2098
        %v2100 = vrot.slane %v837, %v2099
        %2103 = vmatprep.subr.mxu0 %v2091
        %2104 = vmatpush1.msra.mxu0 %v2090
        %2105 = vmatprep.subr.mxu0 %v2089
        %2106 = vmatpush1.msra.mxu0 %v2088
        %2107 = vmatprep.subr.mxu0 %v2087
        %2108 = vmatpush1.msra.mxu0 %v2086
        %2109 = vmatprep.subr.mxu0 %v2085
        %2110 = vmatpush1.msra.mxu0 %v2084
        %2111 = vmatprep.subr.mxu0 %v2083
        %2112 = vmatpush1.msra.mxu0 %v2082
        %2113 = vmatprep.subr.mxu0 %v2081
        %2114 = vmatpush1.msra.mxu0 %v2080
        %2115 = vmatprep.subr.mxu0 %v2079
        %2116 = vmatpush1.msra.mxu0 %v2078
        %2117 = vmatprep.subr.mxu0 %v2077
        %2118 = vmatpush1.msra.mxu0 %v2076
        %2119 = vmatprep.subr.mxu0 %v2075
        %2120 = vmatpush1.msra.mxu0 %v2074
        %2121 = vmatprep.subr.mxu0 %v2073
        %2122 = vmatpush1.msra.mxu0 %v2072
        %2123 = vmatprep.subr.mxu0 %v2071
        %2124 = vmatpush1.msra.mxu0 %v2070
        %2125 = vmatprep.subr.mxu0 %v2069
        %2126 = vmatpush1.msra.mxu0 %v2068
        %2127 = vmatprep.subr.mxu0 %v2067
        %2128 = vmatpush1.msra.mxu0 %v2066
        %2129 = vmatprep.subr.mxu0 %v2065
        %2130 = vmatpush1.msra.mxu0 %v2064
        %2131 = vmatprep.subr.mxu0 %v2063
        %2132 = vmatpush1.msra.mxu0 %v2062
        %2133 = vmatprep.subr.mxu0 %v2061
        %2134 = vmatpush1.msra.mxu0 %v2060
        %2135 = vmatprep.subr.mxu0 0.0
        %2136 = vmatpush2.msra.mxu0 0.0
        %2137 = vmatprep.subr.mxu0 0.0
        %2138 = vmatpush2.msra.mxu0 0.0
        %2139 = vmatprep.subr.mxu0 0.0
        %2140 = vmatpush2.msra.mxu0 0.0
        %2141 = vmatprep.subr.mxu0 0.0
        %2142 = vmatpush2.msra.mxu0 0.0
        %2143 = vmatprep.subr.mxu0 0.0
        %2144 = vmatpush2.msra.mxu0 0.0
        %2145 = vmatprep.subr.mxu0 0.0
        %2146 = vmatpush2.msra.mxu0 0.0
        %2147 = vmatprep.subr.mxu0 0.0
        %2148 = vmatpush2.msra.mxu0 0.0
        %2149 = vmatprep.subr.mxu0 0.0
        %2150 = vmatpush2.msra.mxu0 0.0
        %2151 = vmatprep.subr.mxu0 0.0
        %2152 = vmatpush2.msra.mxu0 0.0
        %2153 = vmatprep.subr.mxu0 0.0
        %2154 = vmatpush2.msra.mxu0 0.0
        %2155 = vmatprep.subr.mxu0 0.0
        %2156 = vmatpush2.msra.mxu0 0.0
        %2157 = vmatprep.subr.mxu0 0.0
        %2158 = vmatpush2.msra.mxu0 0.0
        %2159 = vmatprep.subr.mxu0 0.0
        %2160 = vmatpush2.msra.mxu0 0.0
        %2161 = vmatprep.subr.mxu0 0.0
        %2162 = vmatpush2.msra.mxu0 0.0
        %2163 = vmatprep.subr.mxu0 0.0
        %2164 = vmatpush2.msra.mxu0 0.0
        %2165 = vmatprep.subr.mxu0 0.0
        %2166 = vmatpush2.msra.mxu0 0.0
        %2167 = vmatprep.mubr.f32.mxu0 0.0
        %2168 = vmatmul.mubr.f32.gmra.mxu0 %v2058
        %v2169 = vpop.f32.mrf.mxu0
        %v2170 = vadd.f32 %v2096, %v2169
        %v2171 = vpop.f32.mrf.mxu0
        %v2172 = vadd.f32 %v2100, %v2171
        %2173 = vmatprep.mubr.f32.mxu0 0.0
        %2174 = vmatmul.mubr.f32.gmra.mxu0 %v2059
        %v2175 = vpop.f32.mrf.mxu0
        %v2176 = vadd.f32 %v2096, %v2175
        %v2177 = vpop.f32.mrf.mxu0
        %v2178 = vadd.f32 %v2100, %v2177
        %2179 = vdwg.mxu0
        %v2180 = vmax.f32 %v2170, 0.0
        %v2181 = vmax.f32 %v2172, 0.0
        %v2182 = vmax.f32 %v2176, 0.0
        %v2183 = vmax.f32 %v2178, 0.0
        %v2184 = vld [vmem:[#allocation7] sm:$0xff]
        %v2185 = vld [vmem:[#allocation7 + $0x8] sm:$0xff]
        %v2186 = vld [vmem:[#allocation7 + $0x10] sm:$0xff]
        %v2187 = vld [vmem:[#allocation7 + $0x18] sm:$0xff]
        %v2188 = vld [vmem:[#allocation7 + $0x20] sm:$0xff]
        %v2189 = vld [vmem:[#allocation7 + $0x28] sm:$0xff]
        %v2190 = vld [vmem:[#allocation7 + $0x30] sm:$0xff]
        %v2191 = vld [vmem:[#allocation7 + $0x38] sm:$0xff]
        %v2192 = vld [vmem:[#allocation7 + $0x40] sm:$0xff]
        %v2193 = vld [vmem:[#allocation7 + $0x48] sm:$0xff]
        %v2194 = vld [vmem:[#allocation7 + $0x50] sm:$0xff]
        %v2195 = vld [vmem:[#allocation7 + $0x58] sm:$0xff]
        %v2196 = vld [vmem:[#allocation7 + $0x60] sm:$0xff]
        %v2197 = vld [vmem:[#allocation7 + $0x68] sm:$0xff]
        %v2198 = vld [vmem:[#allocation7 + $0x70] sm:$0xff]
        %v2199 = vld [vmem:[#allocation7 + $0x78] sm:$0xff]
        %v2200 = vld [vmem:[#allocation7 + $0x80] sm:$0xff]
        %v2201 = vld [vmem:[#allocation7 + $0x88] sm:$0xff]
        %v2202 = vld [vmem:[#allocation7 + $0x90] sm:$0xff]
        %v2203 = vld [vmem:[#allocation7 + $0x98] sm:$0xff]
        %v2204 = vld [vmem:[#allocation7 + $0xa0] sm:$0xff]
        %v2205 = vld [vmem:[#allocation7 + $0xa8] sm:$0xff]
        %v2206 = vld [vmem:[#allocation7 + $0xb0] sm:$0xff]
        %v2207 = vld [vmem:[#allocation7 + $0xb8] sm:$0xff]
        %v2208 = vld [vmem:[#allocation7 + $0xc0] sm:$0xff]
        %v2209 = vld [vmem:[#allocation7 + $0xc8] sm:$0xff]
        %v2210 = vld [vmem:[#allocation7 + $0xd0] sm:$0xff]
        %v2211 = vld [vmem:[#allocation7 + $0xd8] sm:$0xff]
        %v2212 = vld [vmem:[#allocation7 + $0xe0] sm:$0xff]
        %v2213 = vld [vmem:[#allocation7 + $0xe8] sm:$0xff]
        %v2214 = vld [vmem:[#allocation7 + $0xf0] sm:$0xff]
        %v2215 = vld [vmem:[#allocation7 + $0xf8] sm:$0xff]
        %2216 = vmatprep.subr.mxu0 0.0
        %2217 = vmatpush1.msra.mxu0 %v2199
        %2218 = vmatprep.subr.mxu0 0.0
        %2219 = vmatpush1.msra.mxu0 %v2198
        %2220 = vmatprep.subr.mxu0 0.0
        %2221 = vmatpush1.msra.mxu0 %v2197
        %2222 = vmatprep.subr.mxu0 0.0
        %2223 = vmatpush1.msra.mxu0 %v2196
        %2224 = vmatprep.subr.mxu0 0.0
        %2225 = vmatpush1.msra.mxu0 %v2195
        %2226 = vmatprep.subr.mxu0 0.0
        %2227 = vmatpush1.msra.mxu0 %v2194
        %2228 = vmatprep.subr.mxu0 0.0
        %2229 = vmatpush1.msra.mxu0 %v2193
        %2230 = vmatprep.subr.mxu0 0.0
        %2231 = vmatpush1.msra.mxu0 %v2192
        %2232 = vmatprep.subr.mxu0 0.0
        %2233 = vmatpush1.msra.mxu0 %v2191
        %2234 = vmatprep.subr.mxu0 0.0
        %2235 = vmatpush1.msra.mxu0 %v2190
        %2236 = vmatprep.subr.mxu0 0.0
        %2237 = vmatpush1.msra.mxu0 %v2189
        %2238 = vmatprep.subr.mxu0 0.0
        %2239 = vmatpush1.msra.mxu0 %v2188
        %2240 = vmatprep.subr.mxu0 0.0
        %2241 = vmatpush1.msra.mxu0 %v2187
        %2242 = vmatprep.subr.mxu0 0.0
        %2243 = vmatpush1.msra.mxu0 %v2186
        %2244 = vmatprep.subr.mxu0 0.0
        %2245 = vmatpush1.msra.mxu0 %v2185
        %2246 = vmatprep.subr.mxu0 0.0
        %2247 = vmatpush1.msra.mxu0 %v2184
        %2248 = vmatprep.subr.mxu0 0.0
        %2249 = vmatpush2.msra.mxu0 %v2215
        %2250 = vmatprep.subr.mxu0 0.0
        %2251 = vmatpush2.msra.mxu0 %v2214
        %2252 = vmatprep.subr.mxu0 0.0
        %2253 = vmatpush2.msra.mxu0 %v2213
        %2254 = vmatprep.subr.mxu0 0.0
        %2255 = vmatpush2.msra.mxu0 %v2212
        %2256 = vmatprep.subr.mxu0 0.0
        %2257 = vmatpush2.msra.mxu0 %v2211
        %2258 = vmatprep.subr.mxu0 0.0
        %2259 = vmatpush2.msra.mxu0 %v2210
        %2260 = vmatprep.subr.mxu0 0.0
        %2261 = vmatpush2.msra.mxu0 %v2209
        %2262 = vmatprep.subr.mxu0 0.0
        %2263 = vmatpush2.msra.mxu0 %v2208
        %2264 = vmatprep.subr.mxu0 0.0
        %2265 = vmatpush2.msra.mxu0 %v2207
        %2266 = vmatprep.subr.mxu0 0.0
        %2267 = vmatpush2.msra.mxu0 %v2206
        %2268 = vmatprep.subr.mxu0 0.0
        %2269 = vmatpush2.msra.mxu0 %v2205
        %2270 = vmatprep.subr.mxu0 0.0
        %2271 = vmatpush2.msra.mxu0 %v2204
        %2272 = vmatprep.subr.mxu0 0.0
        %2273 = vmatpush2.msra.mxu0 %v2203
        %2274 = vmatprep.subr.mxu0 0.0
        %2275 = vmatpush2.msra.mxu0 %v2202
        %2276 = vmatprep.subr.mxu0 0.0
        %2277 = vmatpush2.msra.mxu0 %v2201
        %2278 = vmatprep.subr.mxu0 0.0
        %2279 = vmatpush2.msra.mxu0 %v2200
        %2280 = vmatprep.mubr.f32.mxu0 %v2181
        %2281 = vmatmul.mubr.f32.gmra.mxu0 %v2180
        %v2282 = vpop.f32.mrf.mxu0
        %v2283 = vadd.f32 0.0, %v2282
        %v2284 = vpop.f32.mrf.mxu0
        %2285 = vmatprep.mubr.f32.mxu0 %v2183
        %2286 = vmatmul.mubr.f32.gmra.mxu0 %v2182
        %v2287 = vpop.f32.mrf.mxu0
        %v2288 = vadd.f32 0.0, %v2287
        %v2289 = vpop.f32.mrf.mxu0
        %2290 = vdwg.mxu0
        %v2291 = vadd.f32 %v2020, %v2283
        %v2292 = vadd.f32 %v2021, %v2288
        %v2293 = vrot.slane %v837, 2
        %v2294 = vlaneseq
        %v2295 = vshrl.u32 %v2294, 7
        %v2296 = vsub.s32 0, %v2295
        %v2297 = vrot.slane %v2293, %v2296
        %v2299 = vadd.f32 %v2291, %v2297
        %v2300 = vadd.f32 %v2292, %v2297
        %s2301 = scalar_lea.vmem [#allocation8], 1
        %v2302 = vld [vmem:[%s2301] ss:$2 sm:$0xff]
        %s2303 = scalar_lea.vmem [#allocation8], 17
        %v2304 = vld [vmem:[%s2303] ss:$2 sm:$0x7]
        %2305 = vadd.xlane.f32.xlu0 %v2299
        %v2306 = vpop.xlane.xlu0 %2305
        %2307 = vadd.xlane.f32.xlu0 %v2300
        %v2308 = vpop.xlane.xlu0 %2307
        %v2309 = vmul.f32 %v2306, %v842
        %v2310 = vmul.f32 %v2308, %v842
        %v2311 = vsub.f32 %v2299, %v2309
        %v2312 = vsub.f32 %v2300, %v2310
        %v2313 = vmul.f32 %v2311, %v2311
        %v2314 = vmul.f32 %v2312, %v2312
        %2315 = vadd.xlane.f32.xlu0 %v2313
        %v2316 = vpop.xlane.xlu0 %2315
        %2317 = vadd.xlane.f32.xlu0 %v2314
        %v2318 = vpop.xlane.xlu0 %2317
        %v2319 = vmul.f32 %v2316, %v842
        %v2320 = vmul.f32 %v2318, %v842
        %v2321 = vadd.f32 %v2319, 1e-05
        %v2322 = vadd.f32 %v2320, 1e-05
        %v2323 = vrsqrt.pop %v2321
        %v2324 = vrsqrt.pop %v2322
        %v2325 = vmul.f32 %v2311, %v2323
        %v2326 = vmul.f32 %v2312, %v2324
        %v2328 = vlaneseq
        %v2329 = vshrl.u32 %v2328, 7
        %v2330 = vsub.s32 0, %v2329
        %v2331 = vrot.slane %v2302, %v2330
        %v2333 = vmul.f32 %v2325, %v2331
        %v2334 = vmul.f32 %v2326, %v2331
        %v2335 = vrot.slane %v2302, 1
        %v2336 = vlaneseq
        %v2337 = vshrl.u32 %v2336, 7
        %v2338 = vsub.s32 0, %v2337
        %v2339 = vrot.slane %v2335, %v2338
        %v2341 = vadd.f32 %v2333, %v2339
        %v2342 = vadd.f32 %v2334, %v2339
        %s2343 = scalar_lea.vmem [#allocation2], 384
        %v2344 = vld [vmem:[%s2343] sm:$0xff]
        %v2345 = vld [vmem:[%s2343 + $0x8] sm:$0xff]
        %v2346 = vld [vmem:[%s2343 + $0x10] sm:$0xff]
        %v2347 = vld [vmem:[%s2343 + $0x18] sm:$0xff]
        %v2348 = vld [vmem:[%s2343 + $0x20] sm:$0xff]
        %v2349 = vld [vmem:[%s2343 + $0x28] sm:$0xff]
        %v2350 = vld [vmem:[%s2343 + $0x30] sm:$0xff]
        %v2351 = vld [vmem:[%s2343 + $0x38] sm:$0xff]
        %v2352 = vld [vmem:[%s2343 + $0x40] sm:$0xff]
        %v2353 = vld [vmem:[%s2343 + $0x48] sm:$0xff]
        %v2354 = vld [vmem:[%s2343 + $0x50] sm:$0xff]
        %v2355 = vld [vmem:[%s2343 + $0x58] sm:$0xff]
        %v2356 = vld [vmem:[%s2343 + $0x60] sm:$0xff]
        %v2357 = vld [vmem:[%s2343 + $0x68] sm:$0xff]
        %v2358 = vld [vmem:[%s2343 + $0x70] sm:$0xff]
        %v2359 = vld [vmem:[%s2343 + $0x78] sm:$0xff]
        %v2360 = vld [vmem:[%s2343 + $0x80] sm:$0xff]
        %v2361 = vld [vmem:[%s2343 + $0x88] sm:$0xff]
        %v2362 = vld [vmem:[%s2343 + $0x90] sm:$0xff]
        %v2363 = vld [vmem:[%s2343 + $0x98] sm:$0xff]
        %v2364 = vld [vmem:[%s2343 + $0xa0] sm:$0xff]
        %v2365 = vld [vmem:[%s2343 + $0xa8] sm:$0xff]
        %v2366 = vld [vmem:[%s2343 + $0xb0] sm:$0xff]
        %v2367 = vld [vmem:[%s2343 + $0xb8] sm:$0xff]
        %v2368 = vld [vmem:[%s2343 + $0xc0] sm:$0xff]
        %v2369 = vld [vmem:[%s2343 + $0xc8] sm:$0xff]
        %v2370 = vld [vmem:[%s2343 + $0xd0] sm:$0xff]
        %v2371 = vld [vmem:[%s2343 + $0xd8] sm:$0xff]
        %v2372 = vld [vmem:[%s2343 + $0xe0] sm:$0xff]
        %v2373 = vld [vmem:[%s2343 + $0xe8] sm:$0xff]
        %v2374 = vld [vmem:[%s2343 + $0xf0] sm:$0xff]
        %v2375 = vld [vmem:[%s2343 + $0xf8] sm:$0xff]
        %v2376 = vld [vmem:[%s2343 + $0x100] sm:$0xff]
        %v2377 = vld [vmem:[%s2343 + $0x108] sm:$0xff]
        %v2378 = vld [vmem:[%s2343 + $0x110] sm:$0xff]
        %v2379 = vld [vmem:[%s2343 + $0x118] sm:$0xff]
        %v2380 = vld [vmem:[%s2343 + $0x120] sm:$0xff]
        %v2381 = vld [vmem:[%s2343 + $0x128] sm:$0xff]
        %v2382 = vld [vmem:[%s2343 + $0x130] sm:$0xff]
        %v2383 = vld [vmem:[%s2343 + $0x138] sm:$0xff]
        %v2384 = vld [vmem:[%s2343 + $0x140] sm:$0xff]
        %v2385 = vld [vmem:[%s2343 + $0x148] sm:$0xff]
        %v2386 = vld [vmem:[%s2343 + $0x150] sm:$0xff]
        %v2387 = vld [vmem:[%s2343 + $0x158] sm:$0xff]
        %v2388 = vld [vmem:[%s2343 + $0x160] sm:$0xff]
        %v2389 = vld [vmem:[%s2343 + $0x168] sm:$0xff]
        %v2390 = vld [vmem:[%s2343 + $0x170] sm:$0xff]
        %v2391 = vld [vmem:[%s2343 + $0x178] sm:$0xff]
        %v2392 = vrot.slane %v2302, 2
        %v2393 = vlaneseq
        %v2394 = vshrl.u32 %v2393, 7
        %v2395 = vsub.s32 0, %v2394
        %v2396 = vrot.slane %v2392, %v2395
        %v2397 = vlaneseq
        %v2398 = vshrl.u32 %v2397, 7
        %v2399 = vsub.s32 1, %v2398
        %v2400 = vrot.slane %v2392, %v2399
        %v2401 = vlaneseq
        %v2402 = vshrl.u32 %v2401, 7
        %v2403 = vsub.s32 2, %v2402
        %v2404 = vrot.slane %v2392, %v2403
        %2408 = vmatprep.subr.mxu0 %v2390
        %2409 = vmatpush1.msra.mxu0 %v2389
        %2410 = vmatprep.subr.mxu0 %v2387
        %2411 = vmatpush1.msra.mxu0 %v2386
        %2412 = vmatprep.subr.mxu0 %v2384
        %2413 = vmatpush1.msra.mxu0 %v2383
        %2414 = vmatprep.subr.mxu0 %v2381
        %2415 = vmatpush1.msra.mxu0 %v2380
        %2416 = vmatprep.subr.mxu0 %v2378
        %2417 = vmatpush1.msra.mxu0 %v2377
        %2418 = vmatprep.subr.mxu0 %v2375
        %2419 = vmatpush1.msra.mxu0 %v2374
        %2420 = vmatprep.subr.mxu0 %v2372
        %2421 = vmatpush1.msra.mxu0 %v2371
        %2422 = vmatprep.subr.mxu0 %v2369
        %2423 = vmatpush1.msra.mxu0 %v2368
        %2424 = vmatprep.subr.mxu0 %v2366
        %2425 = vmatpush1.msra.mxu0 %v2365
        %2426 = vmatprep.subr.mxu0 %v2363
        %2427 = vmatpush1.msra.mxu0 %v2362
        %2428 = vmatprep.subr.mxu0 %v2360
        %2429 = vmatpush1.msra.mxu0 %v2359
        %2430 = vmatprep.subr.mxu0 %v2357
        %2431 = vmatpush1.msra.mxu0 %v2356
        %2432 = vmatprep.subr.mxu0 %v2354
        %2433 = vmatpush1.msra.mxu0 %v2353
        %2434 = vmatprep.subr.mxu0 %v2351
        %2435 = vmatpush1.msra.mxu0 %v2350
        %2436 = vmatprep.subr.mxu0 %v2348
        %2437 = vmatpush1.msra.mxu0 %v2347
        %2438 = vmatprep.subr.mxu0 %v2345
        %2439 = vmatpush1.msra.mxu0 %v2344
        %2440 = vmatprep.subr.mxu0 0.0
        %2441 = vmatpush2.msra.mxu0 0.0
        %2442 = vmatprep.subr.mxu0 0.0
        %2443 = vmatpush2.msra.mxu0 0.0
        %2444 = vmatprep.subr.mxu0 0.0
        %2445 = vmatpush2.msra.mxu0 0.0
        %2446 = vmatprep.subr.mxu0 0.0
        %2447 = vmatpush2.msra.mxu0 0.0
        %2448 = vmatprep.subr.mxu0 0.0
        %2449 = vmatpush2.msra.mxu0 0.0
        %2450 = vmatprep.subr.mxu0 0.0
        %2451 = vmatpush2.msra.mxu0 0.0
        %2452 = vmatprep.subr.mxu0 0.0
        %2453 = vmatpush2.msra.mxu0 0.0
        %2454 = vmatprep.subr.mxu0 0.0
        %2455 = vmatpush2.msra.mxu0 0.0
        %2456 = vmatprep.subr.mxu0 0.0
        %2457 = vmatpush2.msra.mxu0 0.0
        %2458 = vmatprep.subr.mxu0 0.0
        %2459 = vmatpush2.msra.mxu0 0.0
        %2460 = vmatprep.subr.mxu0 0.0
        %2461 = vmatpush2.msra.mxu0 0.0
        %2462 = vmatprep.subr.mxu0 0.0
        %2463 = vmatpush2.msra.mxu0 0.0
        %2464 = vmatprep.subr.mxu0 0.0
        %2465 = vmatpush2.msra.mxu0 0.0
        %2466 = vmatprep.subr.mxu0 0.0
        %2467 = vmatpush2.msra.mxu0 0.0
        %2468 = vmatprep.subr.mxu0 0.0
        %2469 = vmatpush2.msra.mxu0 0.0
        %2470 = vmatprep.subr.mxu0 0.0
        %2471 = vmatpush2.msra.mxu0 0.0
        %2472 = vmatprep.mubr.f32.mxu0 0.0
        %2473 = vmatmul.mubr.f32.gmra.mxu0 %v2341
        %v2474 = vpop.f32.mrf.mxu0
        %v2475 = vadd.f32 %v2396, %v2474
        %v2476 = vpop.f32.mrf.mxu0
        %v2477 = vadd.f32 %v2400, %v2476
        %2478 = vmatprep.mubr.f32.mxu0 0.0
        %2479 = vmatmul.mubr.f32.gmra.mxu0 %v2342
        %v2480 = vpop.f32.mrf.mxu0
        %v2481 = vadd.f32 %v2396, %v2480
        %v2482 = vpop.f32.mrf.mxu0
        %v2483 = vadd.f32 %v2400, %v2482
        %2484 = vdwg.mxu0
        %2485 = vmatprep.subr.mxu0 0.0
        %2486 = vmatpush1.msra.mxu0 %v2391
        %2487 = vmatprep.subr.mxu0 0.0
        %2488 = vmatpush1.msra.mxu0 %v2388
        %2489 = vmatprep.subr.mxu0 0.0
        %2490 = vmatpush1.msra.mxu0 %v2385
        %2491 = vmatprep.subr.mxu0 0.0
        %2492 = vmatpush1.msra.mxu0 %v2382
        %2493 = vmatprep.subr.mxu0 0.0
        %2494 = vmatpush1.msra.mxu0 %v2379
        %2495 = vmatprep.subr.mxu0 0.0
        %2496 = vmatpush1.msra.mxu0 %v2376
        %2497 = vmatprep.subr.mxu0 0.0
        %2498 = vmatpush1.msra.mxu0 %v2373
        %2499 = vmatprep.subr.mxu0 0.0
        %2500 = vmatpush1.msra.mxu0 %v2370
        %2501 = vmatprep.subr.mxu0 0.0
        %2502 = vmatpush1.msra.mxu0 %v2367
        %2503 = vmatprep.subr.mxu0 0.0
        %2504 = vmatpush1.msra.mxu0 %v2364
        %2505 = vmatprep.subr.mxu0 0.0
        %2506 = vmatpush1.msra.mxu0 %v2361
        %2507 = vmatprep.subr.mxu0 0.0
        %2508 = vmatpush1.msra.mxu0 %v2358
        %2509 = vmatprep.subr.mxu0 0.0
        %2510 = vmatpush1.msra.mxu0 %v2355
        %2511 = vmatprep.subr.mxu0 0.0
        %2512 = vmatpush1.msra.mxu0 %v2352
        %2513 = vmatprep.subr.mxu0 0.0
        %2514 = vmatpush1.msra.mxu0 %v2349
        %2515 = vmatprep.subr.mxu0 0.0
        %2516 = vmatpush1.msra.mxu0 %v2346
        %2517 = vmatprep.subr.mxu0 0.0
        %2518 = vmatpush2.msra.mxu0 0.0
        %2519 = vmatprep.subr.mxu0 0.0
        %2520 = vmatpush2.msra.mxu0 0.0
        %2521 = vmatprep.subr.mxu0 0.0
        %2522 = vmatpush2.msra.mxu0 0.0
        %2523 = vmatprep.subr.mxu0 0.0
        %2524 = vmatpush2.msra.mxu0 0.0
        %2525 = vmatprep.subr.mxu0 0.0
        %2526 = vmatpush2.msra.mxu0 0.0
        %2527 = vmatprep.subr.mxu0 0.0
        %2528 = vmatpush2.msra.mxu0 0.0
        %2529 = vmatprep.subr.mxu0 0.0
        %2530 = vmatpush2.msra.mxu0 0.0
        %2531 = vmatprep.subr.mxu0 0.0
        %2532 = vmatpush2.msra.mxu0 0.0
        %2533 = vmatprep.subr.mxu0 0.0
        %2534 = vmatpush2.msra.mxu0 0.0
        %2535 = vmatprep.subr.mxu0 0.0
        %2536 = vmatpush2.msra.mxu0 0.0
        %2537 = vmatprep.subr.mxu0 0.0
        %2538 = vmatpush2.msra.mxu0 0.0
        %2539 = vmatprep.subr.mxu0 0.0
        %2540 = vmatpush2.msra.mxu0 0.0
        %2541 = vmatprep.subr.mxu0 0.0
        %2542 = vmatpush2.msra.mxu0 0.0
        %2543 = vmatprep.subr.mxu0 0.0
        %2544 = vmatpush2.msra.mxu0 0.0
        %2545 = vmatprep.subr.mxu0 0.0
        %2546 = vmatpush2.msra.mxu0 0.0
        %2547 = vmatprep.subr.mxu0 0.0
        %2548 = vmatpush2.msra.mxu0 0.0
        %2549 = vmatprep.mubr.f32.mxu0 0.0
        %2550 = vmatmul.mubr.f32.gmra.mxu0 %v2341
        %v2551 = vpop.f32.mrf.mxu0
        %v2552 = vadd.f32 %v2404, %v2551
        %v2553 = vpop.f32.mrf.mxu0
        %2554 = vmatprep.mubr.f32.mxu0 0.0
        %2555 = vmatmul.mubr.f32.gmra.mxu0 %v2342
        %v2556 = vpop.f32.mrf.mxu0
        %v2557 = vadd.f32 %v2404, %v2556
        %v2558 = vpop.f32.mrf.mxu0
        %2559 = vdwg.mxu0
        %v2560 = vmul.f32 %v2475, 0.17677669
        %v2561 = vmul.f32 %v2481, 0.17677669
        %v2563 = vsel %vm1095, %v2560, 0
        %v2566 = vsel %vm1095, %v2561, 0
        %v2569 = vsel %vm1095, %v2477, 0
        %v2572 = vsel %vm1095, %v2483, 0
        %2574 = vmatprep.subr.mxu0 0.0
        %2575 = vmatpush1.xpose.msra.mxu0 0.0
        %2576 = vmatprep.subr.mxu0 0.0
        %2577 = vmatpush1.xpose.msra.mxu0 0.0
        %2578 = vmatprep.subr.mxu0 0.0
        %2579 = vmatpush1.xpose.msra.mxu0 0.0
        %2580 = vmatprep.subr.mxu0 0.0
        %2581 = vmatpush1.xpose.msra.mxu0 0.0
        %2582 = vmatprep.subr.mxu0 0.0
        %2583 = vmatpush1.xpose.msra.mxu0 0.0
        %2584 = vmatprep.subr.mxu0 0.0
        %2585 = vmatpush1.xpose.msra.mxu0 0.0
        %2586 = vmatprep.subr.mxu0 0.0
        %2587 = vmatpush1.xpose.msra.mxu0 0.0
        %2588 = vmatprep.subr.mxu0 0.0
        %2589 = vmatpush1.xpose.msra.mxu0 0.0
        %2590 = vmatprep.subr.mxu0 0.0
        %2591 = vmatpush1.xpose.msra.mxu0 0.0
        %2592 = vmatprep.subr.mxu0 0.0
        %2593 = vmatpush1.xpose.msra.mxu0 0.0
        %2594 = vmatprep.subr.mxu0 0.0
        %2595 = vmatpush1.xpose.msra.mxu0 0.0
        %2596 = vmatprep.subr.mxu0 0.0
        %2597 = vmatpush1.xpose.msra.mxu0 0.0
        %2598 = vmatprep.subr.mxu0 0.0
        %2599 = vmatpush1.xpose.msra.mxu0 0.0
        %2600 = vmatprep.subr.mxu0 0.0
        %2601 = vmatpush1.xpose.msra.mxu0 0.0
        %2602 = vmatprep.subr.mxu0 0.0
        %2603 = vmatpush1.xpose.msra.mxu0 %v2572
        %2604 = vmatprep.subr.mxu0 0.0
        %2605 = vmatpush1.xpose.msra.mxu0 %v2569
        %2606 = vmatprep.subr.mxu0 0.0
        %2607 = vmatpush2.xpose.msra.mxu0 0.0
        %2608 = vmatprep.subr.mxu0 0.0
        %2609 = vmatpush2.xpose.msra.mxu0 0.0
        %2610 = vmatprep.subr.mxu0 0.0
        %2611 = vmatpush2.xpose.msra.mxu0 0.0
        %2612 = vmatprep.subr.mxu0 0.0
        %2613 = vmatpush2.xpose.msra.mxu0 0.0
        %2614 = vmatprep.subr.mxu0 0.0
        %2615 = vmatpush2.xpose.msra.mxu0 0.0
        %2616 = vmatprep.subr.mxu0 0.0
        %2617 = vmatpush2.xpose.msra.mxu0 0.0
        %2618 = vmatprep.subr.mxu0 0.0
        %2619 = vmatpush2.xpose.msra.mxu0 0.0
        %2620 = vmatprep.subr.mxu0 0.0
        %2621 = vmatpush2.xpose.msra.mxu0 0.0
        %2622 = vmatprep.subr.mxu0 0.0
        %2623 = vmatpush2.xpose.msra.mxu0 0.0
        %2624 = vmatprep.subr.mxu0 0.0
        %2625 = vmatpush2.xpose.msra.mxu0 0.0
        %2626 = vmatprep.subr.mxu0 0.0
        %2627 = vmatpush2.xpose.msra.mxu0 0.0
        %2628 = vmatprep.subr.mxu0 0.0
        %2629 = vmatpush2.xpose.msra.mxu0 0.0
        %2630 = vmatprep.subr.mxu0 0.0
        %2631 = vmatpush2.xpose.msra.mxu0 0.0
        %2632 = vmatprep.subr.mxu0 0.0
        %2633 = vmatpush2.xpose.msra.mxu0 0.0
        %2634 = vmatprep.subr.mxu0 0.0
        %2635 = vmatpush2.xpose.msra.mxu0 0.0
        %2636 = vmatprep.subr.mxu0 0.0
        %2637 = vmatpush2.xpose.msra.mxu0 0.0
        %2638 = vmatprep.mubr.f32.mxu0 0.0
        %2639 = vmatmul.mubr.f32.gmra.mxu0 %v2563
        %v2640 = vpop.f32.mrf.mxu0
        %v2641 = vadd.f32 0.0, %v2640
        %v2642 = vpop.f32.mrf.mxu0
        %2643 = vmatprep.mubr.f32.mxu0 0.0
        %2644 = vmatmul.mubr.f32.gmra.mxu0 %v2566
        %v2645 = vpop.f32.mrf.mxu0
        %v2646 = vadd.f32 0.0, %v2645
        %v2647 = vpop.f32.mrf.mxu0
        %2648 = vdwg.mxu0
        %v2649 = vsel %vm1183, %v2641, -inf
        %2650 = vmax.xlane.f32.xlu0 %v2649
        %v2651 = vpop.xlane.xlu0 %2650
        %v2652 = vsel %vm1183, %v2646, -inf
        %2653 = vmax.xlane.f32.xlu0 %v2652
        %v2654 = vpop.xlane.xlu0 %2653
        %v2655 = vsub.f32 %v2641, %v2651
        %v2656 = vsub.f32 %v2646, %v2654
        %v2657 = vmul.f32 %v2655, 1.442695
        %v2658 = vpow.pop %v2657
        %v2659 = vmul.f32 %v2656, 1.442695
        %v2660 = vpow.pop %v2659
        %v2661 = vsel %vm1183, %v2658, 0.0
        %2662 = vadd.xlane.f32.xlu0 %v2661
        %v2663 = vpop.xlane.xlu0 %2662
        %v2664 = vsel %vm1183, %v2660, 0.0
        %2665 = vadd.xlane.f32.xlu0 %v2664
        %v2666 = vpop.xlane.xlu0 %2665
        %v2667 = vrcp.pop %v2663
        %v2668 = vrcp.pop %v2666
        %v2669 = vmul.f32 %v2658, %v2667
        %v2670 = vmul.f32 %v2660, %v2668
        %v2672 = vsel %vm1183, %v2669, 0
        %v2675 = vsel %vm1183, %v2670, 0
        %2677 = vmatprep.subr.mxu0 0.0
        %2678 = vmatpush1.msra.mxu0 0.0
        %2679 = vmatprep.subr.mxu0 0.0
        %2680 = vmatpush1.msra.mxu0 0.0
        %2681 = vmatprep.subr.mxu0 0.0
        %2682 = vmatpush1.msra.mxu0 0.0
        %2683 = vmatprep.subr.mxu0 0.0
        %2684 = vmatpush1.msra.mxu0 0.0
        %2685 = vmatprep.subr.mxu0 0.0
        %2686 = vmatpush1.msra.mxu0 0.0
        %2687 = vmatprep.subr.mxu0 0.0
        %2688 = vmatpush1.msra.mxu0 0.0
        %2689 = vmatprep.subr.mxu0 0.0
        %2690 = vmatpush1.msra.mxu0 0.0
        %2691 = vmatprep.subr.mxu0 0.0
        %2692 = vmatpush1.msra.mxu0 0.0
        %2693 = vmatprep.subr.mxu0 0.0
        %2694 = vmatpush1.msra.mxu0 0.0
        %2695 = vmatprep.subr.mxu0 0.0
        %2696 = vmatpush1.msra.mxu0 0.0
        %2697 = vmatprep.subr.mxu0 0.0
        %2698 = vmatpush1.msra.mxu0 0.0
        %2699 = vmatprep.subr.mxu0 0.0
        %2700 = vmatpush1.msra.mxu0 0.0
        %2701 = vmatprep.subr.mxu0 0.0
        %2702 = vmatpush1.msra.mxu0 0.0
        %2703 = vmatprep.subr.mxu0 0.0
        %2704 = vmatpush1.msra.mxu0 0.0
        %2705 = vmatprep.subr.mxu0 0.0
        %2706 = vmatpush1.msra.mxu0 %v2557
        %2707 = vmatprep.subr.mxu0 0.0
        %2708 = vmatpush1.msra.mxu0 %v2552
        %2709 = vmatprep.subr.mxu0 0.0
        %2710 = vmatpush2.msra.mxu0 0.0
        %2711 = vmatprep.subr.mxu0 0.0
        %2712 = vmatpush2.msra.mxu0 0.0
        %2713 = vmatprep.subr.mxu0 0.0
        %2714 = vmatpush2.msra.mxu0 0.0
        %2715 = vmatprep.subr.mxu0 0.0
        %2716 = vmatpush2.msra.mxu0 0.0
        %2717 = vmatprep.subr.mxu0 0.0
        %2718 = vmatpush2.msra.mxu0 0.0
        %2719 = vmatprep.subr.mxu0 0.0
        %2720 = vmatpush2.msra.mxu0 0.0
        %2721 = vmatprep.subr.mxu0 0.0
        %2722 = vmatpush2.msra.mxu0 0.0
        %2723 = vmatprep.subr.mxu0 0.0
        %2724 = vmatpush2.msra.mxu0 0.0
        %2725 = vmatprep.subr.mxu0 0.0
        %2726 = vmatpush2.msra.mxu0 0.0
        %2727 = vmatprep.subr.mxu0 0.0
        %2728 = vmatpush2.msra.mxu0 0.0
        %2729 = vmatprep.subr.mxu0 0.0
        %2730 = vmatpush2.msra.mxu0 0.0
        %2731 = vmatprep.subr.mxu0 0.0
        %2732 = vmatpush2.msra.mxu0 0.0
        %2733 = vmatprep.subr.mxu0 0.0
        %2734 = vmatpush2.msra.mxu0 0.0
        %2735 = vmatprep.subr.mxu0 0.0
        %2736 = vmatpush2.msra.mxu0 0.0
        %2737 = vmatprep.subr.mxu0 0.0
        %2738 = vmatpush2.msra.mxu0 0.0
        %2739 = vmatprep.subr.mxu0 0.0
        %2740 = vmatpush2.msra.mxu0 0.0
        %2741 = vmatprep.mubr.f32.mxu0 0.0
        %2742 = vmatmul.mubr.f32.gmra.mxu0 %v2672
        %v2743 = vpop.f32.mrf.mxu0
        %v2744 = vadd.f32 0.0, %v2743
        %v2745 = vpop.f32.mrf.mxu0
        %2746 = vmatprep.mubr.f32.mxu0 0.0
        %2747 = vmatmul.mubr.f32.gmra.mxu0 %v2675
        %v2748 = vpop.f32.mrf.mxu0
        %v2749 = vadd.f32 0.0, %v2748
        %v2750 = vpop.f32.mrf.mxu0
        %2751 = vdwg.mxu0
        %2752 = vrot.lane.b32.xlu0 %v2560, 96
        %v2753 = vpop.permute.xlu0 %2752
        %2754 = vrot.lane.b32.xlu0 %v2561, 96
        %v2755 = vpop.permute.xlu0 %2754
        %2756 = vrot.lane.b32.xlu0 %v2477, 96
        %v2757 = vpop.permute.xlu0 %2756
        %2758 = vrot.lane.b32.xlu0 %v2483, 96
        %v2759 = vpop.permute.xlu0 %2758
        %v2760 = vsel %vm1095, %v2753, 0
        %v2762 = vsel %vm1095, %v2755, 0
        %v2764 = vsel %vm1095, %v2757, 0
        %v2766 = vsel %vm1095, %v2759, 0
        %2768 = vmatprep.subr.mxu0 0.0
        %2769 = vmatpush1.xpose.msra.mxu0 0.0
        %2770 = vmatprep.subr.mxu0 0.0
        %2771 = vmatpush1.xpose.msra.mxu0 0.0
        %2772 = vmatprep.subr.mxu0 0.0
        %2773 = vmatpush1.xpose.msra.mxu0 0.0
        %2774 = vmatprep.subr.mxu0 0.0
        %2775 = vmatpush1.xpose.msra.mxu0 0.0
        %2776 = vmatprep.subr.mxu0 0.0
        %2777 = vmatpush1.xpose.msra.mxu0 0.0
        %2778 = vmatprep.subr.mxu0 0.0
        %2779 = vmatpush1.xpose.msra.mxu0 0.0
        %2780 = vmatprep.subr.mxu0 0.0
        %2781 = vmatpush1.xpose.msra.mxu0 0.0
        %2782 = vmatprep.subr.mxu0 0.0
        %2783 = vmatpush1.xpose.msra.mxu0 0.0
        %2784 = vmatprep.subr.mxu0 0.0
        %2785 = vmatpush1.xpose.msra.mxu0 0.0
        %2786 = vmatprep.subr.mxu0 0.0
        %2787 = vmatpush1.xpose.msra.mxu0 0.0
        %2788 = vmatprep.subr.mxu0 0.0
        %2789 = vmatpush1.xpose.msra.mxu0 0.0
        %2790 = vmatprep.subr.mxu0 0.0
        %2791 = vmatpush1.xpose.msra.mxu0 0.0
        %2792 = vmatprep.subr.mxu0 0.0
        %2793 = vmatpush1.xpose.msra.mxu0 0.0
        %2794 = vmatprep.subr.mxu0 0.0
        %2795 = vmatpush1.xpose.msra.mxu0 0.0
        %2796 = vmatprep.subr.mxu0 0.0
        %2797 = vmatpush1.xpose.msra.mxu0 %v2766
        %2798 = vmatprep.subr.mxu0 0.0
        %2799 = vmatpush1.xpose.msra.mxu0 %v2764
        %2800 = vmatprep.subr.mxu0 0.0
        %2801 = vmatpush2.xpose.msra.mxu0 0.0
        %2802 = vmatprep.subr.mxu0 0.0
        %2803 = vmatpush2.xpose.msra.mxu0 0.0
        %2804 = vmatprep.subr.mxu0 0.0
        %2805 = vmatpush2.xpose.msra.mxu0 0.0
        %2806 = vmatprep.subr.mxu0 0.0
        %2807 = vmatpush2.xpose.msra.mxu0 0.0
        %2808 = vmatprep.subr.mxu0 0.0
        %2809 = vmatpush2.xpose.msra.mxu0 0.0
        %2810 = vmatprep.subr.mxu0 0.0
        %2811 = vmatpush2.xpose.msra.mxu0 0.0
        %2812 = vmatprep.subr.mxu0 0.0
        %2813 = vmatpush2.xpose.msra.mxu0 0.0
        %2814 = vmatprep.subr.mxu0 0.0
        %2815 = vmatpush2.xpose.msra.mxu0 0.0
        %2816 = vmatprep.subr.mxu0 0.0
        %2817 = vmatpush2.xpose.msra.mxu0 0.0
        %2818 = vmatprep.subr.mxu0 0.0
        %2819 = vmatpush2.xpose.msra.mxu0 0.0
        %2820 = vmatprep.subr.mxu0 0.0
        %2821 = vmatpush2.xpose.msra.mxu0 0.0
        %2822 = vmatprep.subr.mxu0 0.0
        %2823 = vmatpush2.xpose.msra.mxu0 0.0
        %2824 = vmatprep.subr.mxu0 0.0
        %2825 = vmatpush2.xpose.msra.mxu0 0.0
        %2826 = vmatprep.subr.mxu0 0.0
        %2827 = vmatpush2.xpose.msra.mxu0 0.0
        %2828 = vmatprep.subr.mxu0 0.0
        %2829 = vmatpush2.xpose.msra.mxu0 0.0
        %2830 = vmatprep.subr.mxu0 0.0
        %2831 = vmatpush2.xpose.msra.mxu0 0.0
        %2832 = vmatprep.mubr.f32.mxu0 0.0
        %2833 = vmatmul.mubr.f32.gmra.mxu0 %v2760
        %v2834 = vpop.f32.mrf.mxu0
        %v2835 = vadd.f32 0.0, %v2834
        %v2836 = vpop.f32.mrf.mxu0
        %2837 = vmatprep.mubr.f32.mxu0 0.0
        %2838 = vmatmul.mubr.f32.gmra.mxu0 %v2762
        %v2839 = vpop.f32.mrf.mxu0
        %v2840 = vadd.f32 0.0, %v2839
        %v2841 = vpop.f32.mrf.mxu0
        %2842 = vdwg.mxu0
        %v2843 = vsel %vm1183, %v2835, -inf
        %2844 = vmax.xlane.f32.xlu0 %v2843
        %v2845 = vpop.xlane.xlu0 %2844
        %v2846 = vsel %vm1183, %v2840, -inf
        %2847 = vmax.xlane.f32.xlu0 %v2846
        %v2848 = vpop.xlane.xlu0 %2847
        %v2849 = vsub.f32 %v2835, %v2845
        %v2850 = vsub.f32 %v2840, %v2848
        %v2851 = vmul.f32 %v2849, 1.442695
        %v2852 = vpow.pop %v2851
        %v2853 = vmul.f32 %v2850, 1.442695
        %v2854 = vpow.pop %v2853
        %v2855 = vsel %vm1183, %v2852, 0.0
        %2856 = vadd.xlane.f32.xlu0 %v2855
        %v2857 = vpop.xlane.xlu0 %2856
        %v2858 = vsel %vm1183, %v2854, 0.0
        %2859 = vadd.xlane.f32.xlu0 %v2858
        %v2860 = vpop.xlane.xlu0 %2859
        %v2861 = vrcp.pop %v2857
        %v2862 = vrcp.pop %v2860
        %v2863 = vmul.f32 %v2852, %v2861
        %v2864 = vmul.f32 %v2854, %v2862
        %2867 = vrot.lane.b32.xlu0 %v2552, 96
        %v2868 = vpop.permute.xlu0 %2867
        %2869 = vrot.lane.b32.xlu0 %v2557, 96
        %v2870 = vpop.permute.xlu0 %2869
        %v2874 = vsel %vm1183, %v2863, 0
        %v2877 = vsel %vm1183, %v2864, 0
        %2879 = vmatprep.subr.mxu0 0.0
        %2880 = vmatpush1.msra.mxu0 0.0
        %2881 = vmatprep.subr.mxu0 0.0
        %2882 = vmatpush1.msra.mxu0 0.0
        %2883 = vmatprep.subr.mxu0 0.0
        %2884 = vmatpush1.msra.mxu0 0.0
        %2885 = vmatprep.subr.mxu0 0.0
        %2886 = vmatpush1.msra.mxu0 0.0
        %2887 = vmatprep.subr.mxu0 0.0
        %2888 = vmatpush1.msra.mxu0 0.0
        %2889 = vmatprep.subr.mxu0 0.0
        %2890 = vmatpush1.msra.mxu0 0.0
        %2891 = vmatprep.subr.mxu0 0.0
        %2892 = vmatpush1.msra.mxu0 0.0
        %2893 = vmatprep.subr.mxu0 0.0
        %2894 = vmatpush1.msra.mxu0 0.0
        %2895 = vmatprep.subr.mxu0 0.0
        %2896 = vmatpush1.msra.mxu0 0.0
        %2897 = vmatprep.subr.mxu0 0.0
        %2898 = vmatpush1.msra.mxu0 0.0
        %2899 = vmatprep.subr.mxu0 0.0
        %2900 = vmatpush1.msra.mxu0 0.0
        %2901 = vmatprep.subr.mxu0 0.0
        %2902 = vmatpush1.msra.mxu0 0.0
        %2903 = vmatprep.subr.mxu0 0.0
        %2904 = vmatpush1.msra.mxu0 0.0
        %2905 = vmatprep.subr.mxu0 0.0
        %2906 = vmatpush1.msra.mxu0 0.0
        %2907 = vmatprep.subr.mxu0 0.0
        %2908 = vmatpush1.msra.mxu0 %v2870
        %2909 = vmatprep.subr.mxu0 0.0
        %2910 = vmatpush1.msra.mxu0 %v2868
        %2911 = vmatprep.subr.mxu0 0.0
        %2912 = vmatpush2.msra.mxu0 0.0
        %2913 = vmatprep.subr.mxu0 0.0
        %2914 = vmatpush2.msra.mxu0 0.0
        %2915 = vmatprep.subr.mxu0 0.0
        %2916 = vmatpush2.msra.mxu0 0.0
        %2917 = vmatprep.subr.mxu0 0.0
        %2918 = vmatpush2.msra.mxu0 0.0
        %2919 = vmatprep.subr.mxu0 0.0
        %2920 = vmatpush2.msra.mxu0 0.0
        %2921 = vmatprep.subr.mxu0 0.0
        %2922 = vmatpush2.msra.mxu0 0.0
        %2923 = vmatprep.subr.mxu0 0.0
        %2924 = vmatpush2.msra.mxu0 0.0
        %2925 = vmatprep.subr.mxu0 0.0
        %2926 = vmatpush2.msra.mxu0 0.0
        %2927 = vmatprep.subr.mxu0 0.0
        %2928 = vmatpush2.msra.mxu0 0.0
        %2929 = vmatprep.subr.mxu0 0.0
        %2930 = vmatpush2.msra.mxu0 0.0
        %2931 = vmatprep.subr.mxu0 0.0
        %2932 = vmatpush2.msra.mxu0 0.0
        %2933 = vmatprep.subr.mxu0 0.0
        %2934 = vmatpush2.msra.mxu0 0.0
        %2935 = vmatprep.subr.mxu0 0.0
        %2936 = vmatpush2.msra.mxu0 0.0
        %2937 = vmatprep.subr.mxu0 0.0
        %2938 = vmatpush2.msra.mxu0 0.0
        %2939 = vmatprep.subr.mxu0 0.0
        %2940 = vmatpush2.msra.mxu0 0.0
        %2941 = vmatprep.subr.mxu0 0.0
        %2942 = vmatpush2.msra.mxu0 0.0
        %2943 = vmatprep.mubr.f32.mxu0 0.0
        %2944 = vmatmul.mubr.f32.gmra.mxu0 %v2874
        %v2945 = vpop.f32.mrf.mxu0
        %v2946 = vadd.f32 0.0, %v2945
        %v2947 = vpop.f32.mrf.mxu0
        %2948 = vmatprep.mubr.f32.mxu0 0.0
        %2949 = vmatmul.mubr.f32.gmra.mxu0 %v2877
        %v2950 = vpop.f32.mrf.mxu0
        %v2951 = vadd.f32 0.0, %v2950
        %v2952 = vpop.f32.mrf.mxu0
        %2953 = vdwg.mxu0
        %2954 = vrot.lane.b32.xlu0 %v2560, 64
        %v2955 = vpop.permute.xlu0 %2954
        %2956 = vrot.lane.b32.xlu0 %v2561, 64
        %v2957 = vpop.permute.xlu0 %2956
        %2958 = vrot.lane.b32.xlu0 %v2477, 64
        %v2959 = vpop.permute.xlu0 %2958
        %2960 = vrot.lane.b32.xlu0 %v2483, 64
        %v2961 = vpop.permute.xlu0 %2960
        %v2962 = vsel %vm1095, %v2955, 0
        %v2964 = vsel %vm1095, %v2957, 0
        %v2966 = vsel %vm1095, %v2959, 0
        %v2968 = vsel %vm1095, %v2961, 0
        %2970 = vmatprep.subr.mxu0 0.0
        %2971 = vmatpush1.xpose.msra.mxu0 0.0
        %2972 = vmatprep.subr.mxu0 0.0
        %2973 = vmatpush1.xpose.msra.mxu0 0.0
        %2974 = vmatprep.subr.mxu0 0.0
        %2975 = vmatpush1.xpose.msra.mxu0 0.0
        %2976 = vmatprep.subr.mxu0 0.0
        %2977 = vmatpush1.xpose.msra.mxu0 0.0
        %2978 = vmatprep.subr.mxu0 0.0
        %2979 = vmatpush1.xpose.msra.mxu0 0.0
        %2980 = vmatprep.subr.mxu0 0.0
        %2981 = vmatpush1.xpose.msra.mxu0 0.0
        %2982 = vmatprep.subr.mxu0 0.0
        %2983 = vmatpush1.xpose.msra.mxu0 0.0
        %2984 = vmatprep.subr.mxu0 0.0
        %2985 = vmatpush1.xpose.msra.mxu0 0.0
        %2986 = vmatprep.subr.mxu0 0.0
        %2987 = vmatpush1.xpose.msra.mxu0 0.0
        %2988 = vmatprep.subr.mxu0 0.0
        %2989 = vmatpush1.xpose.msra.mxu0 0.0
        %2990 = vmatprep.subr.mxu0 0.0
        %2991 = vmatpush1.xpose.msra.mxu0 0.0
        %2992 = vmatprep.subr.mxu0 0.0
        %2993 = vmatpush1.xpose.msra.mxu0 0.0
        %2994 = vmatprep.subr.mxu0 0.0
        %2995 = vmatpush1.xpose.msra.mxu0 0.0
        %2996 = vmatprep.subr.mxu0 0.0
        %2997 = vmatpush1.xpose.msra.mxu0 0.0
        %2998 = vmatprep.subr.mxu0 0.0
        %2999 = vmatpush1.xpose.msra.mxu0 %v2968
        %3000 = vmatprep.subr.mxu0 0.0
        %3001 = vmatpush1.xpose.msra.mxu0 %v2966
        %3002 = vmatprep.subr.mxu0 0.0
        %3003 = vmatpush2.xpose.msra.mxu0 0.0
        %3004 = vmatprep.subr.mxu0 0.0
        %3005 = vmatpush2.xpose.msra.mxu0 0.0
        %3006 = vmatprep.subr.mxu0 0.0
        %3007 = vmatpush2.xpose.msra.mxu0 0.0
        %3008 = vmatprep.subr.mxu0 0.0
        %3009 = vmatpush2.xpose.msra.mxu0 0.0
        %3010 = vmatprep.subr.mxu0 0.0
        %3011 = vmatpush2.xpose.msra.mxu0 0.0
        %3012 = vmatprep.subr.mxu0 0.0
        %3013 = vmatpush2.xpose.msra.mxu0 0.0
        %3014 = vmatprep.subr.mxu0 0.0
        %3015 = vmatpush2.xpose.msra.mxu0 0.0
        %3016 = vmatprep.subr.mxu0 0.0
        %3017 = vmatpush2.xpose.msra.mxu0 0.0
        %3018 = vmatprep.subr.mxu0 0.0
        %3019 = vmatpush2.xpose.msra.mxu0 0.0
        %3020 = vmatprep.subr.mxu0 0.0
        %3021 = vmatpush2.xpose.msra.mxu0 0.0
        %3022 = vmatprep.subr.mxu0 0.0
        %3023 = vmatpush2.xpose.msra.mxu0 0.0
        %3024 = vmatprep.subr.mxu0 0.0
        %3025 = vmatpush2.xpose.msra.mxu0 0.0
        %3026 = vmatprep.subr.mxu0 0.0
        %3027 = vmatpush2.xpose.msra.mxu0 0.0
        %3028 = vmatprep.subr.mxu0 0.0
        %3029 = vmatpush2.xpose.msra.mxu0 0.0
        %3030 = vmatprep.subr.mxu0 0.0
        %3031 = vmatpush2.xpose.msra.mxu0 0.0
        %3032 = vmatprep.subr.mxu0 0.0
        %3033 = vmatpush2.xpose.msra.mxu0 0.0
        %3034 = vmatprep.mubr.f32.mxu0 0.0
        %3035 = vmatmul.mubr.f32.gmra.mxu0 %v2962
        %v3036 = vpop.f32.mrf.mxu0
        %v3037 = vadd.f32 0.0, %v3036
        %v3038 = vpop.f32.mrf.mxu0
        %3039 = vmatprep.mubr.f32.mxu0 0.0
        %3040 = vmatmul.mubr.f32.gmra.mxu0 %v2964
        %v3041 = vpop.f32.mrf.mxu0
        %v3042 = vadd.f32 0.0, %v3041
        %v3043 = vpop.f32.mrf.mxu0
        %3044 = vdwg.mxu0
        %v3045 = vsel %vm1183, %v3037, -inf
        %3046 = vmax.xlane.f32.xlu0 %v3045
        %v3047 = vpop.xlane.xlu0 %3046
        %v3048 = vsel %vm1183, %v3042, -inf
        %3049 = vmax.xlane.f32.xlu0 %v3048
        %v3050 = vpop.xlane.xlu0 %3049
        %v3051 = vsub.f32 %v3037, %v3047
        %v3052 = vsub.f32 %v3042, %v3050
        %v3053 = vmul.f32 %v3051, 1.442695
        %v3054 = vpow.pop %v3053
        %v3055 = vmul.f32 %v3052, 1.442695
        %v3056 = vpow.pop %v3055
        %v3057 = vsel %vm1183, %v3054, 0.0
        %3058 = vadd.xlane.f32.xlu0 %v3057
        %v3059 = vpop.xlane.xlu0 %3058
        %v3060 = vsel %vm1183, %v3056, 0.0
        %3061 = vadd.xlane.f32.xlu0 %v3060
        %v3062 = vpop.xlane.xlu0 %3061
        %v3063 = vrcp.pop %v3059
        %v3064 = vrcp.pop %v3062
        %v3065 = vmul.f32 %v3054, %v3063
        %v3066 = vmul.f32 %v3056, %v3064
        %3067 = vrot.lane.b32.xlu0 %v2552, 64
        %v3068 = vpop.permute.xlu0 %3067
        %3069 = vrot.lane.b32.xlu0 %v2557, 64
        %v3070 = vpop.permute.xlu0 %3069
        %v3074 = vsel %vm1183, %v3065, 0
        %v3077 = vsel %vm1183, %v3066, 0
        %3079 = vmatprep.subr.mxu0 0.0
        %3080 = vmatpush1.msra.mxu0 0.0
        %3081 = vmatprep.subr.mxu0 0.0
        %3082 = vmatpush1.msra.mxu0 0.0
        %3083 = vmatprep.subr.mxu0 0.0
        %3084 = vmatpush1.msra.mxu0 0.0
        %3085 = vmatprep.subr.mxu0 0.0
        %3086 = vmatpush1.msra.mxu0 0.0
        %3087 = vmatprep.subr.mxu0 0.0
        %3088 = vmatpush1.msra.mxu0 0.0
        %3089 = vmatprep.subr.mxu0 0.0
        %3090 = vmatpush1.msra.mxu0 0.0
        %3091 = vmatprep.subr.mxu0 0.0
        %3092 = vmatpush1.msra.mxu0 0.0
        %3093 = vmatprep.subr.mxu0 0.0
        %3094 = vmatpush1.msra.mxu0 0.0
        %3095 = vmatprep.subr.mxu0 0.0
        %3096 = vmatpush1.msra.mxu0 0.0
        %3097 = vmatprep.subr.mxu0 0.0
        %3098 = vmatpush1.msra.mxu0 0.0
        %3099 = vmatprep.subr.mxu0 0.0
        %3100 = vmatpush1.msra.mxu0 0.0
        %3101 = vmatprep.subr.mxu0 0.0
        %3102 = vmatpush1.msra.mxu0 0.0
        %3103 = vmatprep.subr.mxu0 0.0
        %3104 = vmatpush1.msra.mxu0 0.0
        %3105 = vmatprep.subr.mxu0 0.0
        %3106 = vmatpush1.msra.mxu0 0.0
        %3107 = vmatprep.subr.mxu0 0.0
        %3108 = vmatpush1.msra.mxu0 %v3070
        %3109 = vmatprep.subr.mxu0 0.0
        %3110 = vmatpush1.msra.mxu0 %v3068
        %3111 = vmatprep.subr.mxu0 0.0
        %3112 = vmatpush2.msra.mxu0 0.0
        %3113 = vmatprep.subr.mxu0 0.0
        %3114 = vmatpush2.msra.mxu0 0.0
        %3115 = vmatprep.subr.mxu0 0.0
        %3116 = vmatpush2.msra.mxu0 0.0
        %3117 = vmatprep.subr.mxu0 0.0
        %3118 = vmatpush2.msra.mxu0 0.0
        %3119 = vmatprep.subr.mxu0 0.0
        %3120 = vmatpush2.msra.mxu0 0.0
        %3121 = vmatprep.subr.mxu0 0.0
        %3122 = vmatpush2.msra.mxu0 0.0
        %3123 = vmatprep.subr.mxu0 0.0
        %3124 = vmatpush2.msra.mxu0 0.0
        %3125 = vmatprep.subr.mxu0 0.0
        %3126 = vmatpush2.msra.mxu0 0.0
        %3127 = vmatprep.subr.mxu0 0.0
        %3128 = vmatpush2.msra.mxu0 0.0
        %3129 = vmatprep.subr.mxu0 0.0
        %3130 = vmatpush2.msra.mxu0 0.0
        %3131 = vmatprep.subr.mxu0 0.0
        %3132 = vmatpush2.msra.mxu0 0.0
        %3133 = vmatprep.subr.mxu0 0.0
        %3134 = vmatpush2.msra.mxu0 0.0
        %3135 = vmatprep.subr.mxu0 0.0
        %3136 = vmatpush2.msra.mxu0 0.0
        %3137 = vmatprep.subr.mxu0 0.0
        %3138 = vmatpush2.msra.mxu0 0.0
        %3139 = vmatprep.subr.mxu0 0.0
        %3140 = vmatpush2.msra.mxu0 0.0
        %3141 = vmatprep.subr.mxu0 0.0
        %3142 = vmatpush2.msra.mxu0 0.0
        %3143 = vmatprep.mubr.f32.mxu0 0.0
        %3144 = vmatmul.mubr.f32.gmra.mxu0 %v3074
        %v3145 = vpop.f32.mrf.mxu0
        %v3146 = vadd.f32 0.0, %v3145
        %v3147 = vpop.f32.mrf.mxu0
        %3148 = vmatprep.mubr.f32.mxu0 0.0
        %3149 = vmatmul.mubr.f32.gmra.mxu0 %v3077
        %v3150 = vpop.f32.mrf.mxu0
        %v3151 = vadd.f32 0.0, %v3150
        %v3152 = vpop.f32.mrf.mxu0
        %3153 = vdwg.mxu0
        %3154 = vrot.lane.b32.xlu0 %v2560, 32
        %v3155 = vpop.permute.xlu0 %3154
        %3156 = vrot.lane.b32.xlu0 %v2561, 32
        %v3157 = vpop.permute.xlu0 %3156
        %3158 = vrot.lane.b32.xlu0 %v2477, 32
        %v3159 = vpop.permute.xlu0 %3158
        %3160 = vrot.lane.b32.xlu0 %v2483, 32
        %v3161 = vpop.permute.xlu0 %3160
        %v3162 = vsel %vm1095, %v3155, 0
        %v3164 = vsel %vm1095, %v3157, 0
        %v3166 = vsel %vm1095, %v3159, 0
        %v3168 = vsel %vm1095, %v3161, 0
        %3170 = vmatprep.subr.mxu0 0.0
        %3171 = vmatpush1.xpose.msra.mxu0 0.0
        %3172 = vmatprep.subr.mxu0 0.0
        %3173 = vmatpush1.xpose.msra.mxu0 0.0
        %3174 = vmatprep.subr.mxu0 0.0
        %3175 = vmatpush1.xpose.msra.mxu0 0.0
        %3176 = vmatprep.subr.mxu0 0.0
        %3177 = vmatpush1.xpose.msra.mxu0 0.0
        %3178 = vmatprep.subr.mxu0 0.0
        %3179 = vmatpush1.xpose.msra.mxu0 0.0
        %3180 = vmatprep.subr.mxu0 0.0
        %3181 = vmatpush1.xpose.msra.mxu0 0.0
        %3182 = vmatprep.subr.mxu0 0.0
        %3183 = vmatpush1.xpose.msra.mxu0 0.0
        %3184 = vmatprep.subr.mxu0 0.0
        %3185 = vmatpush1.xpose.msra.mxu0 0.0
        %3186 = vmatprep.subr.mxu0 0.0
        %3187 = vmatpush1.xpose.msra.mxu0 0.0
        %3188 = vmatprep.subr.mxu0 0.0
        %3189 = vmatpush1.xpose.msra.mxu0 0.0
        %3190 = vmatprep.subr.mxu0 0.0
        %3191 = vmatpush1.xpose.msra.mxu0 0.0
        %3192 = vmatprep.subr.mxu0 0.0
        %3193 = vmatpush1.xpose.msra.mxu0 0.0
        %3194 = vmatprep.subr.mxu0 0.0
        %3195 = vmatpush1.xpose.msra.mxu0 0.0
        %3196 = vmatprep.subr.mxu0 0.0
        %3197 = vmatpush1.xpose.msra.mxu0 0.0
        %3198 = vmatprep.subr.mxu0 0.0
        %3199 = vmatpush1.xpose.msra.mxu0 %v3168
        %3200 = vmatprep.subr.mxu0 0.0
        %3201 = vmatpush1.xpose.msra.mxu0 %v3166
        %3202 = vmatprep.subr.mxu0 0.0
        %3203 = vmatpush2.xpose.msra.mxu0 0.0
        %3204 = vmatprep.subr.mxu0 0.0
        %3205 = vmatpush2.xpose.msra.mxu0 0.0
        %3206 = vmatprep.subr.mxu0 0.0
        %3207 = vmatpush2.xpose.msra.mxu0 0.0
        %3208 = vmatprep.subr.mxu0 0.0
        %3209 = vmatpush2.xpose.msra.mxu0 0.0
        %3210 = vmatprep.subr.mxu0 0.0
        %3211 = vmatpush2.xpose.msra.mxu0 0.0
        %3212 = vmatprep.subr.mxu0 0.0
        %3213 = vmatpush2.xpose.msra.mxu0 0.0
        %3214 = vmatprep.subr.mxu0 0.0
        %3215 = vmatpush2.xpose.msra.mxu0 0.0
        %3216 = vmatprep.subr.mxu0 0.0
        %3217 = vmatpush2.xpose.msra.mxu0 0.0
        %3218 = vmatprep.subr.mxu0 0.0
        %3219 = vmatpush2.xpose.msra.mxu0 0.0
        %3220 = vmatprep.subr.mxu0 0.0
        %3221 = vmatpush2.xpose.msra.mxu0 0.0
        %3222 = vmatprep.subr.mxu0 0.0
        %3223 = vmatpush2.xpose.msra.mxu0 0.0
        %3224 = vmatprep.subr.mxu0 0.0
        %3225 = vmatpush2.xpose.msra.mxu0 0.0
        %3226 = vmatprep.subr.mxu0 0.0
        %3227 = vmatpush2.xpose.msra.mxu0 0.0
        %3228 = vmatprep.subr.mxu0 0.0
        %3229 = vmatpush2.xpose.msra.mxu0 0.0
        %3230 = vmatprep.subr.mxu0 0.0
        %3231 = vmatpush2.xpose.msra.mxu0 0.0
        %3232 = vmatprep.subr.mxu0 0.0
        %3233 = vmatpush2.xpose.msra.mxu0 0.0
        %3234 = vmatprep.mubr.f32.mxu0 0.0
        %3235 = vmatmul.mubr.f32.gmra.mxu0 %v3162
        %v3236 = vpop.f32.mrf.mxu0
        %v3237 = vadd.f32 0.0, %v3236
        %v3238 = vpop.f32.mrf.mxu0
        %3239 = vmatprep.mubr.f32.mxu0 0.0
        %3240 = vmatmul.mubr.f32.gmra.mxu0 %v3164
        %v3241 = vpop.f32.mrf.mxu0
        %v3242 = vadd.f32 0.0, %v3241
        %v3243 = vpop.f32.mrf.mxu0
        %3244 = vdwg.mxu0
        %v3245 = vsel %vm1183, %v3237, -inf
        %3246 = vmax.xlane.f32.xlu0 %v3245
        %v3247 = vpop.xlane.xlu0 %3246
        %v3248 = vsel %vm1183, %v3242, -inf
        %3249 = vmax.xlane.f32.xlu0 %v3248
        %v3250 = vpop.xlane.xlu0 %3249
        %v3251 = vsub.f32 %v3237, %v3247
        %v3252 = vsub.f32 %v3242, %v3250
        %v3253 = vmul.f32 %v3251, 1.442695
        %v3254 = vpow.pop %v3253
        %v3255 = vmul.f32 %v3252, 1.442695
        %v3256 = vpow.pop %v3255
        %v3257 = vsel %vm1183, %v3254, 0.0
        %3258 = vadd.xlane.f32.xlu0 %v3257
        %v3259 = vpop.xlane.xlu0 %3258
        %v3260 = vsel %vm1183, %v3256, 0.0
        %3261 = vadd.xlane.f32.xlu0 %v3260
        %v3262 = vpop.xlane.xlu0 %3261
        %v3263 = vrcp.pop %v3259
        %v3264 = vrcp.pop %v3262
        %v3265 = vmul.f32 %v3254, %v3263
        %v3266 = vmul.f32 %v3256, %v3264
        %3267 = vrot.lane.b32.xlu0 %v2552, 32
        %v3268 = vpop.permute.xlu0 %3267
        %3269 = vrot.lane.b32.xlu0 %v2557, 32
        %v3270 = vpop.permute.xlu0 %3269
        %v3274 = vsel %vm1183, %v3265, 0
        %v3277 = vsel %vm1183, %v3266, 0
        %3279 = vmatprep.subr.mxu0 0.0
        %3280 = vmatpush1.msra.mxu0 0.0
        %3281 = vmatprep.subr.mxu0 0.0
        %3282 = vmatpush1.msra.mxu0 0.0
        %3283 = vmatprep.subr.mxu0 0.0
        %3284 = vmatpush1.msra.mxu0 0.0
        %3285 = vmatprep.subr.mxu0 0.0
        %3286 = vmatpush1.msra.mxu0 0.0
        %3287 = vmatprep.subr.mxu0 0.0
        %3288 = vmatpush1.msra.mxu0 0.0
        %3289 = vmatprep.subr.mxu0 0.0
        %3290 = vmatpush1.msra.mxu0 0.0
        %3291 = vmatprep.subr.mxu0 0.0
        %3292 = vmatpush1.msra.mxu0 0.0
        %3293 = vmatprep.subr.mxu0 0.0
        %3294 = vmatpush1.msra.mxu0 0.0
        %3295 = vmatprep.subr.mxu0 0.0
        %3296 = vmatpush1.msra.mxu0 0.0
        %3297 = vmatprep.subr.mxu0 0.0
        %3298 = vmatpush1.msra.mxu0 0.0
        %3299 = vmatprep.subr.mxu0 0.0
        %3300 = vmatpush1.msra.mxu0 0.0
        %3301 = vmatprep.subr.mxu0 0.0
        %3302 = vmatpush1.msra.mxu0 0.0
        %3303 = vmatprep.subr.mxu0 0.0
        %3304 = vmatpush1.msra.mxu0 0.0
        %3305 = vmatprep.subr.mxu0 0.0
        %3306 = vmatpush1.msra.mxu0 0.0
        %3307 = vmatprep.subr.mxu0 0.0
        %3308 = vmatpush1.msra.mxu0 %v3270
        %3309 = vmatprep.subr.mxu0 0.0
        %3310 = vmatpush1.msra.mxu0 %v3268
        %3311 = vmatprep.subr.mxu0 0.0
        %3312 = vmatpush2.msra.mxu0 0.0
        %3313 = vmatprep.subr.mxu0 0.0
        %3314 = vmatpush2.msra.mxu0 0.0
        %3315 = vmatprep.subr.mxu0 0.0
        %3316 = vmatpush2.msra.mxu0 0.0
        %3317 = vmatprep.subr.mxu0 0.0
        %3318 = vmatpush2.msra.mxu0 0.0
        %3319 = vmatprep.subr.mxu0 0.0
        %3320 = vmatpush2.msra.mxu0 0.0
        %3321 = vmatprep.subr.mxu0 0.0
        %3322 = vmatpush2.msra.mxu0 0.0
        %3323 = vmatprep.subr.mxu0 0.0
        %3324 = vmatpush2.msra.mxu0 0.0
        %3325 = vmatprep.subr.mxu0 0.0
        %3326 = vmatpush2.msra.mxu0 0.0
        %3327 = vmatprep.subr.mxu0 0.0
        %3328 = vmatpush2.msra.mxu0 0.0
        %3329 = vmatprep.subr.mxu0 0.0
        %3330 = vmatpush2.msra.mxu0 0.0
        %3331 = vmatprep.subr.mxu0 0.0
        %3332 = vmatpush2.msra.mxu0 0.0
        %3333 = vmatprep.subr.mxu0 0.0
        %3334 = vmatpush2.msra.mxu0 0.0
        %3335 = vmatprep.subr.mxu0 0.0
        %3336 = vmatpush2.msra.mxu0 0.0
        %3337 = vmatprep.subr.mxu0 0.0
        %3338 = vmatpush2.msra.mxu0 0.0
        %3339 = vmatprep.subr.mxu0 0.0
        %3340 = vmatpush2.msra.mxu0 0.0
        %3341 = vmatprep.subr.mxu0 0.0
        %3342 = vmatpush2.msra.mxu0 0.0
        %3343 = vmatprep.mubr.f32.mxu0 0.0
        %3344 = vmatmul.mubr.f32.gmra.mxu0 %v3274
        %v3345 = vpop.f32.mrf.mxu0
        %v3346 = vadd.f32 0.0, %v3345
        %v3347 = vpop.f32.mrf.mxu0
        %3348 = vmatprep.mubr.f32.mxu0 0.0
        %3349 = vmatmul.mubr.f32.gmra.mxu0 %v3277
        %v3350 = vpop.f32.mrf.mxu0
        %v3351 = vadd.f32 0.0, %v3350
        %v3352 = vpop.f32.mrf.mxu0
        %3353 = vdwg.mxu0
        %3356 = vrot.lane.b32.xlu0 %v2946, 32
        %v3357 = vpop.permute.xlu0 %3356
        %3358 = vrot.lane.b32.xlu0 %v2951, 32
        %v3359 = vpop.permute.xlu0 %3358
        %3364 = vrot.lane.b32.xlu0 %v3146, 64
        %v3365 = vpop.permute.xlu0 %3364
        %3366 = vrot.lane.b32.xlu0 %v3151, 64
        %v3367 = vpop.permute.xlu0 %3366
        %3372 = vrot.lane.b32.xlu0 %v3346, 96
        %v3373 = vpop.permute.xlu0 %3372
        %3374 = vrot.lane.b32.xlu0 %v3351, 96
        %v3375 = vpop.permute.xlu0 %3374
        %v3378 = vsel %vm1095, %v2744, %v3357
        %v3379 = vsel %vm1095, %v2749, %v3359
        %v3380 = vsel %vm1915, %v3378, %v3365
        %v3381 = vsel %vm1915, %v3379, %v3367
        %v3382 = vsel %vm1918, %v3380, %v3373
        %v3383 = vsel %vm1918, %v3381, %v3375
        %s3384 = scalar_lea.vmem %s4, 128
        %v3385 = vld [vmem:[%s3384] sm:$0xff]
        %v3386 = vld [vmem:[%s3384 + $0x8] sm:$0xff]
        %v3387 = vld [vmem:[%s3384 + $0x10] sm:$0xff]
        %v3388 = vld [vmem:[%s3384 + $0x18] sm:$0xff]
        %v3389 = vld [vmem:[%s3384 + $0x20] sm:$0xff]
        %v3390 = vld [vmem:[%s3384 + $0x28] sm:$0xff]
        %v3391 = vld [vmem:[%s3384 + $0x30] sm:$0xff]
        %v3392 = vld [vmem:[%s3384 + $0x38] sm:$0xff]
        %v3393 = vld [vmem:[%s3384 + $0x40] sm:$0xff]
        %v3394 = vld [vmem:[%s3384 + $0x48] sm:$0xff]
        %v3395 = vld [vmem:[%s3384 + $0x50] sm:$0xff]
        %v3396 = vld [vmem:[%s3384 + $0x58] sm:$0xff]
        %v3397 = vld [vmem:[%s3384 + $0x60] sm:$0xff]
        %v3398 = vld [vmem:[%s3384 + $0x68] sm:$0xff]
        %v3399 = vld [vmem:[%s3384 + $0x70] sm:$0xff]
        %v3400 = vld [vmem:[%s3384 + $0x78] sm:$0xff]
        %3401 = vmatprep.subr.mxu0 0.0
        %3402 = vmatpush1.msra.mxu0 %v3400
        %3403 = vmatprep.subr.mxu0 0.0
        %3404 = vmatpush1.msra.mxu0 %v3399
        %3405 = vmatprep.subr.mxu0 0.0
        %3406 = vmatpush1.msra.mxu0 %v3398
        %3407 = vmatprep.subr.mxu0 0.0
        %3408 = vmatpush1.msra.mxu0 %v3397
        %3409 = vmatprep.subr.mxu0 0.0
        %3410 = vmatpush1.msra.mxu0 %v3396
        %3411 = vmatprep.subr.mxu0 0.0
        %3412 = vmatpush1.msra.mxu0 %v3395
        %3413 = vmatprep.subr.mxu0 0.0
        %3414 = vmatpush1.msra.mxu0 %v3394
        %3415 = vmatprep.subr.mxu0 0.0
        %3416 = vmatpush1.msra.mxu0 %v3393
        %3417 = vmatprep.subr.mxu0 0.0
        %3418 = vmatpush1.msra.mxu0 %v3392
        %3419 = vmatprep.subr.mxu0 0.0
        %3420 = vmatpush1.msra.mxu0 %v3391
        %3421 = vmatprep.subr.mxu0 0.0
        %3422 = vmatpush1.msra.mxu0 %v3390
        %3423 = vmatprep.subr.mxu0 0.0
        %3424 = vmatpush1.msra.mxu0 %v3389
        %3425 = vmatprep.subr.mxu0 0.0
        %3426 = vmatpush1.msra.mxu0 %v3388
        %3427 = vmatprep.subr.mxu0 0.0
        %3428 = vmatpush1.msra.mxu0 %v3387
        %3429 = vmatprep.subr.mxu0 0.0
        %3430 = vmatpush1.msra.mxu0 %v3386
        %3431 = vmatprep.subr.mxu0 0.0
        %3432 = vmatpush1.msra.mxu0 %v3385
        %3433 = vmatprep.subr.mxu0 0.0
        %3434 = vmatpush2.msra.mxu0 0.0
        %3435 = vmatprep.subr.mxu0 0.0
        %3436 = vmatpush2.msra.mxu0 0.0
        %3437 = vmatprep.subr.mxu0 0.0
        %3438 = vmatpush2.msra.mxu0 0.0
        %3439 = vmatprep.subr.mxu0 0.0
        %3440 = vmatpush2.msra.mxu0 0.0
        %3441 = vmatprep.subr.mxu0 0.0
        %3442 = vmatpush2.msra.mxu0 0.0
        %3443 = vmatprep.subr.mxu0 0.0
        %3444 = vmatpush2.msra.mxu0 0.0
        %3445 = vmatprep.subr.mxu0 0.0
        %3446 = vmatpush2.msra.mxu0 0.0
        %3447 = vmatprep.subr.mxu0 0.0
        %3448 = vmatpush2.msra.mxu0 0.0
        %3449 = vmatprep.subr.mxu0 0.0
        %3450 = vmatpush2.msra.mxu0 0.0
        %3451 = vmatprep.subr.mxu0 0.0
        %3452 = vmatpush2.msra.mxu0 0.0
        %3453 = vmatprep.subr.mxu0 0.0
        %3454 = vmatpush2.msra.mxu0 0.0
        %3455 = vmatprep.subr.mxu0 0.0
        %3456 = vmatpush2.msra.mxu0 0.0
        %3457 = vmatprep.subr.mxu0 0.0
        %3458 = vmatpush2.msra.mxu0 0.0
        %3459 = vmatprep.subr.mxu0 0.0
        %3460 = vmatpush2.msra.mxu0 0.0
        %3461 = vmatprep.subr.mxu0 0.0
        %3462 = vmatpush2.msra.mxu0 0.0
        %3463 = vmatprep.subr.mxu0 0.0
        %3464 = vmatpush2.msra.mxu0 0.0
        %3465 = vmatprep.mubr.f32.mxu0 0.0
        %3466 = vmatmul.mubr.f32.gmra.mxu0 %v3382
        %v3467 = vpop.f32.mrf.mxu0
        %v3468 = vadd.f32 0.0, %v3467
        %v3469 = vpop.f32.mrf.mxu0
        %3470 = vmatprep.mubr.f32.mxu0 0.0
        %3471 = vmatmul.mubr.f32.gmra.mxu0 %v3383
        %v3472 = vpop.f32.mrf.mxu0
        %v3473 = vadd.f32 0.0, %v3472
        %v3474 = vpop.f32.mrf.mxu0
        %3475 = vdwg.mxu0
        %v3476 = vadd.f32 %v2299, %v3468
        %v3477 = vadd.f32 %v2300, %v3473
        %v3478 = vrot.slane %v2302, 5
        %v3479 = vlaneseq
        %v3480 = vshrl.u32 %v3479, 7
        %v3481 = vsub.s32 0, %v3480
        %v3482 = vrot.slane %v3478, %v3481
        %v3484 = vadd.f32 %v3476, %v3482
        %v3485 = vadd.f32 %v3477, %v3482
        %3486 = vadd.xlane.f32.xlu0 %v3484
        %v3487 = vpop.xlane.xlu0 %3486
        %3488 = vadd.xlane.f32.xlu0 %v3485
        %v3489 = vpop.xlane.xlu0 %3488
        %v3490 = vmul.f32 %v3487, %v842
        %v3491 = vmul.f32 %v3489, %v842
        %v3492 = vsub.f32 %v3484, %v3490
        %v3493 = vsub.f32 %v3485, %v3491
        %v3494 = vmul.f32 %v3492, %v3492
        %v3495 = vmul.f32 %v3493, %v3493
        %3496 = vadd.xlane.f32.xlu0 %v3494
        %v3497 = vpop.xlane.xlu0 %3496
        %3498 = vadd.xlane.f32.xlu0 %v3495
        %v3499 = vpop.xlane.xlu0 %3498
        %v3500 = vmul.f32 %v3497, %v842
        %v3501 = vmul.f32 %v3499, %v842
        %v3502 = vadd.f32 %v3500, 1e-05
        %v3503 = vadd.f32 %v3501, 1e-05
        %v3504 = vrsqrt.pop %v3502
        %v3505 = vrsqrt.pop %v3503
        %v3506 = vmul.f32 %v3492, %v3504
        %v3507 = vmul.f32 %v3493, %v3505
        %v3508 = vrot.slane %v2302, 6
        %v3509 = vlaneseq
        %v3510 = vshrl.u32 %v3509, 7
        %v3511 = vsub.s32 0, %v3510
        %v3512 = vrot.slane %v3508, %v3511
        %v3514 = vmul.f32 %v3506, %v3512
        %v3515 = vmul.f32 %v3507, %v3512
        %v3516 = vrot.slane %v2302, 7
        %v3517 = vlaneseq
        %v3518 = vshrl.u32 %v3517, 7
        %v3519 = vsub.s32 0, %v3518
        %v3520 = vrot.slane %v3516, %v3519
        %v3522 = vadd.f32 %v3514, %v3520
        %v3523 = vadd.f32 %v3515, %v3520
        %s3524 = scalar_lea.vmem [#allocation5], 256
        %v3525 = vld [vmem:[%s3524] sm:$0xff]
        %v3526 = vld [vmem:[%s3524 + $0x8] sm:$0xff]
        %v3527 = vld [vmem:[%s3524 + $0x10] sm:$0xff]
        %v3528 = vld [vmem:[%s3524 + $0x18] sm:$0xff]
        %v3529 = vld [vmem:[%s3524 + $0x20] sm:$0xff]
        %v3530 = vld [vmem:[%s3524 + $0x28] sm:$0xff]
        %v3531 = vld [vmem:[%s3524 + $0x30] sm:$0xff]
        %v3532 = vld [vmem:[%s3524 + $0x38] sm:$0xff]
        %v3533 = vld [vmem:[%s3524 + $0x40] sm:$0xff]
        %v3534 = vld [vmem:[%s3524 + $0x48] sm:$0xff]
        %v3535 = vld [vmem:[%s3524 + $0x50] sm:$0xff]
        %v3536 = vld [vmem:[%s3524 + $0x58] sm:$0xff]
        %v3537 = vld [vmem:[%s3524 + $0x60] sm:$0xff]
        %v3538 = vld [vmem:[%s3524 + $0x68] sm:$0xff]
        %v3539 = vld [vmem:[%s3524 + $0x70] sm:$0xff]
        %v3540 = vld [vmem:[%s3524 + $0x78] sm:$0xff]
        %v3541 = vld [vmem:[%s3524 + $0x80] sm:$0xff]
        %v3542 = vld [vmem:[%s3524 + $0x88] sm:$0xff]
        %v3543 = vld [vmem:[%s3524 + $0x90] sm:$0xff]
        %v3544 = vld [vmem:[%s3524 + $0x98] sm:$0xff]
        %v3545 = vld [vmem:[%s3524 + $0xa0] sm:$0xff]
        %v3546 = vld [vmem:[%s3524 + $0xa8] sm:$0xff]
        %v3547 = vld [vmem:[%s3524 + $0xb0] sm:$0xff]
        %v3548 = vld [vmem:[%s3524 + $0xb8] sm:$0xff]
        %v3549 = vld [vmem:[%s3524 + $0xc0] sm:$0xff]
        %v3550 = vld [vmem:[%s3524 + $0xc8] sm:$0xff]
        %v3551 = vld [vmem:[%s3524 + $0xd0] sm:$0xff]
        %v3552 = vld [vmem:[%s3524 + $0xd8] sm:$0xff]
        %v3553 = vld [vmem:[%s3524 + $0xe0] sm:$0xff]
        %v3554 = vld [vmem:[%s3524 + $0xe8] sm:$0xff]
        %v3555 = vld [vmem:[%s3524 + $0xf0] sm:$0xff]
        %v3556 = vld [vmem:[%s3524 + $0xf8] sm:$0xff]
        %v3558 = vlaneseq
        %v3559 = vshrl.u32 %v3558, 7
        %v3560 = vsub.s32 0, %v3559
        %v3561 = vrot.slane %v2304, %v3560
        %v3562 = vlaneseq
        %v3563 = vshrl.u32 %v3562, 7
        %v3564 = vsub.s32 1, %v3563
        %v3565 = vrot.slane %v2304, %v3564
        %3568 = vmatprep.subr.mxu0 %v3556
        %3569 = vmatpush1.msra.mxu0 %v3555
        %3570 = vmatprep.subr.mxu0 %v3554
        %3571 = vmatpush1.msra.mxu0 %v3553
        %3572 = vmatprep.subr.mxu0 %v3552
        %3573 = vmatpush1.msra.mxu0 %v3551
        %3574 = vmatprep.subr.mxu0 %v3550
        %3575 = vmatpush1.msra.mxu0 %v3549
        %3576 = vmatprep.subr.mxu0 %v3548
        %3577 = vmatpush1.msra.mxu0 %v3547
        %3578 = vmatprep.subr.mxu0 %v3546
        %3579 = vmatpush1.msra.mxu0 %v3545
        %3580 = vmatprep.subr.mxu0 %v3544
        %3581 = vmatpush1.msra.mxu0 %v3543
        %3582 = vmatprep.subr.mxu0 %v3542
        %3583 = vmatpush1.msra.mxu0 %v3541
        %3584 = vmatprep.subr.mxu0 %v3540
        %3585 = vmatpush1.msra.mxu0 %v3539
        %3586 = vmatprep.subr.mxu0 %v3538
        %3587 = vmatpush1.msra.mxu0 %v3537
        %3588 = vmatprep.subr.mxu0 %v3536
        %3589 = vmatpush1.msra.mxu0 %v3535
        %3590 = vmatprep.subr.mxu0 %v3534
        %3591 = vmatpush1.msra.mxu0 %v3533
        %3592 = vmatprep.subr.mxu0 %v3532
        %3593 = vmatpush1.msra.mxu0 %v3531
        %3594 = vmatprep.subr.mxu0 %v3530
        %3595 = vmatpush1.msra.mxu0 %v3529
        %3596 = vmatprep.subr.mxu0 %v3528
        %3597 = vmatpush1.msra.mxu0 %v3527
        %3598 = vmatprep.subr.mxu0 %v3526
        %3599 = vmatpush1.msra.mxu0 %v3525
        %3600 = vmatprep.subr.mxu0 0.0
        %3601 = vmatpush2.msra.mxu0 0.0
        %3602 = vmatprep.subr.mxu0 0.0
        %3603 = vmatpush2.msra.mxu0 0.0
        %3604 = vmatprep.subr.mxu0 0.0
        %3605 = vmatpush2.msra.mxu0 0.0
        %3606 = vmatprep.subr.mxu0 0.0
        %3607 = vmatpush2.msra.mxu0 0.0
        %3608 = vmatprep.subr.mxu0 0.0
        %3609 = vmatpush2.msra.mxu0 0.0
        %3610 = vmatprep.subr.mxu0 0.0
        %3611 = vmatpush2.msra.mxu0 0.0
        %3612 = vmatprep.subr.mxu0 0.0
        %3613 = vmatpush2.msra.mxu0 0.0
        %3614 = vmatprep.subr.mxu0 0.0
        %3615 = vmatpush2.msra.mxu0 0.0
        %3616 = vmatprep.subr.mxu0 0.0
        %3617 = vmatpush2.msra.mxu0 0.0
        %3618 = vmatprep.subr.mxu0 0.0
        %3619 = vmatpush2.msra.mxu0 0.0
        %3620 = vmatprep.subr.mxu0 0.0
        %3621 = vmatpush2.msra.mxu0 0.0
        %3622 = vmatprep.subr.mxu0 0.0
        %3623 = vmatpush2.msra.mxu0 0.0
        %3624 = vmatprep.subr.mxu0 0.0
        %3625 = vmatpush2.msra.mxu0 0.0
        %3626 = vmatprep.subr.mxu0 0.0
        %3627 = vmatpush2.msra.mxu0 0.0
        %3628 = vmatprep.subr.mxu0 0.0
        %3629 = vmatpush2.msra.mxu0 0.0
        %3630 = vmatprep.subr.mxu0 0.0
        %3631 = vmatpush2.msra.mxu0 0.0
        %3632 = vmatprep.mubr.f32.mxu0 0.0
        %3633 = vmatmul.mubr.f32.gmra.mxu0 %v3522
        %v3634 = vpop.f32.mrf.mxu0
        %v3635 = vadd.f32 %v3561, %v3634
        %v3636 = vpop.f32.mrf.mxu0
        %v3637 = vadd.f32 %v3565, %v3636
        %3638 = vmatprep.mubr.f32.mxu0 0.0
        %3639 = vmatmul.mubr.f32.gmra.mxu0 %v3523
        %v3640 = vpop.f32.mrf.mxu0
        %v3641 = vadd.f32 %v3561, %v3640
        %v3642 = vpop.f32.mrf.mxu0
        %v3643 = vadd.f32 %v3565, %v3642
        %3644 = vdwg.mxu0
        %v3645 = vmax.f32 %v3635, 0.0
        %v3646 = vmax.f32 %v3637, 0.0
        %v3647 = vmax.f32 %v3641, 0.0
        %v3648 = vmax.f32 %v3643, 0.0
        %s3649 = scalar_lea.vmem [#allocation7], 256
        %v3650 = vld [vmem:[%s3649] sm:$0xff]
        %v3651 = vld [vmem:[%s3649 + $0x8] sm:$0xff]
        %v3652 = vld [vmem:[%s3649 + $0x10] sm:$0xff]
        %v3653 = vld [vmem:[%s3649 + $0x18] sm:$0xff]
        %v3654 = vld [vmem:[%s3649 + $0x20] sm:$0xff]
        %v3655 = vld [vmem:[%s3649 + $0x28] sm:$0xff]
        %v3656 = vld [vmem:[%s3649 + $0x30] sm:$0xff]
        %v3657 = vld [vmem:[%s3649 + $0x38] sm:$0xff]
        %v3658 = vld [vmem:[%s3649 + $0x40] sm:$0xff]
        %v3659 = vld [vmem:[%s3649 + $0x48] sm:$0xff]
        %v3660 = vld [vmem:[%s3649 + $0x50] sm:$0xff]
        %v3661 = vld [vmem:[%s3649 + $0x58] sm:$0xff]
        %v3662 = vld [vmem:[%s3649 + $0x60] sm:$0xff]
        %v3663 = vld [vmem:[%s3649 + $0x68] sm:$0xff]
        %v3664 = vld [vmem:[%s3649 + $0x70] sm:$0xff]
        %v3665 = vld [vmem:[%s3649 + $0x78] sm:$0xff]
        %v3666 = vld [vmem:[%s3649 + $0x80] sm:$0xff]
        %v3667 = vld [vmem:[%s3649 + $0x88] sm:$0xff]
        %v3668 = vld [vmem:[%s3649 + $0x90] sm:$0xff]
        %v3669 = vld [vmem:[%s3649 + $0x98] sm:$0xff]
        %v3670 = vld [vmem:[%s3649 + $0xa0] sm:$0xff]
        %v3671 = vld [vmem:[%s3649 + $0xa8] sm:$0xff]
        %v3672 = vld [vmem:[%s3649 + $0xb0] sm:$0xff]
        %v3673 = vld [vmem:[%s3649 + $0xb8] sm:$0xff]
        %v3674 = vld [vmem:[%s3649 + $0xc0] sm:$0xff]
        %v3675 = vld [vmem:[%s3649 + $0xc8] sm:$0xff]
        %v3676 = vld [vmem:[%s3649 + $0xd0] sm:$0xff]
        %v3677 = vld [vmem:[%s3649 + $0xd8] sm:$0xff]
        %v3678 = vld [vmem:[%s3649 + $0xe0] sm:$0xff]
        %v3679 = vld [vmem:[%s3649 + $0xe8] sm:$0xff]
        %v3680 = vld [vmem:[%s3649 + $0xf0] sm:$0xff]
        %v3681 = vld [vmem:[%s3649 + $0xf8] sm:$0xff]
        %3682 = vmatprep.subr.mxu0 0.0
        %3683 = vmatpush1.msra.mxu0 %v3665
        %3684 = vmatprep.subr.mxu0 0.0
        %3685 = vmatpush1.msra.mxu0 %v3664
        %3686 = vmatprep.subr.mxu0 0.0
        %3687 = vmatpush1.msra.mxu0 %v3663
        %3688 = vmatprep.subr.mxu0 0.0
        %3689 = vmatpush1.msra.mxu0 %v3662
        %3690 = vmatprep.subr.mxu0 0.0
        %3691 = vmatpush1.msra.mxu0 %v3661
        %3692 = vmatprep.subr.mxu0 0.0
        %3693 = vmatpush1.msra.mxu0 %v3660
        %3694 = vmatprep.subr.mxu0 0.0
        %3695 = vmatpush1.msra.mxu0 %v3659
        %3696 = vmatprep.subr.mxu0 0.0
        %3697 = vmatpush1.msra.mxu0 %v3658
        %3698 = vmatprep.subr.mxu0 0.0
        %3699 = vmatpush1.msra.mxu0 %v3657
        %3700 = vmatprep.subr.mxu0 0.0
        %3701 = vmatpush1.msra.mxu0 %v3656
        %3702 = vmatprep.subr.mxu0 0.0
        %3703 = vmatpush1.msra.mxu0 %v3655
        %3704 = vmatprep.subr.mxu0 0.0
        %3705 = vmatpush1.msra.mxu0 %v3654
        %3706 = vmatprep.subr.mxu0 0.0
        %3707 = vmatpush1.msra.mxu0 %v3653
        %3708 = vmatprep.subr.mxu0 0.0
        %3709 = vmatpush1.msra.mxu0 %v3652
        %3710 = vmatprep.subr.mxu0 0.0
        %3711 = vmatpush1.msra.mxu0 %v3651
        %3712 = vmatprep.subr.mxu0 0.0
        %3713 = vmatpush1.msra.mxu0 %v3650
        %3714 = vmatprep.subr.mxu0 0.0
        %3715 = vmatpush2.msra.mxu0 %v3681
        %3716 = vmatprep.subr.mxu0 0.0
        %3717 = vmatpush2.msra.mxu0 %v3680
        %3718 = vmatprep.subr.mxu0 0.0
        %3719 = vmatpush2.msra.mxu0 %v3679
        %3720 = vmatprep.subr.mxu0 0.0
        %3721 = vmatpush2.msra.mxu0 %v3678
        %3722 = vmatprep.subr.mxu0 0.0
        %3723 = vmatpush2.msra.mxu0 %v3677
        %3724 = vmatprep.subr.mxu0 0.0
        %3725 = vmatpush2.msra.mxu0 %v3676
        %3726 = vmatprep.subr.mxu0 0.0
        %3727 = vmatpush2.msra.mxu0 %v3675
        %3728 = vmatprep.subr.mxu0 0.0
        %3729 = vmatpush2.msra.mxu0 %v3674
        %3730 = vmatprep.subr.mxu0 0.0
        %3731 = vmatpush2.msra.mxu0 %v3673
        %3732 = vmatprep.subr.mxu0 0.0
        %3733 = vmatpush2.msra.mxu0 %v3672
        %3734 = vmatprep.subr.mxu0 0.0
        %3735 = vmatpush2.msra.mxu0 %v3671
        %3736 = vmatprep.subr.mxu0 0.0
        %3737 = vmatpush2.msra.mxu0 %v3670
        %3738 = vmatprep.subr.mxu0 0.0
        %3739 = vmatpush2.msra.mxu0 %v3669
        %3740 = vmatprep.subr.mxu0 0.0
        %3741 = vmatpush2.msra.mxu0 %v3668
        %3742 = vmatprep.subr.mxu0 0.0
        %3743 = vmatpush2.msra.mxu0 %v3667
        %3744 = vmatprep.subr.mxu0 0.0
        %3745 = vmatpush2.msra.mxu0 %v3666
        %3746 = vmatprep.mubr.f32.mxu0 %v3646
        %3747 = vmatmul.mubr.f32.gmra.mxu0 %v3645
        %v3748 = vpop.f32.mrf.mxu0
        %v3749 = vadd.f32 0.0, %v3748
        %v3750 = vpop.f32.mrf.mxu0
        %3751 = vmatprep.mubr.f32.mxu0 %v3648
        %3752 = vmatmul.mubr.f32.gmra.mxu0 %v3647
        %v3753 = vpop.f32.mrf.mxu0
        %v3754 = vadd.f32 0.0, %v3753
        %v3755 = vpop.f32.mrf.mxu0
        %3756 = vdwg.mxu0
        %v3757 = vadd.f32 %v3484, %v3749
        %v3758 = vadd.f32 %v3485, %v3754
        %v3759 = vrot.slane %v2304, 2
        %v3760 = vlaneseq
        %v3761 = vshrl.u32 %v3760, 7
        %v3762 = vsub.s32 0, %v3761
        %v3763 = vrot.slane %v3759, %v3762
        %v3765 = vadd.f32 %v3757, %v3763
        %v3766 = vadd.f32 %v3758, %v3763
        %v3767 = vld [vmem:[%s832] sm:$0xff]
        %v3768 = vld [vmem:[%s828] sm:$0xff]
        %v3769 = vld [vmem:[#allocation20] ss:$2 sm:$0xff]
        %s3770 = scalar_lea.vmem [#allocation20], 16
        %v3771 = vld [vmem:[%s3770] ss:$2 sm:$0xff]
        %s3772 = scalar_lea.vmem [#allocation20], 32
        %v3773 = vld [vmem:[%s3772] ss:$2 sm:$0x1]
        %3774 = vadd.xlane.f32.xlu0 %v3768
        %v3775 = vpop.xlane.xlu0 %3774
        %v3776 = vmul.f32 %v3775, %v842
        %v3777 = vsub.f32 %v3768, %v3776
        %v3778 = vmul.f32 %v3777, %v3777
        %3779 = vadd.xlane.f32.xlu0 %v3778
        %v3780 = vpop.xlane.xlu0 %3779
        %v3781 = vmul.f32 %v3780, %v842
        %v3782 = vadd.f32 %v3781, 1e-05
        %v3783 = vrsqrt.pop %v3782
        %v3784 = vmul.f32 %v3777, %v3783
        %v3786 = vlaneseq
        %v3787 = vshrl.u32 %v3786, 7
        %v3788 = vsub.s32 0, %v3787
        %v3789 = vrot.slane %v3769, %v3788
        %v3791 = vmul.f32 %v3784, %v3789
        %v3792 = vrot.slane %v3769, 1
        %v3793 = vlaneseq
        %v3794 = vshrl.u32 %v3793, 7
        %v3795 = vsub.s32 0, %v3794
        %v3796 = vrot.slane %v3792, %v3795
        %v3798 = vadd.f32 %v3791, %v3796
        %v3799 = vld [vmem:[#allocation10] sm:$0xff]
        %v3800 = vld [vmem:[#allocation10 + $0x8] sm:$0xff]
        %v3801 = vld [vmem:[#allocation10 + $0x10] sm:$0xff]
        %v3802 = vld [vmem:[#allocation10 + $0x18] sm:$0xff]
        %v3803 = vld [vmem:[#allocation10 + $0x20] sm:$0xff]
        %v3804 = vld [vmem:[#allocation10 + $0x28] sm:$0xff]
        %v3805 = vld [vmem:[#allocation10 + $0x30] sm:$0xff]
        %v3806 = vld [vmem:[#allocation10 + $0x38] sm:$0xff]
        %v3807 = vld [vmem:[#allocation10 + $0x40] sm:$0xff]
        %v3808 = vld [vmem:[#allocation10 + $0x48] sm:$0xff]
        %v3809 = vld [vmem:[#allocation10 + $0x50] sm:$0xff]
        %v3810 = vld [vmem:[#allocation10 + $0x58] sm:$0xff]
        %v3811 = vld [vmem:[#allocation10 + $0x60] sm:$0xff]
        %v3812 = vld [vmem:[#allocation10 + $0x68] sm:$0xff]
        %v3813 = vld [vmem:[#allocation10 + $0x70] sm:$0xff]
        %v3814 = vld [vmem:[#allocation10 + $0x78] sm:$0xff]
        %v3815 = vld [vmem:[#allocation10 + $0x80] sm:$0xff]
        %v3816 = vld [vmem:[#allocation10 + $0x88] sm:$0xff]
        %v3817 = vld [vmem:[#allocation10 + $0x90] sm:$0xff]
        %v3818 = vld [vmem:[#allocation10 + $0x98] sm:$0xff]
        %v3819 = vld [vmem:[#allocation10 + $0xa0] sm:$0xff]
        %v3820 = vld [vmem:[#allocation10 + $0xa8] sm:$0xff]
        %v3821 = vld [vmem:[#allocation10 + $0xb0] sm:$0xff]
        %v3822 = vld [vmem:[#allocation10 + $0xb8] sm:$0xff]
        %v3823 = vld [vmem:[#allocation10 + $0xc0] sm:$0xff]
        %v3824 = vld [vmem:[#allocation10 + $0xc8] sm:$0xff]
        %v3825 = vld [vmem:[#allocation10 + $0xd0] sm:$0xff]
        %v3826 = vld [vmem:[#allocation10 + $0xd8] sm:$0xff]
        %v3827 = vld [vmem:[#allocation10 + $0xe0] sm:$0xff]
        %v3828 = vld [vmem:[#allocation10 + $0xe8] sm:$0xff]
        %v3829 = vld [vmem:[#allocation10 + $0xf0] sm:$0xff]
        %v3830 = vld [vmem:[#allocation10 + $0xf8] sm:$0xff]
        %v3831 = vld [vmem:[#allocation10 + $0x100] sm:$0xff]
        %v3832 = vld [vmem:[#allocation10 + $0x108] sm:$0xff]
        %v3833 = vld [vmem:[#allocation10 + $0x110] sm:$0xff]
        %v3834 = vld [vmem:[#allocation10 + $0x118] sm:$0xff]
        %v3835 = vld [vmem:[#allocation10 + $0x120] sm:$0xff]
        %v3836 = vld [vmem:[#allocation10 + $0x128] sm:$0xff]
        %v3837 = vld [vmem:[#allocation10 + $0x130] sm:$0xff]
        %v3838 = vld [vmem:[#allocation10 + $0x138] sm:$0xff]
        %v3839 = vld [vmem:[#allocation10 + $0x140] sm:$0xff]
        %v3840 = vld [vmem:[#allocation10 + $0x148] sm:$0xff]
        %v3841 = vld [vmem:[#allocation10 + $0x150] sm:$0xff]
        %v3842 = vld [vmem:[#allocation10 + $0x158] sm:$0xff]
        %v3843 = vld [vmem:[#allocation10 + $0x160] sm:$0xff]
        %v3844 = vld [vmem:[#allocation10 + $0x168] sm:$0xff]
        %v3845 = vld [vmem:[#allocation10 + $0x170] sm:$0xff]
        %v3846 = vld [vmem:[#allocation10 + $0x178] sm:$0xff]
        %v3847 = vrot.slane %v3769, 2
        %v3848 = vlaneseq
        %v3849 = vshrl.u32 %v3848, 7
        %v3850 = vsub.s32 0, %v3849
        %v3851 = vrot.slane %v3847, %v3850
        %v3852 = vlaneseq
        %v3853 = vshrl.u32 %v3852, 7
        %v3854 = vsub.s32 1, %v3853
        %v3855 = vrot.slane %v3847, %v3854
        %v3856 = vlaneseq
        %v3857 = vshrl.u32 %v3856, 7
        %v3858 = vsub.s32 2, %v3857
        %v3859 = vrot.slane %v3847, %v3858
        %3863 = vmatprep.subr.mxu0 %v3845
        %3864 = vmatpush1.msra.mxu0 %v3844
        %3865 = vmatprep.subr.mxu0 %v3842
        %3866 = vmatpush1.msra.mxu0 %v3841
        %3867 = vmatprep.subr.mxu0 %v3839
        %3868 = vmatpush1.msra.mxu0 %v3838
        %3869 = vmatprep.subr.mxu0 %v3836
        %3870 = vmatpush1.msra.mxu0 %v3835
        %3871 = vmatprep.subr.mxu0 %v3833
        %3872 = vmatpush1.msra.mxu0 %v3832
        %3873 = vmatprep.subr.mxu0 %v3830
        %3874 = vmatpush1.msra.mxu0 %v3829
        %3875 = vmatprep.subr.mxu0 %v3827
        %3876 = vmatpush1.msra.mxu0 %v3826
        %3877 = vmatprep.subr.mxu0 %v3824
        %3878 = vmatpush1.msra.mxu0 %v3823
        %3879 = vmatprep.subr.mxu0 %v3821
        %3880 = vmatpush1.msra.mxu0 %v3820
        %3881 = vmatprep.subr.mxu0 %v3818
        %3882 = vmatpush1.msra.mxu0 %v3817
        %3883 = vmatprep.subr.mxu0 %v3815
        %3884 = vmatpush1.msra.mxu0 %v3814
        %3885 = vmatprep.subr.mxu0 %v3812
        %3886 = vmatpush1.msra.mxu0 %v3811
        %3887 = vmatprep.subr.mxu0 %v3809
        %3888 = vmatpush1.msra.mxu0 %v3808
        %3889 = vmatprep.subr.mxu0 %v3806
        %3890 = vmatpush1.msra.mxu0 %v3805
        %3891 = vmatprep.subr.mxu0 %v3803
        %3892 = vmatpush1.msra.mxu0 %v3802
        %3893 = vmatprep.subr.mxu0 %v3800
        %3894 = vmatpush1.msra.mxu0 %v3799
        %3895 = vmatprep.subr.mxu0 0.0
        %3896 = vmatpush2.msra.mxu0 0.0
        %3897 = vmatprep.subr.mxu0 0.0
        %3898 = vmatpush2.msra.mxu0 0.0
        %3899 = vmatprep.subr.mxu0 0.0
        %3900 = vmatpush2.msra.mxu0 0.0
        %3901 = vmatprep.subr.mxu0 0.0
        %3902 = vmatpush2.msra.mxu0 0.0
        %3903 = vmatprep.subr.mxu0 0.0
        %3904 = vmatpush2.msra.mxu0 0.0
        %3905 = vmatprep.subr.mxu0 0.0
        %3906 = vmatpush2.msra.mxu0 0.0
        %3907 = vmatprep.subr.mxu0 0.0
        %3908 = vmatpush2.msra.mxu0 0.0
        %3909 = vmatprep.subr.mxu0 0.0
        %3910 = vmatpush2.msra.mxu0 0.0
        %3911 = vmatprep.subr.mxu0 0.0
        %3912 = vmatpush2.msra.mxu0 0.0
        %3913 = vmatprep.subr.mxu0 0.0
        %3914 = vmatpush2.msra.mxu0 0.0
        %3915 = vmatprep.subr.mxu0 0.0
        %3916 = vmatpush2.msra.mxu0 0.0
        %3917 = vmatprep.subr.mxu0 0.0
        %3918 = vmatpush2.msra.mxu0 0.0
        %3919 = vmatprep.subr.mxu0 0.0
        %3920 = vmatpush2.msra.mxu0 0.0
        %3921 = vmatprep.subr.mxu0 0.0
        %3922 = vmatpush2.msra.mxu0 0.0
        %3923 = vmatprep.subr.mxu0 0.0
        %3924 = vmatpush2.msra.mxu0 0.0
        %3925 = vmatprep.subr.mxu0 0.0
        %3926 = vmatpush2.msra.mxu0 0.0
        %3927 = vmatprep.mubr.f32.mxu0 0.0
        %3928 = vmatmul.mubr.f32.gmra.mxu0 %v3798
        %v3929 = vpop.f32.mrf.mxu0
        %v3930 = vadd.f32 %v3851, %v3929
        %v3931 = vpop.f32.mrf.mxu0
        %v3932 = vadd.f32 %v3855, %v3931
        %3933 = vdwg.mxu0
        %3934 = vmatprep.subr.mxu0 0.0
        %3935 = vmatpush1.msra.mxu0 %v3846
        %3936 = vmatprep.subr.mxu0 0.0
        %3937 = vmatpush1.msra.mxu0 %v3843
        %3938 = vmatprep.subr.mxu0 0.0
        %3939 = vmatpush1.msra.mxu0 %v3840
        %3940 = vmatprep.subr.mxu0 0.0
        %3941 = vmatpush1.msra.mxu0 %v3837
        %3942 = vmatprep.subr.mxu0 0.0
        %3943 = vmatpush1.msra.mxu0 %v3834
        %3944 = vmatprep.subr.mxu0 0.0
        %3945 = vmatpush1.msra.mxu0 %v3831
        %3946 = vmatprep.subr.mxu0 0.0
        %3947 = vmatpush1.msra.mxu0 %v3828
        %3948 = vmatprep.subr.mxu0 0.0
        %3949 = vmatpush1.msra.mxu0 %v3825
        %3950 = vmatprep.subr.mxu0 0.0
        %3951 = vmatpush1.msra.mxu0 %v3822
        %3952 = vmatprep.subr.mxu0 0.0
        %3953 = vmatpush1.msra.mxu0 %v3819
        %3954 = vmatprep.subr.mxu0 0.0
        %3955 = vmatpush1.msra.mxu0 %v3816
        %3956 = vmatprep.subr.mxu0 0.0
        %3957 = vmatpush1.msra.mxu0 %v3813
        %3958 = vmatprep.subr.mxu0 0.0
        %3959 = vmatpush1.msra.mxu0 %v3810
        %3960 = vmatprep.subr.mxu0 0.0
        %3961 = vmatpush1.msra.mxu0 %v3807
        %3962 = vmatprep.subr.mxu0 0.0
        %3963 = vmatpush1.msra.mxu0 %v3804
        %3964 = vmatprep.subr.mxu0 0.0
        %3965 = vmatpush1.msra.mxu0 %v3801
        %3966 = vmatprep.subr.mxu0 0.0
        %3967 = vmatpush2.msra.mxu0 0.0
        %3968 = vmatprep.subr.mxu0 0.0
        %3969 = vmatpush2.msra.mxu0 0.0
        %3970 = vmatprep.subr.mxu0 0.0
        %3971 = vmatpush2.msra.mxu0 0.0
        %3972 = vmatprep.subr.mxu0 0.0
        %3973 = vmatpush2.msra.mxu0 0.0
        %3974 = vmatprep.subr.mxu0 0.0
        %3975 = vmatpush2.msra.mxu0 0.0
        %3976 = vmatprep.subr.mxu0 0.0
        %3977 = vmatpush2.msra.mxu0 0.0
        %3978 = vmatprep.subr.mxu0 0.0
        %3979 = vmatpush2.msra.mxu0 0.0
        %3980 = vmatprep.subr.mxu0 0.0
        %3981 = vmatpush2.msra.mxu0 0.0
        %3982 = vmatprep.subr.mxu0 0.0
        %3983 = vmatpush2.msra.mxu0 0.0
        %3984 = vmatprep.subr.mxu0 0.0
        %3985 = vmatpush2.msra.mxu0 0.0
        %3986 = vmatprep.subr.mxu0 0.0
        %3987 = vmatpush2.msra.mxu0 0.0
        %3988 = vmatprep.subr.mxu0 0.0
        %3989 = vmatpush2.msra.mxu0 0.0
        %3990 = vmatprep.subr.mxu0 0.0
        %3991 = vmatpush2.msra.mxu0 0.0
        %3992 = vmatprep.subr.mxu0 0.0
        %3993 = vmatpush2.msra.mxu0 0.0
        %3994 = vmatprep.subr.mxu0 0.0
        %3995 = vmatpush2.msra.mxu0 0.0
        %3996 = vmatprep.subr.mxu0 0.0
        %3997 = vmatpush2.msra.mxu0 0.0
        %3998 = vmatprep.mubr.f32.mxu0 0.0
        %3999 = vmatmul.mubr.f32.gmra.mxu0 %v3798
        %v4000 = vpop.f32.mrf.mxu0
        %v4001 = vadd.f32 %v3859, %v4000
        %v4002 = vpop.f32.mrf.mxu0
        %4003 = vdwg.mxu0
        %v4004 = vmul.f32 %v3930, 0.17677669
        %v4006 = vsel %vm1095, %v4004, 0
        %v4009 = vsel %vm1095, %v3932, 0
        %4011 = vmatprep.subr.mxu0 0.0
        %4012 = vmatpush1.xpose.msra.mxu0 0.0
        %4013 = vmatprep.subr.mxu0 0.0
        %4014 = vmatpush1.xpose.msra.mxu0 0.0
        %4015 = vmatprep.subr.mxu0 0.0
        %4016 = vmatpush1.xpose.msra.mxu0 0.0
        %4017 = vmatprep.subr.mxu0 0.0
        %4018 = vmatpush1.xpose.msra.mxu0 0.0
        %4019 = vmatprep.subr.mxu0 0.0
        %4020 = vmatpush1.xpose.msra.mxu0 0.0
        %4021 = vmatprep.subr.mxu0 0.0
        %4022 = vmatpush1.xpose.msra.mxu0 0.0
        %4023 = vmatprep.subr.mxu0 0.0
        %4024 = vmatpush1.xpose.msra.mxu0 0.0
        %4025 = vmatprep.subr.mxu0 0.0
        %4026 = vmatpush1.xpose.msra.mxu0 0.0
        %4027 = vmatprep.subr.mxu0 0.0
        %4028 = vmatpush1.xpose.msra.mxu0 0.0
        %4029 = vmatprep.subr.mxu0 0.0
        %4030 = vmatpush1.xpose.msra.mxu0 0.0
        %4031 = vmatprep.subr.mxu0 0.0
        %4032 = vmatpush1.xpose.msra.mxu0 0.0
        %4033 = vmatprep.subr.mxu0 0.0
        %4034 = vmatpush1.xpose.msra.mxu0 0.0
        %4035 = vmatprep.subr.mxu0 0.0
        %4036 = vmatpush1.xpose.msra.mxu0 0.0
        %4037 = vmatprep.subr.mxu0 0.0
        %4038 = vmatpush1.xpose.msra.mxu0 0.0
        %4039 = vmatprep.subr.mxu0 0.0
        %4040 = vmatpush1.xpose.msra.mxu0 0.0
        %4041 = vmatprep.subr.mxu0 0.0
        %4042 = vmatpush1.xpose.msra.mxu0 %v4009
        %4043 = vmatprep.subr.mxu0 0.0
        %4044 = vmatpush2.xpose.msra.mxu0 0.0
        %4045 = vmatprep.subr.mxu0 0.0
        %4046 = vmatpush2.xpose.msra.mxu0 0.0
        %4047 = vmatprep.subr.mxu0 0.0
        %4048 = vmatpush2.xpose.msra.mxu0 0.0
        %4049 = vmatprep.subr.mxu0 0.0
        %4050 = vmatpush2.xpose.msra.mxu0 0.0
        %4051 = vmatprep.subr.mxu0 0.0
        %4052 = vmatpush2.xpose.msra.mxu0 0.0
        %4053 = vmatprep.subr.mxu0 0.0
        %4054 = vmatpush2.xpose.msra.mxu0 0.0
        %4055 = vmatprep.subr.mxu0 0.0
        %4056 = vmatpush2.xpose.msra.mxu0 0.0
        %4057 = vmatprep.subr.mxu0 0.0
        %4058 = vmatpush2.xpose.msra.mxu0 0.0
        %4059 = vmatprep.subr.mxu0 0.0
        %4060 = vmatpush2.xpose.msra.mxu0 0.0
        %4061 = vmatprep.subr.mxu0 0.0
        %4062 = vmatpush2.xpose.msra.mxu0 0.0
        %4063 = vmatprep.subr.mxu0 0.0
        %4064 = vmatpush2.xpose.msra.mxu0 0.0
        %4065 = vmatprep.subr.mxu0 0.0
        %4066 = vmatpush2.xpose.msra.mxu0 0.0
        %4067 = vmatprep.subr.mxu0 0.0
        %4068 = vmatpush2.xpose.msra.mxu0 0.0
        %4069 = vmatprep.subr.mxu0 0.0
        %4070 = vmatpush2.xpose.msra.mxu0 0.0
        %4071 = vmatprep.subr.mxu0 0.0
        %4072 = vmatpush2.xpose.msra.mxu0 0.0
        %4073 = vmatprep.subr.mxu0 0.0
        %4074 = vmatpush2.xpose.msra.mxu0 0.0
        %4075 = vmatprep.mubr.f32.mxu0 0.0
        %4076 = vmatmul.mubr.f32.gmra.mxu0 %v4006
        %v4077 = vpop.f32.mrf.mxu0
        %v4078 = vadd.f32 %v3767, %v4077
        %v4079 = vpop.f32.mrf.mxu0
        %4080 = vdwg.mxu0
        %vm4081 = vcmask 64512
        %v4082 = vsel %vm4081, %v4078, -inf
        %4083 = vmax.xlane.f32.xlu0 %v4082
        %v4084 = vpop.xlane.xlu0 %4083
        %v4085 = vsub.f32 %v4078, %v4084
        %v4086 = vmul.f32 %v4085, 1.442695
        %v4087 = vpow.pop %v4086
        %v4088 = vsel %vm4081, %v4087, 0.0
        %4089 = vadd.xlane.f32.xlu0 %v4088
        %v4090 = vpop.xlane.xlu0 %4089
        %v4091 = vrcp.pop %v4090
        %v4092 = vmul.f32 %v4087, %v4091
        %v4094 = vsel %vm4081, %v4092, 0
        %4096 = vmatprep.subr.mxu0 0.0
        %4097 = vmatpush1.msra.mxu0 0.0
        %4098 = vmatprep.subr.mxu0 0.0
        %4099 = vmatpush1.msra.mxu0 0.0
        %4100 = vmatprep.subr.mxu0 0.0
        %4101 = vmatpush1.msra.mxu0 0.0
        %4102 = vmatprep.subr.mxu0 0.0
        %4103 = vmatpush1.msra.mxu0 0.0
        %4104 = vmatprep.subr.mxu0 0.0
        %4105 = vmatpush1.msra.mxu0 0.0
        %4106 = vmatprep.subr.mxu0 0.0
        %4107 = vmatpush1.msra.mxu0 0.0
        %4108 = vmatprep.subr.mxu0 0.0
        %4109 = vmatpush1.msra.mxu0 0.0
        %4110 = vmatprep.subr.mxu0 0.0
        %4111 = vmatpush1.msra.mxu0 0.0
        %4112 = vmatprep.subr.mxu0 0.0
        %4113 = vmatpush1.msra.mxu0 0.0
        %4114 = vmatprep.subr.mxu0 0.0
        %4115 = vmatpush1.msra.mxu0 0.0
        %4116 = vmatprep.subr.mxu0 0.0
        %4117 = vmatpush1.msra.mxu0 0.0
        %4118 = vmatprep.subr.mxu0 0.0
        %4119 = vmatpush1.msra.mxu0 0.0
        %4120 = vmatprep.subr.mxu0 0.0
        %4121 = vmatpush1.msra.mxu0 0.0
        %4122 = vmatprep.subr.mxu0 0.0
        %4123 = vmatpush1.msra.mxu0 0.0
        %4124 = vmatprep.subr.mxu0 0.0
        %4125 = vmatpush1.msra.mxu0 0.0
        %4126 = vmatprep.subr.mxu0 0.0
        %4127 = vmatpush1.msra.mxu0 %v4001
        %4128 = vmatprep.subr.mxu0 0.0
        %4129 = vmatpush2.msra.mxu0 0.0
        %4130 = vmatprep.subr.mxu0 0.0
        %4131 = vmatpush2.msra.mxu0 0.0
        %4132 = vmatprep.subr.mxu0 0.0
        %4133 = vmatpush2.msra.mxu0 0.0
        %4134 = vmatprep.subr.mxu0 0.0
        %4135 = vmatpush2.msra.mxu0 0.0
        %4136 = vmatprep.subr.mxu0 0.0
        %4137 = vmatpush2.msra.mxu0 0.0
        %4138 = vmatprep.subr.mxu0 0.0
        %4139 = vmatpush2.msra.mxu0 0.0
        %4140 = vmatprep.subr.mxu0 0.0
        %4141 = vmatpush2.msra.mxu0 0.0
        %4142 = vmatprep.subr.mxu0 0.0
        %4143 = vmatpush2.msra.mxu0 0.0
        %4144 = vmatprep.subr.mxu0 0.0
        %4145 = vmatpush2.msra.mxu0 0.0
        %4146 = vmatprep.subr.mxu0 0.0
        %4147 = vmatpush2.msra.mxu0 0.0
        %4148 = vmatprep.subr.mxu0 0.0
        %4149 = vmatpush2.msra.mxu0 0.0
        %4150 = vmatprep.subr.mxu0 0.0
        %4151 = vmatpush2.msra.mxu0 0.0
        %4152 = vmatprep.subr.mxu0 0.0
        %4153 = vmatpush2.msra.mxu0 0.0
        %4154 = vmatprep.subr.mxu0 0.0
        %4155 = vmatpush2.msra.mxu0 0.0
        %4156 = vmatprep.subr.mxu0 0.0
        %4157 = vmatpush2.msra.mxu0 0.0
        %4158 = vmatprep.subr.mxu0 0.0
        %4159 = vmatpush2.msra.mxu0 0.0
        %4160 = vmatprep.mubr.f32.mxu0 0.0
        %4161 = vmatmul.mubr.f32.gmra.mxu0 %v4094
        %v4162 = vpop.f32.mrf.mxu0
        %v4163 = vadd.f32 0.0, %v4162
        %v4164 = vpop.f32.mrf.mxu0
        %4165 = vdwg.mxu0
        %4166 = vrot.lane.b32.xlu0 %v4004, 96
        %v4167 = vpop.permute.xlu0 %4166
        %4168 = vrot.lane.b32.xlu0 %v3932, 96
        %v4169 = vpop.permute.xlu0 %4168
        %v4170 = vsel %vm1095, %v4167, 0
        %v4172 = vsel %vm1095, %v4169, 0
        %4174 = vmatprep.subr.mxu0 0.0
        %4175 = vmatpush1.xpose.msra.mxu0 0.0
        %4176 = vmatprep.subr.mxu0 0.0
        %4177 = vmatpush1.xpose.msra.mxu0 0.0
        %4178 = vmatprep.subr.mxu0 0.0
        %4179 = vmatpush1.xpose.msra.mxu0 0.0
        %4180 = vmatprep.subr.mxu0 0.0
        %4181 = vmatpush1.xpose.msra.mxu0 0.0
        %4182 = vmatprep.subr.mxu0 0.0
        %4183 = vmatpush1.xpose.msra.mxu0 0.0
        %4184 = vmatprep.subr.mxu0 0.0
        %4185 = vmatpush1.xpose.msra.mxu0 0.0
        %4186 = vmatprep.subr.mxu0 0.0
        %4187 = vmatpush1.xpose.msra.mxu0 0.0
        %4188 = vmatprep.subr.mxu0 0.0
        %4189 = vmatpush1.xpose.msra.mxu0 0.0
        %4190 = vmatprep.subr.mxu0 0.0
        %4191 = vmatpush1.xpose.msra.mxu0 0.0
        %4192 = vmatprep.subr.mxu0 0.0
        %4193 = vmatpush1.xpose.msra.mxu0 0.0
        %4194 = vmatprep.subr.mxu0 0.0
        %4195 = vmatpush1.xpose.msra.mxu0 0.0
        %4196 = vmatprep.subr.mxu0 0.0
        %4197 = vmatpush1.xpose.msra.mxu0 0.0
        %4198 = vmatprep.subr.mxu0 0.0
        %4199 = vmatpush1.xpose.msra.mxu0 0.0
        %4200 = vmatprep.subr.mxu0 0.0
        %4201 = vmatpush1.xpose.msra.mxu0 0.0
        %4202 = vmatprep.subr.mxu0 0.0
        %4203 = vmatpush1.xpose.msra.mxu0 0.0
        %4204 = vmatprep.subr.mxu0 0.0
        %4205 = vmatpush1.xpose.msra.mxu0 %v4172
        %4206 = vmatprep.subr.mxu0 0.0
        %4207 = vmatpush2.xpose.msra.mxu0 0.0
        %4208 = vmatprep.subr.mxu0 0.0
        %4209 = vmatpush2.xpose.msra.mxu0 0.0
        %4210 = vmatprep.subr.mxu0 0.0
        %4211 = vmatpush2.xpose.msra.mxu0 0.0
        %4212 = vmatprep.subr.mxu0 0.0
        %4213 = vmatpush2.xpose.msra.mxu0 0.0
        %4214 = vmatprep.subr.mxu0 0.0
        %4215 = vmatpush2.xpose.msra.mxu0 0.0
        %4216 = vmatprep.subr.mxu0 0.0
        %4217 = vmatpush2.xpose.msra.mxu0 0.0
        %4218 = vmatprep.subr.mxu0 0.0
        %4219 = vmatpush2.xpose.msra.mxu0 0.0
        %4220 = vmatprep.subr.mxu0 0.0
        %4221 = vmatpush2.xpose.msra.mxu0 0.0
        %4222 = vmatprep.subr.mxu0 0.0
        %4223 = vmatpush2.xpose.msra.mxu0 0.0
        %4224 = vmatprep.subr.mxu0 0.0
        %4225 = vmatpush2.xpose.msra.mxu0 0.0
        %4226 = vmatprep.subr.mxu0 0.0
        %4227 = vmatpush2.xpose.msra.mxu0 0.0
        %4228 = vmatprep.subr.mxu0 0.0
        %4229 = vmatpush2.xpose.msra.mxu0 0.0
        %4230 = vmatprep.subr.mxu0 0.0
        %4231 = vmatpush2.xpose.msra.mxu0 0.0
        %4232 = vmatprep.subr.mxu0 0.0
        %4233 = vmatpush2.xpose.msra.mxu0 0.0
        %4234 = vmatprep.subr.mxu0 0.0
        %4235 = vmatpush2.xpose.msra.mxu0 0.0
        %4236 = vmatprep.subr.mxu0 0.0
        %4237 = vmatpush2.xpose.msra.mxu0 0.0
        %4238 = vmatprep.mubr.f32.mxu0 0.0
        %4239 = vmatmul.mubr.f32.gmra.mxu0 %v4170
        %v4240 = vpop.f32.mrf.mxu0
        %v4241 = vadd.f32 %v3767, %v4240
        %v4242 = vpop.f32.mrf.mxu0
        %4243 = vdwg.mxu0
        %v4244 = vsel %vm4081, %v4241, -inf
        %4245 = vmax.xlane.f32.xlu0 %v4244
        %v4246 = vpop.xlane.xlu0 %4245
        %v4247 = vsub.f32 %v4241, %v4246
        %v4248 = vmul.f32 %v4247, 1.442695
        %v4249 = vpow.pop %v4248
        %v4250 = vsel %vm4081, %v4249, 0.0
        %4251 = vadd.xlane.f32.xlu0 %v4250
        %v4252 = vpop.xlane.xlu0 %4251
        %v4253 = vrcp.pop %v4252
        %v4254 = vmul.f32 %v4249, %v4253
        %4256 = vrot.lane.b32.xlu0 %v4001, 96
        %v4257 = vpop.permute.xlu0 %4256
        %v4260 = vsel %vm4081, %v4254, 0
        %4262 = vmatprep.subr.mxu0 0.0
        %4263 = vmatpush1.msra.mxu0 0.0
        %4264 = vmatprep.subr.mxu0 0.0
        %4265 = vmatpush1.msra.mxu0 0.0
        %4266 = vmatprep.subr.mxu0 0.0
        %4267 = vmatpush1.msra.mxu0 0.0
        %4268 = vmatprep.subr.mxu0 0.0
        %4269 = vmatpush1.msra.mxu0 0.0
        %4270 = vmatprep.subr.mxu0 0.0
        %4271 = vmatpush1.msra.mxu0 0.0
        %4272 = vmatprep.subr.mxu0 0.0
        %4273 = vmatpush1.msra.mxu0 0.0
        %4274 = vmatprep.subr.mxu0 0.0
        %4275 = vmatpush1.msra.mxu0 0.0
        %4276 = vmatprep.subr.mxu0 0.0
        %4277 = vmatpush1.msra.mxu0 0.0
        %4278 = vmatprep.subr.mxu0 0.0
        %4279 = vmatpush1.msra.mxu0 0.0
        %4280 = vmatprep.subr.mxu0 0.0
        %4281 = vmatpush1.msra.mxu0 0.0
        %4282 = vmatprep.subr.mxu0 0.0
        %4283 = vmatpush1.msra.mxu0 0.0
        %4284 = vmatprep.subr.mxu0 0.0
        %4285 = vmatpush1.msra.mxu0 0.0
        %4286 = vmatprep.subr.mxu0 0.0
        %4287 = vmatpush1.msra.mxu0 0.0
        %4288 = vmatprep.subr.mxu0 0.0
        %4289 = vmatpush1.msra.mxu0 0.0
        %4290 = vmatprep.subr.mxu0 0.0
        %4291 = vmatpush1.msra.mxu0 0.0
        %4292 = vmatprep.subr.mxu0 0.0
        %4293 = vmatpush1.msra.mxu0 %v4257
        %4294 = vmatprep.subr.mxu0 0.0
        %4295 = vmatpush2.msra.mxu0 0.0
        %4296 = vmatprep.subr.mxu0 0.0
        %4297 = vmatpush2.msra.mxu0 0.0
        %4298 = vmatprep.subr.mxu0 0.0
        %4299 = vmatpush2.msra.mxu0 0.0
        %4300 = vmatprep.subr.mxu0 0.0
        %4301 = vmatpush2.msra.mxu0 0.0
        %4302 = vmatprep.subr.mxu0 0.0
        %4303 = vmatpush2.msra.mxu0 0.0
        %4304 = vmatprep.subr.mxu0 0.0
        %4305 = vmatpush2.msra.mxu0 0.0
        %4306 = vmatprep.subr.mxu0 0.0
        %4307 = vmatpush2.msra.mxu0 0.0
        %4308 = vmatprep.subr.mxu0 0.0
        %4309 = vmatpush2.msra.mxu0 0.0
        %4310 = vmatprep.subr.mxu0 0.0
        %4311 = vmatpush2.msra.mxu0 0.0
        %4312 = vmatprep.subr.mxu0 0.0
        %4313 = vmatpush2.msra.mxu0 0.0
        %4314 = vmatprep.subr.mxu0 0.0
        %4315 = vmatpush2.msra.mxu0 0.0
        %4316 = vmatprep.subr.mxu0 0.0
        %4317 = vmatpush2.msra.mxu0 0.0
        %4318 = vmatprep.subr.mxu0 0.0
        %4319 = vmatpush2.msra.mxu0 0.0
        %4320 = vmatprep.subr.mxu0 0.0
        %4321 = vmatpush2.msra.mxu0 0.0
        %4322 = vmatprep.subr.mxu0 0.0
        %4323 = vmatpush2.msra.mxu0 0.0
        %4324 = vmatprep.subr.mxu0 0.0
        %4325 = vmatpush2.msra.mxu0 0.0
        %4326 = vmatprep.mubr.f32.mxu0 0.0
        %4327 = vmatmul.mubr.f32.gmra.mxu0 %v4260
        %v4328 = vpop.f32.mrf.mxu0
        %v4329 = vadd.f32 0.0, %v4328
        %v4330 = vpop.f32.mrf.mxu0
        %4331 = vdwg.mxu0
        %4332 = vrot.lane.b32.xlu0 %v4004, 64
        %v4333 = vpop.permute.xlu0 %4332
        %4334 = vrot.lane.b32.xlu0 %v3932, 64
        %v4335 = vpop.permute.xlu0 %4334
        %v4336 = vsel %vm1095, %v4333, 0
        %v4338 = vsel %vm1095, %v4335, 0
        %4340 = vmatprep.subr.mxu0 0.0
        %4341 = vmatpush1.xpose.msra.mxu0 0.0
        %4342 = vmatprep.subr.mxu0 0.0
        %4343 = vmatpush1.xpose.msra.mxu0 0.0
        %4344 = vmatprep.subr.mxu0 0.0
        %4345 = vmatpush1.xpose.msra.mxu0 0.0
        %4346 = vmatprep.subr.mxu0 0.0
        %4347 = vmatpush1.xpose.msra.mxu0 0.0
        %4348 = vmatprep.subr.mxu0 0.0
        %4349 = vmatpush1.xpose.msra.mxu0 0.0
        %4350 = vmatprep.subr.mxu0 0.0
        %4351 = vmatpush1.xpose.msra.mxu0 0.0
        %4352 = vmatprep.subr.mxu0 0.0
        %4353 = vmatpush1.xpose.msra.mxu0 0.0
        %4354 = vmatprep.subr.mxu0 0.0
        %4355 = vmatpush1.xpose.msra.mxu0 0.0
        %4356 = vmatprep.subr.mxu0 0.0
        %4357 = vmatpush1.xpose.msra.mxu0 0.0
        %4358 = vmatprep.subr.mxu0 0.0
        %4359 = vmatpush1.xpose.msra.mxu0 0.0
        %4360 = vmatprep.subr.mxu0 0.0
        %4361 = vmatpush1.xpose.msra.mxu0 0.0
        %4362 = vmatprep.subr.mxu0 0.0
        %4363 = vmatpush1.xpose.msra.mxu0 0.0
        %4364 = vmatprep.subr.mxu0 0.0
        %4365 = vmatpush1.xpose.msra.mxu0 0.0
        %4366 = vmatprep.subr.mxu0 0.0
        %4367 = vmatpush1.xpose.msra.mxu0 0.0
        %4368 = vmatprep.subr.mxu0 0.0
        %4369 = vmatpush1.xpose.msra.mxu0 0.0
        %4370 = vmatprep.subr.mxu0 0.0
        %4371 = vmatpush1.xpose.msra.mxu0 %v4338
        %4372 = vmatprep.subr.mxu0 0.0
        %4373 = vmatpush2.xpose.msra.mxu0 0.0
        %4374 = vmatprep.subr.mxu0 0.0
        %4375 = vmatpush2.xpose.msra.mxu0 0.0
        %4376 = vmatprep.subr.mxu0 0.0
        %4377 = vmatpush2.xpose.msra.mxu0 0.0
        %4378 = vmatprep.subr.mxu0 0.0
        %4379 = vmatpush2.xpose.msra.mxu0 0.0
        %4380 = vmatprep.subr.mxu0 0.0
        %4381 = vmatpush2.xpose.msra.mxu0 0.0
        %4382 = vmatprep.subr.mxu0 0.0
        %4383 = vmatpush2.xpose.msra.mxu0 0.0
        %4384 = vmatprep.subr.mxu0 0.0
        %4385 = vmatpush2.xpose.msra.mxu0 0.0
        %4386 = vmatprep.subr.mxu0 0.0
        %4387 = vmatpush2.xpose.msra.mxu0 0.0
        %4388 = vmatprep.subr.mxu0 0.0
        %4389 = vmatpush2.xpose.msra.mxu0 0.0
        %4390 = vmatprep.subr.mxu0 0.0
        %4391 = vmatpush2.xpose.msra.mxu0 0.0
        %4392 = vmatprep.subr.mxu0 0.0
        %4393 = vmatpush2.xpose.msra.mxu0 0.0
        %4394 = vmatprep.subr.mxu0 0.0
        %4395 = vmatpush2.xpose.msra.mxu0 0.0
        %4396 = vmatprep.subr.mxu0 0.0
        %4397 = vmatpush2.xpose.msra.mxu0 0.0
        %4398 = vmatprep.subr.mxu0 0.0
        %4399 = vmatpush2.xpose.msra.mxu0 0.0
        %4400 = vmatprep.subr.mxu0 0.0
        %4401 = vmatpush2.xpose.msra.mxu0 0.0
        %4402 = vmatprep.subr.mxu0 0.0
        %4403 = vmatpush2.xpose.msra.mxu0 0.0
        %4404 = vmatprep.mubr.f32.mxu0 0.0
        %4405 = vmatmul.mubr.f32.gmra.mxu0 %v4336
        %v4406 = vpop.f32.mrf.mxu0
        %v4407 = vadd.f32 %v3767, %v4406
        %v4408 = vpop.f32.mrf.mxu0
        %4409 = vdwg.mxu0
        %v4410 = vsel %vm4081, %v4407, -inf
        %4411 = vmax.xlane.f32.xlu0 %v4410
        %v4412 = vpop.xlane.xlu0 %4411
        %v4413 = vsub.f32 %v4407, %v4412
        %v4414 = vmul.f32 %v4413, 1.442695
        %v4415 = vpow.pop %v4414
        %v4416 = vsel %vm4081, %v4415, 0.0
        %4417 = vadd.xlane.f32.xlu0 %v4416
        %v4418 = vpop.xlane.xlu0 %4417
        %v4419 = vrcp.pop %v4418
        %v4420 = vmul.f32 %v4415, %v4419
        %4421 = vrot.lane.b32.xlu0 %v4001, 64
        %v4422 = vpop.permute.xlu0 %4421
        %v4425 = vsel %vm4081, %v4420, 0
        %4427 = vmatprep.subr.mxu0 0.0
        %4428 = vmatpush1.msra.mxu0 0.0
        %4429 = vmatprep.subr.mxu0 0.0
        %4430 = vmatpush1.msra.mxu0 0.0
        %4431 = vmatprep.subr.mxu0 0.0
        %4432 = vmatpush1.msra.mxu0 0.0
        %4433 = vmatprep.subr.mxu0 0.0
        %4434 = vmatpush1.msra.mxu0 0.0
        %4435 = vmatprep.subr.mxu0 0.0
        %4436 = vmatpush1.msra.mxu0 0.0
        %4437 = vmatprep.subr.mxu0 0.0
        %4438 = vmatpush1.msra.mxu0 0.0
        %4439 = vmatprep.subr.mxu0 0.0
        %4440 = vmatpush1.msra.mxu0 0.0
        %4441 = vmatprep.subr.mxu0 0.0
        %4442 = vmatpush1.msra.mxu0 0.0
        %4443 = vmatprep.subr.mxu0 0.0
        %4444 = vmatpush1.msra.mxu0 0.0
        %4445 = vmatprep.subr.mxu0 0.0
        %4446 = vmatpush1.msra.mxu0 0.0
        %4447 = vmatprep.subr.mxu0 0.0
        %4448 = vmatpush1.msra.mxu0 0.0
        %4449 = vmatprep.subr.mxu0 0.0
        %4450 = vmatpush1.msra.mxu0 0.0
        %4451 = vmatprep.subr.mxu0 0.0
        %4452 = vmatpush1.msra.mxu0 0.0
        %4453 = vmatprep.subr.mxu0 0.0
        %4454 = vmatpush1.msra.mxu0 0.0
        %4455 = vmatprep.subr.mxu0 0.0
        %4456 = vmatpush1.msra.mxu0 0.0
        %4457 = vmatprep.subr.mxu0 0.0
        %4458 = vmatpush1.msra.mxu0 %v4422
        %4459 = vmatprep.subr.mxu0 0.0
        %4460 = vmatpush2.msra.mxu0 0.0
        %4461 = vmatprep.subr.mxu0 0.0
        %4462 = vmatpush2.msra.mxu0 0.0
        %4463 = vmatprep.subr.mxu0 0.0
        %4464 = vmatpush2.msra.mxu0 0.0
        %4465 = vmatprep.subr.mxu0 0.0
        %4466 = vmatpush2.msra.mxu0 0.0
        %4467 = vmatprep.subr.mxu0 0.0
        %4468 = vmatpush2.msra.mxu0 0.0
        %4469 = vmatprep.subr.mxu0 0.0
        %4470 = vmatpush2.msra.mxu0 0.0
        %4471 = vmatprep.subr.mxu0 0.0
        %4472 = vmatpush2.msra.mxu0 0.0
        %4473 = vmatprep.subr.mxu0 0.0
        %4474 = vmatpush2.msra.mxu0 0.0
        %4475 = vmatprep.subr.mxu0 0.0
        %4476 = vmatpush2.msra.mxu0 0.0
        %4477 = vmatprep.subr.mxu0 0.0
        %4478 = vmatpush2.msra.mxu0 0.0
        %4479 = vmatprep.subr.mxu0 0.0
        %4480 = vmatpush2.msra.mxu0 0.0
        %4481 = vmatprep.subr.mxu0 0.0
        %4482 = vmatpush2.msra.mxu0 0.0
        %4483 = vmatprep.subr.mxu0 0.0
        %4484 = vmatpush2.msra.mxu0 0.0
        %4485 = vmatprep.subr.mxu0 0.0
        %4486 = vmatpush2.msra.mxu0 0.0
        %4487 = vmatprep.subr.mxu0 0.0
        %4488 = vmatpush2.msra.mxu0 0.0
        %4489 = vmatprep.subr.mxu0 0.0
        %4490 = vmatpush2.msra.mxu0 0.0
        %4491 = vmatprep.mubr.f32.mxu0 0.0
        %4492 = vmatmul.mubr.f32.gmra.mxu0 %v4425
        %v4493 = vpop.f32.mrf.mxu0
        %v4494 = vadd.f32 0.0, %v4493
        %v4495 = vpop.f32.mrf.mxu0
        %4496 = vdwg.mxu0
        %4497 = vrot.lane.b32.xlu0 %v4004, 32
        %v4498 = vpop.permute.xlu0 %4497
        %4499 = vrot.lane.b32.xlu0 %v3932, 32
        %v4500 = vpop.permute.xlu0 %4499
        %v4501 = vsel %vm1095, %v4498, 0
        %v4503 = vsel %vm1095, %v4500, 0
        %4505 = vmatprep.subr.mxu0 0.0
        %4506 = vmatpush1.xpose.msra.mxu0 0.0
        %4507 = vmatprep.subr.mxu0 0.0
        %4508 = vmatpush1.xpose.msra.mxu0 0.0
        %4509 = vmatprep.subr.mxu0 0.0
        %4510 = vmatpush1.xpose.msra.mxu0 0.0
        %4511 = vmatprep.subr.mxu0 0.0
        %4512 = vmatpush1.xpose.msra.mxu0 0.0
        %4513 = vmatprep.subr.mxu0 0.0
        %4514 = vmatpush1.xpose.msra.mxu0 0.0
        %4515 = vmatprep.subr.mxu0 0.0
        %4516 = vmatpush1.xpose.msra.mxu0 0.0
        %4517 = vmatprep.subr.mxu0 0.0
        %4518 = vmatpush1.xpose.msra.mxu0 0.0
        %4519 = vmatprep.subr.mxu0 0.0
        %4520 = vmatpush1.xpose.msra.mxu0 0.0
        %4521 = vmatprep.subr.mxu0 0.0
        %4522 = vmatpush1.xpose.msra.mxu0 0.0
        %4523 = vmatprep.subr.mxu0 0.0
        %4524 = vmatpush1.xpose.msra.mxu0 0.0
        %4525 = vmatprep.subr.mxu0 0.0
        %4526 = vmatpush1.xpose.msra.mxu0 0.0
        %4527 = vmatprep.subr.mxu0 0.0
        %4528 = vmatpush1.xpose.msra.mxu0 0.0
        %4529 = vmatprep.subr.mxu0 0.0
        %4530 = vmatpush1.xpose.msra.mxu0 0.0
        %4531 = vmatprep.subr.mxu0 0.0
        %4532 = vmatpush1.xpose.msra.mxu0 0.0
        %4533 = vmatprep.subr.mxu0 0.0
        %4534 = vmatpush1.xpose.msra.mxu0 0.0
        %4535 = vmatprep.subr.mxu0 0.0
        %4536 = vmatpush1.xpose.msra.mxu0 %v4503
        %4537 = vmatprep.subr.mxu0 0.0
        %4538 = vmatpush2.xpose.msra.mxu0 0.0
        %4539 = vmatprep.subr.mxu0 0.0
        %4540 = vmatpush2.xpose.msra.mxu0 0.0
        %4541 = vmatprep.subr.mxu0 0.0
        %4542 = vmatpush2.xpose.msra.mxu0 0.0
        %4543 = vmatprep.subr.mxu0 0.0
        %4544 = vmatpush2.xpose.msra.mxu0 0.0
        %4545 = vmatprep.subr.mxu0 0.0
        %4546 = vmatpush2.xpose.msra.mxu0 0.0
        %4547 = vmatprep.subr.mxu0 0.0
        %4548 = vmatpush2.xpose.msra.mxu0 0.0
        %4549 = vmatprep.subr.mxu0 0.0
        %4550 = vmatpush2.xpose.msra.mxu0 0.0
        %4551 = vmatprep.subr.mxu0 0.0
        %4552 = vmatpush2.xpose.msra.mxu0 0.0
        %4553 = vmatprep.subr.mxu0 0.0
        %4554 = vmatpush2.xpose.msra.mxu0 0.0
        %4555 = vmatprep.subr.mxu0 0.0
        %4556 = vmatpush2.xpose.msra.mxu0 0.0
        %4557 = vmatprep.subr.mxu0 0.0
        %4558 = vmatpush2.xpose.msra.mxu0 0.0
        %4559 = vmatprep.subr.mxu0 0.0
        %4560 = vmatpush2.xpose.msra.mxu0 0.0
        %4561 = vmatprep.subr.mxu0 0.0
        %4562 = vmatpush2.xpose.msra.mxu0 0.0
        %4563 = vmatprep.subr.mxu0 0.0
        %4564 = vmatpush2.xpose.msra.mxu0 0.0
        %4565 = vmatprep.subr.mxu0 0.0
        %4566 = vmatpush2.xpose.msra.mxu0 0.0
        %4567 = vmatprep.subr.mxu0 0.0
        %4568 = vmatpush2.xpose.msra.mxu0 0.0
        %4569 = vmatprep.mubr.f32.mxu0 0.0
        %4570 = vmatmul.mubr.f32.gmra.mxu0 %v4501
        %v4571 = vpop.f32.mrf.mxu0
        %v4572 = vadd.f32 %v3767, %v4571
        %v4573 = vpop.f32.mrf.mxu0
        %4574 = vdwg.mxu0
        %v4575 = vsel %vm4081, %v4572, -inf
        %4576 = vmax.xlane.f32.xlu0 %v4575
        %v4577 = vpop.xlane.xlu0 %4576
        %v4578 = vsub.f32 %v4572, %v4577
        %v4579 = vmul.f32 %v4578, 1.442695
        %v4580 = vpow.pop %v4579
        %v4581 = vsel %vm4081, %v4580, 0.0
        %4582 = vadd.xlane.f32.xlu0 %v4581
        %v4583 = vpop.xlane.xlu0 %4582
        %v4584 = vrcp.pop %v4583
        %v4585 = vmul.f32 %v4580, %v4584
        %4586 = vrot.lane.b32.xlu0 %v4001, 32
        %v4587 = vpop.permute.xlu0 %4586
        %v4590 = vsel %vm4081, %v4585, 0
        %4592 = vmatprep.subr.mxu0 0.0
        %4593 = vmatpush1.msra.mxu0 0.0
        %4594 = vmatprep.subr.mxu0 0.0
        %4595 = vmatpush1.msra.mxu0 0.0
        %4596 = vmatprep.subr.mxu0 0.0
        %4597 = vmatpush1.msra.mxu0 0.0
        %4598 = vmatprep.subr.mxu0 0.0
        %4599 = vmatpush1.msra.mxu0 0.0
        %4600 = vmatprep.subr.mxu0 0.0
        %4601 = vmatpush1.msra.mxu0 0.0
        %4602 = vmatprep.subr.mxu0 0.0
        %4603 = vmatpush1.msra.mxu0 0.0
        %4604 = vmatprep.subr.mxu0 0.0
        %4605 = vmatpush1.msra.mxu0 0.0
        %4606 = vmatprep.subr.mxu0 0.0
        %4607 = vmatpush1.msra.mxu0 0.0
        %4608 = vmatprep.subr.mxu0 0.0
        %4609 = vmatpush1.msra.mxu0 0.0
        %4610 = vmatprep.subr.mxu0 0.0
        %4611 = vmatpush1.msra.mxu0 0.0
        %4612 = vmatprep.subr.mxu0 0.0
        %4613 = vmatpush1.msra.mxu0 0.0
        %4614 = vmatprep.subr.mxu0 0.0
        %4615 = vmatpush1.msra.mxu0 0.0
        %4616 = vmatprep.subr.mxu0 0.0
        %4617 = vmatpush1.msra.mxu0 0.0
        %4618 = vmatprep.subr.mxu0 0.0
        %4619 = vmatpush1.msra.mxu0 0.0
        %4620 = vmatprep.subr.mxu0 0.0
        %4621 = vmatpush1.msra.mxu0 0.0
        %4622 = vmatprep.subr.mxu0 0.0
        %4623 = vmatpush1.msra.mxu0 %v4587
        %4624 = vmatprep.subr.mxu0 0.0
        %4625 = vmatpush2.msra.mxu0 0.0
        %4626 = vmatprep.subr.mxu0 0.0
        %4627 = vmatpush2.msra.mxu0 0.0
        %4628 = vmatprep.subr.mxu0 0.0
        %4629 = vmatpush2.msra.mxu0 0.0
        %4630 = vmatprep.subr.mxu0 0.0
        %4631 = vmatpush2.msra.mxu0 0.0
        %4632 = vmatprep.subr.mxu0 0.0
        %4633 = vmatpush2.msra.mxu0 0.0
        %4634 = vmatprep.subr.mxu0 0.0
        %4635 = vmatpush2.msra.mxu0 0.0
        %4636 = vmatprep.subr.mxu0 0.0
        %4637 = vmatpush2.msra.mxu0 0.0
        %4638 = vmatprep.subr.mxu0 0.0
        %4639 = vmatpush2.msra.mxu0 0.0
        %4640 = vmatprep.subr.mxu0 0.0
        %4641 = vmatpush2.msra.mxu0 0.0
        %4642 = vmatprep.subr.mxu0 0.0
        %4643 = vmatpush2.msra.mxu0 0.0
        %4644 = vmatprep.subr.mxu0 0.0
        %4645 = vmatpush2.msra.mxu0 0.0
        %4646 = vmatprep.subr.mxu0 0.0
        %4647 = vmatpush2.msra.mxu0 0.0
        %4648 = vmatprep.subr.mxu0 0.0
        %4649 = vmatpush2.msra.mxu0 0.0
        %4650 = vmatprep.subr.mxu0 0.0
        %4651 = vmatpush2.msra.mxu0 0.0
        %4652 = vmatprep.subr.mxu0 0.0
        %4653 = vmatpush2.msra.mxu0 0.0
        %4654 = vmatprep.subr.mxu0 0.0
        %4655 = vmatpush2.msra.mxu0 0.0
        %4656 = vmatprep.mubr.f32.mxu0 0.0
        %4657 = vmatmul.mubr.f32.gmra.mxu0 %v4590
        %v4658 = vpop.f32.mrf.mxu0
        %v4659 = vadd.f32 0.0, %v4658
        %v4660 = vpop.f32.mrf.mxu0
        %4661 = vdwg.mxu0
        %4663 = vrot.lane.b32.xlu0 %v4329, 32
        %v4664 = vpop.permute.xlu0 %4663
        %4667 = vrot.lane.b32.xlu0 %v4494, 64
        %v4668 = vpop.permute.xlu0 %4667
        %4671 = vrot.lane.b32.xlu0 %v4659, 96
        %v4672 = vpop.permute.xlu0 %4671
        %v4674 = vsel %vm1095, %v4163, %v4664
        %v4675 = vsel %vm1915, %v4674, %v4668
        %v4676 = vsel %vm1918, %v4675, %v4672
        %v4677 = vld [vmem:[#allocation11] sm:$0xff]
        %v4678 = vld [vmem:[#allocation11 + $0x8] sm:$0xff]
        %v4679 = vld [vmem:[#allocation11 + $0x10] sm:$0xff]
        %v4680 = vld [vmem:[#allocation11 + $0x18] sm:$0xff]
        %v4681 = vld [vmem:[#allocation11 + $0x20] sm:$0xff]
        %v4682 = vld [vmem:[#allocation11 + $0x28] sm:$0xff]
        %v4683 = vld [vmem:[#allocation11 + $0x30] sm:$0xff]
        %v4684 = vld [vmem:[#allocation11 + $0x38] sm:$0xff]
        %v4685 = vld [vmem:[#allocation11 + $0x40] sm:$0xff]
        %v4686 = vld [vmem:[#allocation11 + $0x48] sm:$0xff]
        %v4687 = vld [vmem:[#allocation11 + $0x50] sm:$0xff]
        %v4688 = vld [vmem:[#allocation11 + $0x58] sm:$0xff]
        %v4689 = vld [vmem:[#allocation11 + $0x60] sm:$0xff]
        %v4690 = vld [vmem:[#allocation11 + $0x68] sm:$0xff]
        %v4691 = vld [vmem:[#allocation11 + $0x70] sm:$0xff]
        %v4692 = vld [vmem:[#allocation11 + $0x78] sm:$0xff]
        %4693 = vmatprep.subr.mxu0 0.0
        %4694 = vmatpush1.msra.mxu0 %v4692
        %4695 = vmatprep.subr.mxu0 0.0
        %4696 = vmatpush1.msra.mxu0 %v4691
        %4697 = vmatprep.subr.mxu0 0.0
        %4698 = vmatpush1.msra.mxu0 %v4690
        %4699 = vmatprep.subr.mxu0 0.0
        %4700 = vmatpush1.msra.mxu0 %v4689
        %4701 = vmatprep.subr.mxu0 0.0
        %4702 = vmatpush1.msra.mxu0 %v4688
        %4703 = vmatprep.subr.mxu0 0.0
        %4704 = vmatpush1.msra.mxu0 %v4687
        %4705 = vmatprep.subr.mxu0 0.0
        %4706 = vmatpush1.msra.mxu0 %v4686
        %4707 = vmatprep.subr.mxu0 0.0
        %4708 = vmatpush1.msra.mxu0 %v4685
        %4709 = vmatprep.subr.mxu0 0.0
        %4710 = vmatpush1.msra.mxu0 %v4684
        %4711 = vmatprep.subr.mxu0 0.0
        %4712 = vmatpush1.msra.mxu0 %v4683
        %4713 = vmatprep.subr.mxu0 0.0
        %4714 = vmatpush1.msra.mxu0 %v4682
        %4715 = vmatprep.subr.mxu0 0.0
        %4716 = vmatpush1.msra.mxu0 %v4681
        %4717 = vmatprep.subr.mxu0 0.0
        %4718 = vmatpush1.msra.mxu0 %v4680
        %4719 = vmatprep.subr.mxu0 0.0
        %4720 = vmatpush1.msra.mxu0 %v4679
        %4721 = vmatprep.subr.mxu0 0.0
        %4722 = vmatpush1.msra.mxu0 %v4678
        %4723 = vmatprep.subr.mxu0 0.0
        %4724 = vmatpush1.msra.mxu0 %v4677
        %4725 = vmatprep.subr.mxu0 0.0
        %4726 = vmatpush2.msra.mxu0 0.0
        %4727 = vmatprep.subr.mxu0 0.0
        %4728 = vmatpush2.msra.mxu0 0.0
        %4729 = vmatprep.subr.mxu0 0.0
        %4730 = vmatpush2.msra.mxu0 0.0
        %4731 = vmatprep.subr.mxu0 0.0
        %4732 = vmatpush2.msra.mxu0 0.0
        %4733 = vmatprep.subr.mxu0 0.0
        %4734 = vmatpush2.msra.mxu0 0.0
        %4735 = vmatprep.subr.mxu0 0.0
        %4736 = vmatpush2.msra.mxu0 0.0
        %4737 = vmatprep.subr.mxu0 0.0
        %4738 = vmatpush2.msra.mxu0 0.0
        %4739 = vmatprep.subr.mxu0 0.0
        %4740 = vmatpush2.msra.mxu0 0.0
        %4741 = vmatprep.subr.mxu0 0.0
        %4742 = vmatpush2.msra.mxu0 0.0
        %4743 = vmatprep.subr.mxu0 0.0
        %4744 = vmatpush2.msra.mxu0 0.0
        %4745 = vmatprep.subr.mxu0 0.0
        %4746 = vmatpush2.msra.mxu0 0.0
        %4747 = vmatprep.subr.mxu0 0.0
        %4748 = vmatpush2.msra.mxu0 0.0
        %4749 = vmatprep.subr.mxu0 0.0
        %4750 = vmatpush2.msra.mxu0 0.0
        %4751 = vmatprep.subr.mxu0 0.0
        %4752 = vmatpush2.msra.mxu0 0.0
        %4753 = vmatprep.subr.mxu0 0.0
        %4754 = vmatpush2.msra.mxu0 0.0
        %4755 = vmatprep.subr.mxu0 0.0
        %4756 = vmatpush2.msra.mxu0 0.0
        %4757 = vmatprep.mubr.f32.mxu0 0.0
        %4758 = vmatmul.mubr.f32.gmra.mxu0 %v4676
        %v4759 = vpop.f32.mrf.mxu0
        %v4760 = vadd.f32 0.0, %v4759
        %v4761 = vpop.f32.mrf.mxu0
        %4762 = vdwg.mxu0
        %v4763 = vadd.f32 %v3768, %v4760
        %v4764 = vrot.slane %v3769, 5
        %v4765 = vlaneseq
        %v4766 = vshrl.u32 %v4765, 7
        %v4767 = vsub.s32 0, %v4766
        %v4768 = vrot.slane %v4764, %v4767
        %v4770 = vadd.f32 %v4763, %v4768
        %4771 = vadd.xlane.f32.xlu0 %v4770
        %v4772 = vpop.xlane.xlu0 %4771
        %v4773 = vmul.f32 %v4772, %v842
        %v4774 = vsub.f32 %v4770, %v4773
        %v4775 = vmul.f32 %v4774, %v4774
        %4776 = vadd.xlane.f32.xlu0 %v4775
        %v4777 = vpop.xlane.xlu0 %4776
        %v4778 = vmul.f32 %v4777, %v842
        %v4779 = vadd.f32 %v4778, 1e-05
        %v4780 = vrsqrt.pop %v4779
        %v4781 = vmul.f32 %v4774, %v4780
        %v4782 = vrot.slane %v3769, 6
        %v4783 = vlaneseq
        %v4784 = vshrl.u32 %v4783, 7
        %v4785 = vsub.s32 0, %v4784
        %v4786 = vrot.slane %v4782, %v4785
        %v4788 = vmul.f32 %v4781, %v4786
        %v4789 = vrot.slane %v3769, 7
        %v4790 = vlaneseq
        %v4791 = vshrl.u32 %v4790, 7
        %v4792 = vsub.s32 0, %v4791
        %v4793 = vrot.slane %v4789, %v4792
        %v4795 = vadd.f32 %v4788, %v4793
        %v4796 = vld [vmem:[#allocation13] sm:$0xff]
        %v4797 = vld [vmem:[#allocation13 + $0x8] sm:$0xff]
        %v4798 = vld [vmem:[#allocation13 + $0x10] sm:$0xff]
        %v4799 = vld [vmem:[#allocation13 + $0x18] sm:$0xff]
        %v4800 = vld [vmem:[#allocation13 + $0x20] sm:$0xff]
        %v4801 = vld [vmem:[#allocation13 + $0x28] sm:$0xff]
        %v4802 = vld [vmem:[#allocation13 + $0x30] sm:$0xff]
        %v4803 = vld [vmem:[#allocation13 + $0x38] sm:$0xff]
        %v4804 = vld [vmem:[#allocation13 + $0x40] sm:$0xff]
        %v4805 = vld [vmem:[#allocation13 + $0x48] sm:$0xff]
        %v4806 = vld [vmem:[#allocation13 + $0x50] sm:$0xff]
        %v4807 = vld [vmem:[#allocation13 + $0x58] sm:$0xff]
        %v4808 = vld [vmem:[#allocation13 + $0x60] sm:$0xff]
        %v4809 = vld [vmem:[#allocation13 + $0x68] sm:$0xff]
        %v4810 = vld [vmem:[#allocation13 + $0x70] sm:$0xff]
        %v4811 = vld [vmem:[#allocation13 + $0x78] sm:$0xff]
        %v4813 = vlaneseq
        %v4814 = vshrl.u32 %v4813, 7
        %v4815 = vsub.s32 0, %v4814
        %v4816 = vrot.slane %v3771, %v4815
        %4818 = vmatprep.subr.mxu0 0.0
        %4819 = vmatpush1.msra.mxu0 %v4811
        %4820 = vmatprep.subr.mxu0 0.0
        %4821 = vmatpush1.msra.mxu0 %v4810
        %4822 = vmatprep.subr.mxu0 0.0
        %4823 = vmatpush1.msra.mxu0 %v4809
        %4824 = vmatprep.subr.mxu0 0.0
        %4825 = vmatpush1.msra.mxu0 %v4808
        %4826 = vmatprep.subr.mxu0 0.0
        %4827 = vmatpush1.msra.mxu0 %v4807
        %4828 = vmatprep.subr.mxu0 0.0
        %4829 = vmatpush1.msra.mxu0 %v4806
        %4830 = vmatprep.subr.mxu0 0.0
        %4831 = vmatpush1.msra.mxu0 %v4805
        %4832 = vmatprep.subr.mxu0 0.0
        %4833 = vmatpush1.msra.mxu0 %v4804
        %4834 = vmatprep.subr.mxu0 0.0
        %4835 = vmatpush1.msra.mxu0 %v4803
        %4836 = vmatprep.subr.mxu0 0.0
        %4837 = vmatpush1.msra.mxu0 %v4802
        %4838 = vmatprep.subr.mxu0 0.0
        %4839 = vmatpush1.msra.mxu0 %v4801
        %4840 = vmatprep.subr.mxu0 0.0
        %4841 = vmatpush1.msra.mxu0 %v4800
        %4842 = vmatprep.subr.mxu0 0.0
        %4843 = vmatpush1.msra.mxu0 %v4799
        %4844 = vmatprep.subr.mxu0 0.0
        %4845 = vmatpush1.msra.mxu0 %v4798
        %4846 = vmatprep.subr.mxu0 0.0
        %4847 = vmatpush1.msra.mxu0 %v4797
        %4848 = vmatprep.subr.mxu0 0.0
        %4849 = vmatpush1.msra.mxu0 %v4796
        %4850 = vmatprep.subr.mxu0 0.0
        %4851 = vmatpush2.msra.mxu0 0.0
        %4852 = vmatprep.subr.mxu0 0.0
        %4853 = vmatpush2.msra.mxu0 0.0
        %4854 = vmatprep.subr.mxu0 0.0
        %4855 = vmatpush2.msra.mxu0 0.0
        %4856 = vmatprep.subr.mxu0 0.0
        %4857 = vmatpush2.msra.mxu0 0.0
        %4858 = vmatprep.subr.mxu0 0.0
        %4859 = vmatpush2.msra.mxu0 0.0
        %4860 = vmatprep.subr.mxu0 0.0
        %4861 = vmatpush2.msra.mxu0 0.0
        %4862 = vmatprep.subr.mxu0 0.0
        %4863 = vmatpush2.msra.mxu0 0.0
        %4864 = vmatprep.subr.mxu0 0.0
        %4865 = vmatpush2.msra.mxu0 0.0
        %4866 = vmatprep.subr.mxu0 0.0
        %4867 = vmatpush2.msra.mxu0 0.0
        %4868 = vmatprep.subr.mxu0 0.0
        %4869 = vmatpush2.msra.mxu0 0.0
        %4870 = vmatprep.subr.mxu0 0.0
        %4871 = vmatpush2.msra.mxu0 0.0
        %4872 = vmatprep.subr.mxu0 0.0
        %4873 = vmatpush2.msra.mxu0 0.0
        %4874 = vmatprep.subr.mxu0 0.0
        %4875 = vmatpush2.msra.mxu0 0.0
        %4876 = vmatprep.subr.mxu0 0.0
        %4877 = vmatpush2.msra.mxu0 0.0
        %4878 = vmatprep.subr.mxu0 0.0
        %4879 = vmatpush2.msra.mxu0 0.0
        %4880 = vmatprep.subr.mxu0 0.0
        %4881 = vmatpush2.msra.mxu0 0.0
        %4882 = vmatprep.mubr.f32.mxu0 0.0
        %4883 = vmatmul.mubr.f32.gmra.mxu0 %v4795
        %v4884 = vpop.f32.mrf.mxu0
        %v4885 = vadd.f32 %v4816, %v4884
        %v4886 = vpop.f32.mrf.mxu0
        %4887 = vdwg.mxu0
        %v4888 = vmul.f32 %v4885, 0.17677669
        %v4889 = vld [vmem:[#allocation14] sm:$0xff]
        %v4890 = vld [vmem:[#allocation14 + $0x8] sm:$0xff]
        %v4891 = vld [vmem:[#allocation14 + $0x10] sm:$0xff]
        %v4892 = vld [vmem:[#allocation14 + $0x18] sm:$0xff]
        %v4893 = vld [vmem:[#allocation14 + $0x20] sm:$0xff]
        %v4894 = vld [vmem:[#allocation14 + $0x28] sm:$0xff]
        %v4895 = vld [vmem:[#allocation14 + $0x30] sm:$0xff]
        %v4896 = vld [vmem:[#allocation14 + $0x38] sm:$0xff]
        %v4897 = vld [vmem:[#allocation14 + $0x40] sm:$0xff]
        %v4898 = vld [vmem:[#allocation14 + $0x48] sm:$0xff]
        %v4899 = vld [vmem:[#allocation14 + $0x50] sm:$0xff]
        %v4900 = vld [vmem:[#allocation14 + $0x58] sm:$0xff]
        %v4901 = vld [vmem:[#allocation14 + $0x60] sm:$0xff]
        %v4902 = vld [vmem:[#allocation14 + $0x68] sm:$0xff]
        %v4903 = vld [vmem:[#allocation14 + $0x70] sm:$0xff]
        %v4904 = vld [vmem:[#allocation14 + $0x78] sm:$0xff]
        %v4905 = vld [vmem:[#allocation14 + $0x80] sm:$0xff]
        %v4906 = vld [vmem:[#allocation14 + $0x88] sm:$0xff]
        %v4907 = vld [vmem:[#allocation14 + $0x90] sm:$0xff]
        %v4908 = vld [vmem:[#allocation14 + $0x98] sm:$0xff]
        %v4909 = vld [vmem:[#allocation14 + $0xa0] sm:$0xff]
        %v4910 = vld [vmem:[#allocation14 + $0xa8] sm:$0xff]
        %v4911 = vld [vmem:[#allocation14 + $0xb0] sm:$0xff]
        %v4912 = vld [vmem:[#allocation14 + $0xb8] sm:$0xff]
        %v4913 = vld [vmem:[#allocation14 + $0xc0] sm:$0xff]
        %v4914 = vld [vmem:[#allocation14 + $0xc8] sm:$0xff]
        %v4915 = vld [vmem:[#allocation14 + $0xd0] sm:$0xff]
        %v4916 = vld [vmem:[#allocation14 + $0xd8] sm:$0xff]
        %v4917 = vld [vmem:[#allocation14 + $0xe0] sm:$0xff]
        %v4918 = vld [vmem:[#allocation14 + $0xe8] sm:$0xff]
        %v4919 = vld [vmem:[#allocation14 + $0xf0] sm:$0xff]
        %v4920 = vld [vmem:[#allocation14 + $0xf8] sm:$0xff]
        %v4921 = vrot.slane %v3771, 1
        %v4922 = vlaneseq
        %v4923 = vshrl.u32 %v4922, 7
        %v4924 = vsub.s32 0, %v4923
        %v4925 = vrot.slane %v4921, %v4924
        %v4926 = vlaneseq
        %v4927 = vshrl.u32 %v4926, 7
        %v4928 = vsub.s32 1, %v4927
        %v4929 = vrot.slane %v4921, %v4928
        %4932 = vmatprep.subr.mxu0 %v4920
        %4933 = vmatpush1.msra.mxu0 %v4919
        %4934 = vmatprep.subr.mxu0 %v4918
        %4935 = vmatpush1.msra.mxu0 %v4917
        %4936 = vmatprep.subr.mxu0 %v4916
        %4937 = vmatpush1.msra.mxu0 %v4915
        %4938 = vmatprep.subr.mxu0 %v4914
        %4939 = vmatpush1.msra.mxu0 %v4913
        %4940 = vmatprep.subr.mxu0 %v4912
        %4941 = vmatpush1.msra.mxu0 %v4911
        %4942 = vmatprep.subr.mxu0 %v4910
        %4943 = vmatpush1.msra.mxu0 %v4909
        %4944 = vmatprep.subr.mxu0 %v4908
        %4945 = vmatpush1.msra.mxu0 %v4907
        %4946 = vmatprep.subr.mxu0 %v4906
        %4947 = vmatpush1.msra.mxu0 %v4905
        %4948 = vmatprep.subr.mxu0 %v4904
        %4949 = vmatpush1.msra.mxu0 %v4903
        %4950 = vmatprep.subr.mxu0 %v4902
        %4951 = vmatpush1.msra.mxu0 %v4901
        %4952 = vmatprep.subr.mxu0 %v4900
        %4953 = vmatpush1.msra.mxu0 %v4899
        %4954 = vmatprep.subr.mxu0 %v4898
        %4955 = vmatpush1.msra.mxu0 %v4897
        %4956 = vmatprep.subr.mxu0 %v4896
        %4957 = vmatpush1.msra.mxu0 %v4895
        %4958 = vmatprep.subr.mxu0 %v4894
        %4959 = vmatpush1.msra.mxu0 %v4893
        %4960 = vmatprep.subr.mxu0 %v4892
        %4961 = vmatpush1.msra.mxu0 %v4891
        %4962 = vmatprep.subr.mxu0 %v4890
        %4963 = vmatpush1.msra.mxu0 %v4889
        %4964 = vmatprep.subr.mxu0 0.0
        %4965 = vmatpush2.msra.mxu0 0.0
        %4966 = vmatprep.subr.mxu0 0.0
        %4967 = vmatpush2.msra.mxu0 0.0
        %4968 = vmatprep.subr.mxu0 0.0
        %4969 = vmatpush2.msra.mxu0 0.0
        %4970 = vmatprep.subr.mxu0 0.0
        %4971 = vmatpush2.msra.mxu0 0.0
        %4972 = vmatprep.subr.mxu0 0.0
        %4973 = vmatpush2.msra.mxu0 0.0
        %4974 = vmatprep.subr.mxu0 0.0
        %4975 = vmatpush2.msra.mxu0 0.0
        %4976 = vmatprep.subr.mxu0 0.0
        %4977 = vmatpush2.msra.mxu0 0.0
        %4978 = vmatprep.subr.mxu0 0.0
        %4979 = vmatpush2.msra.mxu0 0.0
        %4980 = vmatprep.subr.mxu0 0.0
        %4981 = vmatpush2.msra.mxu0 0.0
        %4982 = vmatprep.subr.mxu0 0.0
        %4983 = vmatpush2.msra.mxu0 0.0
        %4984 = vmatprep.subr.mxu0 0.0
        %4985 = vmatpush2.msra.mxu0 0.0
        %4986 = vmatprep.subr.mxu0 0.0
        %4987 = vmatpush2.msra.mxu0 0.0
        %4988 = vmatprep.subr.mxu0 0.0
        %4989 = vmatpush2.msra.mxu0 0.0
        %4990 = vmatprep.subr.mxu0 0.0
        %4991 = vmatpush2.msra.mxu0 0.0
        %4992 = vmatprep.subr.mxu0 0.0
        %4993 = vmatpush2.msra.mxu0 0.0
        %4994 = vmatprep.subr.mxu0 0.0
        %4995 = vmatpush2.msra.mxu0 0.0
        %4996 = vmatprep.mubr.f32.mxu0 0.0
        %4997 = vmatmul.mubr.f32.gmra.mxu0 %v3765
        %v4998 = vpop.f32.mrf.mxu0
        %v4999 = vadd.f32 %v4925, %v4998
        %v5000 = vpop.f32.mrf.mxu0
        %v5001 = vadd.f32 %v4929, %v5000
        %5002 = vmatprep.mubr.f32.mxu0 0.0
        %5003 = vmatmul.mubr.f32.gmra.mxu0 %v3766
        %v5004 = vpop.f32.mrf.mxu0
        %v5005 = vadd.f32 %v4925, %v5004
        %v5006 = vpop.f32.mrf.mxu0
        %v5007 = vadd.f32 %v4929, %v5006
        %5008 = vdwg.mxu0
        %v5010 = vsel %vm1095, %v4888, 0
        %v5013 = vsel %vm1095, %v4999, 0
        %v5016 = vsel %vm1095, %v5005, 0
        %5018 = vmatprep.subr.mxu0 0.0
        %5019 = vmatpush1.xpose.msra.mxu0 0.0
        %5020 = vmatprep.subr.mxu0 0.0
        %5021 = vmatpush1.xpose.msra.mxu0 0.0
        %5022 = vmatprep.subr.mxu0 0.0
        %5023 = vmatpush1.xpose.msra.mxu0 0.0
        %5024 = vmatprep.subr.mxu0 0.0
        %5025 = vmatpush1.xpose.msra.mxu0 0.0
        %5026 = vmatprep.subr.mxu0 0.0
        %5027 = vmatpush1.xpose.msra.mxu0 0.0
        %5028 = vmatprep.subr.mxu0 0.0
        %5029 = vmatpush1.xpose.msra.mxu0 0.0
        %5030 = vmatprep.subr.mxu0 0.0
        %5031 = vmatpush1.xpose.msra.mxu0 0.0
        %5032 = vmatprep.subr.mxu0 0.0
        %5033 = vmatpush1.xpose.msra.mxu0 0.0
        %5034 = vmatprep.subr.mxu0 0.0
        %5035 = vmatpush1.xpose.msra.mxu0 0.0
        %5036 = vmatprep.subr.mxu0 0.0
        %5037 = vmatpush1.xpose.msra.mxu0 0.0
        %5038 = vmatprep.subr.mxu0 0.0
        %5039 = vmatpush1.xpose.msra.mxu0 0.0
        %5040 = vmatprep.subr.mxu0 0.0
        %5041 = vmatpush1.xpose.msra.mxu0 0.0
        %5042 = vmatprep.subr.mxu0 0.0
        %5043 = vmatpush1.xpose.msra.mxu0 0.0
        %5044 = vmatprep.subr.mxu0 0.0
        %5045 = vmatpush1.xpose.msra.mxu0 0.0
        %5046 = vmatprep.subr.mxu0 0.0
        %5047 = vmatpush1.xpose.msra.mxu0 %v5016
        %5048 = vmatprep.subr.mxu0 0.0
        %5049 = vmatpush1.xpose.msra.mxu0 %v5013
        %5050 = vmatprep.subr.mxu0 0.0
        %5051 = vmatpush2.xpose.msra.mxu0 0.0
        %5052 = vmatprep.subr.mxu0 0.0
        %5053 = vmatpush2.xpose.msra.mxu0 0.0
        %5054 = vmatprep.subr.mxu0 0.0
        %5055 = vmatpush2.xpose.msra.mxu0 0.0
        %5056 = vmatprep.subr.mxu0 0.0
        %5057 = vmatpush2.xpose.msra.mxu0 0.0
        %5058 = vmatprep.subr.mxu0 0.0
        %5059 = vmatpush2.xpose.msra.mxu0 0.0
        %5060 = vmatprep.subr.mxu0 0.0
        %5061 = vmatpush2.xpose.msra.mxu0 0.0
        %5062 = vmatprep.subr.mxu0 0.0
        %5063 = vmatpush2.xpose.msra.mxu0 0.0
        %5064 = vmatprep.subr.mxu0 0.0
        %5065 = vmatpush2.xpose.msra.mxu0 0.0
        %5066 = vmatprep.subr.mxu0 0.0
        %5067 = vmatpush2.xpose.msra.mxu0 0.0
        %5068 = vmatprep.subr.mxu0 0.0
        %5069 = vmatpush2.xpose.msra.mxu0 0.0
        %5070 = vmatprep.subr.mxu0 0.0
        %5071 = vmatpush2.xpose.msra.mxu0 0.0
        %5072 = vmatprep.subr.mxu0 0.0
        %5073 = vmatpush2.xpose.msra.mxu0 0.0
        %5074 = vmatprep.subr.mxu0 0.0
        %5075 = vmatpush2.xpose.msra.mxu0 0.0
        %5076 = vmatprep.subr.mxu0 0.0
        %5077 = vmatpush2.xpose.msra.mxu0 0.0
        %5078 = vmatprep.subr.mxu0 0.0
        %5079 = vmatpush2.xpose.msra.mxu0 0.0
        %5080 = vmatprep.subr.mxu0 0.0
        %5081 = vmatpush2.xpose.msra.mxu0 0.0
        %5082 = vmatprep.mubr.f32.mxu0 0.0
        %5083 = vmatmul.mubr.f32.gmra.mxu0 %v5010
        %v5084 = vpop.f32.mrf.mxu0
        %v5085 = vadd.f32 0.0, %v5084
        %v5086 = vpop.f32.mrf.mxu0
        %5087 = vdwg.mxu0
        %v5088 = vsel %vm1183, %v5085, -inf
        %5089 = vmax.xlane.f32.xlu0 %v5088
        %v5090 = vpop.xlane.xlu0 %5089
        %v5091 = vsub.f32 %v5085, %v5090
        %v5092 = vmul.f32 %v5091, 1.442695
        %v5093 = vpow.pop %v5092
        %v5094 = vsel %vm1183, %v5093, 0.0
        %5095 = vadd.xlane.f32.xlu0 %v5094
        %v5096 = vpop.xlane.xlu0 %5095
        %v5097 = vrcp.pop %v5096
        %v5098 = vmul.f32 %v5093, %v5097
        %v5100 = vsel %vm1183, %v5098, 0
        %5102 = vmatprep.subr.mxu0 0.0
        %5103 = vmatpush1.msra.mxu0 0.0
        %5104 = vmatprep.subr.mxu0 0.0
        %5105 = vmatpush1.msra.mxu0 0.0
        %5106 = vmatprep.subr.mxu0 0.0
        %5107 = vmatpush1.msra.mxu0 0.0
        %5108 = vmatprep.subr.mxu0 0.0
        %5109 = vmatpush1.msra.mxu0 0.0
        %5110 = vmatprep.subr.mxu0 0.0
        %5111 = vmatpush1.msra.mxu0 0.0
        %5112 = vmatprep.subr.mxu0 0.0
        %5113 = vmatpush1.msra.mxu0 0.0
        %5114 = vmatprep.subr.mxu0 0.0
        %5115 = vmatpush1.msra.mxu0 0.0
        %5116 = vmatprep.subr.mxu0 0.0
        %5117 = vmatpush1.msra.mxu0 0.0
        %5118 = vmatprep.subr.mxu0 0.0
        %5119 = vmatpush1.msra.mxu0 0.0
        %5120 = vmatprep.subr.mxu0 0.0
        %5121 = vmatpush1.msra.mxu0 0.0
        %5122 = vmatprep.subr.mxu0 0.0
        %5123 = vmatpush1.msra.mxu0 0.0
        %5124 = vmatprep.subr.mxu0 0.0
        %5125 = vmatpush1.msra.mxu0 0.0
        %5126 = vmatprep.subr.mxu0 0.0
        %5127 = vmatpush1.msra.mxu0 0.0
        %5128 = vmatprep.subr.mxu0 0.0
        %5129 = vmatpush1.msra.mxu0 0.0
        %5130 = vmatprep.subr.mxu0 0.0
        %5131 = vmatpush1.msra.mxu0 %v5007
        %5132 = vmatprep.subr.mxu0 0.0
        %5133 = vmatpush1.msra.mxu0 %v5001
        %5134 = vmatprep.subr.mxu0 0.0
        %5135 = vmatpush2.msra.mxu0 0.0
        %5136 = vmatprep.subr.mxu0 0.0
        %5137 = vmatpush2.msra.mxu0 0.0
        %5138 = vmatprep.subr.mxu0 0.0
        %5139 = vmatpush2.msra.mxu0 0.0
        %5140 = vmatprep.subr.mxu0 0.0
        %5141 = vmatpush2.msra.mxu0 0.0
        %5142 = vmatprep.subr.mxu0 0.0
        %5143 = vmatpush2.msra.mxu0 0.0
        %5144 = vmatprep.subr.mxu0 0.0
        %5145 = vmatpush2.msra.mxu0 0.0
        %5146 = vmatprep.subr.mxu0 0.0
        %5147 = vmatpush2.msra.mxu0 0.0
        %5148 = vmatprep.subr.mxu0 0.0
        %5149 = vmatpush2.msra.mxu0 0.0
        %5150 = vmatprep.subr.mxu0 0.0
        %5151 = vmatpush2.msra.mxu0 0.0
        %5152 = vmatprep.subr.mxu0 0.0
        %5153 = vmatpush2.msra.mxu0 0.0
        %5154 = vmatprep.subr.mxu0 0.0
        %5155 = vmatpush2.msra.mxu0 0.0
        %5156 = vmatprep.subr.mxu0 0.0
        %5157 = vmatpush2.msra.mxu0 0.0
        %5158 = vmatprep.subr.mxu0 0.0
        %5159 = vmatpush2.msra.mxu0 0.0
        %5160 = vmatprep.subr.mxu0 0.0
        %5161 = vmatpush2.msra.mxu0 0.0
        %5162 = vmatprep.subr.mxu0 0.0
        %5163 = vmatpush2.msra.mxu0 0.0
        %5164 = vmatprep.subr.mxu0 0.0
        %5165 = vmatpush2.msra.mxu0 0.0
        %5166 = vmatprep.mubr.f32.mxu0 0.0
        %5167 = vmatmul.mubr.f32.gmra.mxu0 %v5100
        %v5168 = vpop.f32.mrf.mxu0
        %v5169 = vadd.f32 0.0, %v5168
        %v5170 = vpop.f32.mrf.mxu0
        %5171 = vdwg.mxu0
        %5172 = vrot.lane.b32.xlu0 %v4888, 96
        %v5173 = vpop.permute.xlu0 %5172
        %5174 = vrot.lane.b32.xlu0 %v4999, 96
        %v5175 = vpop.permute.xlu0 %5174
        %5176 = vrot.lane.b32.xlu0 %v5005, 96
        %v5177 = vpop.permute.xlu0 %5176
        %v5178 = vsel %vm1095, %v5173, 0
        %v5180 = vsel %vm1095, %v5175, 0
        %v5182 = vsel %vm1095, %v5177, 0
        %5184 = vmatprep.subr.mxu0 0.0
        %5185 = vmatpush1.xpose.msra.mxu0 0.0
        %5186 = vmatprep.subr.mxu0 0.0
        %5187 = vmatpush1.xpose.msra.mxu0 0.0
        %5188 = vmatprep.subr.mxu0 0.0
        %5189 = vmatpush1.xpose.msra.mxu0 0.0
        %5190 = vmatprep.subr.mxu0 0.0
        %5191 = vmatpush1.xpose.msra.mxu0 0.0
        %5192 = vmatprep.subr.mxu0 0.0
        %5193 = vmatpush1.xpose.msra.mxu0 0.0
        %5194 = vmatprep.subr.mxu0 0.0
        %5195 = vmatpush1.xpose.msra.mxu0 0.0
        %5196 = vmatprep.subr.mxu0 0.0
        %5197 = vmatpush1.xpose.msra.mxu0 0.0
        %5198 = vmatprep.subr.mxu0 0.0
        %5199 = vmatpush1.xpose.msra.mxu0 0.0
        %5200 = vmatprep.subr.mxu0 0.0
        %5201 = vmatpush1.xpose.msra.mxu0 0.0
        %5202 = vmatprep.subr.mxu0 0.0
        %5203 = vmatpush1.xpose.msra.mxu0 0.0
        %5204 = vmatprep.subr.mxu0 0.0
        %5205 = vmatpush1.xpose.msra.mxu0 0.0
        %5206 = vmatprep.subr.mxu0 0.0
        %5207 = vmatpush1.xpose.msra.mxu0 0.0
        %5208 = vmatprep.subr.mxu0 0.0
        %5209 = vmatpush1.xpose.msra.mxu0 0.0
        %5210 = vmatprep.subr.mxu0 0.0
        %5211 = vmatpush1.xpose.msra.mxu0 0.0
        %5212 = vmatprep.subr.mxu0 0.0
        %5213 = vmatpush1.xpose.msra.mxu0 %v5182
        %5214 = vmatprep.subr.mxu0 0.0
        %5215 = vmatpush1.xpose.msra.mxu0 %v5180
        %5216 = vmatprep.subr.mxu0 0.0
        %5217 = vmatpush2.xpose.msra.mxu0 0.0
        %5218 = vmatprep.subr.mxu0 0.0
        %5219 = vmatpush2.xpose.msra.mxu0 0.0
        %5220 = vmatprep.subr.mxu0 0.0
        %5221 = vmatpush2.xpose.msra.mxu0 0.0
        %5222 = vmatprep.subr.mxu0 0.0
        %5223 = vmatpush2.xpose.msra.mxu0 0.0
        %5224 = vmatprep.subr.mxu0 0.0
        %5225 = vmatpush2.xpose.msra.mxu0 0.0
        %5226 = vmatprep.subr.mxu0 0.0
        %5227 = vmatpush2.xpose.msra.mxu0 0.0
        %5228 = vmatprep.subr.mxu0 0.0
        %5229 = vmatpush2.xpose.msra.mxu0 0.0
        %5230 = vmatprep.subr.mxu0 0.0
        %5231 = vmatpush2.xpose.msra.mxu0 0.0
        %5232 = vmatprep.subr.mxu0 0.0
        %5233 = vmatpush2.xpose.msra.mxu0 0.0
        %5234 = vmatprep.subr.mxu0 0.0
        %5235 = vmatpush2.xpose.msra.mxu0 0.0
        %5236 = vmatprep.subr.mxu0 0.0
        %5237 = vmatpush2.xpose.msra.mxu0 0.0
        %5238 = vmatprep.subr.mxu0 0.0
        %5239 = vmatpush2.xpose.msra.mxu0 0.0
        %5240 = vmatprep.subr.mxu0 0.0
        %5241 = vmatpush2.xpose.msra.mxu0 0.0
        %5242 = vmatprep.subr.mxu0 0.0
        %5243 = vmatpush2.xpose.msra.mxu0 0.0
        %5244 = vmatprep.subr.mxu0 0.0
        %5245 = vmatpush2.xpose.msra.mxu0 0.0
        %5246 = vmatprep.subr.mxu0 0.0
        %5247 = vmatpush2.xpose.msra.mxu0 0.0
        %5248 = vmatprep.mubr.f32.mxu0 0.0
        %5249 = vmatmul.mubr.f32.gmra.mxu0 %v5178
        %v5250 = vpop.f32.mrf.mxu0
        %v5251 = vadd.f32 0.0, %v5250
        %v5252 = vpop.f32.mrf.mxu0
        %5253 = vdwg.mxu0
        %v5254 = vsel %vm1183, %v5251, -inf
        %5255 = vmax.xlane.f32.xlu0 %v5254
        %v5256 = vpop.xlane.xlu0 %5255
        %v5257 = vsub.f32 %v5251, %v5256
        %v5258 = vmul.f32 %v5257, 1.442695
        %v5259 = vpow.pop %v5258
        %v5260 = vsel %vm1183, %v5259, 0.0
        %5261 = vadd.xlane.f32.xlu0 %v5260
        %v5262 = vpop.xlane.xlu0 %5261
        %v5263 = vrcp.pop %v5262
        %v5264 = vmul.f32 %v5259, %v5263
        %5267 = vrot.lane.b32.xlu0 %v5001, 96
        %v5268 = vpop.permute.xlu0 %5267
        %5269 = vrot.lane.b32.xlu0 %v5007, 96
        %v5270 = vpop.permute.xlu0 %5269
        %v5274 = vsel %vm1183, %v5264, 0
        %5276 = vmatprep.subr.mxu0 0.0
        %5277 = vmatpush1.msra.mxu0 0.0
        %5278 = vmatprep.subr.mxu0 0.0
        %5279 = vmatpush1.msra.mxu0 0.0
        %5280 = vmatprep.subr.mxu0 0.0
        %5281 = vmatpush1.msra.mxu0 0.0
        %5282 = vmatprep.subr.mxu0 0.0
        %5283 = vmatpush1.msra.mxu0 0.0
        %5284 = vmatprep.subr.mxu0 0.0
        %5285 = vmatpush1.msra.mxu0 0.0
        %5286 = vmatprep.subr.mxu0 0.0
        %5287 = vmatpush1.msra.mxu0 0.0
        %5288 = vmatprep.subr.mxu0 0.0
        %5289 = vmatpush1.msra.mxu0 0.0
        %5290 = vmatprep.subr.mxu0 0.0
        %5291 = vmatpush1.msra.mxu0 0.0
        %5292 = vmatprep.subr.mxu0 0.0
        %5293 = vmatpush1.msra.mxu0 0.0
        %5294 = vmatprep.subr.mxu0 0.0
        %5295 = vmatpush1.msra.mxu0 0.0
        %5296 = vmatprep.subr.mxu0 0.0
        %5297 = vmatpush1.msra.mxu0 0.0
        %5298 = vmatprep.subr.mxu0 0.0
        %5299 = vmatpush1.msra.mxu0 0.0
        %5300 = vmatprep.subr.mxu0 0.0
        %5301 = vmatpush1.msra.mxu0 0.0
        %5302 = vmatprep.subr.mxu0 0.0
        %5303 = vmatpush1.msra.mxu0 0.0
        %5304 = vmatprep.subr.mxu0 0.0
        %5305 = vmatpush1.msra.mxu0 %v5270
        %5306 = vmatprep.subr.mxu0 0.0
        %5307 = vmatpush1.msra.mxu0 %v5268
        %5308 = vmatprep.subr.mxu0 0.0
        %5309 = vmatpush2.msra.mxu0 0.0
        %5310 = vmatprep.subr.mxu0 0.0
        %5311 = vmatpush2.msra.mxu0 0.0
        %5312 = vmatprep.subr.mxu0 0.0
        %5313 = vmatpush2.msra.mxu0 0.0
        %5314 = vmatprep.subr.mxu0 0.0
        %5315 = vmatpush2.msra.mxu0 0.0
        %5316 = vmatprep.subr.mxu0 0.0
        %5317 = vmatpush2.msra.mxu0 0.0
        %5318 = vmatprep.subr.mxu0 0.0
        %5319 = vmatpush2.msra.mxu0 0.0
        %5320 = vmatprep.subr.mxu0 0.0
        %5321 = vmatpush2.msra.mxu0 0.0
        %5322 = vmatprep.subr.mxu0 0.0
        %5323 = vmatpush2.msra.mxu0 0.0
        %5324 = vmatprep.subr.mxu0 0.0
        %5325 = vmatpush2.msra.mxu0 0.0
        %5326 = vmatprep.subr.mxu0 0.0
        %5327 = vmatpush2.msra.mxu0 0.0
        %5328 = vmatprep.subr.mxu0 0.0
        %5329 = vmatpush2.msra.mxu0 0.0
        %5330 = vmatprep.subr.mxu0 0.0
        %5331 = vmatpush2.msra.mxu0 0.0
        %5332 = vmatprep.subr.mxu0 0.0
        %5333 = vmatpush2.msra.mxu0 0.0
        %5334 = vmatprep.subr.mxu0 0.0
        %5335 = vmatpush2.msra.mxu0 0.0
        %5336 = vmatprep.subr.mxu0 0.0
        %5337 = vmatpush2.msra.mxu0 0.0
        %5338 = vmatprep.subr.mxu0 0.0
        %5339 = vmatpush2.msra.mxu0 0.0
        %5340 = vmatprep.mubr.f32.mxu0 0.0
        %5341 = vmatmul.mubr.f32.gmra.mxu0 %v5274
        %v5342 = vpop.f32.mrf.mxu0
        %v5343 = vadd.f32 0.0, %v5342
        %v5344 = vpop.f32.mrf.mxu0
        %5345 = vdwg.mxu0
        %5346 = vrot.lane.b32.xlu0 %v4888, 64
        %v5347 = vpop.permute.xlu0 %5346
        %5348 = vrot.lane.b32.xlu0 %v4999, 64
        %v5349 = vpop.permute.xlu0 %5348
        %5350 = vrot.lane.b32.xlu0 %v5005, 64
        %v5351 = vpop.permute.xlu0 %5350
        %v5352 = vsel %vm1095, %v5347, 0
        %v5354 = vsel %vm1095, %v5349, 0
        %v5356 = vsel %vm1095, %v5351, 0
        %5358 = vmatprep.subr.mxu0 0.0
        %5359 = vmatpush1.xpose.msra.mxu0 0.0
        %5360 = vmatprep.subr.mxu0 0.0
        %5361 = vmatpush1.xpose.msra.mxu0 0.0
        %5362 = vmatprep.subr.mxu0 0.0
        %5363 = vmatpush1.xpose.msra.mxu0 0.0
        %5364 = vmatprep.subr.mxu0 0.0
        %5365 = vmatpush1.xpose.msra.mxu0 0.0
        %5366 = vmatprep.subr.mxu0 0.0
        %5367 = vmatpush1.xpose.msra.mxu0 0.0
        %5368 = vmatprep.subr.mxu0 0.0
        %5369 = vmatpush1.xpose.msra.mxu0 0.0
        %5370 = vmatprep.subr.mxu0 0.0
        %5371 = vmatpush1.xpose.msra.mxu0 0.0
        %5372 = vmatprep.subr.mxu0 0.0
        %5373 = vmatpush1.xpose.msra.mxu0 0.0
        %5374 = vmatprep.subr.mxu0 0.0
        %5375 = vmatpush1.xpose.msra.mxu0 0.0
        %5376 = vmatprep.subr.mxu0 0.0
        %5377 = vmatpush1.xpose.msra.mxu0 0.0
        %5378 = vmatprep.subr.mxu0 0.0
        %5379 = vmatpush1.xpose.msra.mxu0 0.0
        %5380 = vmatprep.subr.mxu0 0.0
        %5381 = vmatpush1.xpose.msra.mxu0 0.0
        %5382 = vmatprep.subr.mxu0 0.0
        %5383 = vmatpush1.xpose.msra.mxu0 0.0
        %5384 = vmatprep.subr.mxu0 0.0
        %5385 = vmatpush1.xpose.msra.mxu0 0.0
        %5386 = vmatprep.subr.mxu0 0.0
        %5387 = vmatpush1.xpose.msra.mxu0 %v5356
        %5388 = vmatprep.subr.mxu0 0.0
        %5389 = vmatpush1.xpose.msra.mxu0 %v5354
        %5390 = vmatprep.subr.mxu0 0.0
        %5391 = vmatpush2.xpose.msra.mxu0 0.0
        %5392 = vmatprep.subr.mxu0 0.0
        %5393 = vmatpush2.xpose.msra.mxu0 0.0
        %5394 = vmatprep.subr.mxu0 0.0
        %5395 = vmatpush2.xpose.msra.mxu0 0.0
        %5396 = vmatprep.subr.mxu0 0.0
        %5397 = vmatpush2.xpose.msra.mxu0 0.0
        %5398 = vmatprep.subr.mxu0 0.0
        %5399 = vmatpush2.xpose.msra.mxu0 0.0
        %5400 = vmatprep.subr.mxu0 0.0
        %5401 = vmatpush2.xpose.msra.mxu0 0.0
        %5402 = vmatprep.subr.mxu0 0.0
        %5403 = vmatpush2.xpose.msra.mxu0 0.0
        %5404 = vmatprep.subr.mxu0 0.0
        %5405 = vmatpush2.xpose.msra.mxu0 0.0
        %5406 = vmatprep.subr.mxu0 0.0
        %5407 = vmatpush2.xpose.msra.mxu0 0.0
        %5408 = vmatprep.subr.mxu0 0.0
        %5409 = vmatpush2.xpose.msra.mxu0 0.0
        %5410 = vmatprep.subr.mxu0 0.0
        %5411 = vmatpush2.xpose.msra.mxu0 0.0
        %5412 = vmatprep.subr.mxu0 0.0
        %5413 = vmatpush2.xpose.msra.mxu0 0.0
        %5414 = vmatprep.subr.mxu0 0.0
        %5415 = vmatpush2.xpose.msra.mxu0 0.0
        %5416 = vmatprep.subr.mxu0 0.0
        %5417 = vmatpush2.xpose.msra.mxu0 0.0
        %5418 = vmatprep.subr.mxu0 0.0
        %5419 = vmatpush2.xpose.msra.mxu0 0.0
        %5420 = vmatprep.subr.mxu0 0.0
        %5421 = vmatpush2.xpose.msra.mxu0 0.0
        %5422 = vmatprep.mubr.f32.mxu0 0.0
        %5423 = vmatmul.mubr.f32.gmra.mxu0 %v5352
        %v5424 = vpop.f32.mrf.mxu0
        %v5425 = vadd.f32 0.0, %v5424
        %v5426 = vpop.f32.mrf.mxu0
        %5427 = vdwg.mxu0
        %v5428 = vsel %vm1183, %v5425, -inf
        %5429 = vmax.xlane.f32.xlu0 %v5428
        %v5430 = vpop.xlane.xlu0 %5429
        %v5431 = vsub.f32 %v5425, %v5430
        %v5432 = vmul.f32 %v5431, 1.442695
        %v5433 = vpow.pop %v5432
        %v5434 = vsel %vm1183, %v5433, 0.0
        %5435 = vadd.xlane.f32.xlu0 %v5434
        %v5436 = vpop.xlane.xlu0 %5435
        %v5437 = vrcp.pop %v5436
        %v5438 = vmul.f32 %v5433, %v5437
        %5439 = vrot.lane.b32.xlu0 %v5001, 64
        %v5440 = vpop.permute.xlu0 %5439
        %5441 = vrot.lane.b32.xlu0 %v5007, 64
        %v5442 = vpop.permute.xlu0 %5441
        %v5446 = vsel %vm1183, %v5438, 0
        %5448 = vmatprep.subr.mxu0 0.0
        %5449 = vmatpush1.msra.mxu0 0.0
        %5450 = vmatprep.subr.mxu0 0.0
        %5451 = vmatpush1.msra.mxu0 0.0
        %5452 = vmatprep.subr.mxu0 0.0
        %5453 = vmatpush1.msra.mxu0 0.0
        %5454 = vmatprep.subr.mxu0 0.0
        %5455 = vmatpush1.msra.mxu0 0.0
        %5456 = vmatprep.subr.mxu0 0.0
        %5457 = vmatpush1.msra.mxu0 0.0
        %5458 = vmatprep.subr.mxu0 0.0
        %5459 = vmatpush1.msra.mxu0 0.0
        %5460 = vmatprep.subr.mxu0 0.0
        %5461 = vmatpush1.msra.mxu0 0.0
        %5462 = vmatprep.subr.mxu0 0.0
        %5463 = vmatpush1.msra.mxu0 0.0
        %5464 = vmatprep.subr.mxu0 0.0
        %5465 = vmatpush1.msra.mxu0 0.0
        %5466 = vmatprep.subr.mxu0 0.0
        %5467 = vmatpush1.msra.mxu0 0.0
        %5468 = vmatprep.subr.mxu0 0.0
        %5469 = vmatpush1.msra.mxu0 0.0
        %5470 = vmatprep.subr.mxu0 0.0
        %5471 = vmatpush1.msra.mxu0 0.0
        %5472 = vmatprep.subr.mxu0 0.0
        %5473 = vmatpush1.msra.mxu0 0.0
        %5474 = vmatprep.subr.mxu0 0.0
        %5475 = vmatpush1.msra.mxu0 0.0
        %5476 = vmatprep.subr.mxu0 0.0
        %5477 = vmatpush1.msra.mxu0 %v5442
        %5478 = vmatprep.subr.mxu0 0.0
        %5479 = vmatpush1.msra.mxu0 %v5440
        %5480 = vmatprep.subr.mxu0 0.0
        %5481 = vmatpush2.msra.mxu0 0.0
        %5482 = vmatprep.subr.mxu0 0.0
        %5483 = vmatpush2.msra.mxu0 0.0
        %5484 = vmatprep.subr.mxu0 0.0
        %5485 = vmatpush2.msra.mxu0 0.0
        %5486 = vmatprep.subr.mxu0 0.0
        %5487 = vmatpush2.msra.mxu0 0.0
        %5488 = vmatprep.subr.mxu0 0.0
        %5489 = vmatpush2.msra.mxu0 0.0
        %5490 = vmatprep.subr.mxu0 0.0
        %5491 = vmatpush2.msra.mxu0 0.0
        %5492 = vmatprep.subr.mxu0 0.0
        %5493 = vmatpush2.msra.mxu0 0.0
        %5494 = vmatprep.subr.mxu0 0.0
        %5495 = vmatpush2.msra.mxu0 0.0
        %5496 = vmatprep.subr.mxu0 0.0
        %5497 = vmatpush2.msra.mxu0 0.0
        %5498 = vmatprep.subr.mxu0 0.0
        %5499 = vmatpush2.msra.mxu0 0.0
        %5500 = vmatprep.subr.mxu0 0.0
        %5501 = vmatpush2.msra.mxu0 0.0
        %5502 = vmatprep.subr.mxu0 0.0
        %5503 = vmatpush2.msra.mxu0 0.0
        %5504 = vmatprep.subr.mxu0 0.0
        %5505 = vmatpush2.msra.mxu0 0.0
        %5506 = vmatprep.subr.mxu0 0.0
        %5507 = vmatpush2.msra.mxu0 0.0
        %5508 = vmatprep.subr.mxu0 0.0
        %5509 = vmatpush2.msra.mxu0 0.0
        %5510 = vmatprep.subr.mxu0 0.0
        %5511 = vmatpush2.msra.mxu0 0.0
        %5512 = vmatprep.mubr.f32.mxu0 0.0
        %5513 = vmatmul.mubr.f32.gmra.mxu0 %v5446
        %v5514 = vpop.f32.mrf.mxu0
        %v5515 = vadd.f32 0.0, %v5514
        %v5516 = vpop.f32.mrf.mxu0
        %5517 = vdwg.mxu0
        %5518 = vrot.lane.b32.xlu0 %v4888, 32
        %v5519 = vpop.permute.xlu0 %5518
        %5520 = vrot.lane.b32.xlu0 %v4999, 32
        %v5521 = vpop.permute.xlu0 %5520
        %5522 = vrot.lane.b32.xlu0 %v5005, 32
        %v5523 = vpop.permute.xlu0 %5522
        %v5524 = vsel %vm1095, %v5519, 0
        %v5526 = vsel %vm1095, %v5521, 0
        %v5528 = vsel %vm1095, %v5523, 0
        %5530 = vmatprep.subr.mxu0 0.0
        %5531 = vmatpush1.xpose.msra.mxu0 0.0
        %5532 = vmatprep.subr.mxu0 0.0
        %5533 = vmatpush1.xpose.msra.mxu0 0.0
        %5534 = vmatprep.subr.mxu0 0.0
        %5535 = vmatpush1.xpose.msra.mxu0 0.0
        %5536 = vmatprep.subr.mxu0 0.0
        %5537 = vmatpush1.xpose.msra.mxu0 0.0
        %5538 = vmatprep.subr.mxu0 0.0
        %5539 = vmatpush1.xpose.msra.mxu0 0.0
        %5540 = vmatprep.subr.mxu0 0.0
        %5541 = vmatpush1.xpose.msra.mxu0 0.0
        %5542 = vmatprep.subr.mxu0 0.0
        %5543 = vmatpush1.xpose.msra.mxu0 0.0
        %5544 = vmatprep.subr.mxu0 0.0
        %5545 = vmatpush1.xpose.msra.mxu0 0.0
        %5546 = vmatprep.subr.mxu0 0.0
        %5547 = vmatpush1.xpose.msra.mxu0 0.0
        %5548 = vmatprep.subr.mxu0 0.0
        %5549 = vmatpush1.xpose.msra.mxu0 0.0
        %5550 = vmatprep.subr.mxu0 0.0
        %5551 = vmatpush1.xpose.msra.mxu0 0.0
        %5552 = vmatprep.subr.mxu0 0.0
        %5553 = vmatpush1.xpose.msra.mxu0 0.0
        %5554 = vmatprep.subr.mxu0 0.0
        %5555 = vmatpush1.xpose.msra.mxu0 0.0
        %5556 = vmatprep.subr.mxu0 0.0
        %5557 = vmatpush1.xpose.msra.mxu0 0.0
        %5558 = vmatprep.subr.mxu0 0.0
        %5559 = vmatpush1.xpose.msra.mxu0 %v5528
        %5560 = vmatprep.subr.mxu0 0.0
        %5561 = vmatpush1.xpose.msra.mxu0 %v5526
        %5562 = vmatprep.subr.mxu0 0.0
        %5563 = vmatpush2.xpose.msra.mxu0 0.0
        %5564 = vmatprep.subr.mxu0 0.0
        %5565 = vmatpush2.xpose.msra.mxu0 0.0
        %5566 = vmatprep.subr.mxu0 0.0
        %5567 = vmatpush2.xpose.msra.mxu0 0.0
        %5568 = vmatprep.subr.mxu0 0.0
        %5569 = vmatpush2.xpose.msra.mxu0 0.0
        %5570 = vmatprep.subr.mxu0 0.0
        %5571 = vmatpush2.xpose.msra.mxu0 0.0
        %5572 = vmatprep.subr.mxu0 0.0
        %5573 = vmatpush2.xpose.msra.mxu0 0.0
        %5574 = vmatprep.subr.mxu0 0.0
        %5575 = vmatpush2.xpose.msra.mxu0 0.0
        %5576 = vmatprep.subr.mxu0 0.0
        %5577 = vmatpush2.xpose.msra.mxu0 0.0
        %5578 = vmatprep.subr.mxu0 0.0
        %5579 = vmatpush2.xpose.msra.mxu0 0.0
        %5580 = vmatprep.subr.mxu0 0.0
        %5581 = vmatpush2.xpose.msra.mxu0 0.0
        %5582 = vmatprep.subr.mxu0 0.0
        %5583 = vmatpush2.xpose.msra.mxu0 0.0
        %5584 = vmatprep.subr.mxu0 0.0
        %5585 = vmatpush2.xpose.msra.mxu0 0.0
        %5586 = vmatprep.subr.mxu0 0.0
        %5587 = vmatpush2.xpose.msra.mxu0 0.0
        %5588 = vmatprep.subr.mxu0 0.0
        %5589 = vmatpush2.xpose.msra.mxu0 0.0
        %5590 = vmatprep.subr.mxu0 0.0
        %5591 = vmatpush2.xpose.msra.mxu0 0.0
        %5592 = vmatprep.subr.mxu0 0.0
        %5593 = vmatpush2.xpose.msra.mxu0 0.0
        %5594 = vmatprep.mubr.f32.mxu0 0.0
        %5595 = vmatmul.mubr.f32.gmra.mxu0 %v5524
        %v5596 = vpop.f32.mrf.mxu0
        %v5597 = vadd.f32 0.0, %v5596
        %v5598 = vpop.f32.mrf.mxu0
        %5599 = vdwg.mxu0
        %v5600 = vsel %vm1183, %v5597, -inf
        %5601 = vmax.xlane.f32.xlu0 %v5600
        %v5602 = vpop.xlane.xlu0 %5601
        %v5603 = vsub.f32 %v5597, %v5602
        %v5604 = vmul.f32 %v5603, 1.442695
        %v5605 = vpow.pop %v5604
        %v5606 = vsel %vm1183, %v5605, 0.0
        %5607 = vadd.xlane.f32.xlu0 %v5606
        %v5608 = vpop.xlane.xlu0 %5607
        %v5609 = vrcp.pop %v5608
        %v5610 = vmul.f32 %v5605, %v5609
        %5611 = vrot.lane.b32.xlu0 %v5001, 32
        %v5612 = vpop.permute.xlu0 %5611
        %5613 = vrot.lane.b32.xlu0 %v5007, 32
        %v5614 = vpop.permute.xlu0 %5613
        %v5618 = vsel %vm1183, %v5610, 0
        %5620 = vmatprep.subr.mxu0 0.0
        %5621 = vmatpush1.msra.mxu0 0.0
        %5622 = vmatprep.subr.mxu0 0.0
        %5623 = vmatpush1.msra.mxu0 0.0
        %5624 = vmatprep.subr.mxu0 0.0
        %5625 = vmatpush1.msra.mxu0 0.0
        %5626 = vmatprep.subr.mxu0 0.0
        %5627 = vmatpush1.msra.mxu0 0.0
        %5628 = vmatprep.subr.mxu0 0.0
        %5629 = vmatpush1.msra.mxu0 0.0
        %5630 = vmatprep.subr.mxu0 0.0
        %5631 = vmatpush1.msra.mxu0 0.0
        %5632 = vmatprep.subr.mxu0 0.0
        %5633 = vmatpush1.msra.mxu0 0.0
        %5634 = vmatprep.subr.mxu0 0.0
        %5635 = vmatpush1.msra.mxu0 0.0
        %5636 = vmatprep.subr.mxu0 0.0
        %5637 = vmatpush1.msra.mxu0 0.0
        %5638 = vmatprep.subr.mxu0 0.0
        %5639 = vmatpush1.msra.mxu0 0.0
        %5640 = vmatprep.subr.mxu0 0.0
        %5641 = vmatpush1.msra.mxu0 0.0
        %5642 = vmatprep.subr.mxu0 0.0
        %5643 = vmatpush1.msra.mxu0 0.0
        %5644 = vmatprep.subr.mxu0 0.0
        %5645 = vmatpush1.msra.mxu0 0.0
        %5646 = vmatprep.subr.mxu0 0.0
        %5647 = vmatpush1.msra.mxu0 0.0
        %5648 = vmatprep.subr.mxu0 0.0
        %5649 = vmatpush1.msra.mxu0 %v5614
        %5650 = vmatprep.subr.mxu0 0.0
        %5651 = vmatpush1.msra.mxu0 %v5612
        %5652 = vmatprep.subr.mxu0 0.0
        %5653 = vmatpush2.msra.mxu0 0.0
        %5654 = vmatprep.subr.mxu0 0.0
        %5655 = vmatpush2.msra.mxu0 0.0
        %5656 = vmatprep.subr.mxu0 0.0
        %5657 = vmatpush2.msra.mxu0 0.0
        %5658 = vmatprep.subr.mxu0 0.0
        %5659 = vmatpush2.msra.mxu0 0.0
        %5660 = vmatprep.subr.mxu0 0.0
        %5661 = vmatpush2.msra.mxu0 0.0
        %5662 = vmatprep.subr.mxu0 0.0
        %5663 = vmatpush2.msra.mxu0 0.0
        %5664 = vmatprep.subr.mxu0 0.0
        %5665 = vmatpush2.msra.mxu0 0.0
        %5666 = vmatprep.subr.mxu0 0.0
        %5667 = vmatpush2.msra.mxu0 0.0
        %5668 = vmatprep.subr.mxu0 0.0
        %5669 = vmatpush2.msra.mxu0 0.0
        %5670 = vmatprep.subr.mxu0 0.0
        %5671 = vmatpush2.msra.mxu0 0.0
        %5672 = vmatprep.subr.mxu0 0.0
        %5673 = vmatpush2.msra.mxu0 0.0
        %5674 = vmatprep.subr.mxu0 0.0
        %5675 = vmatpush2.msra.mxu0 0.0
        %5676 = vmatprep.subr.mxu0 0.0
        %5677 = vmatpush2.msra.mxu0 0.0
        %5678 = vmatprep.subr.mxu0 0.0
        %5679 = vmatpush2.msra.mxu0 0.0
        %5680 = vmatprep.subr.mxu0 0.0
        %5681 = vmatpush2.msra.mxu0 0.0
        %5682 = vmatprep.subr.mxu0 0.0
        %5683 = vmatpush2.msra.mxu0 0.0
        %5684 = vmatprep.mubr.f32.mxu0 0.0
        %5685 = vmatmul.mubr.f32.gmra.mxu0 %v5618
        %v5686 = vpop.f32.mrf.mxu0
        %v5687 = vadd.f32 0.0, %v5686
        %v5688 = vpop.f32.mrf.mxu0
        %5689 = vdwg.mxu0
        %5691 = vrot.lane.b32.xlu0 %v5343, 32
        %v5692 = vpop.permute.xlu0 %5691
        %5695 = vrot.lane.b32.xlu0 %v5515, 64
        %v5696 = vpop.permute.xlu0 %5695
        %5699 = vrot.lane.b32.xlu0 %v5687, 96
        %v5700 = vpop.permute.xlu0 %5699
        %v5702 = vsel %vm1095, %v5169, %v5692
        %v5703 = vsel %vm1915, %v5702, %v5696
        %v5704 = vsel %vm1918, %v5703, %v5700
        %v5705 = vld [vmem:[#allocation16] sm:$0xff]
        %v5706 = vld [vmem:[#allocation16 + $0x8] sm:$0xff]
        %v5707 = vld [vmem:[#allocation16 + $0x10] sm:$0xff]
        %v5708 = vld [vmem:[#allocation16 + $0x18] sm:$0xff]
        %v5709 = vld [vmem:[#allocation16 + $0x20] sm:$0xff]
        %v5710 = vld [vmem:[#allocation16 + $0x28] sm:$0xff]
        %v5711 = vld [vmem:[#allocation16 + $0x30] sm:$0xff]
        %v5712 = vld [vmem:[#allocation16 + $0x38] sm:$0xff]
        %v5713 = vld [vmem:[#allocation16 + $0x40] sm:$0xff]
        %v5714 = vld [vmem:[#allocation16 + $0x48] sm:$0xff]
        %v5715 = vld [vmem:[#allocation16 + $0x50] sm:$0xff]
        %v5716 = vld [vmem:[#allocation16 + $0x58] sm:$0xff]
        %v5717 = vld [vmem:[#allocation16 + $0x60] sm:$0xff]
        %v5718 = vld [vmem:[#allocation16 + $0x68] sm:$0xff]
        %v5719 = vld [vmem:[#allocation16 + $0x70] sm:$0xff]
        %v5720 = vld [vmem:[#allocation16 + $0x78] sm:$0xff]
        %5721 = vmatprep.subr.mxu0 0.0
        %5722 = vmatpush1.msra.mxu0 %v5720
        %5723 = vmatprep.subr.mxu0 0.0
        %5724 = vmatpush1.msra.mxu0 %v5719
        %5725 = vmatprep.subr.mxu0 0.0
        %5726 = vmatpush1.msra.mxu0 %v5718
        %5727 = vmatprep.subr.mxu0 0.0
        %5728 = vmatpush1.msra.mxu0 %v5717
        %5729 = vmatprep.subr.mxu0 0.0
        %5730 = vmatpush1.msra.mxu0 %v5716
        %5731 = vmatprep.subr.mxu0 0.0
        %5732 = vmatpush1.msra.mxu0 %v5715
        %5733 = vmatprep.subr.mxu0 0.0
        %5734 = vmatpush1.msra.mxu0 %v5714
        %5735 = vmatprep.subr.mxu0 0.0
        %5736 = vmatpush1.msra.mxu0 %v5713
        %5737 = vmatprep.subr.mxu0 0.0
        %5738 = vmatpush1.msra.mxu0 %v5712
        %5739 = vmatprep.subr.mxu0 0.0
        %5740 = vmatpush1.msra.mxu0 %v5711
        %5741 = vmatprep.subr.mxu0 0.0
        %5742 = vmatpush1.msra.mxu0 %v5710
        %5743 = vmatprep.subr.mxu0 0.0
        %5744 = vmatpush1.msra.mxu0 %v5709
        %5745 = vmatprep.subr.mxu0 0.0
        %5746 = vmatpush1.msra.mxu0 %v5708
        %5747 = vmatprep.subr.mxu0 0.0
        %5748 = vmatpush1.msra.mxu0 %v5707
        %5749 = vmatprep.subr.mxu0 0.0
        %5750 = vmatpush1.msra.mxu0 %v5706
        %5751 = vmatprep.subr.mxu0 0.0
        %5752 = vmatpush1.msra.mxu0 %v5705
        %5753 = vmatprep.subr.mxu0 0.0
        %5754 = vmatpush2.msra.mxu0 0.0
        %5755 = vmatprep.subr.mxu0 0.0
        %5756 = vmatpush2.msra.mxu0 0.0
        %5757 = vmatprep.subr.mxu0 0.0
        %5758 = vmatpush2.msra.mxu0 0.0
        %5759 = vmatprep.subr.mxu0 0.0
        %5760 = vmatpush2.msra.mxu0 0.0
        %5761 = vmatprep.subr.mxu0 0.0
        %5762 = vmatpush2.msra.mxu0 0.0
        %5763 = vmatprep.subr.mxu0 0.0
        %5764 = vmatpush2.msra.mxu0 0.0
        %5765 = vmatprep.subr.mxu0 0.0
        %5766 = vmatpush2.msra.mxu0 0.0
        %5767 = vmatprep.subr.mxu0 0.0
        %5768 = vmatpush2.msra.mxu0 0.0
        %5769 = vmatprep.subr.mxu0 0.0
        %5770 = vmatpush2.msra.mxu0 0.0
        %5771 = vmatprep.subr.mxu0 0.0
        %5772 = vmatpush2.msra.mxu0 0.0
        %5773 = vmatprep.subr.mxu0 0.0
        %5774 = vmatpush2.msra.mxu0 0.0
        %5775 = vmatprep.subr.mxu0 0.0
        %5776 = vmatpush2.msra.mxu0 0.0
        %5777 = vmatprep.subr.mxu0 0.0
        %5778 = vmatpush2.msra.mxu0 0.0
        %5779 = vmatprep.subr.mxu0 0.0
        %5780 = vmatpush2.msra.mxu0 0.0
        %5781 = vmatprep.subr.mxu0 0.0
        %5782 = vmatpush2.msra.mxu0 0.0
        %5783 = vmatprep.subr.mxu0 0.0
        %5784 = vmatpush2.msra.mxu0 0.0
        %5785 = vmatprep.mubr.f32.mxu0 0.0
        %5786 = vmatmul.mubr.f32.gmra.mxu0 %v5704
        %v5787 = vpop.f32.mrf.mxu0
        %v5788 = vadd.f32 0.0, %v5787
        %v5789 = vpop.f32.mrf.mxu0
        %5790 = vdwg.mxu0
        %v5791 = vadd.f32 %v4770, %v5788
        %v5792 = vrot.slane %v3771, 3
        %v5793 = vlaneseq
        %v5794 = vshrl.u32 %v5793, 7
        %v5795 = vsub.s32 0, %v5794
        %v5796 = vrot.slane %v5792, %v5795
        %v5798 = vadd.f32 %v5791, %v5796
        %5799 = vadd.xlane.f32.xlu0 %v5798
        %v5800 = vpop.xlane.xlu0 %5799
        %v5801 = vmul.f32 %v5800, %v842
        %v5802 = vsub.f32 %v5798, %v5801
        %v5803 = vmul.f32 %v5802, %v5802
        %5804 = vadd.xlane.f32.xlu0 %v5803
        %v5805 = vpop.xlane.xlu0 %5804
        %v5806 = vmul.f32 %v5805, %v842
        %v5807 = vadd.f32 %v5806, 1e-05
        %v5808 = vrsqrt.pop %v5807
        %v5809 = vmul.f32 %v5802, %v5808
        %v5810 = vrot.slane %v3771, 4
        %v5811 = vlaneseq
        %v5812 = vshrl.u32 %v5811, 7
        %v5813 = vsub.s32 0, %v5812
        %v5814 = vrot.slane %v5810, %v5813
        %v5816 = vmul.f32 %v5809, %v5814
        %v5817 = vrot.slane %v3771, 5
        %v5818 = vlaneseq
        %v5819 = vshrl.u32 %v5818, 7
        %v5820 = vsub.s32 0, %v5819
        %v5821 = vrot.slane %v5817, %v5820
        %v5823 = vadd.f32 %v5816, %v5821
        %v5824 = vld [vmem:[#allocation17] sm:$0xff]
        %v5825 = vld [vmem:[#allocation17 + $0x8] sm:$0xff]
        %v5826 = vld [vmem:[#allocation17 + $0x10] sm:$0xff]
        %v5827 = vld [vmem:[#allocation17 + $0x18] sm:$0xff]
        %v5828 = vld [vmem:[#allocation17 + $0x20] sm:$0xff]
        %v5829 = vld [vmem:[#allocation17 + $0x28] sm:$0xff]
        %v5830 = vld [vmem:[#allocation17 + $0x30] sm:$0xff]
        %v5831 = vld [vmem:[#allocation17 + $0x38] sm:$0xff]
        %v5832 = vld [vmem:[#allocation17 + $0x40] sm:$0xff]
        %v5833 = vld [vmem:[#allocation17 + $0x48] sm:$0xff]
        %v5834 = vld [vmem:[#allocation17 + $0x50] sm:$0xff]
        %v5835 = vld [vmem:[#allocation17 + $0x58] sm:$0xff]
        %v5836 = vld [vmem:[#allocation17 + $0x60] sm:$0xff]
        %v5837 = vld [vmem:[#allocation17 + $0x68] sm:$0xff]
        %v5838 = vld [vmem:[#allocation17 + $0x70] sm:$0xff]
        %v5839 = vld [vmem:[#allocation17 + $0x78] sm:$0xff]
        %v5840 = vld [vmem:[#allocation17 + $0x80] sm:$0xff]
        %v5841 = vld [vmem:[#allocation17 + $0x88] sm:$0xff]
        %v5842 = vld [vmem:[#allocation17 + $0x90] sm:$0xff]
        %v5843 = vld [vmem:[#allocation17 + $0x98] sm:$0xff]
        %v5844 = vld [vmem:[#allocation17 + $0xa0] sm:$0xff]
        %v5845 = vld [vmem:[#allocation17 + $0xa8] sm:$0xff]
        %v5846 = vld [vmem:[#allocation17 + $0xb0] sm:$0xff]
        %v5847 = vld [vmem:[#allocation17 + $0xb8] sm:$0xff]
        %v5848 = vld [vmem:[#allocation17 + $0xc0] sm:$0xff]
        %v5849 = vld [vmem:[#allocation17 + $0xc8] sm:$0xff]
        %v5850 = vld [vmem:[#allocation17 + $0xd0] sm:$0xff]
        %v5851 = vld [vmem:[#allocation17 + $0xd8] sm:$0xff]
        %v5852 = vld [vmem:[#allocation17 + $0xe0] sm:$0xff]
        %v5853 = vld [vmem:[#allocation17 + $0xe8] sm:$0xff]
        %v5854 = vld [vmem:[#allocation17 + $0xf0] sm:$0xff]
        %v5855 = vld [vmem:[#allocation17 + $0xf8] sm:$0xff]
        %v5856 = vrot.slane %v3771, 6
        %v5857 = vlaneseq
        %v5858 = vshrl.u32 %v5857, 7
        %v5859 = vsub.s32 0, %v5858
        %v5860 = vrot.slane %v5856, %v5859
        %v5861 = vlaneseq
        %v5862 = vshrl.u32 %v5861, 7
        %v5863 = vsub.s32 1, %v5862
        %v5864 = vrot.slane %v5856, %v5863
        %5867 = vmatprep.subr.mxu0 %v5855
        %5868 = vmatpush1.msra.mxu0 %v5854
        %5869 = vmatprep.subr.mxu0 %v5853
        %5870 = vmatpush1.msra.mxu0 %v5852
        %5871 = vmatprep.subr.mxu0 %v5851
        %5872 = vmatpush1.msra.mxu0 %v5850
        %5873 = vmatprep.subr.mxu0 %v5849
        %5874 = vmatpush1.msra.mxu0 %v5848
        %5875 = vmatprep.subr.mxu0 %v5847
        %5876 = vmatpush1.msra.mxu0 %v5846
        %5877 = vmatprep.subr.mxu0 %v5845
        %5878 = vmatpush1.msra.mxu0 %v5844
        %5879 = vmatprep.subr.mxu0 %v5843
        %5880 = vmatpush1.msra.mxu0 %v5842
        %5881 = vmatprep.subr.mxu0 %v5841
        %5882 = vmatpush1.msra.mxu0 %v5840
        %5883 = vmatprep.subr.mxu0 %v5839
        %5884 = vmatpush1.msra.mxu0 %v5838
        %5885 = vmatprep.subr.mxu0 %v5837
        %5886 = vmatpush1.msra.mxu0 %v5836
        %5887 = vmatprep.subr.mxu0 %v5835
        %5888 = vmatpush1.msra.mxu0 %v5834
        %5889 = vmatprep.subr.mxu0 %v5833
        %5890 = vmatpush1.msra.mxu0 %v5832
        %5891 = vmatprep.subr.mxu0 %v5831
        %5892 = vmatpush1.msra.mxu0 %v5830
        %5893 = vmatprep.subr.mxu0 %v5829
        %5894 = vmatpush1.msra.mxu0 %v5828
        %5895 = vmatprep.subr.mxu0 %v5827
        %5896 = vmatpush1.msra.mxu0 %v5826
        %5897 = vmatprep.subr.mxu0 %v5825
        %5898 = vmatpush1.msra.mxu0 %v5824
        %5899 = vmatprep.subr.mxu0 0.0
        %5900 = vmatpush2.msra.mxu0 0.0
        %5901 = vmatprep.subr.mxu0 0.0
        %5902 = vmatpush2.msra.mxu0 0.0
        %5903 = vmatprep.subr.mxu0 0.0
        %5904 = vmatpush2.msra.mxu0 0.0
        %5905 = vmatprep.subr.mxu0 0.0
        %5906 = vmatpush2.msra.mxu0 0.0
        %5907 = vmatprep.subr.mxu0 0.0
        %5908 = vmatpush2.msra.mxu0 0.0
        %5909 = vmatprep.subr.mxu0 0.0
        %5910 = vmatpush2.msra.mxu0 0.0
        %5911 = vmatprep.subr.mxu0 0.0
        %5912 = vmatpush2.msra.mxu0 0.0
        %5913 = vmatprep.subr.mxu0 0.0
        %5914 = vmatpush2.msra.mxu0 0.0
        %5915 = vmatprep.subr.mxu0 0.0
        %5916 = vmatpush2.msra.mxu0 0.0
        %5917 = vmatprep.subr.mxu0 0.0
        %5918 = vmatpush2.msra.mxu0 0.0
        %5919 = vmatprep.subr.mxu0 0.0
        %5920 = vmatpush2.msra.mxu0 0.0
        %5921 = vmatprep.subr.mxu0 0.0
        %5922 = vmatpush2.msra.mxu0 0.0
        %5923 = vmatprep.subr.mxu0 0.0
        %5924 = vmatpush2.msra.mxu0 0.0
        %5925 = vmatprep.subr.mxu0 0.0
        %5926 = vmatpush2.msra.mxu0 0.0
        %5927 = vmatprep.subr.mxu0 0.0
        %5928 = vmatpush2.msra.mxu0 0.0
        %5929 = vmatprep.subr.mxu0 0.0
        %5930 = vmatpush2.msra.mxu0 0.0
        %5931 = vmatprep.mubr.f32.mxu0 0.0
        %5932 = vmatmul.mubr.f32.gmra.mxu0 %v5823
        %v5933 = vpop.f32.mrf.mxu0
        %v5934 = vadd.f32 %v5860, %v5933
        %v5935 = vpop.f32.mrf.mxu0
        %v5936 = vadd.f32 %v5864, %v5935
        %5937 = vdwg.mxu0
        %v5938 = vmax.f32 %v5934, 0.0
        %v5939 = vmax.f32 %v5936, 0.0
        %v5940 = vld [vmem:[#allocation19] sm:$0xff]
        %v5941 = vld [vmem:[#allocation19 + $0x8] sm:$0xff]
        %v5942 = vld [vmem:[#allocation19 + $0x10] sm:$0xff]
        %v5943 = vld [vmem:[#allocation19 + $0x18] sm:$0xff]
        %v5944 = vld [vmem:[#allocation19 + $0x20] sm:$0xff]
        %v5945 = vld [vmem:[#allocation19 + $0x28] sm:$0xff]
        %v5946 = vld [vmem:[#allocation19 + $0x30] sm:$0xff]
        %v5947 = vld [vmem:[#allocation19 + $0x38] sm:$0xff]
        %v5948 = vld [vmem:[#allocation19 + $0x40] sm:$0xff]
        %v5949 = vld [vmem:[#allocation19 + $0x48] sm:$0xff]
        %v5950 = vld [vmem:[#allocation19 + $0x50] sm:$0xff]
        %v5951 = vld [vmem:[#allocation19 + $0x58] sm:$0xff]
        %v5952 = vld [vmem:[#allocation19 + $0x60] sm:$0xff]
        %v5953 = vld [vmem:[#allocation19 + $0x68] sm:$0xff]
        %v5954 = vld [vmem:[#allocation19 + $0x70] sm:$0xff]
        %v5955 = vld [vmem:[#allocation19 + $0x78] sm:$0xff]
        %v5956 = vld [vmem:[#allocation19 + $0x80] sm:$0xff]
        %v5957 = vld [vmem:[#allocation19 + $0x88] sm:$0xff]
        %v5958 = vld [vmem:[#allocation19 + $0x90] sm:$0xff]
        %v5959 = vld [vmem:[#allocation19 + $0x98] sm:$0xff]
        %v5960 = vld [vmem:[#allocation19 + $0xa0] sm:$0xff]
        %v5961 = vld [vmem:[#allocation19 + $0xa8] sm:$0xff]
        %v5962 = vld [vmem:[#allocation19 + $0xb0] sm:$0xff]
        %v5963 = vld [vmem:[#allocation19 + $0xb8] sm:$0xff]
        %v5964 = vld [vmem:[#allocation19 + $0xc0] sm:$0xff]
        %v5965 = vld [vmem:[#allocation19 + $0xc8] sm:$0xff]
        %v5966 = vld [vmem:[#allocation19 + $0xd0] sm:$0xff]
        %v5967 = vld [vmem:[#allocation19 + $0xd8] sm:$0xff]
        %v5968 = vld [vmem:[#allocation19 + $0xe0] sm:$0xff]
        %v5969 = vld [vmem:[#allocation19 + $0xe8] sm:$0xff]
        %v5970 = vld [vmem:[#allocation19 + $0xf0] sm:$0xff]
        %v5971 = vld [vmem:[#allocation19 + $0xf8] sm:$0xff]
        %5972 = vmatprep.subr.mxu0 0.0
        %5973 = vmatpush1.msra.mxu0 %v5955
        %5974 = vmatprep.subr.mxu0 0.0
        %5975 = vmatpush1.msra.mxu0 %v5954
        %5976 = vmatprep.subr.mxu0 0.0
        %5977 = vmatpush1.msra.mxu0 %v5953
        %5978 = vmatprep.subr.mxu0 0.0
        %5979 = vmatpush1.msra.mxu0 %v5952
        %5980 = vmatprep.subr.mxu0 0.0
        %5981 = vmatpush1.msra.mxu0 %v5951
        %5982 = vmatprep.subr.mxu0 0.0
        %5983 = vmatpush1.msra.mxu0 %v5950
        %5984 = vmatprep.subr.mxu0 0.0
        %5985 = vmatpush1.msra.mxu0 %v5949
        %5986 = vmatprep.subr.mxu0 0.0
        %5987 = vmatpush1.msra.mxu0 %v5948
        %5988 = vmatprep.subr.mxu0 0.0
        %5989 = vmatpush1.msra.mxu0 %v5947
        %5990 = vmatprep.subr.mxu0 0.0
        %5991 = vmatpush1.msra.mxu0 %v5946
        %5992 = vmatprep.subr.mxu0 0.0
        %5993 = vmatpush1.msra.mxu0 %v5945
        %5994 = vmatprep.subr.mxu0 0.0
        %5995 = vmatpush1.msra.mxu0 %v5944
        %5996 = vmatprep.subr.mxu0 0.0
        %5997 = vmatpush1.msra.mxu0 %v5943
        %5998 = vmatprep.subr.mxu0 0.0
        %5999 = vmatpush1.msra.mxu0 %v5942
        %6000 = vmatprep.subr.mxu0 0.0
        %6001 = vmatpush1.msra.mxu0 %v5941
        %6002 = vmatprep.subr.mxu0 0.0
        %6003 = vmatpush1.msra.mxu0 %v5940
        %6004 = vmatprep.subr.mxu0 0.0
        %6005 = vmatpush2.msra.mxu0 %v5971
        %6006 = vmatprep.subr.mxu0 0.0
        %6007 = vmatpush2.msra.mxu0 %v5970
        %6008 = vmatprep.subr.mxu0 0.0
        %6009 = vmatpush2.msra.mxu0 %v5969
        %6010 = vmatprep.subr.mxu0 0.0
        %6011 = vmatpush2.msra.mxu0 %v5968
        %6012 = vmatprep.subr.mxu0 0.0
        %6013 = vmatpush2.msra.mxu0 %v5967
        %6014 = vmatprep.subr.mxu0 0.0
        %6015 = vmatpush2.msra.mxu0 %v5966
        %6016 = vmatprep.subr.mxu0 0.0
        %6017 = vmatpush2.msra.mxu0 %v5965
        %6018 = vmatprep.subr.mxu0 0.0
        %6019 = vmatpush2.msra.mxu0 %v5964
        %6020 = vmatprep.subr.mxu0 0.0
        %6021 = vmatpush2.msra.mxu0 %v5963
        %6022 = vmatprep.subr.mxu0 0.0
        %6023 = vmatpush2.msra.mxu0 %v5962
        %6024 = vmatprep.subr.mxu0 0.0
        %6025 = vmatpush2.msra.mxu0 %v5961
        %6026 = vmatprep.subr.mxu0 0.0
        %6027 = vmatpush2.msra.mxu0 %v5960
        %6028 = vmatprep.subr.mxu0 0.0
        %6029 = vmatpush2.msra.mxu0 %v5959
        %6030 = vmatprep.subr.mxu0 0.0
        %6031 = vmatpush2.msra.mxu0 %v5958
        %6032 = vmatprep.subr.mxu0 0.0
        %6033 = vmatpush2.msra.mxu0 %v5957
        %6034 = vmatprep.subr.mxu0 0.0
        %6035 = vmatpush2.msra.mxu0 %v5956
        %6036 = vmatprep.mubr.f32.mxu0 %v5939
        %6037 = vmatmul.mubr.f32.gmra.mxu0 %v5938
        %v6038 = vpop.f32.mrf.mxu0
        %v6039 = vadd.f32 0.0, %v6038
        %v6040 = vpop.f32.mrf.mxu0
        %6041 = vdwg.mxu0
        %v6042 = vadd.f32 %v5798, %v6039
        %v6044 = vlaneseq
        %v6045 = vshrl.u32 %v6044, 7
        %v6046 = vsub.s32 0, %v6045
        %v6047 = vrot.slane %v3773, %v6046
        %v6049 = vadd.f32 %v6042, %v6047
        %s6050 = scalar_lea.vmem [#allocation20], 1
        %v6051 = vld [vmem:[%s6050] ss:$2 sm:$0xff]
        %s6052 = scalar_lea.vmem [#allocation20], 17
        %v6053 = vld [vmem:[%s6052] ss:$2 sm:$0xff]
        %s6054 = scalar_lea.vmem [#allocation20], 33
        %v6055 = vld [vmem:[%s6054] ss:$2 sm:$0x1]
        %6056 = vadd.xlane.f32.xlu0 %v6049
        %v6057 = vpop.xlane.xlu0 %6056
        %v6058 = vmul.f32 %v6057, %v842
        %v6059 = vsub.f32 %v6049, %v6058
        %v6060 = vmul.f32 %v6059, %v6059
        %6061 = vadd.xlane.f32.xlu0 %v6060
        %v6062 = vpop.xlane.xlu0 %6061
        %v6063 = vmul.f32 %v6062, %v842
        %v6064 = vadd.f32 %v6063, 1e-05
        %v6065 = vrsqrt.pop %v6064
        %v6066 = vmul.f32 %v6059, %v6065
        %v6068 = vlaneseq
        %v6069 = vshrl.u32 %v6068, 7
        %v6070 = vsub.s32 0, %v6069
        %v6071 = vrot.slane %v6051, %v6070
        %v6073 = vmul.f32 %v6066, %v6071
        %v6074 = vrot.slane %v6051, 1
        %v6075 = vlaneseq
        %v6076 = vshrl.u32 %v6075, 7
        %v6077 = vsub.s32 0, %v6076
        %v6078 = vrot.slane %v6074, %v6077
        %v6080 = vadd.f32 %v6073, %v6078
        %s6081 = scalar_lea.vmem [#allocation10], 384
        %v6082 = vld [vmem:[%s6081] sm:$0xff]
        %v6083 = vld [vmem:[%s6081 + $0x8] sm:$0xff]
        %v6084 = vld [vmem:[%s6081 + $0x10] sm:$0xff]
        %v6085 = vld [vmem:[%s6081 + $0x18] sm:$0xff]
        %v6086 = vld [vmem:[%s6081 + $0x20] sm:$0xff]
        %v6087 = vld [vmem:[%s6081 + $0x28] sm:$0xff]
        %v6088 = vld [vmem:[%s6081 + $0x30] sm:$0xff]
        %v6089 = vld [vmem:[%s6081 + $0x38] sm:$0xff]
        %v6090 = vld [vmem:[%s6081 + $0x40] sm:$0xff]
        %v6091 = vld [vmem:[%s6081 + $0x48] sm:$0xff]
        %v6092 = vld [vmem:[%s6081 + $0x50] sm:$0xff]
        %v6093 = vld [vmem:[%s6081 + $0x58] sm:$0xff]
        %v6094 = vld [vmem:[%s6081 + $0x60] sm:$0xff]
        %v6095 = vld [vmem:[%s6081 + $0x68] sm:$0xff]
        %v6096 = vld [vmem:[%s6081 + $0x70] sm:$0xff]
        %v6097 = vld [vmem:[%s6081 + $0x78] sm:$0xff]
        %v6098 = vld [vmem:[%s6081 + $0x80] sm:$0xff]
        %v6099 = vld [vmem:[%s6081 + $0x88] sm:$0xff]
        %v6100 = vld [vmem:[%s6081 + $0x90] sm:$0xff]
        %v6101 = vld [vmem:[%s6081 + $0x98] sm:$0xff]
        %v6102 = vld [vmem:[%s6081 + $0xa0] sm:$0xff]
        %v6103 = vld [vmem:[%s6081 + $0xa8] sm:$0xff]
        %v6104 = vld [vmem:[%s6081 + $0xb0] sm:$0xff]
        %v6105 = vld [vmem:[%s6081 + $0xb8] sm:$0xff]
        %v6106 = vld [vmem:[%s6081 + $0xc0] sm:$0xff]
        %v6107 = vld [vmem:[%s6081 + $0xc8] sm:$0xff]
        %v6108 = vld [vmem:[%s6081 + $0xd0] sm:$0xff]
        %v6109 = vld [vmem:[%s6081 + $0xd8] sm:$0xff]
        %v6110 = vld [vmem:[%s6081 + $0xe0] sm:$0xff]
        %v6111 = vld [vmem:[%s6081 + $0xe8] sm:$0xff]
        %v6112 = vld [vmem:[%s6081 + $0xf0] sm:$0xff]
        %v6113 = vld [vmem:[%s6081 + $0xf8] sm:$0xff]
        %v6114 = vld [vmem:[%s6081 + $0x100] sm:$0xff]
        %v6115 = vld [vmem:[%s6081 + $0x108] sm:$0xff]
        %v6116 = vld [vmem:[%s6081 + $0x110] sm:$0xff]
        %v6117 = vld [vmem:[%s6081 + $0x118] sm:$0xff]
        %v6118 = vld [vmem:[%s6081 + $0x120] sm:$0xff]
        %v6119 = vld [vmem:[%s6081 + $0x128] sm:$0xff]
        %v6120 = vld [vmem:[%s6081 + $0x130] sm:$0xff]
        %v6121 = vld [vmem:[%s6081 + $0x138] sm:$0xff]
        %v6122 = vld [vmem:[%s6081 + $0x140] sm:$0xff]
        %v6123 = vld [vmem:[%s6081 + $0x148] sm:$0xff]
        %v6124 = vld [vmem:[%s6081 + $0x150] sm:$0xff]
        %v6125 = vld [vmem:[%s6081 + $0x158] sm:$0xff]
        %v6126 = vld [vmem:[%s6081 + $0x160] sm:$0xff]
        %v6127 = vld [vmem:[%s6081 + $0x168] sm:$0xff]
        %v6128 = vld [vmem:[%s6081 + $0x170] sm:$0xff]
        %v6129 = vld [vmem:[%s6081 + $0x178] sm:$0xff]
        %v6130 = vrot.slane %v6051, 2
        %v6131 = vlaneseq
        %v6132 = vshrl.u32 %v6131, 7
        %v6133 = vsub.s32 0, %v6132
        %v6134 = vrot.slane %v6130, %v6133
        %v6135 = vlaneseq
        %v6136 = vshrl.u32 %v6135, 7
        %v6137 = vsub.s32 1, %v6136
        %v6138 = vrot.slane %v6130, %v6137
        %v6139 = vlaneseq
        %v6140 = vshrl.u32 %v6139, 7
        %v6141 = vsub.s32 2, %v6140
        %v6142 = vrot.slane %v6130, %v6141
        %6146 = vmatprep.subr.mxu0 %v6128
        %6147 = vmatpush1.msra.mxu0 %v6127
        %6148 = vmatprep.subr.mxu0 %v6125
        %6149 = vmatpush1.msra.mxu0 %v6124
        %6150 = vmatprep.subr.mxu0 %v6122
        %6151 = vmatpush1.msra.mxu0 %v6121
        %6152 = vmatprep.subr.mxu0 %v6119
        %6153 = vmatpush1.msra.mxu0 %v6118
        %6154 = vmatprep.subr.mxu0 %v6116
        %6155 = vmatpush1.msra.mxu0 %v6115
        %6156 = vmatprep.subr.mxu0 %v6113
        %6157 = vmatpush1.msra.mxu0 %v6112
        %6158 = vmatprep.subr.mxu0 %v6110
        %6159 = vmatpush1.msra.mxu0 %v6109
        %6160 = vmatprep.subr.mxu0 %v6107
        %6161 = vmatpush1.msra.mxu0 %v6106
        %6162 = vmatprep.subr.mxu0 %v6104
        %6163 = vmatpush1.msra.mxu0 %v6103
        %6164 = vmatprep.subr.mxu0 %v6101
        %6165 = vmatpush1.msra.mxu0 %v6100
        %6166 = vmatprep.subr.mxu0 %v6098
        %6167 = vmatpush1.msra.mxu0 %v6097
        %6168 = vmatprep.subr.mxu0 %v6095
        %6169 = vmatpush1.msra.mxu0 %v6094
        %6170 = vmatprep.subr.mxu0 %v6092
        %6171 = vmatpush1.msra.mxu0 %v6091
        %6172 = vmatprep.subr.mxu0 %v6089
        %6173 = vmatpush1.msra.mxu0 %v6088
        %6174 = vmatprep.subr.mxu0 %v6086
        %6175 = vmatpush1.msra.mxu0 %v6085
        %6176 = vmatprep.subr.mxu0 %v6083
        %6177 = vmatpush1.msra.mxu0 %v6082
        %6178 = vmatprep.subr.mxu0 0.0
        %6179 = vmatpush2.msra.mxu0 0.0
        %6180 = vmatprep.subr.mxu0 0.0
        %6181 = vmatpush2.msra.mxu0 0.0
        %6182 = vmatprep.subr.mxu0 0.0
        %6183 = vmatpush2.msra.mxu0 0.0
        %6184 = vmatprep.subr.mxu0 0.0
        %6185 = vmatpush2.msra.mxu0 0.0
        %6186 = vmatprep.subr.mxu0 0.0
        %6187 = vmatpush2.msra.mxu0 0.0
        %6188 = vmatprep.subr.mxu0 0.0
        %6189 = vmatpush2.msra.mxu0 0.0
        %6190 = vmatprep.subr.mxu0 0.0
        %6191 = vmatpush2.msra.mxu0 0.0
        %6192 = vmatprep.subr.mxu0 0.0
        %6193 = vmatpush2.msra.mxu0 0.0
        %6194 = vmatprep.subr.mxu0 0.0
        %6195 = vmatpush2.msra.mxu0 0.0
        %6196 = vmatprep.subr.mxu0 0.0
        %6197 = vmatpush2.msra.mxu0 0.0
        %6198 = vmatprep.subr.mxu0 0.0
        %6199 = vmatpush2.msra.mxu0 0.0
        %6200 = vmatprep.subr.mxu0 0.0
        %6201 = vmatpush2.msra.mxu0 0.0
        %6202 = vmatprep.subr.mxu0 0.0
        %6203 = vmatpush2.msra.mxu0 0.0
        %6204 = vmatprep.subr.mxu0 0.0
        %6205 = vmatpush2.msra.mxu0 0.0
        %6206 = vmatprep.subr.mxu0 0.0
        %6207 = vmatpush2.msra.mxu0 0.0
        %6208 = vmatprep.subr.mxu0 0.0
        %6209 = vmatpush2.msra.mxu0 0.0
        %6210 = vmatprep.mubr.f32.mxu0 0.0
        %6211 = vmatmul.mubr.f32.gmra.mxu0 %v6080
        %v6212 = vpop.f32.mrf.mxu0
        %v6213 = vadd.f32 %v6134, %v6212
        %v6214 = vpop.f32.mrf.mxu0
        %v6215 = vadd.f32 %v6138, %v6214
        %6216 = vdwg.mxu0
        %6217 = vmatprep.subr.mxu0 0.0
        %6218 = vmatpush1.msra.mxu0 %v6129
        %6219 = vmatprep.subr.mxu0 0.0
        %6220 = vmatpush1.msra.mxu0 %v6126
        %6221 = vmatprep.subr.mxu0 0.0
        %6222 = vmatpush1.msra.mxu0 %v6123
        %6223 = vmatprep.subr.mxu0 0.0
        %6224 = vmatpush1.msra.mxu0 %v6120
        %6225 = vmatprep.subr.mxu0 0.0
        %6226 = vmatpush1.msra.mxu0 %v6117
        %6227 = vmatprep.subr.mxu0 0.0
        %6228 = vmatpush1.msra.mxu0 %v6114
        %6229 = vmatprep.subr.mxu0 0.0
        %6230 = vmatpush1.msra.mxu0 %v6111
        %6231 = vmatprep.subr.mxu0 0.0
        %6232 = vmatpush1.msra.mxu0 %v6108
        %6233 = vmatprep.subr.mxu0 0.0
        %6234 = vmatpush1.msra.mxu0 %v6105
        %6235 = vmatprep.subr.mxu0 0.0
        %6236 = vmatpush1.msra.mxu0 %v6102
        %6237 = vmatprep.subr.mxu0 0.0
        %6238 = vmatpush1.msra.mxu0 %v6099
        %6239 = vmatprep.subr.mxu0 0.0
        %6240 = vmatpush1.msra.mxu0 %v6096
        %6241 = vmatprep.subr.mxu0 0.0
        %6242 = vmatpush1.msra.mxu0 %v6093
        %6243 = vmatprep.subr.mxu0 0.0
        %6244 = vmatpush1.msra.mxu0 %v6090
        %6245 = vmatprep.subr.mxu0 0.0
        %6246 = vmatpush1.msra.mxu0 %v6087
        %6247 = vmatprep.subr.mxu0 0.0
        %6248 = vmatpush1.msra.mxu0 %v6084
        %6249 = vmatprep.subr.mxu0 0.0
        %6250 = vmatpush2.msra.mxu0 0.0
        %6251 = vmatprep.subr.mxu0 0.0
        %6252 = vmatpush2.msra.mxu0 0.0
        %6253 = vmatprep.subr.mxu0 0.0
        %6254 = vmatpush2.msra.mxu0 0.0
        %6255 = vmatprep.subr.mxu0 0.0
        %6256 = vmatpush2.msra.mxu0 0.0
        %6257 = vmatprep.subr.mxu0 0.0
        %6258 = vmatpush2.msra.mxu0 0.0
        %6259 = vmatprep.subr.mxu0 0.0
        %6260 = vmatpush2.msra.mxu0 0.0
        %6261 = vmatprep.subr.mxu0 0.0
        %6262 = vmatpush2.msra.mxu0 0.0
        %6263 = vmatprep.subr.mxu0 0.0
        %6264 = vmatpush2.msra.mxu0 0.0
        %6265 = vmatprep.subr.mxu0 0.0
        %6266 = vmatpush2.msra.mxu0 0.0
        %6267 = vmatprep.subr.mxu0 0.0
        %6268 = vmatpush2.msra.mxu0 0.0
        %6269 = vmatprep.subr.mxu0 0.0
        %6270 = vmatpush2.msra.mxu0 0.0
        %6271 = vmatprep.subr.mxu0 0.0
        %6272 = vmatpush2.msra.mxu0 0.0
        %6273 = vmatprep.subr.mxu0 0.0
        %6274 = vmatpush2.msra.mxu0 0.0
        %6275 = vmatprep.subr.mxu0 0.0
        %6276 = vmatpush2.msra.mxu0 0.0
        %6277 = vmatprep.subr.mxu0 0.0
        %6278 = vmatpush2.msra.mxu0 0.0
        %6279 = vmatprep.subr.mxu0 0.0
        %6280 = vmatpush2.msra.mxu0 0.0
        %6281 = vmatprep.mubr.f32.mxu0 0.0
        %6282 = vmatmul.mubr.f32.gmra.mxu0 %v6080
        %v6283 = vpop.f32.mrf.mxu0
        %v6284 = vadd.f32 %v6142, %v6283
        %v6285 = vpop.f32.mrf.mxu0
        %6286 = vdwg.mxu0
        %v6287 = vmul.f32 %v6213, 0.17677669
        %v6289 = vsel %vm1095, %v6287, 0
        %v6292 = vsel %vm1095, %v6215, 0
        %6294 = vmatprep.subr.mxu0 0.0
        %6295 = vmatpush1.xpose.msra.mxu0 0.0
        %6296 = vmatprep.subr.mxu0 0.0
        %6297 = vmatpush1.xpose.msra.mxu0 0.0
        %6298 = vmatprep.subr.mxu0 0.0
        %6299 = vmatpush1.xpose.msra.mxu0 0.0
        %6300 = vmatprep.subr.mxu0 0.0
        %6301 = vmatpush1.xpose.msra.mxu0 0.0
        %6302 = vmatprep.subr.mxu0 0.0
        %6303 = vmatpush1.xpose.msra.mxu0 0.0
        %6304 = vmatprep.subr.mxu0 0.0
        %6305 = vmatpush1.xpose.msra.mxu0 0.0
        %6306 = vmatprep.subr.mxu0 0.0
        %6307 = vmatpush1.xpose.msra.mxu0 0.0
        %6308 = vmatprep.subr.mxu0 0.0
        %6309 = vmatpush1.xpose.msra.mxu0 0.0
        %6310 = vmatprep.subr.mxu0 0.0
        %6311 = vmatpush1.xpose.msra.mxu0 0.0
        %6312 = vmatprep.subr.mxu0 0.0
        %6313 = vmatpush1.xpose.msra.mxu0 0.0
        %6314 = vmatprep.subr.mxu0 0.0
        %6315 = vmatpush1.xpose.msra.mxu0 0.0
        %6316 = vmatprep.subr.mxu0 0.0
        %6317 = vmatpush1.xpose.msra.mxu0 0.0
        %6318 = vmatprep.subr.mxu0 0.0
        %6319 = vmatpush1.xpose.msra.mxu0 0.0
        %6320 = vmatprep.subr.mxu0 0.0
        %6321 = vmatpush1.xpose.msra.mxu0 0.0
        %6322 = vmatprep.subr.mxu0 0.0
        %6323 = vmatpush1.xpose.msra.mxu0 0.0
        %6324 = vmatprep.subr.mxu0 0.0
        %6325 = vmatpush1.xpose.msra.mxu0 %v6292
        %6326 = vmatprep.subr.mxu0 0.0
        %6327 = vmatpush2.xpose.msra.mxu0 0.0
        %6328 = vmatprep.subr.mxu0 0.0
        %6329 = vmatpush2.xpose.msra.mxu0 0.0
        %6330 = vmatprep.subr.mxu0 0.0
        %6331 = vmatpush2.xpose.msra.mxu0 0.0
        %6332 = vmatprep.subr.mxu0 0.0
        %6333 = vmatpush2.xpose.msra.mxu0 0.0
        %6334 = vmatprep.subr.mxu0 0.0
        %6335 = vmatpush2.xpose.msra.mxu0 0.0
        %6336 = vmatprep.subr.mxu0 0.0
        %6337 = vmatpush2.xpose.msra.mxu0 0.0
        %6338 = vmatprep.subr.mxu0 0.0
        %6339 = vmatpush2.xpose.msra.mxu0 0.0
        %6340 = vmatprep.subr.mxu0 0.0
        %6341 = vmatpush2.xpose.msra.mxu0 0.0
        %6342 = vmatprep.subr.mxu0 0.0
        %6343 = vmatpush2.xpose.msra.mxu0 0.0
        %6344 = vmatprep.subr.mxu0 0.0
        %6345 = vmatpush2.xpose.msra.mxu0 0.0
        %6346 = vmatprep.subr.mxu0 0.0
        %6347 = vmatpush2.xpose.msra.mxu0 0.0
        %6348 = vmatprep.subr.mxu0 0.0
        %6349 = vmatpush2.xpose.msra.mxu0 0.0
        %6350 = vmatprep.subr.mxu0 0.0
        %6351 = vmatpush2.xpose.msra.mxu0 0.0
        %6352 = vmatprep.subr.mxu0 0.0
        %6353 = vmatpush2.xpose.msra.mxu0 0.0
        %6354 = vmatprep.subr.mxu0 0.0
        %6355 = vmatpush2.xpose.msra.mxu0 0.0
        %6356 = vmatprep.subr.mxu0 0.0
        %6357 = vmatpush2.xpose.msra.mxu0 0.0
        %6358 = vmatprep.mubr.f32.mxu0 0.0
        %6359 = vmatmul.mubr.f32.gmra.mxu0 %v6289
        %v6360 = vpop.f32.mrf.mxu0
        %v6361 = vadd.f32 %v3767, %v6360
        %v6362 = vpop.f32.mrf.mxu0
        %6363 = vdwg.mxu0
        %v6364 = vsel %vm4081, %v6361, -inf
        %6365 = vmax.xlane.f32.xlu0 %v6364
        %v6366 = vpop.xlane.xlu0 %6365
        %v6367 = vsub.f32 %v6361, %v6366
        %v6368 = vmul.f32 %v6367, 1.442695
        %v6369 = vpow.pop %v6368
        %v6370 = vsel %vm4081, %v6369, 0.0
        %6371 = vadd.xlane.f32.xlu0 %v6370
        %v6372 = vpop.xlane.xlu0 %6371
        %v6373 = vrcp.pop %v6372
        %v6374 = vmul.f32 %v6369, %v6373
        %v6376 = vsel %vm4081, %v6374, 0
        %6378 = vmatprep.subr.mxu0 0.0
        %6379 = vmatpush1.msra.mxu0 0.0
        %6380 = vmatprep.subr.mxu0 0.0
        %6381 = vmatpush1.msra.mxu0 0.0
        %6382 = vmatprep.subr.mxu0 0.0
        %6383 = vmatpush1.msra.mxu0 0.0
        %6384 = vmatprep.subr.mxu0 0.0
        %6385 = vmatpush1.msra.mxu0 0.0
        %6386 = vmatprep.subr.mxu0 0.0
        %6387 = vmatpush1.msra.mxu0 0.0
        %6388 = vmatprep.subr.mxu0 0.0
        %6389 = vmatpush1.msra.mxu0 0.0
        %6390 = vmatprep.subr.mxu0 0.0
        %6391 = vmatpush1.msra.mxu0 0.0
        %6392 = vmatprep.subr.mxu0 0.0
        %6393 = vmatpush1.msra.mxu0 0.0
        %6394 = vmatprep.subr.mxu0 0.0
        %6395 = vmatpush1.msra.mxu0 0.0
        %6396 = vmatprep.subr.mxu0 0.0
        %6397 = vmatpush1.msra.mxu0 0.0
        %6398 = vmatprep.subr.mxu0 0.0
        %6399 = vmatpush1.msra.mxu0 0.0
        %6400 = vmatprep.subr.mxu0 0.0
        %6401 = vmatpush1.msra.mxu0 0.0
        %6402 = vmatprep.subr.mxu0 0.0
        %6403 = vmatpush1.msra.mxu0 0.0
        %6404 = vmatprep.subr.mxu0 0.0
        %6405 = vmatpush1.msra.mxu0 0.0
        %6406 = vmatprep.subr.mxu0 0.0
        %6407 = vmatpush1.msra.mxu0 0.0
        %6408 = vmatprep.subr.mxu0 0.0
        %6409 = vmatpush1.msra.mxu0 %v6284
        %6410 = vmatprep.subr.mxu0 0.0
        %6411 = vmatpush2.msra.mxu0 0.0
        %6412 = vmatprep.subr.mxu0 0.0
        %6413 = vmatpush2.msra.mxu0 0.0
        %6414 = vmatprep.subr.mxu0 0.0
        %6415 = vmatpush2.msra.mxu0 0.0
        %6416 = vmatprep.subr.mxu0 0.0
        %6417 = vmatpush2.msra.mxu0 0.0
        %6418 = vmatprep.subr.mxu0 0.0
        %6419 = vmatpush2.msra.mxu0 0.0
        %6420 = vmatprep.subr.mxu0 0.0
        %6421 = vmatpush2.msra.mxu0 0.0
        %6422 = vmatprep.subr.mxu0 0.0
        %6423 = vmatpush2.msra.mxu0 0.0
        %6424 = vmatprep.subr.mxu0 0.0
        %6425 = vmatpush2.msra.mxu0 0.0
        %6426 = vmatprep.subr.mxu0 0.0
        %6427 = vmatpush2.msra.mxu0 0.0
        %6428 = vmatprep.subr.mxu0 0.0
        %6429 = vmatpush2.msra.mxu0 0.0
        %6430 = vmatprep.subr.mxu0 0.0
        %6431 = vmatpush2.msra.mxu0 0.0
        %6432 = vmatprep.subr.mxu0 0.0
        %6433 = vmatpush2.msra.mxu0 0.0
        %6434 = vmatprep.subr.mxu0 0.0
        %6435 = vmatpush2.msra.mxu0 0.0
        %6436 = vmatprep.subr.mxu0 0.0
        %6437 = vmatpush2.msra.mxu0 0.0
        %6438 = vmatprep.subr.mxu0 0.0
        %6439 = vmatpush2.msra.mxu0 0.0
        %6440 = vmatprep.subr.mxu0 0.0
        %6441 = vmatpush2.msra.mxu0 0.0
        %6442 = vmatprep.mubr.f32.mxu0 0.0
        %6443 = vmatmul.mubr.f32.gmra.mxu0 %v6376
        %v6444 = vpop.f32.mrf.mxu0
        %v6445 = vadd.f32 0.0, %v6444
        %v6446 = vpop.f32.mrf.mxu0
        %6447 = vdwg.mxu0
        %6448 = vrot.lane.b32.xlu0 %v6287, 96
        %v6449 = vpop.permute.xlu0 %6448
        %6450 = vrot.lane.b32.xlu0 %v6215, 96
        %v6451 = vpop.permute.xlu0 %6450
        %v6452 = vsel %vm1095, %v6449, 0
        %v6454 = vsel %vm1095, %v6451, 0
        %6456 = vmatprep.subr.mxu0 0.0
        %6457 = vmatpush1.xpose.msra.mxu0 0.0
        %6458 = vmatprep.subr.mxu0 0.0
        %6459 = vmatpush1.xpose.msra.mxu0 0.0
        %6460 = vmatprep.subr.mxu0 0.0
        %6461 = vmatpush1.xpose.msra.mxu0 0.0
        %6462 = vmatprep.subr.mxu0 0.0
        %6463 = vmatpush1.xpose.msra.mxu0 0.0
        %6464 = vmatprep.subr.mxu0 0.0
        %6465 = vmatpush1.xpose.msra.mxu0 0.0
        %6466 = vmatprep.subr.mxu0 0.0
        %6467 = vmatpush1.xpose.msra.mxu0 0.0
        %6468 = vmatprep.subr.mxu0 0.0
        %6469 = vmatpush1.xpose.msra.mxu0 0.0
        %6470 = vmatprep.subr.mxu0 0.0
        %6471 = vmatpush1.xpose.msra.mxu0 0.0
        %6472 = vmatprep.subr.mxu0 0.0
        %6473 = vmatpush1.xpose.msra.mxu0 0.0
        %6474 = vmatprep.subr.mxu0 0.0
        %6475 = vmatpush1.xpose.msra.mxu0 0.0
        %6476 = vmatprep.subr.mxu0 0.0
        %6477 = vmatpush1.xpose.msra.mxu0 0.0
        %6478 = vmatprep.subr.mxu0 0.0
        %6479 = vmatpush1.xpose.msra.mxu0 0.0
        %6480 = vmatprep.subr.mxu0 0.0
        %6481 = vmatpush1.xpose.msra.mxu0 0.0
        %6482 = vmatprep.subr.mxu0 0.0
        %6483 = vmatpush1.xpose.msra.mxu0 0.0
        %6484 = vmatprep.subr.mxu0 0.0
        %6485 = vmatpush1.xpose.msra.mxu0 0.0
        %6486 = vmatprep.subr.mxu0 0.0
        %6487 = vmatpush1.xpose.msra.mxu0 %v6454
        %6488 = vmatprep.subr.mxu0 0.0
        %6489 = vmatpush2.xpose.msra.mxu0 0.0
        %6490 = vmatprep.subr.mxu0 0.0
        %6491 = vmatpush2.xpose.msra.mxu0 0.0
        %6492 = vmatprep.subr.mxu0 0.0
        %6493 = vmatpush2.xpose.msra.mxu0 0.0
        %6494 = vmatprep.subr.mxu0 0.0
        %6495 = vmatpush2.xpose.msra.mxu0 0.0
        %6496 = vmatprep.subr.mxu0 0.0
        %6497 = vmatpush2.xpose.msra.mxu0 0.0
        %6498 = vmatprep.subr.mxu0 0.0
        %6499 = vmatpush2.xpose.msra.mxu0 0.0
        %6500 = vmatprep.subr.mxu0 0.0
        %6501 = vmatpush2.xpose.msra.mxu0 0.0
        %6502 = vmatprep.subr.mxu0 0.0
        %6503 = vmatpush2.xpose.msra.mxu0 0.0
        %6504 = vmatprep.subr.mxu0 0.0
        %6505 = vmatpush2.xpose.msra.mxu0 0.0
        %6506 = vmatprep.subr.mxu0 0.0
        %6507 = vmatpush2.xpose.msra.mxu0 0.0
        %6508 = vmatprep.subr.mxu0 0.0
        %6509 = vmatpush2.xpose.msra.mxu0 0.0
        %6510 = vmatprep.subr.mxu0 0.0
        %6511 = vmatpush2.xpose.msra.mxu0 0.0
        %6512 = vmatprep.subr.mxu0 0.0
        %6513 = vmatpush2.xpose.msra.mxu0 0.0
        %6514 = vmatprep.subr.mxu0 0.0
        %6515 = vmatpush2.xpose.msra.mxu0 0.0
        %6516 = vmatprep.subr.mxu0 0.0
        %6517 = vmatpush2.xpose.msra.mxu0 0.0
        %6518 = vmatprep.subr.mxu0 0.0
        %6519 = vmatpush2.xpose.msra.mxu0 0.0
        %6520 = vmatprep.mubr.f32.mxu0 0.0
        %6521 = vmatmul.mubr.f32.gmra.mxu0 %v6452
        %v6522 = vpop.f32.mrf.mxu0
        %v6523 = vadd.f32 %v3767, %v6522
        %v6524 = vpop.f32.mrf.mxu0
        %6525 = vdwg.mxu0
        %v6526 = vsel %vm4081, %v6523, -inf
        %6527 = vmax.xlane.f32.xlu0 %v6526
        %v6528 = vpop.xlane.xlu0 %6527
        %v6529 = vsub.f32 %v6523, %v6528
        %v6530 = vmul.f32 %v6529, 1.442695
        %v6531 = vpow.pop %v6530
        %v6532 = vsel %vm4081, %v6531, 0.0
        %6533 = vadd.xlane.f32.xlu0 %v6532
        %v6534 = vpop.xlane.xlu0 %6533
        %v6535 = vrcp.pop %v6534
        %v6536 = vmul.f32 %v6531, %v6535
        %6538 = vrot.lane.b32.xlu0 %v6284, 96
        %v6539 = vpop.permute.xlu0 %6538
        %v6542 = vsel %vm4081, %v6536, 0
        %6544 = vmatprep.subr.mxu0 0.0
        %6545 = vmatpush1.msra.mxu0 0.0
        %6546 = vmatprep.subr.mxu0 0.0
        %6547 = vmatpush1.msra.mxu0 0.0
        %6548 = vmatprep.subr.mxu0 0.0
        %6549 = vmatpush1.msra.mxu0 0.0
        %6550 = vmatprep.subr.mxu0 0.0
        %6551 = vmatpush1.msra.mxu0 0.0
        %6552 = vmatprep.subr.mxu0 0.0
        %6553 = vmatpush1.msra.mxu0 0.0
        %6554 = vmatprep.subr.mxu0 0.0
        %6555 = vmatpush1.msra.mxu0 0.0
        %6556 = vmatprep.subr.mxu0 0.0
        %6557 = vmatpush1.msra.mxu0 0.0
        %6558 = vmatprep.subr.mxu0 0.0
        %6559 = vmatpush1.msra.mxu0 0.0
        %6560 = vmatprep.subr.mxu0 0.0
        %6561 = vmatpush1.msra.mxu0 0.0
        %6562 = vmatprep.subr.mxu0 0.0
        %6563 = vmatpush1.msra.mxu0 0.0
        %6564 = vmatprep.subr.mxu0 0.0
        %6565 = vmatpush1.msra.mxu0 0.0
        %6566 = vmatprep.subr.mxu0 0.0
        %6567 = vmatpush1.msra.mxu0 0.0
        %6568 = vmatprep.subr.mxu0 0.0
        %6569 = vmatpush1.msra.mxu0 0.0
        %6570 = vmatprep.subr.mxu0 0.0
        %6571 = vmatpush1.msra.mxu0 0.0
        %6572 = vmatprep.subr.mxu0 0.0
        %6573 = vmatpush1.msra.mxu0 0.0
        %6574 = vmatprep.subr.mxu0 0.0
        %6575 = vmatpush1.msra.mxu0 %v6539
        %6576 = vmatprep.subr.mxu0 0.0
        %6577 = vmatpush2.msra.mxu0 0.0
        %6578 = vmatprep.subr.mxu0 0.0
        %6579 = vmatpush2.msra.mxu0 0.0
        %6580 = vmatprep.subr.mxu0 0.0
        %6581 = vmatpush2.msra.mxu0 0.0
        %6582 = vmatprep.subr.mxu0 0.0
        %6583 = vmatpush2.msra.mxu0 0.0
        %6584 = vmatprep.subr.mxu0 0.0
        %6585 = vmatpush2.msra.mxu0 0.0
        %6586 = vmatprep.subr.mxu0 0.0
        %6587 = vmatpush2.msra.mxu0 0.0
        %6588 = vmatprep.subr.mxu0 0.0
        %6589 = vmatpush2.msra.mxu0 0.0
        %6590 = vmatprep.subr.mxu0 0.0
        %6591 = vmatpush2.msra.mxu0 0.0
        %6592 = vmatprep.subr.mxu0 0.0
        %6593 = vmatpush2.msra.mxu0 0.0
        %6594 = vmatprep.subr.mxu0 0.0
        %6595 = vmatpush2.msra.mxu0 0.0
        %6596 = vmatprep.subr.mxu0 0.0
        %6597 = vmatpush2.msra.mxu0 0.0
        %6598 = vmatprep.subr.mxu0 0.0
        %6599 = vmatpush2.msra.mxu0 0.0
        %6600 = vmatprep.subr.mxu0 0.0
        %6601 = vmatpush2.msra.mxu0 0.0
        %6602 = vmatprep.subr.mxu0 0.0
        %6603 = vmatpush2.msra.mxu0 0.0
        %6604 = vmatprep.subr.mxu0 0.0
        %6605 = vmatpush2.msra.mxu0 0.0
        %6606 = vmatprep.subr.mxu0 0.0
        %6607 = vmatpush2.msra.mxu0 0.0
        %6608 = vmatprep.mubr.f32.mxu0 0.0
        %6609 = vmatmul.mubr.f32.gmra.mxu0 %v6542
        %v6610 = vpop.f32.mrf.mxu0
        %v6611 = vadd.f32 0.0, %v6610
        %v6612 = vpop.f32.mrf.mxu0
        %6613 = vdwg.mxu0
        %6614 = vrot.lane.b32.xlu0 %v6287, 64
        %v6615 = vpop.permute.xlu0 %6614
        %6616 = vrot.lane.b32.xlu0 %v6215, 64
        %v6617 = vpop.permute.xlu0 %6616
        %v6618 = vsel %vm1095, %v6615, 0
        %v6620 = vsel %vm1095, %v6617, 0
        %6622 = vmatprep.subr.mxu0 0.0
        %6623 = vmatpush1.xpose.msra.mxu0 0.0
        %6624 = vmatprep.subr.mxu0 0.0
        %6625 = vmatpush1.xpose.msra.mxu0 0.0
        %6626 = vmatprep.subr.mxu0 0.0
        %6627 = vmatpush1.xpose.msra.mxu0 0.0
        %6628 = vmatprep.subr.mxu0 0.0
        %6629 = vmatpush1.xpose.msra.mxu0 0.0
        %6630 = vmatprep.subr.mxu0 0.0
        %6631 = vmatpush1.xpose.msra.mxu0 0.0
        %6632 = vmatprep.subr.mxu0 0.0
        %6633 = vmatpush1.xpose.msra.mxu0 0.0
        %6634 = vmatprep.subr.mxu0 0.0
        %6635 = vmatpush1.xpose.msra.mxu0 0.0
        %6636 = vmatprep.subr.mxu0 0.0
        %6637 = vmatpush1.xpose.msra.mxu0 0.0
        %6638 = vmatprep.subr.mxu0 0.0
        %6639 = vmatpush1.xpose.msra.mxu0 0.0
        %6640 = vmatprep.subr.mxu0 0.0
        %6641 = vmatpush1.xpose.msra.mxu0 0.0
        %6642 = vmatprep.subr.mxu0 0.0
        %6643 = vmatpush1.xpose.msra.mxu0 0.0
        %6644 = vmatprep.subr.mxu0 0.0
        %6645 = vmatpush1.xpose.msra.mxu0 0.0
        %6646 = vmatprep.subr.mxu0 0.0
        %6647 = vmatpush1.xpose.msra.mxu0 0.0
        %6648 = vmatprep.subr.mxu0 0.0
        %6649 = vmatpush1.xpose.msra.mxu0 0.0
        %6650 = vmatprep.subr.mxu0 0.0
        %6651 = vmatpush1.xpose.msra.mxu0 0.0
        %6652 = vmatprep.subr.mxu0 0.0
        %6653 = vmatpush1.xpose.msra.mxu0 %v6620
        %6654 = vmatprep.subr.mxu0 0.0
        %6655 = vmatpush2.xpose.msra.mxu0 0.0
        %6656 = vmatprep.subr.mxu0 0.0
        %6657 = vmatpush2.xpose.msra.mxu0 0.0
        %6658 = vmatprep.subr.mxu0 0.0
        %6659 = vmatpush2.xpose.msra.mxu0 0.0
        %6660 = vmatprep.subr.mxu0 0.0
        %6661 = vmatpush2.xpose.msra.mxu0 0.0
        %6662 = vmatprep.subr.mxu0 0.0
        %6663 = vmatpush2.xpose.msra.mxu0 0.0
        %6664 = vmatprep.subr.mxu0 0.0
        %6665 = vmatpush2.xpose.msra.mxu0 0.0
        %6666 = vmatprep.subr.mxu0 0.0
        %6667 = vmatpush2.xpose.msra.mxu0 0.0
        %6668 = vmatprep.subr.mxu0 0.0
        %6669 = vmatpush2.xpose.msra.mxu0 0.0
        %6670 = vmatprep.subr.mxu0 0.0
        %6671 = vmatpush2.xpose.msra.mxu0 0.0
        %6672 = vmatprep.subr.mxu0 0.0
        %6673 = vmatpush2.xpose.msra.mxu0 0.0
        %6674 = vmatprep.subr.mxu0 0.0
        %6675 = vmatpush2.xpose.msra.mxu0 0.0
        %6676 = vmatprep.subr.mxu0 0.0
        %6677 = vmatpush2.xpose.msra.mxu0 0.0
        %6678 = vmatprep.subr.mxu0 0.0
        %6679 = vmatpush2.xpose.msra.mxu0 0.0
        %6680 = vmatprep.subr.mxu0 0.0
        %6681 = vmatpush2.xpose.msra.mxu0 0.0
        %6682 = vmatprep.subr.mxu0 0.0
        %6683 = vmatpush2.xpose.msra.mxu0 0.0
        %6684 = vmatprep.subr.mxu0 0.0
        %6685 = vmatpush2.xpose.msra.mxu0 0.0
        %6686 = vmatprep.mubr.f32.mxu0 0.0
        %6687 = vmatmul.mubr.f32.gmra.mxu0 %v6618
        %v6688 = vpop.f32.mrf.mxu0
        %v6689 = vadd.f32 %v3767, %v6688
        %v6690 = vpop.f32.mrf.mxu0
        %6691 = vdwg.mxu0
        %v6692 = vsel %vm4081, %v6689, -inf
        %6693 = vmax.xlane.f32.xlu0 %v6692
        %v6694 = vpop.xlane.xlu0 %6693
        %v6695 = vsub.f32 %v6689, %v6694
        %v6696 = vmul.f32 %v6695, 1.442695
        %v6697 = vpow.pop %v6696
        %v6698 = vsel %vm4081, %v6697, 0.0
        %6699 = vadd.xlane.f32.xlu0 %v6698
        %v6700 = vpop.xlane.xlu0 %6699
        %v6701 = vrcp.pop %v6700
        %v6702 = vmul.f32 %v6697, %v6701
        %6703 = vrot.lane.b32.xlu0 %v6284, 64
        %v6704 = vpop.permute.xlu0 %6703
        %v6707 = vsel %vm4081, %v6702, 0
        %6709 = vmatprep.subr.mxu0 0.0
        %6710 = vmatpush1.msra.mxu0 0.0
        %6711 = vmatprep.subr.mxu0 0.0
        %6712 = vmatpush1.msra.mxu0 0.0
        %6713 = vmatprep.subr.mxu0 0.0
        %6714 = vmatpush1.msra.mxu0 0.0
        %6715 = vmatprep.subr.mxu0 0.0
        %6716 = vmatpush1.msra.mxu0 0.0
        %6717 = vmatprep.subr.mxu0 0.0
        %6718 = vmatpush1.msra.mxu0 0.0
        %6719 = vmatprep.subr.mxu0 0.0
        %6720 = vmatpush1.msra.mxu0 0.0
        %6721 = vmatprep.subr.mxu0 0.0
        %6722 = vmatpush1.msra.mxu0 0.0
        %6723 = vmatprep.subr.mxu0 0.0
        %6724 = vmatpush1.msra.mxu0 0.0
        %6725 = vmatprep.subr.mxu0 0.0
        %6726 = vmatpush1.msra.mxu0 0.0
        %6727 = vmatprep.subr.mxu0 0.0
        %6728 = vmatpush1.msra.mxu0 0.0
        %6729 = vmatprep.subr.mxu0 0.0
        %6730 = vmatpush1.msra.mxu0 0.0
        %6731 = vmatprep.subr.mxu0 0.0
        %6732 = vmatpush1.msra.mxu0 0.0
        %6733 = vmatprep.subr.mxu0 0.0
        %6734 = vmatpush1.msra.mxu0 0.0
        %6735 = vmatprep.subr.mxu0 0.0
        %6736 = vmatpush1.msra.mxu0 0.0
        %6737 = vmatprep.subr.mxu0 0.0
        %6738 = vmatpush1.msra.mxu0 0.0
        %6739 = vmatprep.subr.mxu0 0.0
        %6740 = vmatpush1.msra.mxu0 %v6704
        %6741 = vmatprep.subr.mxu0 0.0
        %6742 = vmatpush2.msra.mxu0 0.0
        %6743 = vmatprep.subr.mxu0 0.0
        %6744 = vmatpush2.msra.mxu0 0.0
        %6745 = vmatprep.subr.mxu0 0.0
        %6746 = vmatpush2.msra.mxu0 0.0
        %6747 = vmatprep.subr.mxu0 0.0
        %6748 = vmatpush2.msra.mxu0 0.0
        %6749 = vmatprep.subr.mxu0 0.0
        %6750 = vmatpush2.msra.mxu0 0.0
        %6751 = vmatprep.subr.mxu0 0.0
        %6752 = vmatpush2.msra.mxu0 0.0
        %6753 = vmatprep.subr.mxu0 0.0
        %6754 = vmatpush2.msra.mxu0 0.0
        %6755 = vmatprep.subr.mxu0 0.0
        %6756 = vmatpush2.msra.mxu0 0.0
        %6757 = vmatprep.subr.mxu0 0.0
        %6758 = vmatpush2.msra.mxu0 0.0
        %6759 = vmatprep.subr.mxu0 0.0
        %6760 = vmatpush2.msra.mxu0 0.0
        %6761 = vmatprep.subr.mxu0 0.0
        %6762 = vmatpush2.msra.mxu0 0.0
        %6763 = vmatprep.subr.mxu0 0.0
        %6764 = vmatpush2.msra.mxu0 0.0
        %6765 = vmatprep.subr.mxu0 0.0
        %6766 = vmatpush2.msra.mxu0 0.0
        %6767 = vmatprep.subr.mxu0 0.0
        %6768 = vmatpush2.msra.mxu0 0.0
        %6769 = vmatprep.subr.mxu0 0.0
        %6770 = vmatpush2.msra.mxu0 0.0
        %6771 = vmatprep.subr.mxu0 0.0
        %6772 = vmatpush2.msra.mxu0 0.0
        %6773 = vmatprep.mubr.f32.mxu0 0.0
        %6774 = vmatmul.mubr.f32.gmra.mxu0 %v6707
        %v6775 = vpop.f32.mrf.mxu0
        %v6776 = vadd.f32 0.0, %v6775
        %v6777 = vpop.f32.mrf.mxu0
        %6778 = vdwg.mxu0
        %6779 = vrot.lane.b32.xlu0 %v6287, 32
        %v6780 = vpop.permute.xlu0 %6779
        %6781 = vrot.lane.b32.xlu0 %v6215, 32
        %v6782 = vpop.permute.xlu0 %6781
        %v6783 = vsel %vm1095, %v6780, 0
        %v6785 = vsel %vm1095, %v6782, 0
        %6787 = vmatprep.subr.mxu0 0.0
        %6788 = vmatpush1.xpose.msra.mxu0 0.0
        %6789 = vmatprep.subr.mxu0 0.0
        %6790 = vmatpush1.xpose.msra.mxu0 0.0
        %6791 = vmatprep.subr.mxu0 0.0
        %6792 = vmatpush1.xpose.msra.mxu0 0.0
        %6793 = vmatprep.subr.mxu0 0.0
        %6794 = vmatpush1.xpose.msra.mxu0 0.0
        %6795 = vmatprep.subr.mxu0 0.0
        %6796 = vmatpush1.xpose.msra.mxu0 0.0
        %6797 = vmatprep.subr.mxu0 0.0
        %6798 = vmatpush1.xpose.msra.mxu0 0.0
        %6799 = vmatprep.subr.mxu0 0.0
        %6800 = vmatpush1.xpose.msra.mxu0 0.0
        %6801 = vmatprep.subr.mxu0 0.0
        %6802 = vmatpush1.xpose.msra.mxu0 0.0
        %6803 = vmatprep.subr.mxu0 0.0
        %6804 = vmatpush1.xpose.msra.mxu0 0.0
        %6805 = vmatprep.subr.mxu0 0.0
        %6806 = vmatpush1.xpose.msra.mxu0 0.0
        %6807 = vmatprep.subr.mxu0 0.0
        %6808 = vmatpush1.xpose.msra.mxu0 0.0
        %6809 = vmatprep.subr.mxu0 0.0
        %6810 = vmatpush1.xpose.msra.mxu0 0.0
        %6811 = vmatprep.subr.mxu0 0.0
        %6812 = vmatpush1.xpose.msra.mxu0 0.0
        %6813 = vmatprep.subr.mxu0 0.0
        %6814 = vmatpush1.xpose.msra.mxu0 0.0
        %6815 = vmatprep.subr.mxu0 0.0
        %6816 = vmatpush1.xpose.msra.mxu0 0.0
        %6817 = vmatprep.subr.mxu0 0.0
        %6818 = vmatpush1.xpose.msra.mxu0 %v6785
        %6819 = vmatprep.subr.mxu0 0.0
        %6820 = vmatpush2.xpose.msra.mxu0 0.0
        %6821 = vmatprep.subr.mxu0 0.0
        %6822 = vmatpush2.xpose.msra.mxu0 0.0
        %6823 = vmatprep.subr.mxu0 0.0
        %6824 = vmatpush2.xpose.msra.mxu0 0.0
        %6825 = vmatprep.subr.mxu0 0.0
        %6826 = vmatpush2.xpose.msra.mxu0 0.0
        %6827 = vmatprep.subr.mxu0 0.0
        %6828 = vmatpush2.xpose.msra.mxu0 0.0
        %6829 = vmatprep.subr.mxu0 0.0
        %6830 = vmatpush2.xpose.msra.mxu0 0.0
        %6831 = vmatprep.subr.mxu0 0.0
        %6832 = vmatpush2.xpose.msra.mxu0 0.0
        %6833 = vmatprep.subr.mxu0 0.0
        %6834 = vmatpush2.xpose.msra.mxu0 0.0
        %6835 = vmatprep.subr.mxu0 0.0
        %6836 = vmatpush2.xpose.msra.mxu0 0.0
        %6837 = vmatprep.subr.mxu0 0.0
        %6838 = vmatpush2.xpose.msra.mxu0 0.0
        %6839 = vmatprep.subr.mxu0 0.0
        %6840 = vmatpush2.xpose.msra.mxu0 0.0
        %6841 = vmatprep.subr.mxu0 0.0
        %6842 = vmatpush2.xpose.msra.mxu0 0.0
        %6843 = vmatprep.subr.mxu0 0.0
        %6844 = vmatpush2.xpose.msra.mxu0 0.0
        %6845 = vmatprep.subr.mxu0 0.0
        %6846 = vmatpush2.xpose.msra.mxu0 0.0
        %6847 = vmatprep.subr.mxu0 0.0
        %6848 = vmatpush2.xpose.msra.mxu0 0.0
        %6849 = vmatprep.subr.mxu0 0.0
        %6850 = vmatpush2.xpose.msra.mxu0 0.0
        %6851 = vmatprep.mubr.f32.mxu0 0.0
        %6852 = vmatmul.mubr.f32.gmra.mxu0 %v6783
        %v6853 = vpop.f32.mrf.mxu0
        %v6854 = vadd.f32 %v3767, %v6853
        %v6855 = vpop.f32.mrf.mxu0
        %6856 = vdwg.mxu0
        %v6857 = vsel %vm4081, %v6854, -inf
        %6858 = vmax.xlane.f32.xlu0 %v6857
        %v6859 = vpop.xlane.xlu0 %6858
        %v6860 = vsub.f32 %v6854, %v6859
        %v6861 = vmul.f32 %v6860, 1.442695
        %v6862 = vpow.pop %v6861
        %v6863 = vsel %vm4081, %v6862, 0.0
        %6864 = vadd.xlane.f32.xlu0 %v6863
        %v6865 = vpop.xlane.xlu0 %6864
        %v6866 = vrcp.pop %v6865
        %v6867 = vmul.f32 %v6862, %v6866
        %6868 = vrot.lane.b32.xlu0 %v6284, 32
        %v6869 = vpop.permute.xlu0 %6868
        %v6872 = vsel %vm4081, %v6867, 0
        %6874 = vmatprep.subr.mxu0 0.0
        %6875 = vmatpush1.msra.mxu0 0.0
        %6876 = vmatprep.subr.mxu0 0.0
        %6877 = vmatpush1.msra.mxu0 0.0
        %6878 = vmatprep.subr.mxu0 0.0
        %6879 = vmatpush1.msra.mxu0 0.0
        %6880 = vmatprep.subr.mxu0 0.0
        %6881 = vmatpush1.msra.mxu0 0.0
        %6882 = vmatprep.subr.mxu0 0.0
        %6883 = vmatpush1.msra.mxu0 0.0
        %6884 = vmatprep.subr.mxu0 0.0
        %6885 = vmatpush1.msra.mxu0 0.0
        %6886 = vmatprep.subr.mxu0 0.0
        %6887 = vmatpush1.msra.mxu0 0.0
        %6888 = vmatprep.subr.mxu0 0.0
        %6889 = vmatpush1.msra.mxu0 0.0
        %6890 = vmatprep.subr.mxu0 0.0
        %6891 = vmatpush1.msra.mxu0 0.0
        %6892 = vmatprep.subr.mxu0 0.0
        %6893 = vmatpush1.msra.mxu0 0.0
        %6894 = vmatprep.subr.mxu0 0.0
        %6895 = vmatpush1.msra.mxu0 0.0
        %6896 = vmatprep.subr.mxu0 0.0
        %6897 = vmatpush1.msra.mxu0 0.0
        %6898 = vmatprep.subr.mxu0 0.0
        %6899 = vmatpush1.msra.mxu0 0.0
        %6900 = vmatprep.subr.mxu0 0.0
        %6901 = vmatpush1.msra.mxu0 0.0
        %6902 = vmatprep.subr.mxu0 0.0
        %6903 = vmatpush1.msra.mxu0 0.0
        %6904 = vmatprep.subr.mxu0 0.0
        %6905 = vmatpush1.msra.mxu0 %v6869
        %6906 = vmatprep.subr.mxu0 0.0
        %6907 = vmatpush2.msra.mxu0 0.0
        %6908 = vmatprep.subr.mxu0 0.0
        %6909 = vmatpush2.msra.mxu0 0.0
        %6910 = vmatprep.subr.mxu0 0.0
        %6911 = vmatpush2.msra.mxu0 0.0
        %6912 = vmatprep.subr.mxu0 0.0
        %6913 = vmatpush2.msra.mxu0 0.0
        %6914 = vmatprep.subr.mxu0 0.0
        %6915 = vmatpush2.msra.mxu0 0.0
        %6916 = vmatprep.subr.mxu0 0.0
        %6917 = vmatpush2.msra.mxu0 0.0
        %6918 = vmatprep.subr.mxu0 0.0
        %6919 = vmatpush2.msra.mxu0 0.0
        %6920 = vmatprep.subr.mxu0 0.0
        %6921 = vmatpush2.msra.mxu0 0.0
        %6922 = vmatprep.subr.mxu0 0.0
        %6923 = vmatpush2.msra.mxu0 0.0
        %6924 = vmatprep.subr.mxu0 0.0
        %6925 = vmatpush2.msra.mxu0 0.0
        %6926 = vmatprep.subr.mxu0 0.0
        %6927 = vmatpush2.msra.mxu0 0.0
        %6928 = vmatprep.subr.mxu0 0.0
        %6929 = vmatpush2.msra.mxu0 0.0
        %6930 = vmatprep.subr.mxu0 0.0
        %6931 = vmatpush2.msra.mxu0 0.0
        %6932 = vmatprep.subr.mxu0 0.0
        %6933 = vmatpush2.msra.mxu0 0.0
        %6934 = vmatprep.subr.mxu0 0.0
        %6935 = vmatpush2.msra.mxu0 0.0
        %6936 = vmatprep.subr.mxu0 0.0
        %6937 = vmatpush2.msra.mxu0 0.0
        %6938 = vmatprep.mubr.f32.mxu0 0.0
        %6939 = vmatmul.mubr.f32.gmra.mxu0 %v6872
        %v6940 = vpop.f32.mrf.mxu0
        %v6941 = vadd.f32 0.0, %v6940
        %v6942 = vpop.f32.mrf.mxu0
        %6943 = vdwg.mxu0
        %6945 = vrot.lane.b32.xlu0 %v6611, 32
        %v6946 = vpop.permute.xlu0 %6945
        %6949 = vrot.lane.b32.xlu0 %v6776, 64
        %v6950 = vpop.permute.xlu0 %6949
        %6953 = vrot.lane.b32.xlu0 %v6941, 96
        %v6954 = vpop.permute.xlu0 %6953
        %v6956 = vsel %vm1095, %v6445, %v6946
        %v6957 = vsel %vm1915, %v6956, %v6950
        %v6958 = vsel %vm1918, %v6957, %v6954
        %s6959 = scalar_lea.vmem [#allocation11], 128
        %v6960 = vld [vmem:[%s6959] sm:$0xff]
        %v6961 = vld [vmem:[%s6959 + $0x8] sm:$0xff]
        %v6962 = vld [vmem:[%s6959 + $0x10] sm:$0xff]
        %v6963 = vld [vmem:[%s6959 + $0x18] sm:$0xff]
        %v6964 = vld [vmem:[%s6959 + $0x20] sm:$0xff]
        %v6965 = vld [vmem:[%s6959 + $0x28] sm:$0xff]
        %v6966 = vld [vmem:[%s6959 + $0x30] sm:$0xff]
        %v6967 = vld [vmem:[%s6959 + $0x38] sm:$0xff]
        %v6968 = vld [vmem:[%s6959 + $0x40] sm:$0xff]
        %v6969 = vld [vmem:[%s6959 + $0x48] sm:$0xff]
        %v6970 = vld [vmem:[%s6959 + $0x50] sm:$0xff]
        %v6971 = vld [vmem:[%s6959 + $0x58] sm:$0xff]
        %v6972 = vld [vmem:[%s6959 + $0x60] sm:$0xff]
        %v6973 = vld [vmem:[%s6959 + $0x68] sm:$0xff]
        %v6974 = vld [vmem:[%s6959 + $0x70] sm:$0xff]
        %v6975 = vld [vmem:[%s6959 + $0x78] sm:$0xff]
        %6976 = vmatprep.subr.mxu0 0.0
        %6977 = vmatpush1.msra.mxu0 %v6975
        %6978 = vmatprep.subr.mxu0 0.0
        %6979 = vmatpush1.msra.mxu0 %v6974
        %6980 = vmatprep.subr.mxu0 0.0
        %6981 = vmatpush1.msra.mxu0 %v6973
        %6982 = vmatprep.subr.mxu0 0.0
        %6983 = vmatpush1.msra.mxu0 %v6972
        %6984 = vmatprep.subr.mxu0 0.0
        %6985 = vmatpush1.msra.mxu0 %v6971
        %6986 = vmatprep.subr.mxu0 0.0
        %6987 = vmatpush1.msra.mxu0 %v6970
        %6988 = vmatprep.subr.mxu0 0.0
        %6989 = vmatpush1.msra.mxu0 %v6969
        %6990 = vmatprep.subr.mxu0 0.0
        %6991 = vmatpush1.msra.mxu0 %v6968
        %6992 = vmatprep.subr.mxu0 0.0
        %6993 = vmatpush1.msra.mxu0 %v6967
        %6994 = vmatprep.subr.mxu0 0.0
        %6995 = vmatpush1.msra.mxu0 %v6966
        %6996 = vmatprep.subr.mxu0 0.0
        %6997 = vmatpush1.msra.mxu0 %v6965
        %6998 = vmatprep.subr.mxu0 0.0
        %6999 = vmatpush1.msra.mxu0 %v6964
        %7000 = vmatprep.subr.mxu0 0.0
        %7001 = vmatpush1.msra.mxu0 %v6963
        %7002 = vmatprep.subr.mxu0 0.0
        %7003 = vmatpush1.msra.mxu0 %v6962
        %7004 = vmatprep.subr.mxu0 0.0
        %7005 = vmatpush1.msra.mxu0 %v6961
        %7006 = vmatprep.subr.mxu0 0.0
        %7007 = vmatpush1.msra.mxu0 %v6960
        %7008 = vmatprep.subr.mxu0 0.0
        %7009 = vmatpush2.msra.mxu0 0.0
        %7010 = vmatprep.subr.mxu0 0.0
        %7011 = vmatpush2.msra.mxu0 0.0
        %7012 = vmatprep.subr.mxu0 0.0
        %7013 = vmatpush2.msra.mxu0 0.0
        %7014 = vmatprep.subr.mxu0 0.0
        %7015 = vmatpush2.msra.mxu0 0.0
        %7016 = vmatprep.subr.mxu0 0.0
        %7017 = vmatpush2.msra.mxu0 0.0
        %7018 = vmatprep.subr.mxu0 0.0
        %7019 = vmatpush2.msra.mxu0 0.0
        %7020 = vmatprep.subr.mxu0 0.0
        %7021 = vmatpush2.msra.mxu0 0.0
        %7022 = vmatprep.subr.mxu0 0.0
        %7023 = vmatpush2.msra.mxu0 0.0
        %7024 = vmatprep.subr.mxu0 0.0
        %7025 = vmatpush2.msra.mxu0 0.0
        %7026 = vmatprep.subr.mxu0 0.0
        %7027 = vmatpush2.msra.mxu0 0.0
        %7028 = vmatprep.subr.mxu0 0.0
        %7029 = vmatpush2.msra.mxu0 0.0
        %7030 = vmatprep.subr.mxu0 0.0
        %7031 = vmatpush2.msra.mxu0 0.0
        %7032 = vmatprep.subr.mxu0 0.0
        %7033 = vmatpush2.msra.mxu0 0.0
        %7034 = vmatprep.subr.mxu0 0.0
        %7035 = vmatpush2.msra.mxu0 0.0
        %7036 = vmatprep.subr.mxu0 0.0
        %7037 = vmatpush2.msra.mxu0 0.0
        %7038 = vmatprep.subr.mxu0 0.0
        %7039 = vmatpush2.msra.mxu0 0.0
        %7040 = vmatprep.mubr.f32.mxu0 0.0
        %7041 = vmatmul.mubr.f32.gmra.mxu0 %v6958
        %v7042 = vpop.f32.mrf.mxu0
        %v7043 = vadd.f32 0.0, %v7042
        %v7044 = vpop.f32.mrf.mxu0
        %7045 = vdwg.mxu0
        %v7046 = vadd.f32 %v6049, %v7043
        %v7047 = vrot.slane %v6051, 5
        %v7048 = vlaneseq
        %v7049 = vshrl.u32 %v7048, 7
        %v7050 = vsub.s32 0, %v7049
        %v7051 = vrot.slane %v7047, %v7050
        %v7053 = vadd.f32 %v7046, %v7051
        %7054 = vadd.xlane.f32.xlu0 %v7053
        %v7055 = vpop.xlane.xlu0 %7054
        %v7056 = vmul.f32 %v7055, %v842
        %v7057 = vsub.f32 %v7053, %v7056
        %v7058 = vmul.f32 %v7057, %v7057
        %7059 = vadd.xlane.f32.xlu0 %v7058
        %v7060 = vpop.xlane.xlu0 %7059
        %v7061 = vmul.f32 %v7060, %v842
        %v7062 = vadd.f32 %v7061, 1e-05
        %v7063 = vrsqrt.pop %v7062
        %v7064 = vmul.f32 %v7057, %v7063
        %v7065 = vrot.slane %v6051, 6
        %v7066 = vlaneseq
        %v7067 = vshrl.u32 %v7066, 7
        %v7068 = vsub.s32 0, %v7067
        %v7069 = vrot.slane %v7065, %v7068
        %v7071 = vmul.f32 %v7064, %v7069
        %v7072 = vrot.slane %v6051, 7
        %v7073 = vlaneseq
        %v7074 = vshrl.u32 %v7073, 7
        %v7075 = vsub.s32 0, %v7074
        %v7076 = vrot.slane %v7072, %v7075
        %v7078 = vadd.f32 %v7071, %v7076
        %s7079 = scalar_lea.vmem [#allocation13], 128
        %v7080 = vld [vmem:[%s7079] sm:$0xff]
        %v7081 = vld [vmem:[%s7079 + $0x8] sm:$0xff]
        %v7082 = vld [vmem:[%s7079 + $0x10] sm:$0xff]
        %v7083 = vld [vmem:[%s7079 + $0x18] sm:$0xff]
        %v7084 = vld [vmem:[%s7079 + $0x20] sm:$0xff]
        %v7085 = vld [vmem:[%s7079 + $0x28] sm:$0xff]
        %v7086 = vld [vmem:[%s7079 + $0x30] sm:$0xff]
        %v7087 = vld [vmem:[%s7079 + $0x38] sm:$0xff]
        %v7088 = vld [vmem:[%s7079 + $0x40] sm:$0xff]
        %v7089 = vld [vmem:[%s7079 + $0x48] sm:$0xff]
        %v7090 = vld [vmem:[%s7079 + $0x50] sm:$0xff]
        %v7091 = vld [vmem:[%s7079 + $0x58] sm:$0xff]
        %v7092 = vld [vmem:[%s7079 + $0x60] sm:$0xff]
        %v7093 = vld [vmem:[%s7079 + $0x68] sm:$0xff]
        %v7094 = vld [vmem:[%s7079 + $0x70] sm:$0xff]
        %v7095 = vld [vmem:[%s7079 + $0x78] sm:$0xff]
        %v7097 = vlaneseq
        %v7098 = vshrl.u32 %v7097, 7
        %v7099 = vsub.s32 0, %v7098
        %v7100 = vrot.slane %v6053, %v7099
        %7102 = vmatprep.subr.mxu0 0.0
        %7103 = vmatpush1.msra.mxu0 %v7095
        %7104 = vmatprep.subr.mxu0 0.0
        %7105 = vmatpush1.msra.mxu0 %v7094
        %7106 = vmatprep.subr.mxu0 0.0
        %7107 = vmatpush1.msra.mxu0 %v7093
        %7108 = vmatprep.subr.mxu0 0.0
        %7109 = vmatpush1.msra.mxu0 %v7092
        %7110 = vmatprep.subr.mxu0 0.0
        %7111 = vmatpush1.msra.mxu0 %v7091
        %7112 = vmatprep.subr.mxu0 0.0
        %7113 = vmatpush1.msra.mxu0 %v7090
        %7114 = vmatprep.subr.mxu0 0.0
        %7115 = vmatpush1.msra.mxu0 %v7089
        %7116 = vmatprep.subr.mxu0 0.0
        %7117 = vmatpush1.msra.mxu0 %v7088
        %7118 = vmatprep.subr.mxu0 0.0
        %7119 = vmatpush1.msra.mxu0 %v7087
        %7120 = vmatprep.subr.mxu0 0.0
        %7121 = vmatpush1.msra.mxu0 %v7086
        %7122 = vmatprep.subr.mxu0 0.0
        %7123 = vmatpush1.msra.mxu0 %v7085
        %7124 = vmatprep.subr.mxu0 0.0
        %7125 = vmatpush1.msra.mxu0 %v7084
        %7126 = vmatprep.subr.mxu0 0.0
        %7127 = vmatpush1.msra.mxu0 %v7083
        %7128 = vmatprep.subr.mxu0 0.0
        %7129 = vmatpush1.msra.mxu0 %v7082
        %7130 = vmatprep.subr.mxu0 0.0
        %7131 = vmatpush1.msra.mxu0 %v7081
        %7132 = vmatprep.subr.mxu0 0.0
        %7133 = vmatpush1.msra.mxu0 %v7080
        %7134 = vmatprep.subr.mxu0 0.0
        %7135 = vmatpush2.msra.mxu0 0.0
        %7136 = vmatprep.subr.mxu0 0.0
        %7137 = vmatpush2.msra.mxu0 0.0
        %7138 = vmatprep.subr.mxu0 0.0
        %7139 = vmatpush2.msra.mxu0 0.0
        %7140 = vmatprep.subr.mxu0 0.0
        %7141 = vmatpush2.msra.mxu0 0.0
        %7142 = vmatprep.subr.mxu0 0.0
        %7143 = vmatpush2.msra.mxu0 0.0
        %7144 = vmatprep.subr.mxu0 0.0
        %7145 = vmatpush2.msra.mxu0 0.0
        %7146 = vmatprep.subr.mxu0 0.0
        %7147 = vmatpush2.msra.mxu0 0.0
        %7148 = vmatprep.subr.mxu0 0.0
        %7149 = vmatpush2.msra.mxu0 0.0
        %7150 = vmatprep.subr.mxu0 0.0
        %7151 = vmatpush2.msra.mxu0 0.0
        %7152 = vmatprep.subr.mxu0 0.0
        %7153 = vmatpush2.msra.mxu0 0.0
        %7154 = vmatprep.subr.mxu0 0.0
        %7155 = vmatpush2.msra.mxu0 0.0
        %7156 = vmatprep.subr.mxu0 0.0
        %7157 = vmatpush2.msra.mxu0 0.0
        %7158 = vmatprep.subr.mxu0 0.0
        %7159 = vmatpush2.msra.mxu0 0.0
        %7160 = vmatprep.subr.mxu0 0.0
        %7161 = vmatpush2.msra.mxu0 0.0
        %7162 = vmatprep.subr.mxu0 0.0
        %7163 = vmatpush2.msra.mxu0 0.0
        %7164 = vmatprep.subr.mxu0 0.0
        %7165 = vmatpush2.msra.mxu0 0.0
        %7166 = vmatprep.mubr.f32.mxu0 0.0
        %7167 = vmatmul.mubr.f32.gmra.mxu0 %v7078
        %v7168 = vpop.f32.mrf.mxu0
        %v7169 = vadd.f32 %v7100, %v7168
        %v7170 = vpop.f32.mrf.mxu0
        %7171 = vdwg.mxu0
        %v7172 = vmul.f32 %v7169, 0.17677669
        %s7173 = scalar_lea.vmem [#allocation14], 256
        %v7174 = vld [vmem:[%s7173] sm:$0xff]
        %v7175 = vld [vmem:[%s7173 + $0x8] sm:$0xff]
        %v7176 = vld [vmem:[%s7173 + $0x10] sm:$0xff]
        %v7177 = vld [vmem:[%s7173 + $0x18] sm:$0xff]
        %v7178 = vld [vmem:[%s7173 + $0x20] sm:$0xff]
        %v7179 = vld [vmem:[%s7173 + $0x28] sm:$0xff]
        %v7180 = vld [vmem:[%s7173 + $0x30] sm:$0xff]
        %v7181 = vld [vmem:[%s7173 + $0x38] sm:$0xff]
        %v7182 = vld [vmem:[%s7173 + $0x40] sm:$0xff]
        %v7183 = vld [vmem:[%s7173 + $0x48] sm:$0xff]
        %v7184 = vld [vmem:[%s7173 + $0x50] sm:$0xff]
        %v7185 = vld [vmem:[%s7173 + $0x58] sm:$0xff]
        %v7186 = vld [vmem:[%s7173 + $0x60] sm:$0xff]
        %v7187 = vld [vmem:[%s7173 + $0x68] sm:$0xff]
        %v7188 = vld [vmem:[%s7173 + $0x70] sm:$0xff]
        %v7189 = vld [vmem:[%s7173 + $0x78] sm:$0xff]
        %v7190 = vld [vmem:[%s7173 + $0x80] sm:$0xff]
        %v7191 = vld [vmem:[%s7173 + $0x88] sm:$0xff]
        %v7192 = vld [vmem:[%s7173 + $0x90] sm:$0xff]
        %v7193 = vld [vmem:[%s7173 + $0x98] sm:$0xff]
        %v7194 = vld [vmem:[%s7173 + $0xa0] sm:$0xff]
        %v7195 = vld [vmem:[%s7173 + $0xa8] sm:$0xff]
        %v7196 = vld [vmem:[%s7173 + $0xb0] sm:$0xff]
        %v7197 = vld [vmem:[%s7173 + $0xb8] sm:$0xff]
        %v7198 = vld [vmem:[%s7173 + $0xc0] sm:$0xff]
        %v7199 = vld [vmem:[%s7173 + $0xc8] sm:$0xff]
        %v7200 = vld [vmem:[%s7173 + $0xd0] sm:$0xff]
        %v7201 = vld [vmem:[%s7173 + $0xd8] sm:$0xff]
        %v7202 = vld [vmem:[%s7173 + $0xe0] sm:$0xff]
        %v7203 = vld [vmem:[%s7173 + $0xe8] sm:$0xff]
        %v7204 = vld [vmem:[%s7173 + $0xf0] sm:$0xff]
        %v7205 = vld [vmem:[%s7173 + $0xf8] sm:$0xff]
        %v7206 = vrot.slane %v6053, 1
        %v7207 = vlaneseq
        %v7208 = vshrl.u32 %v7207, 7
        %v7209 = vsub.s32 0, %v7208
        %v7210 = vrot.slane %v7206, %v7209
        %v7211 = vlaneseq
        %v7212 = vshrl.u32 %v7211, 7
        %v7213 = vsub.s32 1, %v7212
        %v7214 = vrot.slane %v7206, %v7213
        %7217 = vmatprep.subr.mxu0 %v7205
        %7218 = vmatpush1.msra.mxu0 %v7204
        %7219 = vmatprep.subr.mxu0 %v7203
        %7220 = vmatpush1.msra.mxu0 %v7202
        %7221 = vmatprep.subr.mxu0 %v7201
        %7222 = vmatpush1.msra.mxu0 %v7200
        %7223 = vmatprep.subr.mxu0 %v7199
        %7224 = vmatpush1.msra.mxu0 %v7198
        %7225 = vmatprep.subr.mxu0 %v7197
        %7226 = vmatpush1.msra.mxu0 %v7196
        %7227 = vmatprep.subr.mxu0 %v7195
        %7228 = vmatpush1.msra.mxu0 %v7194
        %7229 = vmatprep.subr.mxu0 %v7193
        %7230 = vmatpush1.msra.mxu0 %v7192
        %7231 = vmatprep.subr.mxu0 %v7191
        %7232 = vmatpush1.msra.mxu0 %v7190
        %7233 = vmatprep.subr.mxu0 %v7189
        %7234 = vmatpush1.msra.mxu0 %v7188
        %7235 = vmatprep.subr.mxu0 %v7187
        %7236 = vmatpush1.msra.mxu0 %v7186
        %7237 = vmatprep.subr.mxu0 %v7185
        %7238 = vmatpush1.msra.mxu0 %v7184
        %7239 = vmatprep.subr.mxu0 %v7183
        %7240 = vmatpush1.msra.mxu0 %v7182
        %7241 = vmatprep.subr.mxu0 %v7181
        %7242 = vmatpush1.msra.mxu0 %v7180
        %7243 = vmatprep.subr.mxu0 %v7179
        %7244 = vmatpush1.msra.mxu0 %v7178
        %7245 = vmatprep.subr.mxu0 %v7177
        %7246 = vmatpush1.msra.mxu0 %v7176
        %7247 = vmatprep.subr.mxu0 %v7175
        %7248 = vmatpush1.msra.mxu0 %v7174
        %7249 = vmatprep.subr.mxu0 0.0
        %7250 = vmatpush2.msra.mxu0 0.0
        %7251 = vmatprep.subr.mxu0 0.0
        %7252 = vmatpush2.msra.mxu0 0.0
        %7253 = vmatprep.subr.mxu0 0.0
        %7254 = vmatpush2.msra.mxu0 0.0
        %7255 = vmatprep.subr.mxu0 0.0
        %7256 = vmatpush2.msra.mxu0 0.0
        %7257 = vmatprep.subr.mxu0 0.0
        %7258 = vmatpush2.msra.mxu0 0.0
        %7259 = vmatprep.subr.mxu0 0.0
        %7260 = vmatpush2.msra.mxu0 0.0
        %7261 = vmatprep.subr.mxu0 0.0
        %7262 = vmatpush2.msra.mxu0 0.0
        %7263 = vmatprep.subr.mxu0 0.0
        %7264 = vmatpush2.msra.mxu0 0.0
        %7265 = vmatprep.subr.mxu0 0.0
        %7266 = vmatpush2.msra.mxu0 0.0
        %7267 = vmatprep.subr.mxu0 0.0
        %7268 = vmatpush2.msra.mxu0 0.0
        %7269 = vmatprep.subr.mxu0 0.0
        %7270 = vmatpush2.msra.mxu0 0.0
        %7271 = vmatprep.subr.mxu0 0.0
        %7272 = vmatpush2.msra.mxu0 0.0
        %7273 = vmatprep.subr.mxu0 0.0
        %7274 = vmatpush2.msra.mxu0 0.0
        %7275 = vmatprep.subr.mxu0 0.0
        %7276 = vmatpush2.msra.mxu0 0.0
        %7277 = vmatprep.subr.mxu0 0.0
        %7278 = vmatpush2.msra.mxu0 0.0
        %7279 = vmatprep.subr.mxu0 0.0
        %7280 = vmatpush2.msra.mxu0 0.0
        %7281 = vmatprep.mubr.f32.mxu0 0.0
        %7282 = vmatmul.mubr.f32.gmra.mxu0 %v3765
        %v7283 = vpop.f32.mrf.mxu0
        %v7284 = vadd.f32 %v7210, %v7283
        %v7285 = vpop.f32.mrf.mxu0
        %v7286 = vadd.f32 %v7214, %v7285
        %7287 = vmatprep.mubr.f32.mxu0 0.0
        %7288 = vmatmul.mubr.f32.gmra.mxu0 %v3766
        %v7289 = vpop.f32.mrf.mxu0
        %v7290 = vadd.f32 %v7210, %v7289
        %v7291 = vpop.f32.mrf.mxu0
        %v7292 = vadd.f32 %v7214, %v7291
        %7293 = vdwg.mxu0
        %v7295 = vsel %vm1095, %v7172, 0
        %v7298 = vsel %vm1095, %v7284, 0
        %v7301 = vsel %vm1095, %v7290, 0
        %7303 = vmatprep.subr.mxu0 0.0
        %7304 = vmatpush1.xpose.msra.mxu0 0.0
        %7305 = vmatprep.subr.mxu0 0.0
        %7306 = vmatpush1.xpose.msra.mxu0 0.0
        %7307 = vmatprep.subr.mxu0 0.0
        %7308 = vmatpush1.xpose.msra.mxu0 0.0
        %7309 = vmatprep.subr.mxu0 0.0
        %7310 = vmatpush1.xpose.msra.mxu0 0.0
        %7311 = vmatprep.subr.mxu0 0.0
        %7312 = vmatpush1.xpose.msra.mxu0 0.0
        %7313 = vmatprep.subr.mxu0 0.0
        %7314 = vmatpush1.xpose.msra.mxu0 0.0
        %7315 = vmatprep.subr.mxu0 0.0
        %7316 = vmatpush1.xpose.msra.mxu0 0.0
        %7317 = vmatprep.subr.mxu0 0.0
        %7318 = vmatpush1.xpose.msra.mxu0 0.0
        %7319 = vmatprep.subr.mxu0 0.0
        %7320 = vmatpush1.xpose.msra.mxu0 0.0
        %7321 = vmatprep.subr.mxu0 0.0
        %7322 = vmatpush1.xpose.msra.mxu0 0.0
        %7323 = vmatprep.subr.mxu0 0.0
        %7324 = vmatpush1.xpose.msra.mxu0 0.0
        %7325 = vmatprep.subr.mxu0 0.0
        %7326 = vmatpush1.xpose.msra.mxu0 0.0
        %7327 = vmatprep.subr.mxu0 0.0
        %7328 = vmatpush1.xpose.msra.mxu0 0.0
        %7329 = vmatprep.subr.mxu0 0.0
        %7330 = vmatpush1.xpose.msra.mxu0 0.0
        %7331 = vmatprep.subr.mxu0 0.0
        %7332 = vmatpush1.xpose.msra.mxu0 %v7301
        %7333 = vmatprep.subr.mxu0 0.0
        %7334 = vmatpush1.xpose.msra.mxu0 %v7298
        %7335 = vmatprep.subr.mxu0 0.0
        %7336 = vmatpush2.xpose.msra.mxu0 0.0
        %7337 = vmatprep.subr.mxu0 0.0
        %7338 = vmatpush2.xpose.msra.mxu0 0.0
        %7339 = vmatprep.subr.mxu0 0.0
        %7340 = vmatpush2.xpose.msra.mxu0 0.0
        %7341 = vmatprep.subr.mxu0 0.0
        %7342 = vmatpush2.xpose.msra.mxu0 0.0
        %7343 = vmatprep.subr.mxu0 0.0
        %7344 = vmatpush2.xpose.msra.mxu0 0.0
        %7345 = vmatprep.subr.mxu0 0.0
        %7346 = vmatpush2.xpose.msra.mxu0 0.0
        %7347 = vmatprep.subr.mxu0 0.0
        %7348 = vmatpush2.xpose.msra.mxu0 0.0
        %7349 = vmatprep.subr.mxu0 0.0
        %7350 = vmatpush2.xpose.msra.mxu0 0.0
        %7351 = vmatprep.subr.mxu0 0.0
        %7352 = vmatpush2.xpose.msra.mxu0 0.0
        %7353 = vmatprep.subr.mxu0 0.0
        %7354 = vmatpush2.xpose.msra.mxu0 0.0
        %7355 = vmatprep.subr.mxu0 0.0
        %7356 = vmatpush2.xpose.msra.mxu0 0.0
        %7357 = vmatprep.subr.mxu0 0.0
        %7358 = vmatpush2.xpose.msra.mxu0 0.0
        %7359 = vmatprep.subr.mxu0 0.0
        %7360 = vmatpush2.xpose.msra.mxu0 0.0
        %7361 = vmatprep.subr.mxu0 0.0
        %7362 = vmatpush2.xpose.msra.mxu0 0.0
        %7363 = vmatprep.subr.mxu0 0.0
        %7364 = vmatpush2.xpose.msra.mxu0 0.0
        %7365 = vmatprep.subr.mxu0 0.0
        %7366 = vmatpush2.xpose.msra.mxu0 0.0
        %7367 = vmatprep.mubr.f32.mxu0 0.0
        %7368 = vmatmul.mubr.f32.gmra.mxu0 %v7295
        %v7369 = vpop.f32.mrf.mxu0
        %v7370 = vadd.f32 0.0, %v7369
        %v7371 = vpop.f32.mrf.mxu0
        %7372 = vdwg.mxu0
        %v7373 = vsel %vm1183, %v7370, -inf
        %7374 = vmax.xlane.f32.xlu0 %v7373
        %v7375 = vpop.xlane.xlu0 %7374
        %v7376 = vsub.f32 %v7370, %v7375
        %v7377 = vmul.f32 %v7376, 1.442695
        %v7378 = vpow.pop %v7377
        %v7379 = vsel %vm1183, %v7378, 0.0
        %7380 = vadd.xlane.f32.xlu0 %v7379
        %v7381 = vpop.xlane.xlu0 %7380
        %v7382 = vrcp.pop %v7381
        %v7383 = vmul.f32 %v7378, %v7382
        %v7385 = vsel %vm1183, %v7383, 0
        %7387 = vmatprep.subr.mxu0 0.0
        %7388 = vmatpush1.msra.mxu0 0.0
        %7389 = vmatprep.subr.mxu0 0.0
        %7390 = vmatpush1.msra.mxu0 0.0
        %7391 = vmatprep.subr.mxu0 0.0
        %7392 = vmatpush1.msra.mxu0 0.0
        %7393 = vmatprep.subr.mxu0 0.0
        %7394 = vmatpush1.msra.mxu0 0.0
        %7395 = vmatprep.subr.mxu0 0.0
        %7396 = vmatpush1.msra.mxu0 0.0
        %7397 = vmatprep.subr.mxu0 0.0
        %7398 = vmatpush1.msra.mxu0 0.0
        %7399 = vmatprep.subr.mxu0 0.0
        %7400 = vmatpush1.msra.mxu0 0.0
        %7401 = vmatprep.subr.mxu0 0.0
        %7402 = vmatpush1.msra.mxu0 0.0
        %7403 = vmatprep.subr.mxu0 0.0
        %7404 = vmatpush1.msra.mxu0 0.0
        %7405 = vmatprep.subr.mxu0 0.0
        %7406 = vmatpush1.msra.mxu0 0.0
        %7407 = vmatprep.subr.mxu0 0.0
        %7408 = vmatpush1.msra.mxu0 0.0
        %7409 = vmatprep.subr.mxu0 0.0
        %7410 = vmatpush1.msra.mxu0 0.0
        %7411 = vmatprep.subr.mxu0 0.0
        %7412 = vmatpush1.msra.mxu0 0.0
        %7413 = vmatprep.subr.mxu0 0.0
        %7414 = vmatpush1.msra.mxu0 0.0
        %7415 = vmatprep.subr.mxu0 0.0
        %7416 = vmatpush1.msra.mxu0 %v7292
        %7417 = vmatprep.subr.mxu0 0.0
        %7418 = vmatpush1.msra.mxu0 %v7286
        %7419 = vmatprep.subr.mxu0 0.0
        %7420 = vmatpush2.msra.mxu0 0.0
        %7421 = vmatprep.subr.mxu0 0.0
        %7422 = vmatpush2.msra.mxu0 0.0
        %7423 = vmatprep.subr.mxu0 0.0
        %7424 = vmatpush2.msra.mxu0 0.0
        %7425 = vmatprep.subr.mxu0 0.0
        %7426 = vmatpush2.msra.mxu0 0.0
        %7427 = vmatprep.subr.mxu0 0.0
        %7428 = vmatpush2.msra.mxu0 0.0
        %7429 = vmatprep.subr.mxu0 0.0
        %7430 = vmatpush2.msra.mxu0 0.0
        %7431 = vmatprep.subr.mxu0 0.0
        %7432 = vmatpush2.msra.mxu0 0.0
        %7433 = vmatprep.subr.mxu0 0.0
        %7434 = vmatpush2.msra.mxu0 0.0
        %7435 = vmatprep.subr.mxu0 0.0
        %7436 = vmatpush2.msra.mxu0 0.0
        %7437 = vmatprep.subr.mxu0 0.0
        %7438 = vmatpush2.msra.mxu0 0.0
        %7439 = vmatprep.subr.mxu0 0.0
        %7440 = vmatpush2.msra.mxu0 0.0
        %7441 = vmatprep.subr.mxu0 0.0
        %7442 = vmatpush2.msra.mxu0 0.0
        %7443 = vmatprep.subr.mxu0 0.0
        %7444 = vmatpush2.msra.mxu0 0.0
        %7445 = vmatprep.subr.mxu0 0.0
        %7446 = vmatpush2.msra.mxu0 0.0
        %7447 = vmatprep.subr.mxu0 0.0
        %7448 = vmatpush2.msra.mxu0 0.0
        %7449 = vmatprep.subr.mxu0 0.0
        %7450 = vmatpush2.msra.mxu0 0.0
        %7451 = vmatprep.mubr.f32.mxu0 0.0
        %7452 = vmatmul.mubr.f32.gmra.mxu0 %v7385
        %v7453 = vpop.f32.mrf.mxu0
        %v7454 = vadd.f32 0.0, %v7453
        %v7455 = vpop.f32.mrf.mxu0
        %7456 = vdwg.mxu0
        %7457 = vrot.lane.b32.xlu0 %v7172, 96
        %v7458 = vpop.permute.xlu0 %7457
        %7459 = vrot.lane.b32.xlu0 %v7284, 96
        %v7460 = vpop.permute.xlu0 %7459
        %7461 = vrot.lane.b32.xlu0 %v7290, 96
        %v7462 = vpop.permute.xlu0 %7461
        %v7463 = vsel %vm1095, %v7458, 0
        %v7465 = vsel %vm1095, %v7460, 0
        %v7467 = vsel %vm1095, %v7462, 0
        %7469 = vmatprep.subr.mxu0 0.0
        %7470 = vmatpush1.xpose.msra.mxu0 0.0
        %7471 = vmatprep.subr.mxu0 0.0
        %7472 = vmatpush1.xpose.msra.mxu0 0.0
        %7473 = vmatprep.subr.mxu0 0.0
        %7474 = vmatpush1.xpose.msra.mxu0 0.0
        %7475 = vmatprep.subr.mxu0 0.0
        %7476 = vmatpush1.xpose.msra.mxu0 0.0
        %7477 = vmatprep.subr.mxu0 0.0
        %7478 = vmatpush1.xpose.msra.mxu0 0.0
        %7479 = vmatprep.subr.mxu0 0.0
        %7480 = vmatpush1.xpose.msra.mxu0 0.0
        %7481 = vmatprep.subr.mxu0 0.0
        %7482 = vmatpush1.xpose.msra.mxu0 0.0
        %7483 = vmatprep.subr.mxu0 0.0
        %7484 = vmatpush1.xpose.msra.mxu0 0.0
        %7485 = vmatprep.subr.mxu0 0.0
        %7486 = vmatpush1.xpose.msra.mxu0 0.0
        %7487 = vmatprep.subr.mxu0 0.0
        %7488 = vmatpush1.xpose.msra.mxu0 0.0
        %7489 = vmatprep.subr.mxu0 0.0
        %7490 = vmatpush1.xpose.msra.mxu0 0.0
        %7491 = vmatprep.subr.mxu0 0.0
        %7492 = vmatpush1.xpose.msra.mxu0 0.0
        %7493 = vmatprep.subr.mxu0 0.0
        %7494 = vmatpush1.xpose.msra.mxu0 0.0
        %7495 = vmatprep.subr.mxu0 0.0
        %7496 = vmatpush1.xpose.msra.mxu0 0.0
        %7497 = vmatprep.subr.mxu0 0.0
        %7498 = vmatpush1.xpose.msra.mxu0 %v7467
        %7499 = vmatprep.subr.mxu0 0.0
        %7500 = vmatpush1.xpose.msra.mxu0 %v7465
        %7501 = vmatprep.subr.mxu0 0.0
        %7502 = vmatpush2.xpose.msra.mxu0 0.0
        %7503 = vmatprep.subr.mxu0 0.0
        %7504 = vmatpush2.xpose.msra.mxu0 0.0
        %7505 = vmatprep.subr.mxu0 0.0
        %7506 = vmatpush2.xpose.msra.mxu0 0.0
        %7507 = vmatprep.subr.mxu0 0.0
        %7508 = vmatpush2.xpose.msra.mxu0 0.0
        %7509 = vmatprep.subr.mxu0 0.0
        %7510 = vmatpush2.xpose.msra.mxu0 0.0
        %7511 = vmatprep.subr.mxu0 0.0
        %7512 = vmatpush2.xpose.msra.mxu0 0.0
        %7513 = vmatprep.subr.mxu0 0.0
        %7514 = vmatpush2.xpose.msra.mxu0 0.0
        %7515 = vmatprep.subr.mxu0 0.0
        %7516 = vmatpush2.xpose.msra.mxu0 0.0
        %7517 = vmatprep.subr.mxu0 0.0
        %7518 = vmatpush2.xpose.msra.mxu0 0.0
        %7519 = vmatprep.subr.mxu0 0.0
        %7520 = vmatpush2.xpose.msra.mxu0 0.0
        %7521 = vmatprep.subr.mxu0 0.0
        %7522 = vmatpush2.xpose.msra.mxu0 0.0
        %7523 = vmatprep.subr.mxu0 0.0
        %7524 = vmatpush2.xpose.msra.mxu0 0.0
        %7525 = vmatprep.subr.mxu0 0.0
        %7526 = vmatpush2.xpose.msra.mxu0 0.0
        %7527 = vmatprep.subr.mxu0 0.0
        %7528 = vmatpush2.xpose.msra.mxu0 0.0
        %7529 = vmatprep.subr.mxu0 0.0
        %7530 = vmatpush2.xpose.msra.mxu0 0.0
        %7531 = vmatprep.subr.mxu0 0.0
        %7532 = vmatpush2.xpose.msra.mxu0 0.0
        %7533 = vmatprep.mubr.f32.mxu0 0.0
        %7534 = vmatmul.mubr.f32.gmra.mxu0 %v7463
        %v7535 = vpop.f32.mrf.mxu0
        %v7536 = vadd.f32 0.0, %v7535
        %v7537 = vpop.f32.mrf.mxu0
        %7538 = vdwg.mxu0
        %v7539 = vsel %vm1183, %v7536, -inf
        %7540 = vmax.xlane.f32.xlu0 %v7539
        %v7541 = vpop.xlane.xlu0 %7540
        %v7542 = vsub.f32 %v7536, %v7541
        %v7543 = vmul.f32 %v7542, 1.442695
        %v7544 = vpow.pop %v7543
        %v7545 = vsel %vm1183, %v7544, 0.0
        %7546 = vadd.xlane.f32.xlu0 %v7545
        %v7547 = vpop.xlane.xlu0 %7546
        %v7548 = vrcp.pop %v7547
        %v7549 = vmul.f32 %v7544, %v7548
        %7552 = vrot.lane.b32.xlu0 %v7286, 96
        %v7553 = vpop.permute.xlu0 %7552
        %7554 = vrot.lane.b32.xlu0 %v7292, 96
        %v7555 = vpop.permute.xlu0 %7554
        %v7559 = vsel %vm1183, %v7549, 0
        %7561 = vmatprep.subr.mxu0 0.0
        %7562 = vmatpush1.msra.mxu0 0.0
        %7563 = vmatprep.subr.mxu0 0.0
        %7564 = vmatpush1.msra.mxu0 0.0
        %7565 = vmatprep.subr.mxu0 0.0
        %7566 = vmatpush1.msra.mxu0 0.0
        %7567 = vmatprep.subr.mxu0 0.0
        %7568 = vmatpush1.msra.mxu0 0.0
        %7569 = vmatprep.subr.mxu0 0.0
        %7570 = vmatpush1.msra.mxu0 0.0
        %7571 = vmatprep.subr.mxu0 0.0
        %7572 = vmatpush1.msra.mxu0 0.0
        %7573 = vmatprep.subr.mxu0 0.0
        %7574 = vmatpush1.msra.mxu0 0.0
        %7575 = vmatprep.subr.mxu0 0.0
        %7576 = vmatpush1.msra.mxu0 0.0
        %7577 = vmatprep.subr.mxu0 0.0
        %7578 = vmatpush1.msra.mxu0 0.0
        %7579 = vmatprep.subr.mxu0 0.0
        %7580 = vmatpush1.msra.mxu0 0.0
        %7581 = vmatprep.subr.mxu0 0.0
        %7582 = vmatpush1.msra.mxu0 0.0
        %7583 = vmatprep.subr.mxu0 0.0
        %7584 = vmatpush1.msra.mxu0 0.0
        %7585 = vmatprep.subr.mxu0 0.0
        %7586 = vmatpush1.msra.mxu0 0.0
        %7587 = vmatprep.subr.mxu0 0.0
        %7588 = vmatpush1.msra.mxu0 0.0
        %7589 = vmatprep.subr.mxu0 0.0
        %7590 = vmatpush1.msra.mxu0 %v7555
        %7591 = vmatprep.subr.mxu0 0.0
        %7592 = vmatpush1.msra.mxu0 %v7553
        %7593 = vmatprep.subr.mxu0 0.0
        %7594 = vmatpush2.msra.mxu0 0.0
        %7595 = vmatprep.subr.mxu0 0.0
        %7596 = vmatpush2.msra.mxu0 0.0
        %7597 = vmatprep.subr.mxu0 0.0
        %7598 = vmatpush2.msra.mxu0 0.0
        %7599 = vmatprep.subr.mxu0 0.0
        %7600 = vmatpush2.msra.mxu0 0.0
        %7601 = vmatprep.subr.mxu0 0.0
        %7602 = vmatpush2.msra.mxu0 0.0
        %7603 = vmatprep.subr.mxu0 0.0
        %7604 = vmatpush2.msra.mxu0 0.0
        %7605 = vmatprep.subr.mxu0 0.0
        %7606 = vmatpush2.msra.mxu0 0.0
        %7607 = vmatprep.subr.mxu0 0.0
        %7608 = vmatpush2.msra.mxu0 0.0
        %7609 = vmatprep.subr.mxu0 0.0
        %7610 = vmatpush2.msra.mxu0 0.0
        %7611 = vmatprep.subr.mxu0 0.0
        %7612 = vmatpush2.msra.mxu0 0.0
        %7613 = vmatprep.subr.mxu0 0.0
        %7614 = vmatpush2.msra.mxu0 0.0
        %7615 = vmatprep.subr.mxu0 0.0
        %7616 = vmatpush2.msra.mxu0 0.0
        %7617 = vmatprep.subr.mxu0 0.0
        %7618 = vmatpush2.msra.mxu0 0.0
        %7619 = vmatprep.subr.mxu0 0.0
        %7620 = vmatpush2.msra.mxu0 0.0
        %7621 = vmatprep.subr.mxu0 0.0
        %7622 = vmatpush2.msra.mxu0 0.0
        %7623 = vmatprep.subr.mxu0 0.0
        %7624 = vmatpush2.msra.mxu0 0.0
        %7625 = vmatprep.mubr.f32.mxu0 0.0
        %7626 = vmatmul.mubr.f32.gmra.mxu0 %v7559
        %v7627 = vpop.f32.mrf.mxu0
        %v7628 = vadd.f32 0.0, %v7627
        %v7629 = vpop.f32.mrf.mxu0
        %7630 = vdwg.mxu0
        %7631 = vrot.lane.b32.xlu0 %v7172, 64
        %v7632 = vpop.permute.xlu0 %7631
        %7633 = vrot.lane.b32.xlu0 %v7284, 64
        %v7634 = vpop.permute.xlu0 %7633
        %7635 = vrot.lane.b32.xlu0 %v7290, 64
        %v7636 = vpop.permute.xlu0 %7635
        %v7637 = vsel %vm1095, %v7632, 0
        %v7639 = vsel %vm1095, %v7634, 0
        %v7641 = vsel %vm1095, %v7636, 0
        %7643 = vmatprep.subr.mxu0 0.0
        %7644 = vmatpush1.xpose.msra.mxu0 0.0
        %7645 = vmatprep.subr.mxu0 0.0
        %7646 = vmatpush1.xpose.msra.mxu0 0.0
        %7647 = vmatprep.subr.mxu0 0.0
        %7648 = vmatpush1.xpose.msra.mxu0 0.0
        %7649 = vmatprep.subr.mxu0 0.0
        %7650 = vmatpush1.xpose.msra.mxu0 0.0
        %7651 = vmatprep.subr.mxu0 0.0
        %7652 = vmatpush1.xpose.msra.mxu0 0.0
        %7653 = vmatprep.subr.mxu0 0.0
        %7654 = vmatpush1.xpose.msra.mxu0 0.0
        %7655 = vmatprep.subr.mxu0 0.0
        %7656 = vmatpush1.xpose.msra.mxu0 0.0
        %7657 = vmatprep.subr.mxu0 0.0
        %7658 = vmatpush1.xpose.msra.mxu0 0.0
        %7659 = vmatprep.subr.mxu0 0.0
        %7660 = vmatpush1.xpose.msra.mxu0 0.0
        %7661 = vmatprep.subr.mxu0 0.0
        %7662 = vmatpush1.xpose.msra.mxu0 0.0
        %7663 = vmatprep.subr.mxu0 0.0
        %7664 = vmatpush1.xpose.msra.mxu0 0.0
        %7665 = vmatprep.subr.mxu0 0.0
        %7666 = vmatpush1.xpose.msra.mxu0 0.0
        %7667 = vmatprep.subr.mxu0 0.0
        %7668 = vmatpush1.xpose.msra.mxu0 0.0
        %7669 = vmatprep.subr.mxu0 0.0
        %7670 = vmatpush1.xpose.msra.mxu0 0.0
        %7671 = vmatprep.subr.mxu0 0.0
        %7672 = vmatpush1.xpose.msra.mxu0 %v7641
        %7673 = vmatprep.subr.mxu0 0.0
        %7674 = vmatpush1.xpose.msra.mxu0 %v7639
        %7675 = vmatprep.subr.mxu0 0.0
        %7676 = vmatpush2.xpose.msra.mxu0 0.0
        %7677 = vmatprep.subr.mxu0 0.0
        %7678 = vmatpush2.xpose.msra.mxu0 0.0
        %7679 = vmatprep.subr.mxu0 0.0
        %7680 = vmatpush2.xpose.msra.mxu0 0.0
        %7681 = vmatprep.subr.mxu0 0.0
        %7682 = vmatpush2.xpose.msra.mxu0 0.0
        %7683 = vmatprep.subr.mxu0 0.0
        %7684 = vmatpush2.xpose.msra.mxu0 0.0
        %7685 = vmatprep.subr.mxu0 0.0
        %7686 = vmatpush2.xpose.msra.mxu0 0.0
        %7687 = vmatprep.subr.mxu0 0.0
        %7688 = vmatpush2.xpose.msra.mxu0 0.0
        %7689 = vmatprep.subr.mxu0 0.0
        %7690 = vmatpush2.xpose.msra.mxu0 0.0
        %7691 = vmatprep.subr.mxu0 0.0
        %7692 = vmatpush2.xpose.msra.mxu0 0.0
        %7693 = vmatprep.subr.mxu0 0.0
        %7694 = vmatpush2.xpose.msra.mxu0 0.0
        %7695 = vmatprep.subr.mxu0 0.0
        %7696 = vmatpush2.xpose.msra.mxu0 0.0
        %7697 = vmatprep.subr.mxu0 0.0
        %7698 = vmatpush2.xpose.msra.mxu0 0.0
        %7699 = vmatprep.subr.mxu0 0.0
        %7700 = vmatpush2.xpose.msra.mxu0 0.0
        %7701 = vmatprep.subr.mxu0 0.0
        %7702 = vmatpush2.xpose.msra.mxu0 0.0
        %7703 = vmatprep.subr.mxu0 0.0
        %7704 = vmatpush2.xpose.msra.mxu0 0.0
        %7705 = vmatprep.subr.mxu0 0.0
        %7706 = vmatpush2.xpose.msra.mxu0 0.0
        %7707 = vmatprep.mubr.f32.mxu0 0.0
        %7708 = vmatmul.mubr.f32.gmra.mxu0 %v7637
        %v7709 = vpop.f32.mrf.mxu0
        %v7710 = vadd.f32 0.0, %v7709
        %v7711 = vpop.f32.mrf.mxu0
        %7712 = vdwg.mxu0
        %v7713 = vsel %vm1183, %v7710, -inf
        %7714 = vmax.xlane.f32.xlu0 %v7713
        %v7715 = vpop.xlane.xlu0 %7714
        %v7716 = vsub.f32 %v7710, %v7715
        %v7717 = vmul.f32 %v7716, 1.442695
        %v7718 = vpow.pop %v7717
        %v7719 = vsel %vm1183, %v7718, 0.0
        %7720 = vadd.xlane.f32.xlu0 %v7719
        %v7721 = vpop.xlane.xlu0 %7720
        %v7722 = vrcp.pop %v7721
        %v7723 = vmul.f32 %v7718, %v7722
        %7724 = vrot.lane.b32.xlu0 %v7286, 64
        %v7725 = vpop.permute.xlu0 %7724
        %7726 = vrot.lane.b32.xlu0 %v7292, 64
        %v7727 = vpop.permute.xlu0 %7726
        %v7731 = vsel %vm1183, %v7723, 0
        %7733 = vmatprep.subr.mxu0 0.0
        %7734 = vmatpush1.msra.mxu0 0.0
        %7735 = vmatprep.subr.mxu0 0.0
        %7736 = vmatpush1.msra.mxu0 0.0
        %7737 = vmatprep.subr.mxu0 0.0
        %7738 = vmatpush1.msra.mxu0 0.0
        %7739 = vmatprep.subr.mxu0 0.0
        %7740 = vmatpush1.msra.mxu0 0.0
        %7741 = vmatprep.subr.mxu0 0.0
        %7742 = vmatpush1.msra.mxu0 0.0
        %7743 = vmatprep.subr.mxu0 0.0
        %7744 = vmatpush1.msra.mxu0 0.0
        %7745 = vmatprep.subr.mxu0 0.0
        %7746 = vmatpush1.msra.mxu0 0.0
        %7747 = vmatprep.subr.mxu0 0.0
        %7748 = vmatpush1.msra.mxu0 0.0
        %7749 = vmatprep.subr.mxu0 0.0
        %7750 = vmatpush1.msra.mxu0 0.0
        %7751 = vmatprep.subr.mxu0 0.0
        %7752 = vmatpush1.msra.mxu0 0.0
        %7753 = vmatprep.subr.mxu0 0.0
        %7754 = vmatpush1.msra.mxu0 0.0
        %7755 = vmatprep.subr.mxu0 0.0
        %7756 = vmatpush1.msra.mxu0 0.0
        %7757 = vmatprep.subr.mxu0 0.0
        %7758 = vmatpush1.msra.mxu0 0.0
        %7759 = vmatprep.subr.mxu0 0.0
        %7760 = vmatpush1.msra.mxu0 0.0
        %7761 = vmatprep.subr.mxu0 0.0
        %7762 = vmatpush1.msra.mxu0 %v7727
        %7763 = vmatprep.subr.mxu0 0.0
        %7764 = vmatpush1.msra.mxu0 %v7725
        %7765 = vmatprep.subr.mxu0 0.0
        %7766 = vmatpush2.msra.mxu0 0.0
        %7767 = vmatprep.subr.mxu0 0.0
        %7768 = vmatpush2.msra.mxu0 0.0
        %7769 = vmatprep.subr.mxu0 0.0
        %7770 = vmatpush2.msra.mxu0 0.0
        %7771 = vmatprep.subr.mxu0 0.0
        %7772 = vmatpush2.msra.mxu0 0.0
        %7773 = vmatprep.subr.mxu0 0.0
        %7774 = vmatpush2.msra.mxu0 0.0
        %7775 = vmatprep.subr.mxu0 0.0
        %7776 = vmatpush2.msra.mxu0 0.0
        %7777 = vmatprep.subr.mxu0 0.0
        %7778 = vmatpush2.msra.mxu0 0.0
        %7779 = vmatprep.subr.mxu0 0.0
        %7780 = vmatpush2.msra.mxu0 0.0
        %7781 = vmatprep.subr.mxu0 0.0
        %7782 = vmatpush2.msra.mxu0 0.0
        %7783 = vmatprep.subr.mxu0 0.0
        %7784 = vmatpush2.msra.mxu0 0.0
        %7785 = vmatprep.subr.mxu0 0.0
        %7786 = vmatpush2.msra.mxu0 0.0
        %7787 = vmatprep.subr.mxu0 0.0
        %7788 = vmatpush2.msra.mxu0 0.0
        %7789 = vmatprep.subr.mxu0 0.0
        %7790 = vmatpush2.msra.mxu0 0.0
        %7791 = vmatprep.subr.mxu0 0.0
        %7792 = vmatpush2.msra.mxu0 0.0
        %7793 = vmatprep.subr.mxu0 0.0
        %7794 = vmatpush2.msra.mxu0 0.0
        %7795 = vmatprep.subr.mxu0 0.0
        %7796 = vmatpush2.msra.mxu0 0.0
        %7797 = vmatprep.mubr.f32.mxu0 0.0
        %7798 = vmatmul.mubr.f32.gmra.mxu0 %v7731
        %v7799 = vpop.f32.mrf.mxu0
        %v7800 = vadd.f32 0.0, %v7799
        %v7801 = vpop.f32.mrf.mxu0
        %7802 = vdwg.mxu0
        %7803 = vrot.lane.b32.xlu0 %v7172, 32
        %v7804 = vpop.permute.xlu0 %7803
        %7805 = vrot.lane.b32.xlu0 %v7284, 32
        %v7806 = vpop.permute.xlu0 %7805
        %7807 = vrot.lane.b32.xlu0 %v7290, 32
        %v7808 = vpop.permute.xlu0 %7807
        %v7809 = vsel %vm1095, %v7804, 0
        %v7811 = vsel %vm1095, %v7806, 0
        %v7813 = vsel %vm1095, %v7808, 0
        %7815 = vmatprep.subr.mxu0 0.0
        %7816 = vmatpush1.xpose.msra.mxu0 0.0
        %7817 = vmatprep.subr.mxu0 0.0
        %7818 = vmatpush1.xpose.msra.mxu0 0.0
        %7819 = vmatprep.subr.mxu0 0.0
        %7820 = vmatpush1.xpose.msra.mxu0 0.0
        %7821 = vmatprep.subr.mxu0 0.0
        %7822 = vmatpush1.xpose.msra.mxu0 0.0
        %7823 = vmatprep.subr.mxu0 0.0
        %7824 = vmatpush1.xpose.msra.mxu0 0.0
        %7825 = vmatprep.subr.mxu0 0.0
        %7826 = vmatpush1.xpose.msra.mxu0 0.0
        %7827 = vmatprep.subr.mxu0 0.0
        %7828 = vmatpush1.xpose.msra.mxu0 0.0
        %7829 = vmatprep.subr.mxu0 0.0
        %7830 = vmatpush1.xpose.msra.mxu0 0.0
        %7831 = vmatprep.subr.mxu0 0.0
        %7832 = vmatpush1.xpose.msra.mxu0 0.0
        %7833 = vmatprep.subr.mxu0 0.0
        %7834 = vmatpush1.xpose.msra.mxu0 0.0
        %7835 = vmatprep.subr.mxu0 0.0
        %7836 = vmatpush1.xpose.msra.mxu0 0.0
        %7837 = vmatprep.subr.mxu0 0.0
        %7838 = vmatpush1.xpose.msra.mxu0 0.0
        %7839 = vmatprep.subr.mxu0 0.0
        %7840 = vmatpush1.xpose.msra.mxu0 0.0
        %7841 = vmatprep.subr.mxu0 0.0
        %7842 = vmatpush1.xpose.msra.mxu0 0.0
        %7843 = vmatprep.subr.mxu0 0.0
        %7844 = vmatpush1.xpose.msra.mxu0 %v7813
        %7845 = vmatprep.subr.mxu0 0.0
        %7846 = vmatpush1.xpose.msra.mxu0 %v7811
        %7847 = vmatprep.subr.mxu0 0.0
        %7848 = vmatpush2.xpose.msra.mxu0 0.0
        %7849 = vmatprep.subr.mxu0 0.0
        %7850 = vmatpush2.xpose.msra.mxu0 0.0
        %7851 = vmatprep.subr.mxu0 0.0
        %7852 = vmatpush2.xpose.msra.mxu0 0.0
        %7853 = vmatprep.subr.mxu0 0.0
        %7854 = vmatpush2.xpose.msra.mxu0 0.0
        %7855 = vmatprep.subr.mxu0 0.0
        %7856 = vmatpush2.xpose.msra.mxu0 0.0
        %7857 = vmatprep.subr.mxu0 0.0
        %7858 = vmatpush2.xpose.msra.mxu0 0.0
        %7859 = vmatprep.subr.mxu0 0.0
        %7860 = vmatpush2.xpose.msra.mxu0 0.0
        %7861 = vmatprep.subr.mxu0 0.0
        %7862 = vmatpush2.xpose.msra.mxu0 0.0
        %7863 = vmatprep.subr.mxu0 0.0
        %7864 = vmatpush2.xpose.msra.mxu0 0.0
        %7865 = vmatprep.subr.mxu0 0.0
        %7866 = vmatpush2.xpose.msra.mxu0 0.0
        %7867 = vmatprep.subr.mxu0 0.0
        %7868 = vmatpush2.xpose.msra.mxu0 0.0
        %7869 = vmatprep.subr.mxu0 0.0
        %7870 = vmatpush2.xpose.msra.mxu0 0.0
        %7871 = vmatprep.subr.mxu0 0.0
        %7872 = vmatpush2.xpose.msra.mxu0 0.0
        %7873 = vmatprep.subr.mxu0 0.0
        %7874 = vmatpush2.xpose.msra.mxu0 0.0
        %7875 = vmatprep.subr.mxu0 0.0
        %7876 = vmatpush2.xpose.msra.mxu0 0.0
        %7877 = vmatprep.subr.mxu0 0.0
        %7878 = vmatpush2.xpose.msra.mxu0 0.0
        %7879 = vmatprep.mubr.f32.mxu0 0.0
        %7880 = vmatmul.mubr.f32.gmra.mxu0 %v7809
        %v7881 = vpop.f32.mrf.mxu0
        %v7882 = vadd.f32 0.0, %v7881
        %v7883 = vpop.f32.mrf.mxu0
        %7884 = vdwg.mxu0
        %v7885 = vsel %vm1183, %v7882, -inf
        %7886 = vmax.xlane.f32.xlu0 %v7885
        %v7887 = vpop.xlane.xlu0 %7886
        %v7888 = vsub.f32 %v7882, %v7887
        %v7889 = vmul.f32 %v7888, 1.442695
        %v7890 = vpow.pop %v7889
        %v7891 = vsel %vm1183, %v7890, 0.0
        %7892 = vadd.xlane.f32.xlu0 %v7891
        %v7893 = vpop.xlane.xlu0 %7892
        %v7894 = vrcp.pop %v7893
        %v7895 = vmul.f32 %v7890, %v7894
        %7896 = vrot.lane.b32.xlu0 %v7286, 32
        %v7897 = vpop.permute.xlu0 %7896
        %7898 = vrot.lane.b32.xlu0 %v7292, 32
        %v7899 = vpop.permute.xlu0 %7898
        %v7903 = vsel %vm1183, %v7895, 0
        %7905 = vmatprep.subr.mxu0 0.0
        %7906 = vmatpush1.msra.mxu0 0.0
        %7907 = vmatprep.subr.mxu0 0.0
        %7908 = vmatpush1.msra.mxu0 0.0
        %7909 = vmatprep.subr.mxu0 0.0
        %7910 = vmatpush1.msra.mxu0 0.0
        %7911 = vmatprep.subr.mxu0 0.0
        %7912 = vmatpush1.msra.mxu0 0.0
        %7913 = vmatprep.subr.mxu0 0.0
        %7914 = vmatpush1.msra.mxu0 0.0
        %7915 = vmatprep.subr.mxu0 0.0
        %7916 = vmatpush1.msra.mxu0 0.0
        %7917 = vmatprep.subr.mxu0 0.0
        %7918 = vmatpush1.msra.mxu0 0.0
        %7919 = vmatprep.subr.mxu0 0.0
        %7920 = vmatpush1.msra.mxu0 0.0
        %7921 = vmatprep.subr.mxu0 0.0
        %7922 = vmatpush1.msra.mxu0 0.0
        %7923 = vmatprep.subr.mxu0 0.0
        %7924 = vmatpush1.msra.mxu0 0.0
        %7925 = vmatprep.subr.mxu0 0.0
        %7926 = vmatpush1.msra.mxu0 0.0
        %7927 = vmatprep.subr.mxu0 0.0
        %7928 = vmatpush1.msra.mxu0 0.0
        %7929 = vmatprep.subr.mxu0 0.0
        %7930 = vmatpush1.msra.mxu0 0.0
        %7931 = vmatprep.subr.mxu0 0.0
        %7932 = vmatpush1.msra.mxu0 0.0
        %7933 = vmatprep.subr.mxu0 0.0
        %7934 = vmatpush1.msra.mxu0 %v7899
        %7935 = vmatprep.subr.mxu0 0.0
        %7936 = vmatpush1.msra.mxu0 %v7897
        %7937 = vmatprep.subr.mxu0 0.0
        %7938 = vmatpush2.msra.mxu0 0.0
        %7939 = vmatprep.subr.mxu0 0.0
        %7940 = vmatpush2.msra.mxu0 0.0
        %7941 = vmatprep.subr.mxu0 0.0
        %7942 = vmatpush2.msra.mxu0 0.0
        %7943 = vmatprep.subr.mxu0 0.0
        %7944 = vmatpush2.msra.mxu0 0.0
        %7945 = vmatprep.subr.mxu0 0.0
        %7946 = vmatpush2.msra.mxu0 0.0
        %7947 = vmatprep.subr.mxu0 0.0
        %7948 = vmatpush2.msra.mxu0 0.0
        %7949 = vmatprep.subr.mxu0 0.0
        %7950 = vmatpush2.msra.mxu0 0.0
        %7951 = vmatprep.subr.mxu0 0.0
        %7952 = vmatpush2.msra.mxu0 0.0
        %7953 = vmatprep.subr.mxu0 0.0
        %7954 = vmatpush2.msra.mxu0 0.0
        %7955 = vmatprep.subr.mxu0 0.0
        %7956 = vmatpush2.msra.mxu0 0.0
        %7957 = vmatprep.subr.mxu0 0.0
        %7958 = vmatpush2.msra.mxu0 0.0
        %7959 = vmatprep.subr.mxu0 0.0
        %7960 = vmatpush2.msra.mxu0 0.0
        %7961 = vmatprep.subr.mxu0 0.0
        %7962 = vmatpush2.msra.mxu0 0.0
        %7963 = vmatprep.subr.mxu0 0.0
        %7964 = vmatpush2.msra.mxu0 0.0
        %7965 = vmatprep.subr.mxu0 0.0
        %7966 = vmatpush2.msra.mxu0 0.0
        %7967 = vmatprep.subr.mxu0 0.0
        %7968 = vmatpush2.msra.mxu0 0.0
        %7969 = vmatprep.mubr.f32.mxu0 0.0
        %7970 = vmatmul.mubr.f32.gmra.mxu0 %v7903
        %v7971 = vpop.f32.mrf.mxu0
        %v7972 = vadd.f32 0.0, %v7971
        %v7973 = vpop.f32.mrf.mxu0
        %7974 = vdwg.mxu0
        %7976 = vrot.lane.b32.xlu0 %v7628, 32
        %v7977 = vpop.permute.xlu0 %7976
        %7980 = vrot.lane.b32.xlu0 %v7800, 64
        %v7981 = vpop.permute.xlu0 %7980
        %7984 = vrot.lane.b32.xlu0 %v7972, 96
        %v7985 = vpop.permute.xlu0 %7984
        %v7987 = vsel %vm1095, %v7454, %v7977
        %v7988 = vsel %vm1915, %v7987, %v7981
        %v7989 = vsel %vm1918, %v7988, %v7985
        %s7990 = scalar_lea.vmem [#allocation16], 128
        %v7991 = vld [vmem:[%s7990] sm:$0xff]
        %v7992 = vld [vmem:[%s7990 + $0x8] sm:$0xff]
        %v7993 = vld [vmem:[%s7990 + $0x10] sm:$0xff]
        %v7994 = vld [vmem:[%s7990 + $0x18] sm:$0xff]
        %v7995 = vld [vmem:[%s7990 + $0x20] sm:$0xff]
        %v7996 = vld [vmem:[%s7990 + $0x28] sm:$0xff]
        %v7997 = vld [vmem:[%s7990 + $0x30] sm:$0xff]
        %v7998 = vld [vmem:[%s7990 + $0x38] sm:$0xff]
        %v7999 = vld [vmem:[%s7990 + $0x40] sm:$0xff]
        %v8000 = vld [vmem:[%s7990 + $0x48] sm:$0xff]
        %v8001 = vld [vmem:[%s7990 + $0x50] sm:$0xff]
        %v8002 = vld [vmem:[%s7990 + $0x58] sm:$0xff]
        %v8003 = vld [vmem:[%s7990 + $0x60] sm:$0xff]
        %v8004 = vld [vmem:[%s7990 + $0x68] sm:$0xff]
        %v8005 = vld [vmem:[%s7990 + $0x70] sm:$0xff]
        %v8006 = vld [vmem:[%s7990 + $0x78] sm:$0xff]
        %8007 = vmatprep.subr.mxu0 0.0
        %8008 = vmatpush1.msra.mxu0 %v8006
        %8009 = vmatprep.subr.mxu0 0.0
        %8010 = vmatpush1.msra.mxu0 %v8005
        %8011 = vmatprep.subr.mxu0 0.0
        %8012 = vmatpush1.msra.mxu0 %v8004
        %8013 = vmatprep.subr.mxu0 0.0
        %8014 = vmatpush1.msra.mxu0 %v8003
        %8015 = vmatprep.subr.mxu0 0.0
        %8016 = vmatpush1.msra.mxu0 %v8002
        %8017 = vmatprep.subr.mxu0 0.0
        %8018 = vmatpush1.msra.mxu0 %v8001
        %8019 = vmatprep.subr.mxu0 0.0
        %8020 = vmatpush1.msra.mxu0 %v8000
        %8021 = vmatprep.subr.mxu0 0.0
        %8022 = vmatpush1.msra.mxu0 %v7999
        %8023 = vmatprep.subr.mxu0 0.0
        %8024 = vmatpush1.msra.mxu0 %v7998
        %8025 = vmatprep.subr.mxu0 0.0
        %8026 = vmatpush1.msra.mxu0 %v7997
        %8027 = vmatprep.subr.mxu0 0.0
        %8028 = vmatpush1.msra.mxu0 %v7996
        %8029 = vmatprep.subr.mxu0 0.0
        %8030 = vmatpush1.msra.mxu0 %v7995
        %8031 = vmatprep.subr.mxu0 0.0
        %8032 = vmatpush1.msra.mxu0 %v7994
        %8033 = vmatprep.subr.mxu0 0.0
        %8034 = vmatpush1.msra.mxu0 %v7993
        %8035 = vmatprep.subr.mxu0 0.0
        %8036 = vmatpush1.msra.mxu0 %v7992
        %8037 = vmatprep.subr.mxu0 0.0
        %8038 = vmatpush1.msra.mxu0 %v7991
        %8039 = vmatprep.subr.mxu0 0.0
        %8040 = vmatpush2.msra.mxu0 0.0
        %8041 = vmatprep.subr.mxu0 0.0
        %8042 = vmatpush2.msra.mxu0 0.0
        %8043 = vmatprep.subr.mxu0 0.0
        %8044 = vmatpush2.msra.mxu0 0.0
        %8045 = vmatprep.subr.mxu0 0.0
        %8046 = vmatpush2.msra.mxu0 0.0
        %8047 = vmatprep.subr.mxu0 0.0
        %8048 = vmatpush2.msra.mxu0 0.0
        %8049 = vmatprep.subr.mxu0 0.0
        %8050 = vmatpush2.msra.mxu0 0.0
        %8051 = vmatprep.subr.mxu0 0.0
        %8052 = vmatpush2.msra.mxu0 0.0
        %8053 = vmatprep.subr.mxu0 0.0
        %8054 = vmatpush2.msra.mxu0 0.0
        %8055 = vmatprep.subr.mxu0 0.0
        %8056 = vmatpush2.msra.mxu0 0.0
        %8057 = vmatprep.subr.mxu0 0.0
        %8058 = vmatpush2.msra.mxu0 0.0
        %8059 = vmatprep.subr.mxu0 0.0
        %8060 = vmatpush2.msra.mxu0 0.0
        %8061 = vmatprep.subr.mxu0 0.0
        %8062 = vmatpush2.msra.mxu0 0.0
        %8063 = vmatprep.subr.mxu0 0.0
        %8064 = vmatpush2.msra.mxu0 0.0
        %8065 = vmatprep.subr.mxu0 0.0
        %8066 = vmatpush2.msra.mxu0 0.0
        %8067 = vmatprep.subr.mxu0 0.0
        %8068 = vmatpush2.msra.mxu0 0.0
        %8069 = vmatprep.subr.mxu0 0.0
        %8070 = vmatpush2.msra.mxu0 0.0
        %8071 = vmatprep.mubr.f32.mxu0 0.0
        %8072 = vmatmul.mubr.f32.gmra.mxu0 %v7989
        %v8073 = vpop.f32.mrf.mxu0
        %v8074 = vadd.f32 0.0, %v8073
        %v8075 = vpop.f32.mrf.mxu0
        %8076 = vdwg.mxu0
        %v8077 = vadd.f32 %v7053, %v8074
        %v8078 = vrot.slane %v6053, 3
        %v8079 = vlaneseq
        %v8080 = vshrl.u32 %v8079, 7
        %v8081 = vsub.s32 0, %v8080
        %v8082 = vrot.slane %v8078, %v8081
        %v8084 = vadd.f32 %v8077, %v8082
        %8085 = vadd.xlane.f32.xlu0 %v8084
        %v8086 = vpop.xlane.xlu0 %8085
        %v8087 = vmul.f32 %v8086, %v842
        %v8088 = vsub.f32 %v8084, %v8087
        %v8089 = vmul.f32 %v8088, %v8088
        %8090 = vadd.xlane.f32.xlu0 %v8089
        %v8091 = vpop.xlane.xlu0 %8090
        %v8092 = vmul.f32 %v8091, %v842
        %v8093 = vadd.f32 %v8092, 1e-05
        %v8094 = vrsqrt.pop %v8093
        %v8095 = vmul.f32 %v8088, %v8094
        %v8096 = vrot.slane %v6053, 4
        %v8097 = vlaneseq
        %v8098 = vshrl.u32 %v8097, 7
        %v8099 = vsub.s32 0, %v8098
        %v8100 = vrot.slane %v8096, %v8099
        %v8102 = vmul.f32 %v8095, %v8100
        %v8103 = vrot.slane %v6053, 5
        %v8104 = vlaneseq
        %v8105 = vshrl.u32 %v8104, 7
        %v8106 = vsub.s32 0, %v8105
        %v8107 = vrot.slane %v8103, %v8106
        %v8109 = vadd.f32 %v8102, %v8107
        %s8110 = scalar_lea.vmem [#allocation17], 256
        %v8111 = vld [vmem:[%s8110] sm:$0xff]
        %v8112 = vld [vmem:[%s8110 + $0x8] sm:$0xff]
        %v8113 = vld [vmem:[%s8110 + $0x10] sm:$0xff]
        %v8114 = vld [vmem:[%s8110 + $0x18] sm:$0xff]
        %v8115 = vld [vmem:[%s8110 + $0x20] sm:$0xff]
        %v8116 = vld [vmem:[%s8110 + $0x28] sm:$0xff]
        %v8117 = vld [vmem:[%s8110 + $0x30] sm:$0xff]
        %v8118 = vld [vmem:[%s8110 + $0x38] sm:$0xff]
        %v8119 = vld [vmem:[%s8110 + $0x40] sm:$0xff]
        %v8120 = vld [vmem:[%s8110 + $0x48] sm:$0xff]
        %v8121 = vld [vmem:[%s8110 + $0x50] sm:$0xff]
        %v8122 = vld [vmem:[%s8110 + $0x58] sm:$0xff]
        %v8123 = vld [vmem:[%s8110 + $0x60] sm:$0xff]
        %v8124 = vld [vmem:[%s8110 + $0x68] sm:$0xff]
        %v8125 = vld [vmem:[%s8110 + $0x70] sm:$0xff]
        %v8126 = vld [vmem:[%s8110 + $0x78] sm:$0xff]
        %v8127 = vld [vmem:[%s8110 + $0x80] sm:$0xff]
        %v8128 = vld [vmem:[%s8110 + $0x88] sm:$0xff]
        %v8129 = vld [vmem:[%s8110 + $0x90] sm:$0xff]
        %v8130 = vld [vmem:[%s8110 + $0x98] sm:$0xff]
        %v8131 = vld [vmem:[%s8110 + $0xa0] sm:$0xff]
        %v8132 = vld [vmem:[%s8110 + $0xa8] sm:$0xff]
        %v8133 = vld [vmem:[%s8110 + $0xb0] sm:$0xff]
        %v8134 = vld [vmem:[%s8110 + $0xb8] sm:$0xff]
        %v8135 = vld [vmem:[%s8110 + $0xc0] sm:$0xff]
        %v8136 = vld [vmem:[%s8110 + $0xc8] sm:$0xff]
        %v8137 = vld [vmem:[%s8110 + $0xd0] sm:$0xff]
        %v8138 = vld [vmem:[%s8110 + $0xd8] sm:$0xff]
        %v8139 = vld [vmem:[%s8110 + $0xe0] sm:$0xff]
        %v8140 = vld [vmem:[%s8110 + $0xe8] sm:$0xff]
        %v8141 = vld [vmem:[%s8110 + $0xf0] sm:$0xff]
        %v8142 = vld [vmem:[%s8110 + $0xf8] sm:$0xff]
        %v8143 = vrot.slane %v6053, 6
        %v8144 = vlaneseq
        %v8145 = vshrl.u32 %v8144, 7
        %v8146 = vsub.s32 0, %v8145
        %v8147 = vrot.slane %v8143, %v8146
        %v8148 = vlaneseq
        %v8149 = vshrl.u32 %v8148, 7
        %v8150 = vsub.s32 1, %v8149
        %v8151 = vrot.slane %v8143, %v8150
        %8154 = vmatprep.subr.mxu0 %v8142
        %8155 = vmatpush1.msra.mxu0 %v8141
        %8156 = vmatprep.subr.mxu0 %v8140
        %8157 = vmatpush1.msra.mxu0 %v8139
        %8158 = vmatprep.subr.mxu0 %v8138
        %8159 = vmatpush1.msra.mxu0 %v8137
        %8160 = vmatprep.subr.mxu0 %v8136
        %8161 = vmatpush1.msra.mxu0 %v8135
        %8162 = vmatprep.subr.mxu0 %v8134
        %8163 = vmatpush1.msra.mxu0 %v8133
        %8164 = vmatprep.subr.mxu0 %v8132
        %8165 = vmatpush1.msra.mxu0 %v8131
        %8166 = vmatprep.subr.mxu0 %v8130
        %8167 = vmatpush1.msra.mxu0 %v8129
        %8168 = vmatprep.subr.mxu0 %v8128
        %8169 = vmatpush1.msra.mxu0 %v8127
        %8170 = vmatprep.subr.mxu0 %v8126
        %8171 = vmatpush1.msra.mxu0 %v8125
        %8172 = vmatprep.subr.mxu0 %v8124
        %8173 = vmatpush1.msra.mxu0 %v8123
        %8174 = vmatprep.subr.mxu0 %v8122
        %8175 = vmatpush1.msra.mxu0 %v8121
        %8176 = vmatprep.subr.mxu0 %v8120
        %8177 = vmatpush1.msra.mxu0 %v8119
        %8178 = vmatprep.subr.mxu0 %v8118
        %8179 = vmatpush1.msra.mxu0 %v8117
        %8180 = vmatprep.subr.mxu0 %v8116
        %8181 = vmatpush1.msra.mxu0 %v8115
        %8182 = vmatprep.subr.mxu0 %v8114
        %8183 = vmatpush1.msra.mxu0 %v8113
        %8184 = vmatprep.subr.mxu0 %v8112
        %8185 = vmatpush1.msra.mxu0 %v8111
        %8186 = vmatprep.subr.mxu0 0.0
        %8187 = vmatpush2.msra.mxu0 0.0
        %8188 = vmatprep.subr.mxu0 0.0
        %8189 = vmatpush2.msra.mxu0 0.0
        %8190 = vmatprep.subr.mxu0 0.0
        %8191 = vmatpush2.msra.mxu0 0.0
        %8192 = vmatprep.subr.mxu0 0.0
        %8193 = vmatpush2.msra.mxu0 0.0
        %8194 = vmatprep.subr.mxu0 0.0
        %8195 = vmatpush2.msra.mxu0 0.0
        %8196 = vmatprep.subr.mxu0 0.0
        %8197 = vmatpush2.msra.mxu0 0.0
        %8198 = vmatprep.subr.mxu0 0.0
        %8199 = vmatpush2.msra.mxu0 0.0
        %8200 = vmatprep.subr.mxu0 0.0
        %8201 = vmatpush2.msra.mxu0 0.0
        %8202 = vmatprep.subr.mxu0 0.0
        %8203 = vmatpush2.msra.mxu0 0.0
        %8204 = vmatprep.subr.mxu0 0.0
        %8205 = vmatpush2.msra.mxu0 0.0
        %8206 = vmatprep.subr.mxu0 0.0
        %8207 = vmatpush2.msra.mxu0 0.0
        %8208 = vmatprep.subr.mxu0 0.0
        %8209 = vmatpush2.msra.mxu0 0.0
        %8210 = vmatprep.subr.mxu0 0.0
        %8211 = vmatpush2.msra.mxu0 0.0
        %8212 = vmatprep.subr.mxu0 0.0
        %8213 = vmatpush2.msra.mxu0 0.0
        %8214 = vmatprep.subr.mxu0 0.0
        %8215 = vmatpush2.msra.mxu0 0.0
        %8216 = vmatprep.subr.mxu0 0.0
        %8217 = vmatpush2.msra.mxu0 0.0
        %8218 = vmatprep.mubr.f32.mxu0 0.0
        %8219 = vmatmul.mubr.f32.gmra.mxu0 %v8109
        %v8220 = vpop.f32.mrf.mxu0
        %v8221 = vadd.f32 %v8147, %v8220
        %v8222 = vpop.f32.mrf.mxu0
        %v8223 = vadd.f32 %v8151, %v8222
        %8224 = vdwg.mxu0
        %v8225 = vmax.f32 %v8221, 0.0
        %v8226 = vmax.f32 %v8223, 0.0
        %s8227 = scalar_lea.vmem [#allocation19], 256
        %v8228 = vld [vmem:[%s8227] sm:$0xff]
        %v8229 = vld [vmem:[%s8227 + $0x8] sm:$0xff]
        %v8230 = vld [vmem:[%s8227 + $0x10] sm:$0xff]
        %v8231 = vld [vmem:[%s8227 + $0x18] sm:$0xff]
        %v8232 = vld [vmem:[%s8227 + $0x20] sm:$0xff]
        %v8233 = vld [vmem:[%s8227 + $0x28] sm:$0xff]
        %v8234 = vld [vmem:[%s8227 + $0x30] sm:$0xff]
        %v8235 = vld [vmem:[%s8227 + $0x38] sm:$0xff]
        %v8236 = vld [vmem:[%s8227 + $0x40] sm:$0xff]
        %v8237 = vld [vmem:[%s8227 + $0x48] sm:$0xff]
        %v8238 = vld [vmem:[%s8227 + $0x50] sm:$0xff]
        %v8239 = vld [vmem:[%s8227 + $0x58] sm:$0xff]
        %v8240 = vld [vmem:[%s8227 + $0x60] sm:$0xff]
        %v8241 = vld [vmem:[%s8227 + $0x68] sm:$0xff]
        %v8242 = vld [vmem:[%s8227 + $0x70] sm:$0xff]
        %v8243 = vld [vmem:[%s8227 + $0x78] sm:$0xff]
        %v8244 = vld [vmem:[%s8227 + $0x80] sm:$0xff]
        %v8245 = vld [vmem:[%s8227 + $0x88] sm:$0xff]
        %v8246 = vld [vmem:[%s8227 + $0x90] sm:$0xff]
        %v8247 = vld [vmem:[%s8227 + $0x98] sm:$0xff]
        %v8248 = vld [vmem:[%s8227 + $0xa0] sm:$0xff]
        %v8249 = vld [vmem:[%s8227 + $0xa8] sm:$0xff]
        %v8250 = vld [vmem:[%s8227 + $0xb0] sm:$0xff]
        %v8251 = vld [vmem:[%s8227 + $0xb8] sm:$0xff]
        %v8252 = vld [vmem:[%s8227 + $0xc0] sm:$0xff]
        %v8253 = vld [vmem:[%s8227 + $0xc8] sm:$0xff]
        %v8254 = vld [vmem:[%s8227 + $0xd0] sm:$0xff]
        %v8255 = vld [vmem:[%s8227 + $0xd8] sm:$0xff]
        %v8256 = vld [vmem:[%s8227 + $0xe0] sm:$0xff]
        %v8257 = vld [vmem:[%s8227 + $0xe8] sm:$0xff]
        %v8258 = vld [vmem:[%s8227 + $0xf0] sm:$0xff]
        %v8259 = vld [vmem:[%s8227 + $0xf8] sm:$0xff]
        %8260 = vmatprep.subr.mxu0 0.0
        %8261 = vmatpush1.msra.mxu0 %v8243
        %8262 = vmatprep.subr.mxu0 0.0
        %8263 = vmatpush1.msra.mxu0 %v8242
        %8264 = vmatprep.subr.mxu0 0.0
        %8265 = vmatpush1.msra.mxu0 %v8241
        %8266 = vmatprep.subr.mxu0 0.0
        %8267 = vmatpush1.msra.mxu0 %v8240
        %8268 = vmatprep.subr.mxu0 0.0
        %8269 = vmatpush1.msra.mxu0 %v8239
        %8270 = vmatprep.subr.mxu0 0.0
        %8271 = vmatpush1.msra.mxu0 %v8238
        %8272 = vmatprep.subr.mxu0 0.0
        %8273 = vmatpush1.msra.mxu0 %v8237
        %8274 = vmatprep.subr.mxu0 0.0
        %8275 = vmatpush1.msra.mxu0 %v8236
        %8276 = vmatprep.subr.mxu0 0.0
        %8277 = vmatpush1.msra.mxu0 %v8235
        %8278 = vmatprep.subr.mxu0 0.0
        %8279 = vmatpush1.msra.mxu0 %v8234
        %8280 = vmatprep.subr.mxu0 0.0
        %8281 = vmatpush1.msra.mxu0 %v8233
        %8282 = vmatprep.subr.mxu0 0.0
        %8283 = vmatpush1.msra.mxu0 %v8232
        %8284 = vmatprep.subr.mxu0 0.0
        %8285 = vmatpush1.msra.mxu0 %v8231
        %8286 = vmatprep.subr.mxu0 0.0
        %8287 = vmatpush1.msra.mxu0 %v8230
        %8288 = vmatprep.subr.mxu0 0.0
        %8289 = vmatpush1.msra.mxu0 %v8229
        %8290 = vmatprep.subr.mxu0 0.0
        %8291 = vmatpush1.msra.mxu0 %v8228
        %8292 = vmatprep.subr.mxu0 0.0
        %8293 = vmatpush2.msra.mxu0 %v8259
        %8294 = vmatprep.subr.mxu0 0.0
        %8295 = vmatpush2.msra.mxu0 %v8258
        %8296 = vmatprep.subr.mxu0 0.0
        %8297 = vmatpush2.msra.mxu0 %v8257
        %8298 = vmatprep.subr.mxu0 0.0
        %8299 = vmatpush2.msra.mxu0 %v8256
        %8300 = vmatprep.subr.mxu0 0.0
        %8301 = vmatpush2.msra.mxu0 %v8255
        %8302 = vmatprep.subr.mxu0 0.0
        %8303 = vmatpush2.msra.mxu0 %v8254
        %8304 = vmatprep.subr.mxu0 0.0
        %8305 = vmatpush2.msra.mxu0 %v8253
        %8306 = vmatprep.subr.mxu0 0.0
        %8307 = vmatpush2.msra.mxu0 %v8252
        %8308 = vmatprep.subr.mxu0 0.0
        %8309 = vmatpush2.msra.mxu0 %v8251
        %8310 = vmatprep.subr.mxu0 0.0
        %8311 = vmatpush2.msra.mxu0 %v8250
        %8312 = vmatprep.subr.mxu0 0.0
        %8313 = vmatpush2.msra.mxu0 %v8249
        %8314 = vmatprep.subr.mxu0 0.0
        %8315 = vmatpush2.msra.mxu0 %v8248
        %8316 = vmatprep.subr.mxu0 0.0
        %8317 = vmatpush2.msra.mxu0 %v8247
        %8318 = vmatprep.subr.mxu0 0.0
        %8319 = vmatpush2.msra.mxu0 %v8246
        %8320 = vmatprep.subr.mxu0 0.0
        %8321 = vmatpush2.msra.mxu0 %v8245
        %8322 = vmatprep.subr.mxu0 0.0
        %8323 = vmatpush2.msra.mxu0 %v8244
        %8324 = vmatprep.mubr.f32.mxu0 %v8226
        %8325 = vmatmul.mubr.f32.gmra.mxu0 %v8225
        %v8326 = vpop.f32.mrf.mxu0
        %v8327 = vadd.f32 0.0, %v8326
        %v8328 = vpop.f32.mrf.mxu0
        %8329 = vdwg.mxu0
        %v8330 = vadd.f32 %v8084, %v8327
        %v8332 = vlaneseq
        %v8333 = vshrl.u32 %v8332, 7
        %v8334 = vsub.s32 0, %v8333
        %v8335 = vrot.slane %v6055, %v8334
        %v8337 = vadd.f32 %v8330, %v8335
        %v8338 = vld [vmem:[#allocation23] sm:$0x3]
        %v8339 = vld [vmem:[%s16] sm:$0xff]
        %v8340 = vld [vmem:[%s16 + $0x8] sm:$0xff]
        %v8341 = vld [vmem:[%s16 + $0x10] sm:$0xff]
        %v8342 = vld [vmem:[%s16 + $0x18] sm:$0xff]
        %v8343 = vld [vmem:[%s16 + $0x20] sm:$0xff]
        %v8344 = vld [vmem:[%s16 + $0x28] sm:$0xff]
        %v8345 = vld [vmem:[%s16 + $0x30] sm:$0xff]
        %v8346 = vld [vmem:[%s16 + $0x38] sm:$0xff]
        %v8347 = vld [vmem:[%s16 + $0x40] sm:$0xff]
        %v8348 = vld [vmem:[%s16 + $0x48] sm:$0xff]
        %v8349 = vld [vmem:[%s16 + $0x50] sm:$0xff]
        %v8350 = vld [vmem:[%s16 + $0x58] sm:$0xff]
        %v8351 = vld [vmem:[%s16 + $0x60] sm:$0xff]
        %v8352 = vld [vmem:[%s16 + $0x68] sm:$0xff]
        %v8353 = vld [vmem:[%s16 + $0x70] sm:$0xff]
        %v8354 = vld [vmem:[%s16 + $0x78] sm:$0xff]
        %v8356 = vlaneseq
        %v8357 = vshrl.u32 %v8356, 7
        %v8358 = vsub.s32 0, %v8357
        %v8359 = vrot.slane %v8338, %v8358
        %8361 = vmatprep.subr.mxu0 0.0
        %8362 = vmatpush1.msra.mxu0 %v8354
        %8363 = vmatprep.subr.mxu0 0.0
        %8364 = vmatpush1.msra.mxu0 %v8353
        %8365 = vmatprep.subr.mxu0 0.0
        %8366 = vmatpush1.msra.mxu0 %v8352
        %8367 = vmatprep.subr.mxu0 0.0
        %8368 = vmatpush1.msra.mxu0 %v8351
        %8369 = vmatprep.subr.mxu0 0.0
        %8370 = vmatpush1.msra.mxu0 %v8350
        %8371 = vmatprep.subr.mxu0 0.0
        %8372 = vmatpush1.msra.mxu0 %v8349
        %8373 = vmatprep.subr.mxu0 0.0
        %8374 = vmatpush1.msra.mxu0 %v8348
        %8375 = vmatprep.subr.mxu0 0.0
        %8376 = vmatpush1.msra.mxu0 %v8347
        %8377 = vmatprep.subr.mxu0 0.0
        %8378 = vmatpush1.msra.mxu0 %v8346
        %8379 = vmatprep.subr.mxu0 0.0
        %8380 = vmatpush1.msra.mxu0 %v8345
        %8381 = vmatprep.subr.mxu0 0.0
        %8382 = vmatpush1.msra.mxu0 %v8344
        %8383 = vmatprep.subr.mxu0 0.0
        %8384 = vmatpush1.msra.mxu0 %v8343
        %8385 = vmatprep.subr.mxu0 0.0
        %8386 = vmatpush1.msra.mxu0 %v8342
        %8387 = vmatprep.subr.mxu0 0.0
        %8388 = vmatpush1.msra.mxu0 %v8341
        %8389 = vmatprep.subr.mxu0 0.0
        %8390 = vmatpush1.msra.mxu0 %v8340
        %8391 = vmatprep.subr.mxu0 0.0
        %8392 = vmatpush1.msra.mxu0 %v8339
        %8393 = vmatprep.subr.mxu0 0.0
        %8394 = vmatpush2.msra.mxu0 0.0
        %8395 = vmatprep.subr.mxu0 0.0
        %8396 = vmatpush2.msra.mxu0 0.0
        %8397 = vmatprep.subr.mxu0 0.0
        %8398 = vmatpush2.msra.mxu0 0.0
        %8399 = vmatprep.subr.mxu0 0.0
        %8400 = vmatpush2.msra.mxu0 0.0
        %8401 = vmatprep.subr.mxu0 0.0
        %8402 = vmatpush2.msra.mxu0 0.0
        %8403 = vmatprep.subr.mxu0 0.0
        %8404 = vmatpush2.msra.mxu0 0.0
        %8405 = vmatprep.subr.mxu0 0.0
        %8406 = vmatpush2.msra.mxu0 0.0
        %8407 = vmatprep.subr.mxu0 0.0
        %8408 = vmatpush2.msra.mxu0 0.0
        %8409 = vmatprep.subr.mxu0 0.0
        %8410 = vmatpush2.msra.mxu0 0.0
        %8411 = vmatprep.subr.mxu0 0.0
        %8412 = vmatpush2.msra.mxu0 0.0
        %8413 = vmatprep.subr.mxu0 0.0
        %8414 = vmatpush2.msra.mxu0 0.0
        %8415 = vmatprep.subr.mxu0 0.0
        %8416 = vmatpush2.msra.mxu0 0.0
        %8417 = vmatprep.subr.mxu0 0.0
        %8418 = vmatpush2.msra.mxu0 0.0
        %8419 = vmatprep.subr.mxu0 0.0
        %8420 = vmatpush2.msra.mxu0 0.0
        %8421 = vmatprep.subr.mxu0 0.0
        %8422 = vmatpush2.msra.mxu0 0.0
        %8423 = vmatprep.subr.mxu0 0.0
        %8424 = vmatpush2.msra.mxu0 0.0
        %8425 = vmatprep.mubr.f32.mxu0 0.0
        %8426 = vmatmul.mubr.f32.gmra.mxu0 %v8337
        %v8427 = vpop.f32.mrf.mxu0
        %v8428 = vadd.f32 %v8359, %v8427
        %v8429 = vpop.f32.mrf.mxu0
        %8430 = vdwg.mxu0
        %v8431 = vmax.f32 %v8428, 0.0
        %v8432 = vld [vmem:[#allocation22] sm:$0xff]
        %v8433 = vld [vmem:[#allocation22 + $0x8] sm:$0xff]
        %v8434 = vld [vmem:[#allocation22 + $0x10] sm:$0xff]
        %v8435 = vld [vmem:[#allocation22 + $0x18] sm:$0xff]
        %v8436 = vld [vmem:[#allocation22 + $0x20] sm:$0xff]
        %v8437 = vld [vmem:[#allocation22 + $0x28] sm:$0xff]
        %v8438 = vld [vmem:[#allocation22 + $0x30] sm:$0xff]
        %v8439 = vld [vmem:[#allocation22 + $0x38] sm:$0xff]
        %v8440 = vld [vmem:[#allocation22 + $0x40] sm:$0xff]
        %v8441 = vld [vmem:[#allocation22 + $0x48] sm:$0xff]
        %v8442 = vld [vmem:[#allocation22 + $0x50] sm:$0xff]
        %v8443 = vld [vmem:[#allocation22 + $0x58] sm:$0xff]
        %v8444 = vld [vmem:[#allocation22 + $0x60] sm:$0xff]
        %v8445 = vld [vmem:[#allocation22 + $0x68] sm:$0xff]
        %v8446 = vld [vmem:[#allocation22 + $0x70] sm:$0xff]
        %v8447 = vld [vmem:[#allocation22 + $0x78] sm:$0xff]
        %v8448 = vrot.slane %v8338, 1
        %v8449 = vlaneseq
        %v8450 = vshrl.u32 %v8449, 7
        %v8451 = vsub.s32 0, %v8450
        %v8452 = vrot.slane %v8448, %v8451
        %8454 = vmatprep.subr.mxu0 0.0
        %8455 = vmatpush1.msra.mxu0 %v8447
        %8456 = vmatprep.subr.mxu0 0.0
        %8457 = vmatpush1.msra.mxu0 %v8446
        %8458 = vmatprep.subr.mxu0 0.0
        %8459 = vmatpush1.msra.mxu0 %v8445
        %8460 = vmatprep.subr.mxu0 0.0
        %8461 = vmatpush1.msra.mxu0 %v8444
        %8462 = vmatprep.subr.mxu0 0.0
        %8463 = vmatpush1.msra.mxu0 %v8443
        %8464 = vmatprep.subr.mxu0 0.0
        %8465 = vmatpush1.msra.mxu0 %v8442
        %8466 = vmatprep.subr.mxu0 0.0
        %8467 = vmatpush1.msra.mxu0 %v8441
        %8468 = vmatprep.subr.mxu0 0.0
        %8469 = vmatpush1.msra.mxu0 %v8440
        %8470 = vmatprep.subr.mxu0 0.0
        %8471 = vmatpush1.msra.mxu0 %v8439
        %8472 = vmatprep.subr.mxu0 0.0
        %8473 = vmatpush1.msra.mxu0 %v8438
        %8474 = vmatprep.subr.mxu0 0.0
        %8475 = vmatpush1.msra.mxu0 %v8437
        %8476 = vmatprep.subr.mxu0 0.0
        %8477 = vmatpush1.msra.mxu0 %v8436
        %8478 = vmatprep.subr.mxu0 0.0
        %8479 = vmatpush1.msra.mxu0 %v8435
        %8480 = vmatprep.subr.mxu0 0.0
        %8481 = vmatpush1.msra.mxu0 %v8434
        %8482 = vmatprep.subr.mxu0 0.0
        %8483 = vmatpush1.msra.mxu0 %v8433
        %8484 = vmatprep.subr.mxu0 0.0
        %8485 = vmatpush1.msra.mxu0 %v8432
        %8486 = vmatprep.subr.mxu0 0.0
        %8487 = vmatpush2.msra.mxu0 0.0
        %8488 = vmatprep.subr.mxu0 0.0
        %8489 = vmatpush2.msra.mxu0 0.0
        %8490 = vmatprep.subr.mxu0 0.0
        %8491 = vmatpush2.msra.mxu0 0.0
        %8492 = vmatprep.subr.mxu0 0.0
        %8493 = vmatpush2.msra.mxu0 0.0
        %8494 = vmatprep.subr.mxu0 0.0
        %8495 = vmatpush2.msra.mxu0 0.0
        %8496 = vmatprep.subr.mxu0 0.0
        %8497 = vmatpush2.msra.mxu0 0.0
        %8498 = vmatprep.subr.mxu0 0.0
        %8499 = vmatpush2.msra.mxu0 0.0
        %8500 = vmatprep.subr.mxu0 0.0
        %8501 = vmatpush2.msra.mxu0 0.0
        %8502 = vmatprep.subr.mxu0 0.0
        %8503 = vmatpush2.msra.mxu0 0.0
        %8504 = vmatprep.subr.mxu0 0.0
        %8505 = vmatpush2.msra.mxu0 0.0
        %8506 = vmatprep.subr.mxu0 0.0
        %8507 = vmatpush2.msra.mxu0 0.0
        %8508 = vmatprep.subr.mxu0 0.0
        %8509 = vmatpush2.msra.mxu0 0.0
        %8510 = vmatprep.subr.mxu0 0.0
        %8511 = vmatpush2.msra.mxu0 0.0
        %8512 = vmatprep.subr.mxu0 0.0
        %8513 = vmatpush2.msra.mxu0 0.0
        %8514 = vmatprep.subr.mxu0 0.0
        %8515 = vmatpush2.msra.mxu0 0.0
        %8516 = vmatprep.subr.mxu0 0.0
        %8517 = vmatpush2.msra.mxu0 0.0
        %8518 = vmatprep.mubr.f32.mxu0 0.0
        %8519 = vmatmul.mubr.f32.gmra.mxu0 %v8431
        %v8520 = vpop.f32.mrf.mxu0
        %v8521 = vadd.f32 %v8452, %v8520
        %v8522 = vpop.f32.mrf.mxu0
        %8523 = vdwg.mxu0
        %8524 = vmax.xlane.f32.xlu0 %v8521
        %v8525 = vpop.xlane.xlu0 %8524
        %v8526 = vsub.f32 %v8521, %v8525
        %v8527 = vmul.f32 %v8526, 1.442695
        %v8528 = vpow.pop %v8527
        %8529 = vadd.xlane.f32.xlu0 %v8528
        %v8530 = vpop.xlane.xlu0 %8529
        %v8531 = vlog2.pop %v8530
        %v8532 = vmul.f32 %v8531, 0.6931472
        %v8533 = vadd.f32 %v8532, %v8525
        %v8534 = vsub.f32 %v8521, %v8533
        %8535 = vst [vmem:[%s819] sm:$0xff] %v8534
        %s8536 = sand.u32 %s463, 1
        %s8537 = scalar_lea.sflag [#allocation4], %s8536
        %s8538 = sand.u32 %s463, 1
        %s8539 = smul.addr %s8538, 8
        %s8540 = scalar_lea.vmem [#allocation25], %s8539
        // Predicated region
        $region153: #{transformer_forward.1} parent=95 // pred_check
          %p8541 = pneg %p473
        $region154: #{transformer_forward.1} parent=95 // pred_check_branch
          %8543 = sbr.rel (%p8541) target = $region156
        $region155: #{transformer_forward.1} parent=95 // pred_region
          %s8545 = ssub.s32 128, 128
          %8546 = vsyncadd %s8537, %s8545
          %s8547 = smul.addr %s41, 128
          %s8548 = scalar_lea.hbm %s19, %s8547
          %s8550 = sshll.u32 %s8540, 4
          %s8551 = int_to_ptr.vmem [resolvable:$true] %s8550
          %8553 = dma.vmem_to_hbm [thread:$0]  %s8551, 128, %s8548, %s8537
        $region156: #{transformer_forward.1} parent=95 // pred_fallthru
          _
      $region96: #{transformer_forward.1} parent=5 // pred_fallthru
        _
      %p8554 = scmp.le.s32.totalorder 2, %s36
      // Predicated region
      $region157: #{transformer_forward.1} parent=5 // pred_check
        %p8555 = pneg %p8554
      $region158: #{transformer_forward.1} parent=5 // pred_check_branch
        %8557 = sbr.rel (%p8555) target = $region160
      $region159: #{transformer_forward.1} parent=5 // pred_region
        %s8558 = ssub.s32 %s36, 2
        // Predicated region
        $region161: #{transformer_forward.1} parent=159 // pred_check
          %p8559 = pneg %p479
        $region162: #{transformer_forward.1} parent=159 // pred_check_branch
          %8561 = sbr.rel (%p8559) target = $region164
        $region163: #{transformer_forward.1} parent=159 // pred_region
          %s8562 = sand.u32 %s464, 1
          %s8563 = scalar_lea.sflag [#allocation4], %s8562
          %s8564 = sand.u32 %s464, 1
          %s8565 = smul.addr %s8564, 8
          %s8566 = scalar_lea.vmem [#allocation25], %s8565
          %8567 = dma.done %s8563, 128
        $region164: #{transformer_forward.1} parent=159 // pred_fallthru
          _
      $region160: #{transformer_forward.1} parent=5 // pred_fallthru
        _
    $region6: #{transformer_forward.1} parent=1 // loop_footer
      %s40 = sadd.s32 1, %s36
    $region7: #{transformer_forward.1} parent=1 // loop_footer_branch
      %35 = sbr.rel target = $region3
    $region8: #{transformer_forward.1} parent=1 // loop_exit
      _
    %8568 = vsyncpa [#allocation3], 1
    %s8569 = scalar_lea.sflag [#allocation3], 1
    %8570 = vsyncpa %s8569, 1
    %8571 = vsyncpa [#allocation6], 1
    %8572 = vsyncpa [#allocation9], 1
    %8573 = vsyncpa [#allocation12], 1
    %8574 = vsyncpa [#allocation15], 1
    %8575 = vsyncpa [#allocation18], 1
    %8576 = vsyncpa [#allocation21], 1
    %8577 = vsyncpa [#allocation24], 1
    %8578 = vsyncpa [#allocation4], 1
    %s8579 = scalar_lea.sflag [#allocation4], 1
    %8580 = vsyncpa %s8579, 1

</llo_original>
